<compile_context>
chip_gen: v7x
topology: tpu7x:2x2x1
jax: 0.10.0
libtpu: 0.0.40
codegen_flags: <defaults>
</compile_context>

<pallas_src>
import functools

import jax
import jax.numpy as jnp
import numpy as np
from jax import lax
from jax.experimental import pallas as pl
from jax.experimental.pallas import tpu as pltpu

_EPS = 1e-5
_SLOPE = 0.2
_VMEM_LIMIT = 32 * 1024 * 1024


def _compiler_params():
    return pltpu.CompilerParams(
        dimension_semantics=("parallel",),   # batch axis: 2 TCs on v7x, harmless on v5e/v6e
        vmem_limit_bytes=_VMEM_LIMIT,
    )


# ----------------------------- Pallas kernels --------------------------------
def _convT_in_lrelu_kernel(pT_ref, w_ref, b_ref, o_ref, *, eps, slope, inv_p):
    # Transposed / lane-dense form (layers 1-3):
    #   pT_ref: (K, P) bf16 patches, w_ref: (C, K) bf16, b_ref: (C, 1) f32
    #   o_ref : (C, P) f32  -- channels on sublanes, spatial P on lanes.
    y = jnp.dot(w_ref[...], pT_ref[...], preferred_element_type=jnp.float32)
    y = y + b_ref[...]
    # InstanceNorm2d (affine=False): per-channel stats over spatial, single pass.
    s1 = jnp.sum(y, axis=-1, keepdims=True)
    s2 = jnp.sum(y * y, axis=-1, keepdims=True)
    mean = s1 * inv_p
    var = jnp.maximum(s2 * inv_p - mean * mean, 0.0)
    inv_std = lax.rsqrt(var + eps)
    yn = (y - mean) * inv_std
    # LeakyReLU(0.2) fused with the normalize pass.
    o_ref[...] = jnp.where(yn > 0, yn, slope * yn).astype(o_ref.dtype)


def _conv_in_lrelu_kernel(p_ref, w_ref, b_ref, o_ref, *, eps, slope, inv_p):
    # Standard orientation (layer 4, C_out = 128 already lane-dense):
    #   p_ref: (P, K) bf16, w_ref: (K, C) bf16, b_ref: (1, C) f32, o_ref: (P, C) f32
    y = jnp.dot(p_ref[...], w_ref[...], preferred_element_type=jnp.float32)
    y = y + b_ref[...]
    s1 = jnp.sum(y, axis=0, keepdims=True)
    s2 = jnp.sum(y * y, axis=0, keepdims=True)
    mean = s1 * inv_p
    var = jnp.maximum(s2 * inv_p - mean * mean, 0.0)
    yn = (y - mean) * lax.rsqrt(var + eps)
    o_ref[...] = jnp.where(yn > 0, yn, slope * yn).astype(o_ref.dtype)


def _last_block_kernel(p_ref, w5_ref, b5_ref, w6_ref, b6_ref, o_ref, *,
                       eps, slope, inv_p):
    # Layer 5 (conv + InstanceNorm + LeakyReLU) fused with layer 6 (4x4 valid
    # conv 256->1, i.e. a weighted full reduction of the 4x4x256 activation).
    #   p_ref: (16, 2048) bf16, w5_ref: (2048, 256) bf16, b5_ref: (1, 256) f32
    #   w6_ref: (16, 256) f32 (pre-reordered), b6_ref: (1, 1) f32, o_ref: (1, 1) f32
    y = jnp.dot(p_ref[...], w5_ref[...], preferred_element_type=jnp.float32)
    y = y + b5_ref[...]
    s1 = jnp.sum(y, axis=0, keepdims=True)
    s2 = jnp.sum(y * y, axis=0, keepdims=True)
    mean = s1 * inv_p
    var = jnp.maximum(s2 * inv_p - mean * mean, 0.0)
    yn = (y - mean) * lax.rsqrt(var + eps)
    yn = jnp.where(yn > 0, yn, slope * yn)
    z = yn * w6_ref[...]                                   # (16, 256) f32
    out = jnp.sum(jnp.sum(z, axis=1, keepdims=True), axis=0, keepdims=True)
    o_ref[...] = (out + b6_ref[...]).astype(o_ref.dtype)


# ----------------------------- kernel wrappers --------------------------------
def conv_block_T(pT, w, b):
    """pT: (N, K, P) bf16, w: (C, K) bf16, b: (C, 1) f32 -> (N, C, P) f32."""
    N, K, P = pT.shape
    C = w.shape[0]
    kernel = functools.partial(_convT_in_lrelu_kernel,
                               eps=_EPS, slope=_SLOPE, inv_p=1.0 / P)
    return pl.pallas_call(
        kernel,
        out_shape=jax.ShapeDtypeStruct((N, C, P), jnp.float32),
        grid=(N,),
        in_specs=[
            pl.BlockSpec((None, K, P), lambda n: (n, 0, 0)),   # per-sample patches
            pl.BlockSpec((C, K), lambda n: (0, 0)),            # shared weight
            pl.BlockSpec((C, 1), lambda n: (0, 0)),            # shared bias
        ],
        out_specs=pl.BlockSpec((None, C, P), lambda n: (n, 0, 0)),
        compiler_params=_compiler_params(),
    )(pT, w, b)


def conv_block(p, w, b):
    """p: (N, P, K) bf16, w: (K, C) bf16, b: (1, C) f32 -> (N, P, C) f32."""
    N, P, K = p.shape
    C = w.shape[1]
    kernel = functools.partial(_conv_in_lrelu_kernel,
                               eps=_EPS, slope=_SLOPE, inv_p=1.0 / P)
    return pl.pallas_call(
        kernel,
        out_shape=jax.ShapeDtypeStruct((N, P, C), jnp.float32),
        grid=(N,),
        in_specs=[
            pl.BlockSpec((None, P, K), lambda n: (n, 0, 0)),
            pl.BlockSpec((K, C), lambda n: (0, 0)),
            pl.BlockSpec((1, C), lambda n: (0, 0)),
        ],
        out_specs=pl.BlockSpec((None, P, C), lambda n: (n, 0, 0)),
        compiler_params=_compiler_params(),
    )(p, w, b)


def last_block(p, w5, b5, w6, b6):
    """p: (N, 16, 2048) bf16 -> (N, 1, 1) f32 (layers 5+6 fused)."""
    N, P, K = p.shape
    C = w5.shape[1]
    kernel = functools.partial(_last_block_kernel,
                               eps=_EPS, slope=_SLOPE, inv_p=1.0 / P)
    return pl.pallas_call(
        kernel,
        out_shape=jax.ShapeDtypeStruct((N, 1, 1), jnp.float32),
        grid=(N,),
        in_specs=[
            pl.BlockSpec((None, P, K), lambda n: (n, 0, 0)),
            pl.BlockSpec((K, C), lambda n: (0, 0)),
            pl.BlockSpec((1, C), lambda n: (0, 0)),
            pl.BlockSpec((P, C), lambda n: (0, 0)),
            pl.BlockSpec((1, 1), lambda n: (0, 0)),
        ],
        out_specs=pl.BlockSpec((None, 1, 1), lambda n: (n, 0, 0)),
        compiler_params=_compiler_params(),
    )(p, w5, b5, w6, b6)


# ------------------------------ im2col (XLA, jitted) --------------------------
def _slices_nchw(x, k, stride, pad):
    N, C, H, W = x.shape
    xp = jnp.pad(x, ((0, 0), (0, 0), (pad, pad), (pad, pad)))
    Hp, Wp = H + 2 * pad, W + 2 * pad
    Ho = (Hp - k) // stride + 1
    Wo = (Wp - k) // stride + 1
    sl = []
    for kh in range(k):
        for kw in range(k):
            sl.append(xp[:, :, kh:kh + stride * Ho:stride, kw:kw + stride * Wo:stride])
    return sl, Ho, Wo


def im2col_cfirst_T(x_nchw, k, stride, pad):
    """NCHW -> patches_T (N, K, P), K ordered (C, kh, kw), P = Ho*Wo on lanes."""
    N, C = x_nchw.shape[:2]
    sl, Ho, Wo = _slices_nchw(x_nchw, k, stride, pad)
    p = jnp.stack(sl, axis=0).reshape(k, k, N, C, Ho * Wo)   # (kh, kw, N, C, P)
    p = p.transpose(2, 3, 0, 1, 4).reshape(N, C * k * k, Ho * Wo)
    return p, Ho, Wo


def im2col_cfirst(x_nchw, k, stride, pad):
    """NCHW -> patches (N, P, K), K ordered (C, kh, kw)."""
    N, C = x_nchw.shape[:2]
    sl, Ho, Wo = _slices_nchw(x_nchw, k, stride, pad)
    p = jnp.stack(sl, axis=0).reshape(k, k, N, C, Ho, Wo)
    p = p.transpose(2, 4, 5, 3, 0, 1).reshape(N, Ho * Wo, C * k * k)
    return p, Ho, Wo


def im2col_clast(x_nhwc, k, stride, pad):
    """NHWC -> patches (N, P, K), K ordered (kh, kw, C)."""
    N, H, W, C = x_nhwc.shape
    xp = jnp.pad(x_nhwc, ((0, 0), (pad, pad), (pad, pad), (0, 0)))
    Hp, Wp = H + 2 * pad, W + 2 * pad
    Ho = (Hp - k) // stride + 1
    Wo = (Wp - k) // stride + 1
    sl = []
    for kh in range(k):
        for kw in range(k):
            sl.append(xp[:, kh:kh + stride * Ho:stride, kw:kw + stride * Wo:stride, :])
    p = jnp.stack(sl, axis=0).reshape(k, k, N, Ho, Wo, C)
    p = p.transpose(2, 3, 4, 0, 1, 5).reshape(N, Ho * Wo, k * k * C)
    return p, Ho, Wo


# ------------------------------ params & forward ------------------------------
def prepare_params(params):
    """One-time weight re-layouts (feedback: const-fold reshapes/transposes)."""
    prep = {}
    convT = []
    for i in range(3):                                   # layers 1-3 (transposed form)
        w, b = params[i]
        c_out = w.shape[0]
        convT.append((w.reshape(c_out, -1).astype(jnp.bfloat16),   # (C, K), K=(C_in,kh,kw)
                      b.reshape(c_out, 1).astype(jnp.float32)))
    prep["convT"] = convT
    w4, b4 = params[3]                                   # layer 4 (standard form)
    prep["conv4"] = (w4.reshape(w4.shape[0], -1).T.astype(jnp.bfloat16),   # (K, 128)
                     b4.reshape(1, -1).astype(jnp.float32))
    w5, b5 = params[4]                                   # layer 5: K ordered (kh, kw, C_in)
    prep["conv5"] = (w5.transpose(2, 3, 1, 0).reshape(-1, w5.shape[0]).astype(jnp.bfloat16),
                     b5.reshape(1, -1).astype(jnp.float32))
    w6, b6 = params[5]                                   # layer 6: (P=16, C=256) reduction weights
    prep["conv6"] = (w6.transpose(2, 3, 1, 0).reshape(16, w6.shape[1]).astype(jnp.float32),
                     b6.reshape(1, 1).astype(jnp.float32))
    return prep


def critic_forward(x, prep):
    """x: (N, 3, H, W) NCHW -> (N, 1, 1, 1); matches the PyTorch Critic."""
    N = x.shape[0]
    cur = x
    # Layers 1-3: lane-dense transposed conv + InstanceNorm + LeakyReLU.
    for wT, bT in prep["convT"]:
        pT, Ho, Wo = im2col_cfirst_T(cur, 4, 2, 1)
        y = conv_block_T(pT.astype(jnp.bfloat16), wT, bT)      # (N, C, P)
        cur = y.reshape(N, wT.shape[0], Ho, Wo)                # NCHW, no transpose
    # Layer 4: (P, C) orientation (C_out=128 lane-dense).
    w4, b4 = prep["conv4"]
    p4, Ho, Wo = im2col_cfirst(cur, 4, 2, 1)
    y4 = conv_block(p4.astype(jnp.bfloat16), w4, b4)           # (N, 64, 128)
    cur_nhwc = y4.reshape(N, Ho, Wo, w4.shape[1])              # NHWC, no transpose
    # Layers 5+6 fused in one kernel.
    w5, b5 = prep["conv5"]
    w6, b6 = prep["conv6"]
    p5, _, _ = im2col_clast(cur_nhwc, 4, 2, 1)                 # (N, 16, 2048)
    out = last_block(p5.astype(jnp.bfloat16), w5, b5, w6, b6)  # (N, 1, 1)
    return out.reshape(N, 1, 1, 1)


def make_params(key):
    """Deterministic synthetic weights matching the PyTorch module shapes."""
    chans = [3, 16, 32, 64, 128, 256]
    params = []
    keys = jax.random.split(key, 2 * len(chans))
    for i in range(5):  # crit_blocks: Conv2d(c_in, c_out, 4, stride=2, padding=1)
        c_in, c_out = chans[i], chans[i + 1]
        fan_in = c_in * 16
        w = jax.random.normal(keys[2 * i], (c_out, c_in, 4, 4), jnp.float32)
        w = w / jnp.sqrt(fan_in).astype(jnp.float32)
        b = 0.01 * jax.random.normal(keys[2 * i + 1], (c_out,), jnp.float32)
        params.append((w, b))
    # final Conv2d(256, 1, kernel_size=4, stride=1, padding=0)
    w = jax.random.normal(keys[10], (1, 256, 4, 4), jnp.float32) / jnp.sqrt(256 * 16)
    b = 0.01 * jax.random.normal(keys[11], (1,), jnp.float32)
    params.append((w.astype(jnp.float32), b.astype(jnp.float32)))
    return params


# ------------------------- pure-JAX reference --------------------------------
def critic_reference(x, params):
    for i, (w, b) in enumerate(params):
        is_block = i < 5
        stride = 2 if is_block else 1
        pad = 1 if is_block else 0
        y = lax.conv_general_dilated(
            x, w, (stride, stride), [(pad, pad), (pad, pad)],
            dimension_numbers=("NCHW", "OIHW", "NCHW"),
            precision=lax.Precision.HIGHEST,
        )
        y = y + b[None, :, None, None]
        if is_block:
            mean = jnp.mean(y, axis=(2, 3), keepdims=True)
            var = jnp.mean((y - mean) ** 2, axis=(2, 3), keepdims=True)
            y = (y - mean) * lax.rsqrt(var + _EPS)
            y = jnp.where(y > 0, y, _SLOPE * y)
        x = y
    return x


if __name__ == "__main__":
    key = jax.random.PRNGKey(0)
    k_params, k_input = jax.random.split(key)
    params = make_params(k_params)
    prep = prepare_params(params)   # one-time weight re-layouts (outside the jit'd forward)

    # Smallest spatial size consistent with the module: 5 stride-2 halvings
    # followed by a 4x4 valid conv -> 128 -> 64 -> 32 -> 16 -> 8 -> 4 -> 1.
    x = jax.random.normal(k_input, (2, 3, 128, 128), jnp.float32)

    fwd = jax.jit(critic_forward)
    out = jax.block_until_ready(fwd(x, prep))
    assert out.shape == (2, 1, 1, 1), out.shape

    ref = jax.block_until_ready(critic_reference(x, params))
    np.testing.assert_allclose(np.asarray(out), np.asarray(ref), rtol=0.1, atol=0.1)

    print("KERNEL_OK")
</pallas_src>

<mosaic_0001>
module attributes {stable_mosaic.version = 11 : i64} {
  func.func @_convT_in_lrelu_kernel(%arg0: i32, %arg1: memref<1x48x4096xbf16, #tpu.memory_space<vmem>>, %arg2: memref<16x48xbf16, #tpu.memory_space<vmem>>, %arg3: memref<16x1xf32, #tpu.memory_space<vmem>>, %arg4: memref<1x16x4096xf32, #tpu.memory_space<vmem>>) attributes {dimension_semantics = [#tpu.dimension_semantics<parallel>], iteration_bounds = array<i64: 2>, scalar_prefetch = 0 : i64, scratch_operands = 0 : i64, tpu.core_type = #tpu.core_type<tc>, window_params = [{transform_indices = @transform_0, window_bounds = array<i64: 1, 48, 4096>}, {pipeline_mode = #tpu.pipeline_mode<synchronous>, transform_indices = @transform_1, window_bounds = array<i64: 16, 48>}, {pipeline_mode = #tpu.pipeline_mode<synchronous>, transform_indices = @transform_2, window_bounds = array<i64: 16, 1>}, {transform_indices = @transform_3, window_bounds = array<i64: 1, 16, 4096>}]} {
    %c0 = arith.constant 0 : index
    %c0_0 = arith.constant 0 : index
    %0 = vector.load %arg2[%c0, %c0_0] : memref<16x48xbf16, #tpu.memory_space<vmem>>, vector<16x48xbf16>
    %c0_1 = arith.constant 0 : index
    %c0_2 = arith.constant 0 : index
    %c0_3 = arith.constant 0 : index
    %1 = vector.load %arg1[%c0_1, %c0_2, %c0_3] : memref<1x48x4096xbf16, #tpu.memory_space<vmem>>, vector<1x48x4096xbf16>
    %2 = vector.shape_cast %1 : vector<1x48x4096xbf16> to vector<48x4096xbf16>
    %cst = arith.constant dense<0.000000e+00> : vector<16x4096xf32>
    %3 = tpu.matmul %0, %2, %cst {dimension_numbers = #tpu.dot_dimension_numbers<[1], [0], [0], [1], [0, 0, 1, 1], [], []>} : vector<16x48xbf16>, vector<48x4096xbf16>, vector<16x4096xf32> -> vector<16x4096xf32>
    %c0_4 = arith.constant 0 : index
    %c0_5 = arith.constant 0 : index
    %4 = vector.load %arg3[%c0_4, %c0_5] : memref<16x1xf32, #tpu.memory_space<vmem>>, vector<16x1xf32>
    %5 = vector.broadcast %4 : vector<16x1xf32> to vector<16x4096xf32>
    %6 = arith.addf %3, %5 : vector<16x4096xf32>
    %cst_6 = arith.constant dense<0.000000e+00> : vector<16xf32>
    %7 = vector.multi_reduction <add>, %6, %cst_6 [1] : vector<16x4096xf32> to vector<16xf32>
    %8 = vector.shape_cast %7 : vector<16xf32> to vector<16x1xf32>
    %9 = arith.mulf %6, %6 : vector<16x4096xf32>
    %cst_7 = arith.constant dense<0.000000e+00> : vector<16xf32>
    %10 = vector.multi_reduction <add>, %9, %cst_7 [1] : vector<16x4096xf32> to vector<16xf32>
    %11 = vector.shape_cast %10 : vector<16xf32> to vector<16x1xf32>
    %cst_8 = arith.constant 2.44140625E-4 : f32
    %12 = vector.broadcast %cst_8 : f32 to vector<16x1xf32>
    %13 = arith.mulf %8, %12 : vector<16x1xf32>
    %cst_9 = arith.constant 2.44140625E-4 : f32
    %14 = vector.broadcast %cst_9 : f32 to vector<16x1xf32>
    %15 = arith.mulf %11, %14 : vector<16x1xf32>
    %16 = arith.mulf %13, %13 : vector<16x1xf32>
    %17 = arith.subf %15, %16 : vector<16x1xf32>
    %cst_10 = arith.constant 0.000000e+00 : f32
    %18 = vector.broadcast %cst_10 : f32 to vector<16x1xf32>
    %19 = arith.maximumf %17, %18 : vector<16x1xf32>
    %cst_11 = arith.constant 9.99999974E-6 : f32
    %20 = vector.broadcast %cst_11 : f32 to vector<16x1xf32>
    %21 = arith.addf %19, %20 : vector<16x1xf32>
    %22 = math.rsqrt %21 : vector<16x1xf32>
    %23 = vector.broadcast %13 : vector<16x1xf32> to vector<16x4096xf32>
    %24 = arith.subf %6, %23 : vector<16x4096xf32>
    %25 = vector.broadcast %22 : vector<16x1xf32> to vector<16x4096xf32>
    %26 = arith.mulf %24, %25 : vector<16x4096xf32>
    %cst_12 = arith.constant 0.000000e+00 : f32
    %27 = vector.broadcast %cst_12 : f32 to vector<16x4096xf32>
    %28 = arith.cmpf ogt, %26, %27 : vector<16x4096xf32>
    %cst_13 = arith.constant 2.000000e-01 : f32
    %29 = vector.broadcast %cst_13 : f32 to vector<16x4096xf32>
    %30 = arith.mulf %29, %26 : vector<16x4096xf32>
    %31 = arith.select %28, %26, %30 : vector<16x4096xi1>, vector<16x4096xf32>
    %c0_14 = arith.constant 0 : index
    %c0_15 = arith.constant 0 : index
    %c0_16 = arith.constant 0 : index
    %32 = vector.load %arg4[%c0_14, %c0_15, %c0_16] : memref<1x16x4096xf32, #tpu.memory_space<vmem>>, vector<1x16x4096xf32>
    %33 = vector.shape_cast %32 : vector<1x16x4096xf32> to vector<16x4096xf32>
    %34 = vector.shape_cast %31 : vector<16x4096xf32> to vector<1x16x4096xf32>
    tpu.vector_store %arg4[%c0_14, %c0_15, %c0_16], %34 {strides = array<i32>} : memref<1x16x4096xf32, #tpu.memory_space<vmem>>, vector<1x16x4096xf32>,
    return
  }
  func.func @transform_0(%arg0: i32) -> (i32, i32, i32) {
    %c0_i32 = arith.constant 0 : i32
    %c0_i32_0 = arith.constant 0 : i32
    %c0_i32_1 = arith.constant 0 : i32
    return %arg0, %c0_i32, %c0_i32_0 : i32, i32, i32
  }
  func.func @transform_1(%arg0: i32) -> (i32, i32) {
    %c0_i32 = arith.constant 0 : i32
    %c0_i32_0 = arith.constant 0 : i32
    %c0_i32_1 = arith.constant 0 : i32
    return %c0_i32, %c0_i32_0 : i32, i32
  }
  func.func @transform_2(%arg0: i32) -> (i32, i32) {
    %c0_i32 = arith.constant 0 : i32
    %c0_i32_0 = arith.constant 0 : i32
    %c0_i32_1 = arith.constant 0 : i32
    return %c0_i32, %c0_i32_0 : i32, i32
  }
  func.func @transform_3(%arg0: i32) -> (i32, i32, i32) {
    %c0_i32 = arith.constant 0 : i32
    %c0_i32_0 = arith.constant 0 : i32
    %c0_i32_1 = arith.constant 0 : i32
    return %arg0, %c0_i32, %c0_i32_0 : i32, i32, i32
  }
}

module attributes {stable_mosaic.version = 11 : i64} {
  func.func @_convT_in_lrelu_kernel(%arg0: i32, %arg1: memref<1x256x1024xbf16, #tpu.memory_space<vmem>>, %arg2: memref<32x256xbf16, #tpu.memory_space<vmem>>, %arg3: memref<32x1xf32, #tpu.memory_space<vmem>>, %arg4: memref<1x32x1024xf32, #tpu.memory_space<vmem>>) attributes {dimension_semantics = [#tpu.dimension_semantics<parallel>], iteration_bounds = array<i64: 2>, scalar_prefetch = 0 : i64, scratch_operands = 0 : i64, tpu.core_type = #tpu.core_type<tc>, window_params = [{transform_indices = @transform_0, window_bounds = array<i64: 1, 256, 1024>}, {pipeline_mode = #tpu.pipeline_mode<synchronous>, transform_indices = @transform_1, window_bounds = array<i64: 32, 256>}, {pipeline_mode = #tpu.pipeline_mode<synchronous>, transform_indices = @transform_2, window_bounds = array<i64: 32, 1>}, {transform_indices = @transform_3, window_bounds = array<i64: 1, 32, 1024>}]} {
    %c0 = arith.constant 0 : index
    %c0_0 = arith.constant 0 : index
    %0 = vector.load %arg2[%c0, %c0_0] : memref<32x256xbf16, #tpu.memory_space<vmem>>, vector<32x256xbf16>
    %c0_1 = arith.constant 0 : index
    %c0_2 = arith.constant 0 : index
    %c0_3 = arith.constant 0 : index
    %1 = vector.load %arg1[%c0_1, %c0_2, %c0_3] : memref<1x256x1024xbf16, #tpu.memory_space<vmem>>, vector<1x256x1024xbf16>
    %2 = vector.shape_cast %1 : vector<1x256x1024xbf16> to vector<256x1024xbf16>
    %cst = arith.constant dense<0.000000e+00> : vector<32x1024xf32>
    %3 = tpu.matmul %0, %2, %cst {dimension_numbers = #tpu.dot_dimension_numbers<[1], [0], [0], [1], [0, 0, 1, 1], [], []>} : vector<32x256xbf16>, vector<256x1024xbf16>, vector<32x1024xf32> -> vector<32x1024xf32>
    %c0_4 = arith.constant 0 : index
    %c0_5 = arith.constant 0 : index
    %4 = vector.load %arg3[%c0_4, %c0_5] : memref<32x1xf32, #tpu.memory_space<vmem>>, vector<32x1xf32>
    %5 = vector.broadcast %4 : vector<32x1xf32> to vector<32x1024xf32>
    %6 = arith.addf %3, %5 : vector<32x1024xf32>
    %cst_6 = arith.constant dense<0.000000e+00> : vector<32xf32>
    %7 = vector.multi_reduction <add>, %6, %cst_6 [1] : vector<32x1024xf32> to vector<32xf32>
    %8 = vector.shape_cast %7 : vector<32xf32> to vector<32x1xf32>
    %9 = arith.mulf %6, %6 : vector<32x1024xf32>
    %cst_7 = arith.constant dense<0.000000e+00> : vector<32xf32>
    %10 = vector.multi_reduction <add>, %9, %cst_7 [1] : vector<32x1024xf32> to vector<32xf32>
    %11 = vector.shape_cast %10 : vector<32xf32> to vector<32x1xf32>
    %cst_8 = arith.constant 9.765625E-4 : f32
    %12 = vector.broadcast %cst_8 : f32 to vector<32x1xf32>
    %13 = arith.mulf %8, %12 : vector<32x1xf32>
    %cst_9 = arith.constant 9.765625E-4 : f32
    %14 = vector.broadcast %cst_9 : f32 to vector<32x1xf32>
    %15 = arith.mulf %11, %14 : vector<32x1xf32>
    %16 = arith.mulf %13, %13 : vector<32x1xf32>
    %17 = arith.subf %15, %16 : vector<32x1xf32>
    %cst_10 = arith.constant 0.000000e+00 : f32
    %18 = vector.broadcast %cst_10 : f32 to vector<32x1xf32>
    %19 = arith.maximumf %17, %18 : vector<32x1xf32>
    %cst_11 = arith.constant 9.99999974E-6 : f32
    %20 = vector.broadcast %cst_11 : f32 to vector<32x1xf32>
    %21 = arith.addf %19, %20 : vector<32x1xf32>
    %22 = math.rsqrt %21 : vector<32x1xf32>
    %23 = vector.broadcast %13 : vector<32x1xf32> to vector<32x1024xf32>
    %24 = arith.subf %6, %23 : vector<32x1024xf32>
    %25 = vector.broadcast %22 : vector<32x1xf32> to vector<32x1024xf32>
    %26 = arith.mulf %24, %25 : vector<32x1024xf32>
    %cst_12 = arith.constant 0.000000e+00 : f32
    %27 = vector.broadcast %cst_12 : f32 to vector<32x1024xf32>
    %28 = arith.cmpf ogt, %26, %27 : vector<32x1024xf32>
    %cst_13 = arith.constant 2.000000e-01 : f32
    %29 = vector.broadcast %cst_13 : f32 to vector<32x1024xf32>
    %30 = arith.mulf %29, %26 : vector<32x1024xf32>
    %31 = arith.select %28, %26, %30 : vector<32x1024xi1>, vector<32x1024xf32>
    %c0_14 = arith.constant 0 : index
    %c0_15 = arith.constant 0 : index
    %c0_16 = arith.constant 0 : index
    %32 = vector.load %arg4[%c0_14, %c0_15, %c0_16] : memref<1x32x1024xf32, #tpu.memory_space<vmem>>, vector<1x32x1024xf32>
    %33 = vector.shape_cast %32 : vector<1x32x1024xf32> to vector<32x1024xf32>
    %34 = vector.shape_cast %31 : vector<32x1024xf32> to vector<1x32x1024xf32>
    tpu.vector_store %arg4[%c0_14, %c0_15, %c0_16], %34 {strides = array<i32>} : memref<1x32x1024xf32, #tpu.memory_space<vmem>>, vector<1x32x1024xf32>,
    return
  }
  func.func @transform_0(%arg0: i32) -> (i32, i32, i32) {
    %c0_i32 = arith.constant 0 : i32
    %c0_i32_0 = arith.constant 0 : i32
    %c0_i32_1 = arith.constant 0 : i32
    return %arg0, %c0_i32, %c0_i32_0 : i32, i32, i32
  }
  func.func @transform_1(%arg0: i32) -> (i32, i32) {
    %c0_i32 = arith.constant 0 : i32
    %c0_i32_0 = arith.constant 0 : i32
    %c0_i32_1 = arith.constant 0 : i32
    return %c0_i32, %c0_i32_0 : i32, i32
  }
  func.func @transform_2(%arg0: i32) -> (i32, i32) {
    %c0_i32 = arith.constant 0 : i32
    %c0_i32_0 = arith.constant 0 : i32
    %c0_i32_1 = arith.constant 0 : i32
    return %c0_i32, %c0_i32_0 : i32, i32
  }
  func.func @transform_3(%arg0: i32) -> (i32, i32, i32) {
    %c0_i32 = arith.constant 0 : i32
    %c0_i32_0 = arith.constant 0 : i32
    %c0_i32_1 = arith.constant 0 : i32
    return %arg0, %c0_i32, %c0_i32_0 : i32, i32, i32
  }
}

module attributes {stable_mosaic.version = 11 : i64} {
  func.func @_convT_in_lrelu_kernel(%arg0: i32, %arg1: memref<1x512x256xbf16, #tpu.memory_space<vmem>>, %arg2: memref<64x512xbf16, #tpu.memory_space<vmem>>, %arg3: memref<64x1xf32, #tpu.memory_space<vmem>>, %arg4: memref<1x64x256xf32, #tpu.memory_space<vmem>>) attributes {dimension_semantics = [#tpu.dimension_semantics<parallel>], iteration_bounds = array<i64: 2>, scalar_prefetch = 0 : i64, scratch_operands = 0 : i64, tpu.core_type = #tpu.core_type<tc>, window_params = [{transform_indices = @transform_0, window_bounds = array<i64: 1, 512, 256>}, {pipeline_mode = #tpu.pipeline_mode<synchronous>, transform_indices = @transform_1, window_bounds = array<i64: 64, 512>}, {pipeline_mode = #tpu.pipeline_mode<synchronous>, transform_indices = @transform_2, window_bounds = array<i64: 64, 1>}, {transform_indices = @transform_3, window_bounds = array<i64: 1, 64, 256>}]} {
    %c0 = arith.constant 0 : index
    %c0_0 = arith.constant 0 : index
    %0 = vector.load %arg2[%c0, %c0_0] : memref<64x512xbf16, #tpu.memory_space<vmem>>, vector<64x512xbf16>
    %c0_1 = arith.constant 0 : index
    %c0_2 = arith.constant 0 : index
    %c0_3 = arith.constant 0 : index
    %1 = vector.load %arg1[%c0_1, %c0_2, %c0_3] : memref<1x512x256xbf16, #tpu.memory_space<vmem>>, vector<1x512x256xbf16>
    %2 = vector.shape_cast %1 : vector<1x512x256xbf16> to vector<512x256xbf16>
    %cst = arith.constant dense<0.000000e+00> : vector<64x256xf32>
    %3 = tpu.matmul %0, %2, %cst {dimension_numbers = #tpu.dot_dimension_numbers<[1], [0], [0], [1], [0, 0, 1, 1], [], []>} : vector<64x512xbf16>, vector<512x256xbf16>, vector<64x256xf32> -> vector<64x256xf32>
    %c0_4 = arith.constant 0 : index
    %c0_5 = arith.constant 0 : index
    %4 = vector.load %arg3[%c0_4, %c0_5] : memref<64x1xf32, #tpu.memory_space<vmem>>, vector<64x1xf32>
    %5 = vector.broadcast %4 : vector<64x1xf32> to vector<64x256xf32>
    %6 = arith.addf %3, %5 : vector<64x256xf32>
    %cst_6 = arith.constant dense<0.000000e+00> : vector<64xf32>
    %7 = vector.multi_reduction <add>, %6, %cst_6 [1] : vector<64x256xf32> to vector<64xf32>
    %8 = vector.shape_cast %7 : vector<64xf32> to vector<64x1xf32>
    %9 = arith.mulf %6, %6 : vector<64x256xf32>
    %cst_7 = arith.constant dense<0.000000e+00> : vector<64xf32>
    %10 = vector.multi_reduction <add>, %9, %cst_7 [1] : vector<64x256xf32> to vector<64xf32>
    %11 = vector.shape_cast %10 : vector<64xf32> to vector<64x1xf32>
    %cst_8 = arith.constant 3.906250e-03 : f32
    %12 = vector.broadcast %cst_8 : f32 to vector<64x1xf32>
    %13 = arith.mulf %8, %12 : vector<64x1xf32>
    %cst_9 = arith.constant 3.906250e-03 : f32
    %14 = vector.broadcast %cst_9 : f32 to vector<64x1xf32>
    %15 = arith.mulf %11, %14 : vector<64x1xf32>
    %16 = arith.mulf %13, %13 : vector<64x1xf32>
    %17 = arith.subf %15, %16 : vector<64x1xf32>
    %cst_10 = arith.constant 0.000000e+00 : f32
    %18 = vector.broadcast %cst_10 : f32 to vector<64x1xf32>
    %19 = arith.maximumf %17, %18 : vector<64x1xf32>
    %cst_11 = arith.constant 9.99999974E-6 : f32
    %20 = vector.broadcast %cst_11 : f32 to vector<64x1xf32>
    %21 = arith.addf %19, %20 : vector<64x1xf32>
    %22 = math.rsqrt %21 : vector<64x1xf32>
    %23 = vector.broadcast %13 : vector<64x1xf32> to vector<64x256xf32>
    %24 = arith.subf %6, %23 : vector<64x256xf32>
    %25 = vector.broadcast %22 : vector<64x1xf32> to vector<64x256xf32>
    %26 = arith.mulf %24, %25 : vector<64x256xf32>
    %cst_12 = arith.constant 0.000000e+00 : f32
    %27 = vector.broadcast %cst_12 : f32 to vector<64x256xf32>
    %28 = arith.cmpf ogt, %26, %27 : vector<64x256xf32>
    %cst_13 = arith.constant 2.000000e-01 : f32
    %29 = vector.broadcast %cst_13 : f32 to vector<64x256xf32>
    %30 = arith.mulf %29, %26 : vector<64x256xf32>
    %31 = arith.select %28, %26, %30 : vector<64x256xi1>, vector<64x256xf32>
    %c0_14 = arith.constant 0 : index
    %c0_15 = arith.constant 0 : index
    %c0_16 = arith.constant 0 : index
    %32 = vector.load %arg4[%c0_14, %c0_15, %c0_16] : memref<1x64x256xf32, #tpu.memory_space<vmem>>, vector<1x64x256xf32>
    %33 = vector.shape_cast %32 : vector<1x64x256xf32> to vector<64x256xf32>
    %34 = vector.shape_cast %31 : vector<64x256xf32> to vector<1x64x256xf32>
    tpu.vector_store %arg4[%c0_14, %c0_15, %c0_16], %34 {strides = array<i32>} : memref<1x64x256xf32, #tpu.memory_space<vmem>>, vector<1x64x256xf32>,
    return
  }
  func.func @transform_0(%arg0: i32) -> (i32, i32, i32) {
    %c0_i32 = arith.constant 0 : i32
    %c0_i32_0 = arith.constant 0 : i32
    %c0_i32_1 = arith.constant 0 : i32
    return %arg0, %c0_i32, %c0_i32_0 : i32, i32, i32
  }
  func.func @transform_1(%arg0: i32) -> (i32, i32) {
    %c0_i32 = arith.constant 0 : i32
    %c0_i32_0 = arith.constant 0 : i32
    %c0_i32_1 = arith.constant 0 : i32
    return %c0_i32, %c0_i32_0 : i32, i32
  }
  func.func @transform_2(%arg0: i32) -> (i32, i32) {
    %c0_i32 = arith.constant 0 : i32
    %c0_i32_0 = arith.constant 0 : i32
    %c0_i32_1 = arith.constant 0 : i32
    return %c0_i32, %c0_i32_0 : i32, i32
  }
  func.func @transform_3(%arg0: i32) -> (i32, i32, i32) {
    %c0_i32 = arith.constant 0 : i32
    %c0_i32_0 = arith.constant 0 : i32
    %c0_i32_1 = arith.constant 0 : i32
    return %arg0, %c0_i32, %c0_i32_0 : i32, i32, i32
  }
}

module attributes {stable_mosaic.version = 11 : i64} {
  func.func @_conv_in_lrelu_kernel(%arg0: i32, %arg1: memref<1x64x1024xbf16, #tpu.memory_space<vmem>>, %arg2: memref<1024x128xbf16, #tpu.memory_space<vmem>>, %arg3: memref<1x128xf32, #tpu.memory_space<vmem>>, %arg4: memref<1x64x128xf32, #tpu.memory_space<vmem>>) attributes {dimension_semantics = [#tpu.dimension_semantics<parallel>], iteration_bounds = array<i64: 2>, scalar_prefetch = 0 : i64, scratch_operands = 0 : i64, tpu.core_type = #tpu.core_type<tc>, window_params = [{transform_indices = @transform_0, window_bounds = array<i64: 1, 64, 1024>}, {pipeline_mode = #tpu.pipeline_mode<synchronous>, transform_indices = @transform_1, window_bounds = array<i64: 1024, 128>}, {pipeline_mode = #tpu.pipeline_mode<synchronous>, transform_indices = @transform_2, window_bounds = array<i64: 1, 128>}, {transform_indices = @transform_3, window_bounds = array<i64: 1, 64, 128>}]} {
    %c0 = arith.constant 0 : index
    %c0_0 = arith.constant 0 : index
    %c0_1 = arith.constant 0 : index
    %0 = vector.load %arg1[%c0, %c0_0, %c0_1] : memref<1x64x1024xbf16, #tpu.memory_space<vmem>>, vector<1x64x1024xbf16>
    %1 = vector.shape_cast %0 : vector<1x64x1024xbf16> to vector<64x1024xbf16>
    %c0_2 = arith.constant 0 : index
    %c0_3 = arith.constant 0 : index
    %2 = vector.load %arg2[%c0_2, %c0_3] : memref<1024x128xbf16, #tpu.memory_space<vmem>>, vector<1024x128xbf16>
    %cst = arith.constant dense<0.000000e+00> : vector<64x128xf32>
    %3 = tpu.matmul %1, %2, %cst {dimension_numbers = #tpu.dot_dimension_numbers<[1], [0], [0], [1], [0, 0, 1, 1], [], []>} : vector<64x1024xbf16>, vector<1024x128xbf16>, vector<64x128xf32> -> vector<64x128xf32>
    %c0_4 = arith.constant 0 : index
    %c0_5 = arith.constant 0 : index
    %4 = vector.load %arg3[%c0_4, %c0_5] : memref<1x128xf32, #tpu.memory_space<vmem>>, vector<1x128xf32>
    %5 = vector.broadcast %4 : vector<1x128xf32> to vector<64x128xf32>
    %6 = arith.addf %3, %5 : vector<64x128xf32>
    %cst_6 = arith.constant dense<0.000000e+00> : vector<128xf32>
    %7 = vector.multi_reduction <add>, %6, %cst_6 [0] : vector<64x128xf32> to vector<128xf32>
    %8 = vector.shape_cast %7 : vector<128xf32> to vector<1x128xf32>
    %9 = arith.mulf %6, %6 : vector<64x128xf32>
    %cst_7 = arith.constant dense<0.000000e+00> : vector<128xf32>
    %10 = vector.multi_reduction <add>, %9, %cst_7 [0] : vector<64x128xf32> to vector<128xf32>
    %11 = vector.shape_cast %10 : vector<128xf32> to vector<1x128xf32>
    %cst_8 = arith.constant 1.562500e-02 : f32
    %12 = vector.broadcast %cst_8 : f32 to vector<1x128xf32>
    %13 = arith.mulf %8, %12 : vector<1x128xf32>
    %cst_9 = arith.constant 1.562500e-02 : f32
    %14 = vector.broadcast %cst_9 : f32 to vector<1x128xf32>
    %15 = arith.mulf %11, %14 : vector<1x128xf32>
    %16 = arith.mulf %13, %13 : vector<1x128xf32>
    %17 = arith.subf %15, %16 : vector<1x128xf32>
    %cst_10 = arith.constant 0.000000e+00 : f32
    %18 = vector.broadcast %cst_10 : f32 to vector<1x128xf32>
    %19 = arith.maximumf %17, %18 : vector<1x128xf32>
    %20 = vector.broadcast %13 : vector<1x128xf32> to vector<64x128xf32>
    %21 = arith.subf %6, %20 : vector<64x128xf32>
    %cst_11 = arith.constant 9.99999974E-6 : f32
    %22 = vector.broadcast %cst_11 : f32 to vector<1x128xf32>
    %23 = arith.addf %19, %22 : vector<1x128xf32>
    %24 = math.rsqrt %23 : vector<1x128xf32>
    %25 = vector.broadcast %24 : vector<1x128xf32> to vector<64x128xf32>
    %26 = arith.mulf %21, %25 : vector<64x128xf32>
    %cst_12 = arith.constant 0.000000e+00 : f32
    %27 = vector.broadcast %cst_12 : f32 to vector<64x128xf32>
    %28 = arith.cmpf ogt, %26, %27 : vector<64x128xf32>
    %cst_13 = arith.constant 2.000000e-01 : f32
    %29 = vector.broadcast %cst_13 : f32 to vector<64x128xf32>
    %30 = arith.mulf %29, %26 : vector<64x128xf32>
    %31 = arith.select %28, %26, %30 : vector<64x128xi1>, vector<64x128xf32>
    %c0_14 = arith.constant 0 : index
    %c0_15 = arith.constant 0 : index
    %c0_16 = arith.constant 0 : index
    %32 = vector.load %arg4[%c0_14, %c0_15, %c0_16] : memref<1x64x128xf32, #tpu.memory_space<vmem>>, vector<1x64x128xf32>
    %33 = vector.shape_cast %32 : vector<1x64x128xf32> to vector<64x128xf32>
    %34 = vector.shape_cast %31 : vector<64x128xf32> to vector<1x64x128xf32>
    tpu.vector_store %arg4[%c0_14, %c0_15, %c0_16], %34 {strides = array<i32>} : memref<1x64x128xf32, #tpu.memory_space<vmem>>, vector<1x64x128xf32>,
    return
  }
  func.func @transform_0(%arg0: i32) -> (i32, i32, i32) {
    %c0_i32 = arith.constant 0 : i32
    %c0_i32_0 = arith.constant 0 : i32
    %c0_i32_1 = arith.constant 0 : i32
    return %arg0, %c0_i32, %c0_i32_0 : i32, i32, i32
  }
  func.func @transform_1(%arg0: i32) -> (i32, i32) {
    %c0_i32 = arith.constant 0 : i32
    %c0_i32_0 = arith.constant 0 : i32
    %c0_i32_1 = arith.constant 0 : i32
    return %c0_i32, %c0_i32_0 : i32, i32
  }
  func.func @transform_2(%arg0: i32) -> (i32, i32) {
    %c0_i32 = arith.constant 0 : i32
    %c0_i32_0 = arith.constant 0 : i32
    %c0_i32_1 = arith.constant 0 : i32
    return %c0_i32, %c0_i32_0 : i32, i32
  }
  func.func @transform_3(%arg0: i32) -> (i32, i32, i32) {
    %c0_i32 = arith.constant 0 : i32
    %c0_i32_0 = arith.constant 0 : i32
    %c0_i32_1 = arith.constant 0 : i32
    return %arg0, %c0_i32, %c0_i32_0 : i32, i32, i32
  }
}

module attributes {stable_mosaic.version = 11 : i64} {
  func.func @_last_block_kernel(%arg0: i32, %arg1: memref<1x16x2048xbf16, #tpu.memory_space<vmem>>, %arg2: memref<2048x256xbf16, #tpu.memory_space<vmem>>, %arg3: memref<1x256xf32, #tpu.memory_space<vmem>>, %arg4: memref<16x256xf32, #tpu.memory_space<vmem>>, %arg5: memref<1x1xf32, #tpu.memory_space<vmem>>, %arg6: memref<1x1x1xf32, #tpu.memory_space<vmem>>) attributes {dimension_semantics = [#tpu.dimension_semantics<parallel>], iteration_bounds = array<i64: 2>, scalar_prefetch = 0 : i64, scratch_operands = 0 : i64, tpu.core_type = #tpu.core_type<tc>, window_params = [{transform_indices = @transform_0, window_bounds = array<i64: 1, 16, 2048>}, {pipeline_mode = #tpu.pipeline_mode<synchronous>, transform_indices = @transform_1, window_bounds = array<i64: 2048, 256>}, {pipeline_mode = #tpu.pipeline_mode<synchronous>, transform_indices = @transform_2, window_bounds = array<i64: 1, 256>}, {pipeline_mode = #tpu.pipeline_mode<synchronous>, transform_indices = @transform_3, window_bounds = array<i64: 16, 256>}, {pipeline_mode = #tpu.pipeline_mode<synchronous>, transform_indices = @transform_4, window_bounds = array<i64: 1, 1>}, {transform_indices = @transform_5, window_bounds = array<i64: 1, 1, 1>}]} {
    %c0 = arith.constant 0 : index
    %c0_0 = arith.constant 0 : index
    %c0_1 = arith.constant 0 : index
    %0 = vector.load %arg1[%c0, %c0_0, %c0_1] : memref<1x16x2048xbf16, #tpu.memory_space<vmem>>, vector<1x16x2048xbf16>
    %1 = vector.shape_cast %0 : vector<1x16x2048xbf16> to vector<16x2048xbf16>
    %c0_2 = arith.constant 0 : index
    %c0_3 = arith.constant 0 : index
    %2 = vector.load %arg2[%c0_2, %c0_3] : memref<2048x256xbf16, #tpu.memory_space<vmem>>, vector<2048x256xbf16>
    %cst = arith.constant dense<0.000000e+00> : vector<16x256xf32>
    %3 = tpu.matmul %1, %2, %cst {dimension_numbers = #tpu.dot_dimension_numbers<[1], [0], [0], [1], [0, 0, 1, 1], [], []>} : vector<16x2048xbf16>, vector<2048x256xbf16>, vector<16x256xf32> -> vector<16x256xf32>
    %c0_4 = arith.constant 0 : index
    %c0_5 = arith.constant 0 : index
    %4 = vector.load %arg3[%c0_4, %c0_5] : memref<1x256xf32, #tpu.memory_space<vmem>>, vector<1x256xf32>
    %5 = vector.broadcast %4 : vector<1x256xf32> to vector<16x256xf32>
    %6 = arith.addf %3, %5 : vector<16x256xf32>
    %cst_6 = arith.constant dense<0.000000e+00> : vector<256xf32>
    %7 = vector.multi_reduction <add>, %6, %cst_6 [0] : vector<16x256xf32> to vector<256xf32>
    %8 = vector.shape_cast %7 : vector<256xf32> to vector<1x256xf32>
    %9 = arith.mulf %6, %6 : vector<16x256xf32>
    %cst_7 = arith.constant dense<0.000000e+00> : vector<256xf32>
    %10 = vector.multi_reduction <add>, %9, %cst_7 [0] : vector<16x256xf32> to vector<256xf32>
    %11 = vector.shape_cast %10 : vector<256xf32> to vector<1x256xf32>
    %cst_8 = arith.constant 6.250000e-02 : f32
    %12 = vector.broadcast %cst_8 : f32 to vector<1x256xf32>
    %13 = arith.mulf %8, %12 : vector<1x256xf32>
    %cst_9 = arith.constant 6.250000e-02 : f32
    %14 = vector.broadcast %cst_9 : f32 to vector<1x256xf32>
    %15 = arith.mulf %11, %14 : vector<1x256xf32>
    %16 = arith.mulf %13, %13 : vector<1x256xf32>
    %17 = arith.subf %15, %16 : vector<1x256xf32>
    %cst_10 = arith.constant 0.000000e+00 : f32
    %18 = vector.broadcast %cst_10 : f32 to vector<1x256xf32>
    %19 = arith.maximumf %17, %18 : vector<1x256xf32>
    %20 = vector.broadcast %13 : vector<1x256xf32> to vector<16x256xf32>
    %21 = arith.subf %6, %20 : vector<16x256xf32>
    %cst_11 = arith.constant 9.99999974E-6 : f32
    %22 = vector.broadcast %cst_11 : f32 to vector<1x256xf32>
    %23 = arith.addf %19, %22 : vector<1x256xf32>
    %24 = math.rsqrt %23 : vector<1x256xf32>
    %25 = vector.broadcast %24 : vector<1x256xf32> to vector<16x256xf32>
    %26 = arith.mulf %21, %25 : vector<16x256xf32>
    %cst_12 = arith.constant 0.000000e+00 : f32
    %27 = vector.broadcast %cst_12 : f32 to vector<16x256xf32>
    %28 = arith.cmpf ogt, %26, %27 : vector<16x256xf32>
    %cst_13 = arith.constant 2.000000e-01 : f32
    %29 = vector.broadcast %cst_13 : f32 to vector<16x256xf32>
    %30 = arith.mulf %29, %26 : vector<16x256xf32>
    %31 = arith.select %28, %26, %30 : vector<16x256xi1>, vector<16x256xf32>
    %c0_14 = arith.constant 0 : index
    %c0_15 = arith.constant 0 : index
    %32 = vector.load %arg4[%c0_14, %c0_15] : memref<16x256xf32, #tpu.memory_space<vmem>>, vector<16x256xf32>
    %33 = arith.mulf %31, %32 : vector<16x256xf32>
    %cst_16 = arith.constant dense<0.000000e+00> : vector<16xf32>
    %34 = vector.multi_reduction <add>, %33, %cst_16 [1] : vector<16x256xf32> to vector<16xf32>
    %35 = vector.shape_cast %34 : vector<16xf32> to vector<16x1xf32>
    %cst_17 = arith.constant dense<0.000000e+00> : vector<1xf32>
    %36 = vector.multi_reduction <add>, %35, %cst_17 [0] : vector<16x1xf32> to vector<1xf32>
    %37 = vector.shape_cast %36 : vector<1xf32> to vector<1x1xf32>
    %c0_18 = arith.constant 0 : index
    %c0_19 = arith.constant 0 : index
    %38 = vector.load %arg5[%c0_18, %c0_19] : memref<1x1xf32, #tpu.memory_space<vmem>>, vector<1x1xf32>
    %39 = arith.addf %37, %38 : vector<1x1xf32>
    %c0_20 = arith.constant 0 : index
    %c0_21 = arith.constant 0 : index
    %c0_22 = arith.constant 0 : index
    %40 = vector.load %arg6[%c0_20, %c0_21, %c0_22] : memref<1x1x1xf32, #tpu.memory_space<vmem>>, vector<1x1x1xf32>
    %41 = vector.shape_cast %40 : vector<1x1x1xf32> to vector<1x1xf32>
    %42 = vector.shape_cast %39 : vector<1x1xf32> to vector<1x1x1xf32>
    tpu.vector_store %arg6[%c0_20, %c0_21, %c0_22], %42 {strides = array<i32>} : memref<1x1x1xf32, #tpu.memory_space<vmem>>, vector<1x1x1xf32>,
    return
  }
  func.func @transform_0(%arg0: i32) -> (i32, i32, i32) {
    %c0_i32 = arith.constant 0 : i32
    %c0_i32_0 = arith.constant 0 : i32
    %c0_i32_1 = arith.constant 0 : i32
    return %arg0, %c0_i32, %c0_i32_0 : i32, i32, i32
  }
  func.func @transform_1(%arg0: i32) -> (i32, i32) {
    %c0_i32 = arith.constant 0 : i32
    %c0_i32_0 = arith.constant 0 : i32
    %c0_i32_1 = arith.constant 0 : i32
    return %c0_i32, %c0_i32_0 : i32, i32
  }
  func.func @transform_2(%arg0: i32) -> (i32, i32) {
    %c0_i32 = arith.constant 0 : i32
    %c0_i32_0 = arith.constant 0 : i32
    %c0_i32_1 = arith.constant 0 : i32
    return %c0_i32, %c0_i32_0 : i32, i32
  }
  func.func @transform_3(%arg0: i32) -> (i32, i32) {
    %c0_i32 = arith.constant 0 : i32
    %c0_i32_0 = arith.constant 0 : i32
    %c0_i32_1 = arith.constant 0 : i32
    return %c0_i32, %c0_i32_0 : i32, i32
  }
  func.func @transform_4(%arg0: i32) -> (i32, i32) {
    %c0_i32 = arith.constant 0 : i32
    %c0_i32_0 = arith.constant 0 : i32
    %c0_i32_1 = arith.constant 0 : i32
    return %c0_i32, %c0_i32_0 : i32, i32
  }
  func.func @transform_5(%arg0: i32) -> (i32, i32, i32) {
    %c0_i32 = arith.constant 0 : i32
    %c0_i32_0 = arith.constant 0 : i32
    %c0_i32_1 = arith.constant 0 : i32
    return %arg0, %c0_i32, %c0_i32_0 : i32, i32, i32
  }
}

</mosaic_0001>

<llo_original>
// kernel: critic_forward.5
$region0: #{critic_forward.5}
  #allocation0 [shape = 'u32[]', space=smem, size = 0x4, offset = 0x4, fixed_abs, tag = 'smem constant byte address 0x4 - core index']
  #allocation1 [shape = 'u32[144,128]{1,0:T(1,128)}', space=vmem, size = 0x12000, scoped, tag = 'internal scratch']
  %s0 = inlined_call_operand.vmem [shape: bf16[2,48,4096], index: 0, kind: input, shape index: {}]
  %s1 = inlined_call_operand.vmem [shape: bf16[16,48], index: 1, kind: input, shape index: {}]
  %s2 = inlined_call_operand.vmem [shape: f32[16,1], index: 2, kind: input, shape index: {}]
  %s3 = inlined_call_operand.vmem [shape: f32[2,16,4096], index: 3, kind: output, shape index: {}]
  %s4 = sld [smem:[#allocation0]]
  $region45: #{critic_forward.5} parent=0
    _
  %s6 = ssub.s32 1, %s4
  %s7 = scalar_select 0, %s6, %s4
  loop: start=0, step=1, limit=4
  $region2: #{critic_forward.5} parent=0 // loop_pre_header
    _
  $region3: #{critic_forward.5} parent=0 // loop_header
    %s9 = sphi 0, %s13
    %p10 = scmp.ge.s32.totalorder %s9, 4
    %s19 = sphi 0, %s21
    %s22 = sphi 0, %s19
    %s23 = sphi 0, %s22
    %s39 = sphi 0, %s23
    %s43 = sphi 0, %s43
    %s45 = sphi 0, %s43
    %s46 = sphi 0, %s45
    %s60 = sphi 0, %s46
    %s64 = sphi 0, %s64
    %s66 = sphi 0, %s64
    %s67 = sphi 0, %s66
    %s81 = sphi 0, %s67
    %s87 = sphi 0, %s89
    %s90 = sphi 0, %s87
    %s91 = sphi 0, %s90
    %s107 = sphi 0, %s91
  $region4: #{critic_forward.5} parent=0 // loop_header_branch
    %12 = sbr.rel (%p10) target = $region8
  $region5: #{critic_forward.5} parent=0 // loop_body
    %s14 = ssub.s32 %s9, 1
    %s15 = ssub.s32 %s9, 2
    %s16 = sadd.s32 %s9, 1
    %s17 = ssub.s32 %s9, %s16
    %p18 = scmp.eq.s32.totalorder %s17, 0
    %s20 = sadd.s32 %s19, 1
    %s21 = scalar_select %p18, %s19, %s20
    %p24 = pneg %p18
    %p25 = scmp.eq.s32.totalorder %s9, 1
    %p26 = por %p24, %p25
    %p27 = scmp.ne.s32.totalorder %s19, %s22
    %p28 = scmp.eq.s32.totalorder %s9, 0
    %p29 = por %p27, %p28
    %p30 = scmp.ne.s32.totalorder %s19, %s22
    %p31 = scmp.eq.s32.totalorder %s14, 1
    %p32 = por %p30, %p31
    %p33 = scmp.ne.s32.totalorder %s22, %s23
    %p34 = scmp.eq.s32.totalorder %s14, 0
    %p35 = por %p33, %p34
    %p36 = scmp.ne.s32.totalorder %s22, %s23
    %p37 = scmp.eq.s32.totalorder %s15, 1
    %p38 = por %p36, %p37
    %p40 = scmp.ne.s32.totalorder %s23, %s39
    %p41 = scmp.eq.s32.totalorder %s15, 0
    %p42 = por %p40, %p41
    %s44 = sadd.s32 %s43, 1
    %p47 = scmp.eq.s32.totalorder %s9, 1
    %p48 = scmp.ne.s32.totalorder %s43, %s45
    %p49 = scmp.eq.s32.totalorder %s9, 0
    %p50 = por %p48, %p49
    %p51 = scmp.ne.s32.totalorder %s43, %s45
    %p52 = scmp.eq.s32.totalorder %s14, 1
    %p53 = por %p51, %p52
    %p54 = scmp.ne.s32.totalorder %s45, %s46
    %p55 = scmp.eq.s32.totalorder %s14, 0
    %p56 = por %p54, %p55
    %p57 = scmp.ne.s32.totalorder %s45, %s46
    %p58 = scmp.eq.s32.totalorder %s15, 1
    %p59 = por %p57, %p58
    %p61 = scmp.ne.s32.totalorder %s46, %s60
    %p62 = scmp.eq.s32.totalorder %s15, 0
    %p63 = por %p61, %p62
    %s65 = sadd.s32 %s64, 1
    %p68 = scmp.eq.s32.totalorder %s9, 1
    %p69 = scmp.ne.s32.totalorder %s64, %s66
    %p70 = scmp.eq.s32.totalorder %s9, 0
    %p71 = por %p69, %p70
    %p72 = scmp.ne.s32.totalorder %s64, %s66
    %p73 = scmp.eq.s32.totalorder %s14, 1
    %p74 = por %p72, %p73
    %p75 = scmp.ne.s32.totalorder %s66, %s67
    %p76 = scmp.eq.s32.totalorder %s14, 0
    %p77 = por %p75, %p76
    %p78 = scmp.ne.s32.totalorder %s66, %s67
    %p79 = scmp.eq.s32.totalorder %s15, 1
    %p80 = por %p78, %p79
    %p82 = scmp.ne.s32.totalorder %s67, %s81
    %p83 = scmp.eq.s32.totalorder %s15, 0
    %p84 = por %p82, %p83
    %s85 = ssub.s32 %s9, %s16
    %p86 = scmp.eq.s32.totalorder %s85, 0
    %s88 = sadd.s32 %s87, 1
    %s89 = scalar_select %p86, %s87, %s88
    %p92 = pneg %p86
    %p93 = scmp.eq.s32.totalorder %s9, 1
    %p94 = por %p92, %p93
    %p95 = scmp.ne.s32.totalorder %s87, %s90
    %p96 = scmp.eq.s32.totalorder %s9, 0
    %p97 = por %p95, %p96
    %p98 = scmp.ne.s32.totalorder %s87, %s90
    %p99 = scmp.eq.s32.totalorder %s14, 1
    %p100 = por %p98, %p99
    %p101 = scmp.ne.s32.totalorder %s90, %s91
    %p102 = scmp.eq.s32.totalorder %s14, 0
    %p103 = por %p101, %p102
    %p104 = scmp.ne.s32.totalorder %s90, %s91
    %p105 = scmp.eq.s32.totalorder %s15, 1
    %p106 = por %p104, %p105
    %p108 = scmp.ne.s32.totalorder %s91, %s107
    %p109 = scmp.eq.s32.totalorder %s15, 0
    %p110 = por %p108, %p109
    %p111 = scmp.le.s32.totalorder 1, %s9
    %p112 = scmp.lt.s32.totalorder %s9, 3
    %p113 = pnand %p111, %p112
    %p114 = pneg %p113
    // Predicated region
    $region9: #{critic_forward.5} parent=5 // pred_check
      _
    $region10: #{critic_forward.5} parent=5 // pred_check_branch
      %116 = sbr.rel (%p113) target = $region12
    $region11: #{critic_forward.5} parent=5 // pred_region
      %s117 = ssub.s32 %s9, 1
      // Predicated region
      $region13: #{critic_forward.5} parent=11 // pred_check
        %p118 = pneg %p56
      $region14: #{critic_forward.5} parent=11 // pred_check_branch
        %120 = sbr.rel (%p118) target = $region16
      $region15: #{critic_forward.5} parent=11 // pred_region
        _
      $region16: #{critic_forward.5} parent=11 // pred_fallthru
        _
      // Predicated region
      $region17: #{critic_forward.5} parent=11 // pred_check
        %p121 = pneg %p77
      $region18: #{critic_forward.5} parent=11 // pred_check_branch
        %123 = sbr.rel (%p121) target = $region20
      $region19: #{critic_forward.5} parent=11 // pred_region
        _
      $region20: #{critic_forward.5} parent=11 // pred_fallthru
        _
    $region12: #{critic_forward.5} parent=5 // pred_fallthru
      _
    %p124 = scmp.lt.s32.totalorder %s9, 2
    // Predicated region
    $region21: #{critic_forward.5} parent=5 // pred_check
      %p125 = pneg %p124
    $region22: #{critic_forward.5} parent=5 // pred_check_branch
      %127 = sbr.rel (%p125) target = $region24
    $region23: #{critic_forward.5} parent=5 // pred_region
      // Predicated region
      $region25: #{critic_forward.5} parent=23 // pred_check
        %p128 = pneg %p29
      $region26: #{critic_forward.5} parent=23 // pred_check_branch
        %130 = sbr.rel (%p128) target = $region28
      $region27: #{critic_forward.5} parent=23 // pred_region
        %p131 = scmp.lt.s32.totalorder %s9, 1
        %s132 = scalar_select %p131, %s9, 1
        %s133 = smul.addr %s132, 192
        %s134 = smul.addr %s133, 4
        %s135 = scalar_lea.vmem %s0, %s134
      $region28: #{critic_forward.5} parent=23 // pred_fallthru
        _
    $region24: #{critic_forward.5} parent=5 // pred_fallthru
      _
    %p136 = scmp.le.s32.totalorder 1, %s9
    %p137 = scmp.lt.s32.totalorder %s9, 3
    %p138 = pnand %p136, %p137
    %p139 = pneg %p138
    // Predicated region
    $region29: #{critic_forward.5} parent=5 // pred_check
      _
    $region30: #{critic_forward.5} parent=5 // pred_check_branch
      %141 = sbr.rel (%p138) target = $region32
    $region31: #{critic_forward.5} parent=5 // pred_region
      %s142 = ssub.s32 %s9, 1
      %p143 = scmp.lt.s32.totalorder %s14, 1
      %s144 = scalar_select %p143, %s14, 1
      %s145 = smul.addr %s144, 192
      %s146 = smul.addr %s145, 4
      %s147 = scalar_lea.vmem %s0, %s146
      %p148 = pneg %p35
      %p149 = pneg %p32
      %p150 = pneg %p56
      %p151 = pneg %p53
      %p152 = pneg %p77
      %p153 = pneg %p74
      %p154 = pneg %p103
      %p155 = pneg %p100
      %p156 = scmp.lt.s32.totalorder %s14, 1
      %s157 = scalar_select %p156, %s14, 1
      %s158 = smul.addr %s157, 64
      %s159 = smul.addr %s158, 8
      %s160 = scalar_lea.vmem %s3, %s159
      %p161 = scmp.lt.s32.totalorder %s14, 1
      %s162 = scalar_select %p161, %s14, 1
      %s163 = smul.addr %s162, 192
      %s164 = smul.addr %s163, 4
      %s165 = scalar_lea.vmem %s0, %s164
      %p166 = scmp.lt.s32.totalorder %s14, 1
      %s167 = scalar_select %p166, %s14, 1
      %s168 = smul.addr %s167, 64
      %s169 = smul.addr %s168, 8
      %s170 = scalar_lea.vmem %s3, %s169
      %v172 = vld [vmem:[%s1] sm:$0xf]
      %v173 = vld [vmem:[%s1 + $0x4] sm:$0xf]
      %v174 = vld [vmem:[%s165] sm:$0xff]
      %v175 = vld [vmem:[%s165 + $0x8] sm:$0xff]
      %v176 = vld [vmem:[%s165 + $0x10] sm:$0xff]
      %v177 = vld [vmem:[%s165 + $0x18] sm:$0xff]
      %v178 = vld [vmem:[%s165 + $0x20] sm:$0xff]
      %v179 = vld [vmem:[%s165 + $0x28] sm:$0xff]
      %v180 = vld [vmem:[%s165 + $0x30] sm:$0xff]
      %v181 = vld [vmem:[%s165 + $0x38] sm:$0xff]
      %v182 = vld [vmem:[%s165 + $0x40] sm:$0xff]
      %v183 = vld [vmem:[%s165 + $0x48] sm:$0xff]
      %v184 = vld [vmem:[%s165 + $0x50] sm:$0xff]
      %v185 = vld [vmem:[%s165 + $0x58] sm:$0xff]
      %v186 = vld [vmem:[%s165 + $0x60] sm:$0xff]
      %v187 = vld [vmem:[%s165 + $0x68] sm:$0xff]
      %v188 = vld [vmem:[%s165 + $0x70] sm:$0xff]
      %v189 = vld [vmem:[%s165 + $0x78] sm:$0xff]
      %v190 = vld [vmem:[%s165 + $0x80] sm:$0xff]
      %v191 = vld [vmem:[%s165 + $0x88] sm:$0xff]
      %v192 = vld [vmem:[%s165 + $0x90] sm:$0xff]
      %v193 = vld [vmem:[%s165 + $0x98] sm:$0xff]
      %v194 = vld [vmem:[%s165 + $0xa0] sm:$0xff]
      %v195 = vld [vmem:[%s165 + $0xa8] sm:$0xff]
      %v196 = vld [vmem:[%s165 + $0xb0] sm:$0xff]
      %v197 = vld [vmem:[%s165 + $0xb8] sm:$0xff]
      %v198 = vld [vmem:[%s165 + $0xc0] sm:$0xff]
      %v199 = vld [vmem:[%s165 + $0xc8] sm:$0xff]
      %v200 = vld [vmem:[%s165 + $0xd0] sm:$0xff]
      %v201 = vld [vmem:[%s165 + $0xd8] sm:$0xff]
      %v202 = vld [vmem:[%s165 + $0xe0] sm:$0xff]
      %v203 = vld [vmem:[%s165 + $0xe8] sm:$0xff]
      %v204 = vld [vmem:[%s165 + $0xf0] sm:$0xff]
      %v205 = vld [vmem:[%s165 + $0xf8] sm:$0xff]
      %v206 = vld [vmem:[%s165 + $0x100] sm:$0xff]
      %v207 = vld [vmem:[%s165 + $0x108] sm:$0xff]
      %v208 = vld [vmem:[%s165 + $0x110] sm:$0xff]
      %v209 = vld [vmem:[%s165 + $0x118] sm:$0xff]
      %v210 = vld [vmem:[%s165 + $0x120] sm:$0xff]
      %v211 = vld [vmem:[%s165 + $0x128] sm:$0xff]
      %v212 = vld [vmem:[%s165 + $0x130] sm:$0xff]
      %v213 = vld [vmem:[%s165 + $0x138] sm:$0xff]
      %v214 = vld [vmem:[%s165 + $0x140] sm:$0xff]
      %v215 = vld [vmem:[%s165 + $0x148] sm:$0xff]
      %v216 = vld [vmem:[%s165 + $0x150] sm:$0xff]
      %v217 = vld [vmem:[%s165 + $0x158] sm:$0xff]
      %v218 = vld [vmem:[%s165 + $0x160] sm:$0xff]
      %v219 = vld [vmem:[%s165 + $0x168] sm:$0xff]
      %v220 = vld [vmem:[%s165 + $0x170] sm:$0xff]
      %v221 = vld [vmem:[%s165 + $0x178] sm:$0xff]
      %v222 = vld [vmem:[%s165 + $0x180] sm:$0xff]
      %v223 = vld [vmem:[%s165 + $0x188] sm:$0xff]
      %v224 = vld [vmem:[%s165 + $0x190] sm:$0xff]
      %v225 = vld [vmem:[%s165 + $0x198] sm:$0xff]
      %v226 = vld [vmem:[%s165 + $0x1a0] sm:$0xff]
      %v227 = vld [vmem:[%s165 + $0x1a8] sm:$0xff]
      %v228 = vld [vmem:[%s165 + $0x1b0] sm:$0xff]
      %v229 = vld [vmem:[%s165 + $0x1b8] sm:$0xff]
      %v230 = vld [vmem:[%s165 + $0x1c0] sm:$0xff]
      %v231 = vld [vmem:[%s165 + $0x1c8] sm:$0xff]
      %v232 = vld [vmem:[%s165 + $0x1d0] sm:$0xff]
      %v233 = vld [vmem:[%s165 + $0x1d8] sm:$0xff]
      %v234 = vld [vmem:[%s165 + $0x1e0] sm:$0xff]
      %v235 = vld [vmem:[%s165 + $0x1e8] sm:$0xff]
      %v236 = vld [vmem:[%s165 + $0x1f0] sm:$0xff]
      %v237 = vld [vmem:[%s165 + $0x1f8] sm:$0xff]
      %v238 = vld [vmem:[%s165 + $0x200] sm:$0xff]
      %v239 = vld [vmem:[%s165 + $0x208] sm:$0xff]
      %v240 = vld [vmem:[%s165 + $0x210] sm:$0xff]
      %v241 = vld [vmem:[%s165 + $0x218] sm:$0xff]
      %v242 = vld [vmem:[%s165 + $0x220] sm:$0xff]
      %v243 = vld [vmem:[%s165 + $0x228] sm:$0xff]
      %v244 = vld [vmem:[%s165 + $0x230] sm:$0xff]
      %v245 = vld [vmem:[%s165 + $0x238] sm:$0xff]
      %v246 = vld [vmem:[%s165 + $0x240] sm:$0xff]
      %v247 = vld [vmem:[%s165 + $0x248] sm:$0xff]
      %v248 = vld [vmem:[%s165 + $0x250] sm:$0xff]
      %v249 = vld [vmem:[%s165 + $0x258] sm:$0xff]
      %v250 = vld [vmem:[%s165 + $0x260] sm:$0xff]
      %v251 = vld [vmem:[%s165 + $0x268] sm:$0xff]
      %v252 = vld [vmem:[%s165 + $0x270] sm:$0xff]
      %v253 = vld [vmem:[%s165 + $0x278] sm:$0xff]
      %v254 = vld [vmem:[%s165 + $0x280] sm:$0xff]
      %v255 = vld [vmem:[%s165 + $0x288] sm:$0xff]
      %v256 = vld [vmem:[%s165 + $0x290] sm:$0xff]
      %v257 = vld [vmem:[%s165 + $0x298] sm:$0xff]
      %v258 = vld [vmem:[%s165 + $0x2a0] sm:$0xff]
      %v259 = vld [vmem:[%s165 + $0x2a8] sm:$0xff]
      %v260 = vld [vmem:[%s165 + $0x2b0] sm:$0xff]
      %v261 = vld [vmem:[%s165 + $0x2b8] sm:$0xff]
      %v262 = vld [vmem:[%s165 + $0x2c0] sm:$0xff]
      %v263 = vld [vmem:[%s165 + $0x2c8] sm:$0xff]
      %v264 = vld [vmem:[%s165 + $0x2d0] sm:$0xff]
      %v265 = vld [vmem:[%s165 + $0x2d8] sm:$0xff]
      %v266 = vld [vmem:[%s165 + $0x2e0] sm:$0xff]
      %v267 = vld [vmem:[%s165 + $0x2e8] sm:$0xff]
      %v268 = vld [vmem:[%s165 + $0x2f0] sm:$0xff]
      %v269 = vld [vmem:[%s165 + $0x2f8] sm:$0xff]
      %v270 = vld [vmem:[%s2] sm:$0xff]
      %v271 = vld [vmem:[%s2 + $0x8] sm:$0xff]
      %273 = vset.pattern.permute.xlu0 0
      %274 = vperm.xlu0 %273, %v270
      %v275 = vpop.permute.xlu0 %274
      %278 = vset.pattern.permute.xlu0 0
      %279 = vperm.xlu0 %278, %v271
      %v280 = vpop.permute.xlu0 %279
      %v284 = vunpack.c.l.b16 %v172
      %v285 = vunpack.c.l.b16 %v173
      %v286 = vpack.c.b16 %v285, %v284
      %v383 = vunpack.c.l.b16 %v174
      %v384 = vunpack.c.h.b16 %v174
      %v385 = vunpack.c.l.b16 %v175
      %v386 = vunpack.c.h.b16 %v175
      %v387 = vunpack.c.l.b16 %v176
      %v388 = vunpack.c.h.b16 %v176
      %v389 = vunpack.c.l.b16 %v177
      %v390 = vunpack.c.h.b16 %v177
      %v391 = vunpack.c.l.b16 %v178
      %v392 = vunpack.c.h.b16 %v178
      %v393 = vunpack.c.l.b16 %v179
      %v394 = vunpack.c.h.b16 %v179
      %v395 = vunpack.c.l.b16 %v180
      %v396 = vunpack.c.h.b16 %v180
      %v397 = vunpack.c.l.b16 %v181
      %v398 = vunpack.c.h.b16 %v181
      %v399 = vunpack.c.l.b16 %v182
      %v400 = vunpack.c.h.b16 %v182
      %v401 = vunpack.c.l.b16 %v183
      %v402 = vunpack.c.h.b16 %v183
      %v403 = vunpack.c.l.b16 %v184
      %v404 = vunpack.c.h.b16 %v184
      %v405 = vunpack.c.l.b16 %v185
      %v406 = vunpack.c.h.b16 %v185
      %v407 = vunpack.c.l.b16 %v186
      %v408 = vunpack.c.h.b16 %v186
      %v409 = vunpack.c.l.b16 %v187
      %v410 = vunpack.c.h.b16 %v187
      %v411 = vunpack.c.l.b16 %v188
      %v412 = vunpack.c.h.b16 %v188
      %v413 = vunpack.c.l.b16 %v189
      %v414 = vunpack.c.h.b16 %v189
      %v415 = vunpack.c.l.b16 %v190
      %v416 = vunpack.c.h.b16 %v190
      %v417 = vunpack.c.l.b16 %v191
      %v418 = vunpack.c.h.b16 %v191
      %v419 = vunpack.c.l.b16 %v192
      %v420 = vunpack.c.h.b16 %v192
      %v421 = vunpack.c.l.b16 %v193
      %v422 = vunpack.c.h.b16 %v193
      %v423 = vunpack.c.l.b16 %v194
      %v424 = vunpack.c.h.b16 %v194
      %v425 = vunpack.c.l.b16 %v195
      %v426 = vunpack.c.h.b16 %v195
      %v427 = vunpack.c.l.b16 %v196
      %v428 = vunpack.c.h.b16 %v196
      %v429 = vunpack.c.l.b16 %v197
      %v430 = vunpack.c.h.b16 %v197
      %v431 = vunpack.c.l.b16 %v198
      %v432 = vunpack.c.h.b16 %v198
      %v433 = vunpack.c.l.b16 %v199
      %v434 = vunpack.c.h.b16 %v199
      %v435 = vunpack.c.l.b16 %v200
      %v436 = vunpack.c.h.b16 %v200
      %v437 = vunpack.c.l.b16 %v201
      %v438 = vunpack.c.h.b16 %v201
      %v439 = vunpack.c.l.b16 %v202
      %v440 = vunpack.c.h.b16 %v202
      %v441 = vunpack.c.l.b16 %v203
      %v442 = vunpack.c.h.b16 %v203
      %v443 = vunpack.c.l.b16 %v204
      %v444 = vunpack.c.h.b16 %v204
      %v445 = vunpack.c.l.b16 %v205
      %v446 = vunpack.c.h.b16 %v205
      %v447 = vunpack.c.l.b16 %v206
      %v448 = vunpack.c.h.b16 %v206
      %v449 = vunpack.c.l.b16 %v207
      %v450 = vunpack.c.h.b16 %v207
      %v451 = vunpack.c.l.b16 %v208
      %v452 = vunpack.c.h.b16 %v208
      %v453 = vunpack.c.l.b16 %v209
      %v454 = vunpack.c.h.b16 %v209
      %v455 = vunpack.c.l.b16 %v210
      %v456 = vunpack.c.h.b16 %v210
      %v457 = vunpack.c.l.b16 %v211
      %v458 = vunpack.c.h.b16 %v211
      %v459 = vunpack.c.l.b16 %v212
      %v460 = vunpack.c.h.b16 %v212
      %v461 = vunpack.c.l.b16 %v213
      %v462 = vunpack.c.h.b16 %v213
      %v463 = vunpack.c.l.b16 %v214
      %v464 = vunpack.c.h.b16 %v214
      %v465 = vunpack.c.l.b16 %v215
      %v466 = vunpack.c.h.b16 %v215
      %v467 = vunpack.c.l.b16 %v216
      %v468 = vunpack.c.h.b16 %v216
      %v469 = vunpack.c.l.b16 %v217
      %v470 = vunpack.c.h.b16 %v217
      %v471 = vunpack.c.l.b16 %v218
      %v472 = vunpack.c.h.b16 %v218
      %v473 = vunpack.c.l.b16 %v219
      %v474 = vunpack.c.h.b16 %v219
      %v475 = vunpack.c.l.b16 %v220
      %v476 = vunpack.c.h.b16 %v220
      %v477 = vunpack.c.l.b16 %v221
      %v478 = vunpack.c.h.b16 %v221
      %v479 = vunpack.c.l.b16 %v222
      %v480 = vunpack.c.h.b16 %v222
      %v481 = vunpack.c.l.b16 %v223
      %v482 = vunpack.c.h.b16 %v223
      %v483 = vunpack.c.l.b16 %v224
      %v484 = vunpack.c.h.b16 %v224
      %v485 = vunpack.c.l.b16 %v225
      %v486 = vunpack.c.h.b16 %v225
      %v487 = vunpack.c.l.b16 %v226
      %v488 = vunpack.c.h.b16 %v226
      %v489 = vunpack.c.l.b16 %v227
      %v490 = vunpack.c.h.b16 %v227
      %v491 = vunpack.c.l.b16 %v228
      %v492 = vunpack.c.h.b16 %v228
      %v493 = vunpack.c.l.b16 %v229
      %v494 = vunpack.c.h.b16 %v229
      %v495 = vunpack.c.l.b16 %v230
      %v496 = vunpack.c.h.b16 %v230
      %v497 = vunpack.c.l.b16 %v231
      %v498 = vunpack.c.h.b16 %v231
      %v499 = vunpack.c.l.b16 %v232
      %v500 = vunpack.c.h.b16 %v232
      %v501 = vunpack.c.l.b16 %v233
      %v502 = vunpack.c.h.b16 %v233
      %v503 = vunpack.c.l.b16 %v234
      %v504 = vunpack.c.h.b16 %v234
      %v505 = vunpack.c.l.b16 %v235
      %v506 = vunpack.c.h.b16 %v235
      %v507 = vunpack.c.l.b16 %v236
      %v508 = vunpack.c.h.b16 %v236
      %v509 = vunpack.c.l.b16 %v237
      %v510 = vunpack.c.h.b16 %v237
      %v511 = vunpack.c.l.b16 %v238
      %v512 = vunpack.c.h.b16 %v238
      %v513 = vunpack.c.l.b16 %v239
      %v514 = vunpack.c.h.b16 %v239
      %v515 = vunpack.c.l.b16 %v240
      %v516 = vunpack.c.h.b16 %v240
      %v517 = vunpack.c.l.b16 %v241
      %v518 = vunpack.c.h.b16 %v241
      %v519 = vunpack.c.l.b16 %v242
      %v520 = vunpack.c.h.b16 %v242
      %v521 = vunpack.c.l.b16 %v243
      %v522 = vunpack.c.h.b16 %v243
      %v523 = vunpack.c.l.b16 %v244
      %v524 = vunpack.c.h.b16 %v244
      %v525 = vunpack.c.l.b16 %v245
      %v526 = vunpack.c.h.b16 %v245
      %v527 = vunpack.c.l.b16 %v246
      %v528 = vunpack.c.h.b16 %v246
      %v529 = vunpack.c.l.b16 %v247
      %v530 = vunpack.c.h.b16 %v247
      %v531 = vunpack.c.l.b16 %v248
      %v532 = vunpack.c.h.b16 %v248
      %v533 = vunpack.c.l.b16 %v249
      %v534 = vunpack.c.h.b16 %v249
      %v535 = vunpack.c.l.b16 %v250
      %v536 = vunpack.c.h.b16 %v250
      %v537 = vunpack.c.l.b16 %v251
      %v538 = vunpack.c.h.b16 %v251
      %v539 = vunpack.c.l.b16 %v252
      %v540 = vunpack.c.h.b16 %v252
      %v541 = vunpack.c.l.b16 %v253
      %v542 = vunpack.c.h.b16 %v253
      %v543 = vunpack.c.l.b16 %v254
      %v544 = vunpack.c.h.b16 %v254
      %v545 = vunpack.c.l.b16 %v255
      %v546 = vunpack.c.h.b16 %v255
      %v547 = vunpack.c.l.b16 %v256
      %v548 = vunpack.c.h.b16 %v256
      %v549 = vunpack.c.l.b16 %v257
      %v550 = vunpack.c.h.b16 %v257
      %v551 = vunpack.c.l.b16 %v258
      %v552 = vunpack.c.h.b16 %v258
      %v553 = vunpack.c.l.b16 %v259
      %v554 = vunpack.c.h.b16 %v259
      %v555 = vunpack.c.l.b16 %v260
      %v556 = vunpack.c.h.b16 %v260
      %v557 = vunpack.c.l.b16 %v261
      %v558 = vunpack.c.h.b16 %v261
      %v559 = vunpack.c.l.b16 %v262
      %v560 = vunpack.c.h.b16 %v262
      %v561 = vunpack.c.l.b16 %v263
      %v562 = vunpack.c.h.b16 %v263
      %v563 = vunpack.c.l.b16 %v264
      %v564 = vunpack.c.h.b16 %v264
      %v565 = vunpack.c.l.b16 %v265
      %v566 = vunpack.c.h.b16 %v265
      %v567 = vunpack.c.l.b16 %v266
      %v568 = vunpack.c.h.b16 %v266
      %v569 = vunpack.c.l.b16 %v267
      %v570 = vunpack.c.h.b16 %v267
      %v571 = vunpack.c.l.b16 %v268
      %v572 = vunpack.c.h.b16 %v268
      %v573 = vunpack.c.l.b16 %v269
      %v574 = vunpack.c.h.b16 %v269
      %v575 = vpack.c.b16 %v415, %v383
      %v576 = vpack.c.b16 %v416, %v384
      %v577 = vpack.c.b16 %v417, %v385
      %v578 = vpack.c.b16 %v418, %v386
      %v579 = vpack.c.b16 %v419, %v387
      %v580 = vpack.c.b16 %v420, %v388
      %v581 = vpack.c.b16 %v421, %v389
      %v582 = vpack.c.b16 %v422, %v390
      %v583 = vpack.c.b16 %v423, %v391
      %v584 = vpack.c.b16 %v424, %v392
      %v585 = vpack.c.b16 %v425, %v393
      %v586 = vpack.c.b16 %v426, %v394
      %v587 = vpack.c.b16 %v427, %v395
      %v588 = vpack.c.b16 %v428, %v396
      %v589 = vpack.c.b16 %v429, %v397
      %v590 = vpack.c.b16 %v430, %v398
      %v591 = vpack.c.b16 %v431, %v399
      %v592 = vpack.c.b16 %v432, %v400
      %v593 = vpack.c.b16 %v433, %v401
      %v594 = vpack.c.b16 %v434, %v402
      %v595 = vpack.c.b16 %v435, %v403
      %v596 = vpack.c.b16 %v436, %v404
      %v597 = vpack.c.b16 %v437, %v405
      %v598 = vpack.c.b16 %v438, %v406
      %v599 = vpack.c.b16 %v439, %v407
      %v600 = vpack.c.b16 %v440, %v408
      %v601 = vpack.c.b16 %v441, %v409
      %v602 = vpack.c.b16 %v442, %v410
      %v603 = vpack.c.b16 %v443, %v411
      %v604 = vpack.c.b16 %v444, %v412
      %v605 = vpack.c.b16 %v445, %v413
      %v606 = vpack.c.b16 %v446, %v414
      %v607 = vpack.c.b16 %v479, %v447
      %v608 = vpack.c.b16 %v480, %v448
      %v609 = vpack.c.b16 %v481, %v449
      %v610 = vpack.c.b16 %v482, %v450
      %v611 = vpack.c.b16 %v483, %v451
      %v612 = vpack.c.b16 %v484, %v452
      %v613 = vpack.c.b16 %v485, %v453
      %v614 = vpack.c.b16 %v486, %v454
      %v615 = vpack.c.b16 %v487, %v455
      %v616 = vpack.c.b16 %v488, %v456
      %v617 = vpack.c.b16 %v489, %v457
      %v618 = vpack.c.b16 %v490, %v458
      %v619 = vpack.c.b16 %v491, %v459
      %v620 = vpack.c.b16 %v492, %v460
      %v621 = vpack.c.b16 %v493, %v461
      %v622 = vpack.c.b16 %v494, %v462
      %v623 = vpack.c.b16 %v495, %v463
      %v624 = vpack.c.b16 %v496, %v464
      %v625 = vpack.c.b16 %v497, %v465
      %v626 = vpack.c.b16 %v498, %v466
      %v627 = vpack.c.b16 %v499, %v467
      %v628 = vpack.c.b16 %v500, %v468
      %v629 = vpack.c.b16 %v501, %v469
      %v630 = vpack.c.b16 %v502, %v470
      %v631 = vpack.c.b16 %v503, %v471
      %v632 = vpack.c.b16 %v504, %v472
      %v633 = vpack.c.b16 %v505, %v473
      %v634 = vpack.c.b16 %v506, %v474
      %v635 = vpack.c.b16 %v507, %v475
      %v636 = vpack.c.b16 %v508, %v476
      %v637 = vpack.c.b16 %v509, %v477
      %v638 = vpack.c.b16 %v510, %v478
      %v639 = vpack.c.b16 %v543, %v511
      %v640 = vpack.c.b16 %v544, %v512
      %v641 = vpack.c.b16 %v545, %v513
      %v642 = vpack.c.b16 %v546, %v514
      %v643 = vpack.c.b16 %v547, %v515
      %v644 = vpack.c.b16 %v548, %v516
      %v645 = vpack.c.b16 %v549, %v517
      %v646 = vpack.c.b16 %v550, %v518
      %v647 = vpack.c.b16 %v551, %v519
      %v648 = vpack.c.b16 %v552, %v520
      %v649 = vpack.c.b16 %v553, %v521
      %v650 = vpack.c.b16 %v554, %v522
      %v651 = vpack.c.b16 %v555, %v523
      %v652 = vpack.c.b16 %v556, %v524
      %v653 = vpack.c.b16 %v557, %v525
      %v654 = vpack.c.b16 %v558, %v526
      %v655 = vpack.c.b16 %v559, %v527
      %v656 = vpack.c.b16 %v560, %v528
      %v657 = vpack.c.b16 %v561, %v529
      %v658 = vpack.c.b16 %v562, %v530
      %v659 = vpack.c.b16 %v563, %v531
      %v660 = vpack.c.b16 %v564, %v532
      %v661 = vpack.c.b16 %v565, %v533
      %v662 = vpack.c.b16 %v566, %v534
      %v663 = vpack.c.b16 %v567, %v535
      %v664 = vpack.c.b16 %v568, %v536
      %v665 = vpack.c.b16 %v569, %v537
      %v666 = vpack.c.b16 %v570, %v538
      %v667 = vpack.c.b16 %v571, %v539
      %v668 = vpack.c.b16 %v572, %v540
      %v669 = vpack.c.b16 %v573, %v541
      %v670 = vpack.c.b16 %v574, %v542
      %vm767 = vcmask 392192
      %v769 = vsel %vm767, %v286, 0
      %771 = vmatprep.subr.bf16.mxu0 %v576
      %772 = vmatpush1.bf16.msra.mxu0 %v575
      %773 = vmatprep.subr.bf16.mxu0 %v608
      %774 = vmatpush1.bf16.msra.mxu0 %v607
      %775 = vmatprep.subr.bf16.mxu0 %v640
      %776 = vmatpush1.bf16.msra.mxu0 %v639
      %777 = vmatprep.subr.bf16.mxu0 0
      %778 = vmatpush1.bf16.msra.mxu0 0
      %779 = vmatprep.subr.bf16.mxu0 0
      %780 = vmatpush1.bf16.msra.mxu0 0
      %781 = vmatprep.subr.bf16.mxu0 0
      %782 = vmatpush1.bf16.msra.mxu0 0
      %783 = vmatprep.subr.bf16.mxu0 0
      %784 = vmatpush1.bf16.msra.mxu0 0
      %785 = vmatprep.subr.bf16.mxu0 0
      %786 = vmatpush1.bf16.msra.mxu0 0
      %787 = vmatprep.subr.bf16.mxu0 0
      %788 = vmatpush1.bf16.msra.mxu0 0
      %789 = vmatprep.subr.bf16.mxu0 0
      %790 = vmatpush1.bf16.msra.mxu0 0
      %791 = vmatprep.subr.bf16.mxu0 0
      %792 = vmatpush1.bf16.msra.mxu0 0
      %793 = vmatprep.subr.bf16.mxu0 0
      %794 = vmatpush1.bf16.msra.mxu0 0
      %795 = vmatprep.subr.bf16.mxu0 0
      %796 = vmatpush1.bf16.msra.mxu0 0
      %797 = vmatprep.subr.bf16.mxu0 0
      %798 = vmatpush1.bf16.msra.mxu0 0
      %799 = vmatprep.subr.bf16.mxu0 0
      %800 = vmatpush1.bf16.msra.mxu0 0
      %801 = vmatprep.subr.bf16.mxu0 0
      %802 = vmatpush1.bf16.msra.mxu0 0
      %803 = vmatprep.mubr.bf16.mxu0 0
      %804 = vmatmul.mubr.bf16.gmra.mrb[0].mxu0 %v769
      %v805 = vpop.f32.mrb[0].mxu0
      %v806 = vadd.f32 %v275, %v805
      %v807 = vpop.f32.mrb[0].mxu0
      %v808 = vadd.f32 %v275, %v807
      %v809 = vpop.f32.mrb[0].mxu0
      %v810 = vadd.f32 %v280, %v809
      %v811 = vpop.f32.mrb[0].mxu0
      %v812 = vadd.f32 %v280, %v811
      %813 = vdwg.mxu0
      %814 = vmatprep.subr.bf16.mxu0 %v578
      %815 = vmatpush1.bf16.msra.mxu0 %v577
      %816 = vmatprep.subr.bf16.mxu0 %v610
      %817 = vmatpush1.bf16.msra.mxu0 %v609
      %818 = vmatprep.subr.bf16.mxu0 %v642
      %819 = vmatpush1.bf16.msra.mxu0 %v641
      %820 = vmatprep.subr.bf16.mxu0 0
      %821 = vmatpush1.bf16.msra.mxu0 0
      %822 = vmatprep.subr.bf16.mxu0 0
      %823 = vmatpush1.bf16.msra.mxu0 0
      %824 = vmatprep.subr.bf16.mxu0 0
      %825 = vmatpush1.bf16.msra.mxu0 0
      %826 = vmatprep.subr.bf16.mxu0 0
      %827 = vmatpush1.bf16.msra.mxu0 0
      %828 = vmatprep.subr.bf16.mxu0 0
      %829 = vmatpush1.bf16.msra.mxu0 0
      %830 = vmatprep.subr.bf16.mxu0 0
      %831 = vmatpush1.bf16.msra.mxu0 0
      %832 = vmatprep.subr.bf16.mxu0 0
      %833 = vmatpush1.bf16.msra.mxu0 0
      %834 = vmatprep.subr.bf16.mxu0 0
      %835 = vmatpush1.bf16.msra.mxu0 0
      %836 = vmatprep.subr.bf16.mxu0 0
      %837 = vmatpush1.bf16.msra.mxu0 0
      %838 = vmatprep.subr.bf16.mxu0 0
      %839 = vmatpush1.bf16.msra.mxu0 0
      %840 = vmatprep.subr.bf16.mxu0 0
      %841 = vmatpush1.bf16.msra.mxu0 0
      %842 = vmatprep.subr.bf16.mxu0 0
      %843 = vmatpush1.bf16.msra.mxu0 0
      %844 = vmatprep.subr.bf16.mxu0 0
      %845 = vmatpush1.bf16.msra.mxu0 0
      %846 = vmatprep.mubr.bf16.mxu0 0
      %847 = vmatmul.mubr.bf16.gmra.mrb[0].mxu0 %v769
      %v848 = vpop.f32.mrb[0].mxu0
      %v849 = vadd.f32 %v275, %v848
      %v850 = vpop.f32.mrb[0].mxu0
      %v851 = vadd.f32 %v275, %v850
      %v852 = vpop.f32.mrb[0].mxu0
      %v853 = vadd.f32 %v280, %v852
      %v854 = vpop.f32.mrb[0].mxu0
      %v855 = vadd.f32 %v280, %v854
      %856 = vdwg.mxu0
      %857 = vmatprep.subr.bf16.mxu0 %v580
      %858 = vmatpush1.bf16.msra.mxu0 %v579
      %859 = vmatprep.subr.bf16.mxu0 %v612
      %860 = vmatpush1.bf16.msra.mxu0 %v611
      %861 = vmatprep.subr.bf16.mxu0 %v644
      %862 = vmatpush1.bf16.msra.mxu0 %v643
      %863 = vmatprep.subr.bf16.mxu0 0
      %864 = vmatpush1.bf16.msra.mxu0 0
      %865 = vmatprep.subr.bf16.mxu0 0
      %866 = vmatpush1.bf16.msra.mxu0 0
      %867 = vmatprep.subr.bf16.mxu0 0
      %868 = vmatpush1.bf16.msra.mxu0 0
      %869 = vmatprep.subr.bf16.mxu0 0
      %870 = vmatpush1.bf16.msra.mxu0 0
      %871 = vmatprep.subr.bf16.mxu0 0
      %872 = vmatpush1.bf16.msra.mxu0 0
      %873 = vmatprep.subr.bf16.mxu0 0
      %874 = vmatpush1.bf16.msra.mxu0 0
      %875 = vmatprep.subr.bf16.mxu0 0
      %876 = vmatpush1.bf16.msra.mxu0 0
      %877 = vmatprep.subr.bf16.mxu0 0
      %878 = vmatpush1.bf16.msra.mxu0 0
      %879 = vmatprep.subr.bf16.mxu0 0
      %880 = vmatpush1.bf16.msra.mxu0 0
      %881 = vmatprep.subr.bf16.mxu0 0
      %882 = vmatpush1.bf16.msra.mxu0 0
      %883 = vmatprep.subr.bf16.mxu0 0
      %884 = vmatpush1.bf16.msra.mxu0 0
      %885 = vmatprep.subr.bf16.mxu0 0
      %886 = vmatpush1.bf16.msra.mxu0 0
      %887 = vmatprep.subr.bf16.mxu0 0
      %888 = vmatpush1.bf16.msra.mxu0 0
      %889 = vmatprep.mubr.bf16.mxu0 0
      %890 = vmatmul.mubr.bf16.gmra.mrb[0].mxu0 %v769
      %v891 = vpop.f32.mrb[0].mxu0
      %v892 = vadd.f32 %v275, %v891
      %v893 = vpop.f32.mrb[0].mxu0
      %v894 = vadd.f32 %v275, %v893
      %v895 = vpop.f32.mrb[0].mxu0
      %v896 = vadd.f32 %v280, %v895
      %v897 = vpop.f32.mrb[0].mxu0
      %v898 = vadd.f32 %v280, %v897
      %899 = vdwg.mxu0
      %900 = vmatprep.subr.bf16.mxu0 %v582
      %901 = vmatpush1.bf16.msra.mxu0 %v581
      %902 = vmatprep.subr.bf16.mxu0 %v614
      %903 = vmatpush1.bf16.msra.mxu0 %v613
      %904 = vmatprep.subr.bf16.mxu0 %v646
      %905 = vmatpush1.bf16.msra.mxu0 %v645
      %906 = vmatprep.subr.bf16.mxu0 0
      %907 = vmatpush1.bf16.msra.mxu0 0
      %908 = vmatprep.subr.bf16.mxu0 0
      %909 = vmatpush1.bf16.msra.mxu0 0
      %910 = vmatprep.subr.bf16.mxu0 0
      %911 = vmatpush1.bf16.msra.mxu0 0
      %912 = vmatprep.subr.bf16.mxu0 0
      %913 = vmatpush1.bf16.msra.mxu0 0
      %914 = vmatprep.subr.bf16.mxu0 0
      %915 = vmatpush1.bf16.msra.mxu0 0
      %916 = vmatprep.subr.bf16.mxu0 0
      %917 = vmatpush1.bf16.msra.mxu0 0
      %918 = vmatprep.subr.bf16.mxu0 0
      %919 = vmatpush1.bf16.msra.mxu0 0
      %920 = vmatprep.subr.bf16.mxu0 0
      %921 = vmatpush1.bf16.msra.mxu0 0
      %922 = vmatprep.subr.bf16.mxu0 0
      %923 = vmatpush1.bf16.msra.mxu0 0
      %924 = vmatprep.subr.bf16.mxu0 0
      %925 = vmatpush1.bf16.msra.mxu0 0
      %926 = vmatprep.subr.bf16.mxu0 0
      %927 = vmatpush1.bf16.msra.mxu0 0
      %928 = vmatprep.subr.bf16.mxu0 0
      %929 = vmatpush1.bf16.msra.mxu0 0
      %930 = vmatprep.subr.bf16.mxu0 0
      %931 = vmatpush1.bf16.msra.mxu0 0
      %932 = vmatprep.mubr.bf16.mxu0 0
      %933 = vmatmul.mubr.bf16.gmra.mrb[0].mxu0 %v769
      %v934 = vpop.f32.mrb[0].mxu0
      %v935 = vadd.f32 %v275, %v934
      %v936 = vpop.f32.mrb[0].mxu0
      %v937 = vadd.f32 %v275, %v936
      %v938 = vpop.f32.mrb[0].mxu0
      %v939 = vadd.f32 %v280, %v938
      %v940 = vpop.f32.mrb[0].mxu0
      %v941 = vadd.f32 %v280, %v940
      %942 = vdwg.mxu0
      %943 = vmatprep.subr.bf16.mxu0 %v584
      %944 = vmatpush1.bf16.msra.mxu0 %v583
      %945 = vmatprep.subr.bf16.mxu0 %v616
      %946 = vmatpush1.bf16.msra.mxu0 %v615
      %947 = vmatprep.subr.bf16.mxu0 %v648
      %948 = vmatpush1.bf16.msra.mxu0 %v647
      %949 = vmatprep.subr.bf16.mxu0 0
      %950 = vmatpush1.bf16.msra.mxu0 0
      %951 = vmatprep.subr.bf16.mxu0 0
      %952 = vmatpush1.bf16.msra.mxu0 0
      %953 = vmatprep.subr.bf16.mxu0 0
      %954 = vmatpush1.bf16.msra.mxu0 0
      %955 = vmatprep.subr.bf16.mxu0 0
      %956 = vmatpush1.bf16.msra.mxu0 0
      %957 = vmatprep.subr.bf16.mxu0 0
      %958 = vmatpush1.bf16.msra.mxu0 0
      %959 = vmatprep.subr.bf16.mxu0 0
      %960 = vmatpush1.bf16.msra.mxu0 0
      %961 = vmatprep.subr.bf16.mxu0 0
      %962 = vmatpush1.bf16.msra.mxu0 0
      %963 = vmatprep.subr.bf16.mxu0 0
      %964 = vmatpush1.bf16.msra.mxu0 0
      %965 = vmatprep.subr.bf16.mxu0 0
      %966 = vmatpush1.bf16.msra.mxu0 0
      %967 = vmatprep.subr.bf16.mxu0 0
      %968 = vmatpush1.bf16.msra.mxu0 0
      %969 = vmatprep.subr.bf16.mxu0 0
      %970 = vmatpush1.bf16.msra.mxu0 0
      %971 = vmatprep.subr.bf16.mxu0 0
      %972 = vmatpush1.bf16.msra.mxu0 0
      %973 = vmatprep.subr.bf16.mxu0 0
      %974 = vmatpush1.bf16.msra.mxu0 0
      %975 = vmatprep.mubr.bf16.mxu0 0
      %976 = vmatmul.mubr.bf16.gmra.mrb[0].mxu0 %v769
      %v977 = vpop.f32.mrb[0].mxu0
      %v978 = vadd.f32 %v275, %v977
      %v979 = vpop.f32.mrb[0].mxu0
      %v980 = vadd.f32 %v275, %v979
      %v981 = vpop.f32.mrb[0].mxu0
      %v982 = vadd.f32 %v280, %v981
      %v983 = vpop.f32.mrb[0].mxu0
      %v984 = vadd.f32 %v280, %v983
      %985 = vdwg.mxu0
      %986 = vmatprep.subr.bf16.mxu0 %v586
      %987 = vmatpush1.bf16.msra.mxu0 %v585
      %988 = vmatprep.subr.bf16.mxu0 %v618
      %989 = vmatpush1.bf16.msra.mxu0 %v617
      %990 = vmatprep.subr.bf16.mxu0 %v650
      %991 = vmatpush1.bf16.msra.mxu0 %v649
      %992 = vmatprep.subr.bf16.mxu0 0
      %993 = vmatpush1.bf16.msra.mxu0 0
      %994 = vmatprep.subr.bf16.mxu0 0
      %995 = vmatpush1.bf16.msra.mxu0 0
      %996 = vmatprep.subr.bf16.mxu0 0
      %997 = vmatpush1.bf16.msra.mxu0 0
      %998 = vmatprep.subr.bf16.mxu0 0
      %999 = vmatpush1.bf16.msra.mxu0 0
      %1000 = vmatprep.subr.bf16.mxu0 0
      %1001 = vmatpush1.bf16.msra.mxu0 0
      %1002 = vmatprep.subr.bf16.mxu0 0
      %1003 = vmatpush1.bf16.msra.mxu0 0
      %1004 = vmatprep.subr.bf16.mxu0 0
      %1005 = vmatpush1.bf16.msra.mxu0 0
      %1006 = vmatprep.subr.bf16.mxu0 0
      %1007 = vmatpush1.bf16.msra.mxu0 0
      %1008 = vmatprep.subr.bf16.mxu0 0
      %1009 = vmatpush1.bf16.msra.mxu0 0
      %1010 = vmatprep.subr.bf16.mxu0 0
      %1011 = vmatpush1.bf16.msra.mxu0 0
      %1012 = vmatprep.subr.bf16.mxu0 0
      %1013 = vmatpush1.bf16.msra.mxu0 0
      %1014 = vmatprep.subr.bf16.mxu0 0
      %1015 = vmatpush1.bf16.msra.mxu0 0
      %1016 = vmatprep.subr.bf16.mxu0 0
      %1017 = vmatpush1.bf16.msra.mxu0 0
      %1018 = vmatprep.mubr.bf16.mxu0 0
      %1019 = vmatmul.mubr.bf16.gmra.mrb[0].mxu0 %v769
      %v1020 = vpop.f32.mrb[0].mxu0
      %v1021 = vadd.f32 %v275, %v1020
      %v1022 = vpop.f32.mrb[0].mxu0
      %v1023 = vadd.f32 %v275, %v1022
      %v1024 = vpop.f32.mrb[0].mxu0
      %v1025 = vadd.f32 %v280, %v1024
      %v1026 = vpop.f32.mrb[0].mxu0
      %v1027 = vadd.f32 %v280, %v1026
      %1028 = vdwg.mxu0
      %1029 = vmatprep.subr.bf16.mxu0 %v588
      %1030 = vmatpush1.bf16.msra.mxu0 %v587
      %1031 = vmatprep.subr.bf16.mxu0 %v620
      %1032 = vmatpush1.bf16.msra.mxu0 %v619
      %1033 = vmatprep.subr.bf16.mxu0 %v652
      %1034 = vmatpush1.bf16.msra.mxu0 %v651
      %1035 = vmatprep.subr.bf16.mxu0 0
      %1036 = vmatpush1.bf16.msra.mxu0 0
      %1037 = vmatprep.subr.bf16.mxu0 0
      %1038 = vmatpush1.bf16.msra.mxu0 0
      %1039 = vmatprep.subr.bf16.mxu0 0
      %1040 = vmatpush1.bf16.msra.mxu0 0
      %1041 = vmatprep.subr.bf16.mxu0 0
      %1042 = vmatpush1.bf16.msra.mxu0 0
      %1043 = vmatprep.subr.bf16.mxu0 0
      %1044 = vmatpush1.bf16.msra.mxu0 0
      %1045 = vmatprep.subr.bf16.mxu0 0
      %1046 = vmatpush1.bf16.msra.mxu0 0
      %1047 = vmatprep.subr.bf16.mxu0 0
      %1048 = vmatpush1.bf16.msra.mxu0 0
      %1049 = vmatprep.subr.bf16.mxu0 0
      %1050 = vmatpush1.bf16.msra.mxu0 0
      %1051 = vmatprep.subr.bf16.mxu0 0
      %1052 = vmatpush1.bf16.msra.mxu0 0
      %1053 = vmatprep.subr.bf16.mxu0 0
      %1054 = vmatpush1.bf16.msra.mxu0 0
      %1055 = vmatprep.subr.bf16.mxu0 0
      %1056 = vmatpush1.bf16.msra.mxu0 0
      %1057 = vmatprep.subr.bf16.mxu0 0
      %1058 = vmatpush1.bf16.msra.mxu0 0
      %1059 = vmatprep.subr.bf16.mxu0 0
      %1060 = vmatpush1.bf16.msra.mxu0 0
      %1061 = vmatprep.mubr.bf16.mxu0 0
      %1062 = vmatmul.mubr.bf16.gmra.mrb[0].mxu0 %v769
      %v1063 = vpop.f32.mrb[0].mxu0
      %v1064 = vadd.f32 %v275, %v1063
      %v1065 = vpop.f32.mrb[0].mxu0
      %v1066 = vadd.f32 %v275, %v1065
      %v1067 = vpop.f32.mrb[0].mxu0
      %v1068 = vadd.f32 %v280, %v1067
      %v1069 = vpop.f32.mrb[0].mxu0
      %v1070 = vadd.f32 %v280, %v1069
      %1071 = vdwg.mxu0
      %1072 = vmatprep.subr.bf16.mxu0 %v590
      %1073 = vmatpush1.bf16.msra.mxu0 %v589
      %1074 = vmatprep.subr.bf16.mxu0 %v622
      %1075 = vmatpush1.bf16.msra.mxu0 %v621
      %1076 = vmatprep.subr.bf16.mxu0 %v654
      %1077 = vmatpush1.bf16.msra.mxu0 %v653
      %1078 = vmatprep.subr.bf16.mxu0 0
      %1079 = vmatpush1.bf16.msra.mxu0 0
      %1080 = vmatprep.subr.bf16.mxu0 0
      %1081 = vmatpush1.bf16.msra.mxu0 0
      %1082 = vmatprep.subr.bf16.mxu0 0
      %1083 = vmatpush1.bf16.msra.mxu0 0
      %1084 = vmatprep.subr.bf16.mxu0 0
      %1085 = vmatpush1.bf16.msra.mxu0 0
      %1086 = vmatprep.subr.bf16.mxu0 0
      %1087 = vmatpush1.bf16.msra.mxu0 0
      %1088 = vmatprep.subr.bf16.mxu0 0
      %1089 = vmatpush1.bf16.msra.mxu0 0
      %1090 = vmatprep.subr.bf16.mxu0 0
      %1091 = vmatpush1.bf16.msra.mxu0 0
      %1092 = vmatprep.subr.bf16.mxu0 0
      %1093 = vmatpush1.bf16.msra.mxu0 0
      %1094 = vmatprep.subr.bf16.mxu0 0
      %1095 = vmatpush1.bf16.msra.mxu0 0
      %1096 = vmatprep.subr.bf16.mxu0 0
      %1097 = vmatpush1.bf16.msra.mxu0 0
      %1098 = vmatprep.subr.bf16.mxu0 0
      %1099 = vmatpush1.bf16.msra.mxu0 0
      %1100 = vmatprep.subr.bf16.mxu0 0
      %1101 = vmatpush1.bf16.msra.mxu0 0
      %1102 = vmatprep.subr.bf16.mxu0 0
      %1103 = vmatpush1.bf16.msra.mxu0 0
      %1104 = vmatprep.mubr.bf16.mxu0 0
      %1105 = vmatmul.mubr.bf16.gmra.mrb[0].mxu0 %v769
      %v1106 = vpop.f32.mrb[0].mxu0
      %v1107 = vadd.f32 %v275, %v1106
      %v1108 = vpop.f32.mrb[0].mxu0
      %v1109 = vadd.f32 %v275, %v1108
      %v1110 = vpop.f32.mrb[0].mxu0
      %v1111 = vadd.f32 %v280, %v1110
      %v1112 = vpop.f32.mrb[0].mxu0
      %v1113 = vadd.f32 %v280, %v1112
      %1114 = vdwg.mxu0
      %1115 = vmatprep.subr.bf16.mxu0 %v592
      %1116 = vmatpush1.bf16.msra.mxu0 %v591
      %1117 = vmatprep.subr.bf16.mxu0 %v624
      %1118 = vmatpush1.bf16.msra.mxu0 %v623
      %1119 = vmatprep.subr.bf16.mxu0 %v656
      %1120 = vmatpush1.bf16.msra.mxu0 %v655
      %1121 = vmatprep.subr.bf16.mxu0 0
      %1122 = vmatpush1.bf16.msra.mxu0 0
      %1123 = vmatprep.subr.bf16.mxu0 0
      %1124 = vmatpush1.bf16.msra.mxu0 0
      %1125 = vmatprep.subr.bf16.mxu0 0
      %1126 = vmatpush1.bf16.msra.mxu0 0
      %1127 = vmatprep.subr.bf16.mxu0 0
      %1128 = vmatpush1.bf16.msra.mxu0 0
      %1129 = vmatprep.subr.bf16.mxu0 0
      %1130 = vmatpush1.bf16.msra.mxu0 0
      %1131 = vmatprep.subr.bf16.mxu0 0
      %1132 = vmatpush1.bf16.msra.mxu0 0
      %1133 = vmatprep.subr.bf16.mxu0 0
      %1134 = vmatpush1.bf16.msra.mxu0 0
      %1135 = vmatprep.subr.bf16.mxu0 0
      %1136 = vmatpush1.bf16.msra.mxu0 0
      %1137 = vmatprep.subr.bf16.mxu0 0
      %1138 = vmatpush1.bf16.msra.mxu0 0
      %1139 = vmatprep.subr.bf16.mxu0 0
      %1140 = vmatpush1.bf16.msra.mxu0 0
      %1141 = vmatprep.subr.bf16.mxu0 0
      %1142 = vmatpush1.bf16.msra.mxu0 0
      %1143 = vmatprep.subr.bf16.mxu0 0
      %1144 = vmatpush1.bf16.msra.mxu0 0
      %1145 = vmatprep.subr.bf16.mxu0 0
      %1146 = vmatpush1.bf16.msra.mxu0 0
      %1147 = vmatprep.mubr.bf16.mxu0 0
      %1148 = vmatmul.mubr.bf16.gmra.mrb[0].mxu0 %v769
      %v1149 = vpop.f32.mrb[0].mxu0
      %v1150 = vadd.f32 %v275, %v1149
      %v1151 = vpop.f32.mrb[0].mxu0
      %v1152 = vadd.f32 %v275, %v1151
      %v1153 = vpop.f32.mrb[0].mxu0
      %v1154 = vadd.f32 %v280, %v1153
      %v1155 = vpop.f32.mrb[0].mxu0
      %v1156 = vadd.f32 %v280, %v1155
      %1157 = vdwg.mxu0
      %1158 = vmatprep.subr.bf16.mxu0 %v594
      %1159 = vmatpush1.bf16.msra.mxu0 %v593
      %1160 = vmatprep.subr.bf16.mxu0 %v626
      %1161 = vmatpush1.bf16.msra.mxu0 %v625
      %1162 = vmatprep.subr.bf16.mxu0 %v658
      %1163 = vmatpush1.bf16.msra.mxu0 %v657
      %1164 = vmatprep.subr.bf16.mxu0 0
      %1165 = vmatpush1.bf16.msra.mxu0 0
      %1166 = vmatprep.subr.bf16.mxu0 0
      %1167 = vmatpush1.bf16.msra.mxu0 0
      %1168 = vmatprep.subr.bf16.mxu0 0
      %1169 = vmatpush1.bf16.msra.mxu0 0
      %1170 = vmatprep.subr.bf16.mxu0 0
      %1171 = vmatpush1.bf16.msra.mxu0 0
      %1172 = vmatprep.subr.bf16.mxu0 0
      %1173 = vmatpush1.bf16.msra.mxu0 0
      %1174 = vmatprep.subr.bf16.mxu0 0
      %1175 = vmatpush1.bf16.msra.mxu0 0
      %1176 = vmatprep.subr.bf16.mxu0 0
      %1177 = vmatpush1.bf16.msra.mxu0 0
      %1178 = vmatprep.subr.bf16.mxu0 0
      %1179 = vmatpush1.bf16.msra.mxu0 0
      %1180 = vmatprep.subr.bf16.mxu0 0
      %1181 = vmatpush1.bf16.msra.mxu0 0
      %1182 = vmatprep.subr.bf16.mxu0 0
      %1183 = vmatpush1.bf16.msra.mxu0 0
      %1184 = vmatprep.subr.bf16.mxu0 0
      %1185 = vmatpush1.bf16.msra.mxu0 0
      %1186 = vmatprep.subr.bf16.mxu0 0
      %1187 = vmatpush1.bf16.msra.mxu0 0
      %1188 = vmatprep.subr.bf16.mxu0 0
      %1189 = vmatpush1.bf16.msra.mxu0 0
      %1190 = vmatprep.mubr.bf16.mxu0 0
      %1191 = vmatmul.mubr.bf16.gmra.mrb[0].mxu0 %v769
      %v1192 = vpop.f32.mrb[0].mxu0
      %v1193 = vadd.f32 %v275, %v1192
      %v1194 = vpop.f32.mrb[0].mxu0
      %v1195 = vadd.f32 %v275, %v1194
      %v1196 = vpop.f32.mrb[0].mxu0
      %v1197 = vadd.f32 %v280, %v1196
      %v1198 = vpop.f32.mrb[0].mxu0
      %v1199 = vadd.f32 %v280, %v1198
      %1200 = vdwg.mxu0
      %1201 = vmatprep.subr.bf16.mxu0 %v596
      %1202 = vmatpush1.bf16.msra.mxu0 %v595
      %1203 = vmatprep.subr.bf16.mxu0 %v628
      %1204 = vmatpush1.bf16.msra.mxu0 %v627
      %1205 = vmatprep.subr.bf16.mxu0 %v660
      %1206 = vmatpush1.bf16.msra.mxu0 %v659
      %1207 = vmatprep.subr.bf16.mxu0 0
      %1208 = vmatpush1.bf16.msra.mxu0 0
      %1209 = vmatprep.subr.bf16.mxu0 0
      %1210 = vmatpush1.bf16.msra.mxu0 0
      %1211 = vmatprep.subr.bf16.mxu0 0
      %1212 = vmatpush1.bf16.msra.mxu0 0
      %1213 = vmatprep.subr.bf16.mxu0 0
      %1214 = vmatpush1.bf16.msra.mxu0 0
      %1215 = vmatprep.subr.bf16.mxu0 0
      %1216 = vmatpush1.bf16.msra.mxu0 0
      %1217 = vmatprep.subr.bf16.mxu0 0
      %1218 = vmatpush1.bf16.msra.mxu0 0
      %1219 = vmatprep.subr.bf16.mxu0 0
      %1220 = vmatpush1.bf16.msra.mxu0 0
      %1221 = vmatprep.subr.bf16.mxu0 0
      %1222 = vmatpush1.bf16.msra.mxu0 0
      %1223 = vmatprep.subr.bf16.mxu0 0
      %1224 = vmatpush1.bf16.msra.mxu0 0
      %1225 = vmatprep.subr.bf16.mxu0 0
      %1226 = vmatpush1.bf16.msra.mxu0 0
      %1227 = vmatprep.subr.bf16.mxu0 0
      %1228 = vmatpush1.bf16.msra.mxu0 0
      %1229 = vmatprep.subr.bf16.mxu0 0
      %1230 = vmatpush1.bf16.msra.mxu0 0
      %1231 = vmatprep.subr.bf16.mxu0 0
      %1232 = vmatpush1.bf16.msra.mxu0 0
      %1233 = vmatprep.mubr.bf16.mxu0 0
      %1234 = vmatmul.mubr.bf16.gmra.mrb[0].mxu0 %v769
      %v1235 = vpop.f32.mrb[0].mxu0
      %v1236 = vadd.f32 %v275, %v1235
      %v1237 = vpop.f32.mrb[0].mxu0
      %v1238 = vadd.f32 %v275, %v1237
      %v1239 = vpop.f32.mrb[0].mxu0
      %v1240 = vadd.f32 %v280, %v1239
      %v1241 = vpop.f32.mrb[0].mxu0
      %v1242 = vadd.f32 %v280, %v1241
      %1243 = vdwg.mxu0
      %1244 = vmatprep.subr.bf16.mxu0 %v598
      %1245 = vmatpush1.bf16.msra.mxu0 %v597
      %1246 = vmatprep.subr.bf16.mxu0 %v630
      %1247 = vmatpush1.bf16.msra.mxu0 %v629
      %1248 = vmatprep.subr.bf16.mxu0 %v662
      %1249 = vmatpush1.bf16.msra.mxu0 %v661
      %1250 = vmatprep.subr.bf16.mxu0 0
      %1251 = vmatpush1.bf16.msra.mxu0 0
      %1252 = vmatprep.subr.bf16.mxu0 0
      %1253 = vmatpush1.bf16.msra.mxu0 0
      %1254 = vmatprep.subr.bf16.mxu0 0
      %1255 = vmatpush1.bf16.msra.mxu0 0
      %1256 = vmatprep.subr.bf16.mxu0 0
      %1257 = vmatpush1.bf16.msra.mxu0 0
      %1258 = vmatprep.subr.bf16.mxu0 0
      %1259 = vmatpush1.bf16.msra.mxu0 0
      %1260 = vmatprep.subr.bf16.mxu0 0
      %1261 = vmatpush1.bf16.msra.mxu0 0
      %1262 = vmatprep.subr.bf16.mxu0 0
      %1263 = vmatpush1.bf16.msra.mxu0 0
      %1264 = vmatprep.subr.bf16.mxu0 0
      %1265 = vmatpush1.bf16.msra.mxu0 0
      %1266 = vmatprep.subr.bf16.mxu0 0
      %1267 = vmatpush1.bf16.msra.mxu0 0
      %1268 = vmatprep.subr.bf16.mxu0 0
      %1269 = vmatpush1.bf16.msra.mxu0 0
      %1270 = vmatprep.subr.bf16.mxu0 0
      %1271 = vmatpush1.bf16.msra.mxu0 0
      %1272 = vmatprep.subr.bf16.mxu0 0
      %1273 = vmatpush1.bf16.msra.mxu0 0
      %1274 = vmatprep.subr.bf16.mxu0 0
      %1275 = vmatpush1.bf16.msra.mxu0 0
      %1276 = vmatprep.mubr.bf16.mxu0 0
      %1277 = vmatmul.mubr.bf16.gmra.mrb[0].mxu0 %v769
      %v1278 = vpop.f32.mrb[0].mxu0
      %v1279 = vadd.f32 %v275, %v1278
      %v1280 = vpop.f32.mrb[0].mxu0
      %v1281 = vadd.f32 %v275, %v1280
      %v1282 = vpop.f32.mrb[0].mxu0
      %v1283 = vadd.f32 %v280, %v1282
      %v1284 = vpop.f32.mrb[0].mxu0
      %v1285 = vadd.f32 %v280, %v1284
      %1286 = vdwg.mxu0
      %1287 = vmatprep.subr.bf16.mxu0 %v600
      %1288 = vmatpush1.bf16.msra.mxu0 %v599
      %1289 = vmatprep.subr.bf16.mxu0 %v632
      %1290 = vmatpush1.bf16.msra.mxu0 %v631
      %1291 = vmatprep.subr.bf16.mxu0 %v664
      %1292 = vmatpush1.bf16.msra.mxu0 %v663
      %1293 = vmatprep.subr.bf16.mxu0 0
      %1294 = vmatpush1.bf16.msra.mxu0 0
      %1295 = vmatprep.subr.bf16.mxu0 0
      %1296 = vmatpush1.bf16.msra.mxu0 0
      %1297 = vmatprep.subr.bf16.mxu0 0
      %1298 = vmatpush1.bf16.msra.mxu0 0
      %1299 = vmatprep.subr.bf16.mxu0 0
      %1300 = vmatpush1.bf16.msra.mxu0 0
      %1301 = vmatprep.subr.bf16.mxu0 0
      %1302 = vmatpush1.bf16.msra.mxu0 0
      %1303 = vmatprep.subr.bf16.mxu0 0
      %1304 = vmatpush1.bf16.msra.mxu0 0
      %1305 = vmatprep.subr.bf16.mxu0 0
      %1306 = vmatpush1.bf16.msra.mxu0 0
      %1307 = vmatprep.subr.bf16.mxu0 0
      %1308 = vmatpush1.bf16.msra.mxu0 0
      %1309 = vmatprep.subr.bf16.mxu0 0
      %1310 = vmatpush1.bf16.msra.mxu0 0
      %1311 = vmatprep.subr.bf16.mxu0 0
      %1312 = vmatpush1.bf16.msra.mxu0 0
      %1313 = vmatprep.subr.bf16.mxu0 0
      %1314 = vmatpush1.bf16.msra.mxu0 0
      %1315 = vmatprep.subr.bf16.mxu0 0
      %1316 = vmatpush1.bf16.msra.mxu0 0
      %1317 = vmatprep.subr.bf16.mxu0 0
      %1318 = vmatpush1.bf16.msra.mxu0 0
      %1319 = vmatprep.mubr.bf16.mxu0 0
      %1320 = vmatmul.mubr.bf16.gmra.mrb[0].mxu0 %v769
      %v1321 = vpop.f32.mrb[0].mxu0
      %v1322 = vadd.f32 %v275, %v1321
      %v1323 = vpop.f32.mrb[0].mxu0
      %v1324 = vadd.f32 %v275, %v1323
      %v1325 = vpop.f32.mrb[0].mxu0
      %v1326 = vadd.f32 %v280, %v1325
      %v1327 = vpop.f32.mrb[0].mxu0
      %v1328 = vadd.f32 %v280, %v1327
      %1329 = vdwg.mxu0
      %1330 = vmatprep.subr.bf16.mxu0 %v602
      %1331 = vmatpush1.bf16.msra.mxu0 %v601
      %1332 = vmatprep.subr.bf16.mxu0 %v634
      %1333 = vmatpush1.bf16.msra.mxu0 %v633
      %1334 = vmatprep.subr.bf16.mxu0 %v666
      %1335 = vmatpush1.bf16.msra.mxu0 %v665
      %1336 = vmatprep.subr.bf16.mxu0 0
      %1337 = vmatpush1.bf16.msra.mxu0 0
      %1338 = vmatprep.subr.bf16.mxu0 0
      %1339 = vmatpush1.bf16.msra.mxu0 0
      %1340 = vmatprep.subr.bf16.mxu0 0
      %1341 = vmatpush1.bf16.msra.mxu0 0
      %1342 = vmatprep.subr.bf16.mxu0 0
      %1343 = vmatpush1.bf16.msra.mxu0 0
      %1344 = vmatprep.subr.bf16.mxu0 0
      %1345 = vmatpush1.bf16.msra.mxu0 0
      %1346 = vmatprep.subr.bf16.mxu0 0
      %1347 = vmatpush1.bf16.msra.mxu0 0
      %1348 = vmatprep.subr.bf16.mxu0 0
      %1349 = vmatpush1.bf16.msra.mxu0 0
      %1350 = vmatprep.subr.bf16.mxu0 0
      %1351 = vmatpush1.bf16.msra.mxu0 0
      %1352 = vmatprep.subr.bf16.mxu0 0
      %1353 = vmatpush1.bf16.msra.mxu0 0
      %1354 = vmatprep.subr.bf16.mxu0 0
      %1355 = vmatpush1.bf16.msra.mxu0 0
      %1356 = vmatprep.subr.bf16.mxu0 0
      %1357 = vmatpush1.bf16.msra.mxu0 0
      %1358 = vmatprep.subr.bf16.mxu0 0
      %1359 = vmatpush1.bf16.msra.mxu0 0
      %1360 = vmatprep.subr.bf16.mxu0 0
      %1361 = vmatpush1.bf16.msra.mxu0 0
      %1362 = vmatprep.mubr.bf16.mxu0 0
      %1363 = vmatmul.mubr.bf16.gmra.mrb[0].mxu0 %v769
      %v1364 = vpop.f32.mrb[0].mxu0
      %v1365 = vadd.f32 %v275, %v1364
      %v1366 = vpop.f32.mrb[0].mxu0
      %v1367 = vadd.f32 %v275, %v1366
      %v1368 = vpop.f32.mrb[0].mxu0
      %v1369 = vadd.f32 %v280, %v1368
      %v1370 = vpop.f32.mrb[0].mxu0
      %v1371 = vadd.f32 %v280, %v1370
      %1372 = vdwg.mxu0
      %1373 = vmatprep.subr.bf16.mxu0 %v604
      %1374 = vmatpush1.bf16.msra.mxu0 %v603
      %1375 = vmatprep.subr.bf16.mxu0 %v636
      %1376 = vmatpush1.bf16.msra.mxu0 %v635
      %1377 = vmatprep.subr.bf16.mxu0 %v668
      %1378 = vmatpush1.bf16.msra.mxu0 %v667
      %1379 = vmatprep.subr.bf16.mxu0 0
      %1380 = vmatpush1.bf16.msra.mxu0 0
      %1381 = vmatprep.subr.bf16.mxu0 0
      %1382 = vmatpush1.bf16.msra.mxu0 0
      %1383 = vmatprep.subr.bf16.mxu0 0
      %1384 = vmatpush1.bf16.msra.mxu0 0
      %1385 = vmatprep.subr.bf16.mxu0 0
      %1386 = vmatpush1.bf16.msra.mxu0 0
      %1387 = vmatprep.subr.bf16.mxu0 0
      %1388 = vmatpush1.bf16.msra.mxu0 0
      %1389 = vmatprep.subr.bf16.mxu0 0
      %1390 = vmatpush1.bf16.msra.mxu0 0
      %1391 = vmatprep.subr.bf16.mxu0 0
      %1392 = vmatpush1.bf16.msra.mxu0 0
      %1393 = vmatprep.subr.bf16.mxu0 0
      %1394 = vmatpush1.bf16.msra.mxu0 0
      %1395 = vmatprep.subr.bf16.mxu0 0
      %1396 = vmatpush1.bf16.msra.mxu0 0
      %1397 = vmatprep.subr.bf16.mxu0 0
      %1398 = vmatpush1.bf16.msra.mxu0 0
      %1399 = vmatprep.subr.bf16.mxu0 0
      %1400 = vmatpush1.bf16.msra.mxu0 0
      %1401 = vmatprep.subr.bf16.mxu0 0
      %1402 = vmatpush1.bf16.msra.mxu0 0
      %1403 = vmatprep.subr.bf16.mxu0 0
      %1404 = vmatpush1.bf16.msra.mxu0 0
      %1405 = vmatprep.mubr.bf16.mxu0 0
      %1406 = vmatmul.mubr.bf16.gmra.mrb[0].mxu0 %v769
      %v1407 = vpop.f32.mrb[0].mxu0
      %v1408 = vadd.f32 %v275, %v1407
      %v1409 = vpop.f32.mrb[0].mxu0
      %v1410 = vadd.f32 %v275, %v1409
      %v1411 = vpop.f32.mrb[0].mxu0
      %v1412 = vadd.f32 %v280, %v1411
      %v1413 = vpop.f32.mrb[0].mxu0
      %v1414 = vadd.f32 %v280, %v1413
      %1415 = vdwg.mxu0
      %1416 = vmatprep.subr.bf16.mxu0 %v606
      %1417 = vmatpush1.bf16.msra.mxu0 %v605
      %1418 = vmatprep.subr.bf16.mxu0 %v638
      %1419 = vmatpush1.bf16.msra.mxu0 %v637
      %1420 = vmatprep.subr.bf16.mxu0 %v670
      %1421 = vmatpush1.bf16.msra.mxu0 %v669
      %1422 = vmatprep.subr.bf16.mxu0 0
      %1423 = vmatpush1.bf16.msra.mxu0 0
      %1424 = vmatprep.subr.bf16.mxu0 0
      %1425 = vmatpush1.bf16.msra.mxu0 0
      %1426 = vmatprep.subr.bf16.mxu0 0
      %1427 = vmatpush1.bf16.msra.mxu0 0
      %1428 = vmatprep.subr.bf16.mxu0 0
      %1429 = vmatpush1.bf16.msra.mxu0 0
      %1430 = vmatprep.subr.bf16.mxu0 0
      %1431 = vmatpush1.bf16.msra.mxu0 0
      %1432 = vmatprep.subr.bf16.mxu0 0
      %1433 = vmatpush1.bf16.msra.mxu0 0
      %1434 = vmatprep.subr.bf16.mxu0 0
      %1435 = vmatpush1.bf16.msra.mxu0 0
      %1436 = vmatprep.subr.bf16.mxu0 0
      %1437 = vmatpush1.bf16.msra.mxu0 0
      %1438 = vmatprep.subr.bf16.mxu0 0
      %1439 = vmatpush1.bf16.msra.mxu0 0
      %1440 = vmatprep.subr.bf16.mxu0 0
      %1441 = vmatpush1.bf16.msra.mxu0 0
      %1442 = vmatprep.subr.bf16.mxu0 0
      %1443 = vmatpush1.bf16.msra.mxu0 0
      %1444 = vmatprep.subr.bf16.mxu0 0
      %1445 = vmatpush1.bf16.msra.mxu0 0
      %1446 = vmatprep.subr.bf16.mxu0 0
      %1447 = vmatpush1.bf16.msra.mxu0 0
      %1448 = vmatprep.mubr.bf16.mxu0 0
      %1449 = vmatmul.mubr.bf16.gmra.mrb[0].mxu0 %v769
      %v1450 = vpop.f32.mrb[0].mxu0
      %v1451 = vadd.f32 %v275, %v1450
      %v1452 = vpop.f32.mrb[0].mxu0
      %v1453 = vadd.f32 %v275, %v1452
      %v1454 = vpop.f32.mrb[0].mxu0
      %v1455 = vadd.f32 %v280, %v1454
      %v1456 = vpop.f32.mrb[0].mxu0
      %v1457 = vadd.f32 %v280, %v1456
      %1458 = vdwg.mxu0
      %v1459 = vadd.f32 %v806, %v808
      %v1460 = vadd.f32 %v1459, %v849
      %v1461 = vadd.f32 %v1460, %v851
      %v1462 = vadd.f32 %v1461, %v892
      %v1463 = vadd.f32 %v1462, %v894
      %v1464 = vadd.f32 %v1463, %v935
      %v1465 = vadd.f32 %v1464, %v937
      %v1466 = vadd.f32 %v1465, %v978
      %v1467 = vadd.f32 %v1466, %v980
      %v1468 = vadd.f32 %v1467, %v1021
      %v1469 = vadd.f32 %v1468, %v1023
      %v1470 = vadd.f32 %v1469, %v1064
      %v1471 = vadd.f32 %v1470, %v1066
      %v1472 = vadd.f32 %v1471, %v1107
      %v1473 = vadd.f32 %v1472, %v1109
      %v1474 = vadd.f32 %v1473, %v1150
      %v1475 = vadd.f32 %v1474, %v1152
      %v1476 = vadd.f32 %v1475, %v1193
      %v1477 = vadd.f32 %v1476, %v1195
      %v1478 = vadd.f32 %v1477, %v1236
      %v1479 = vadd.f32 %v1478, %v1238
      %v1480 = vadd.f32 %v1479, %v1279
      %v1481 = vadd.f32 %v1480, %v1281
      %v1482 = vadd.f32 %v1481, %v1322
      %v1483 = vadd.f32 %v1482, %v1324
      %v1484 = vadd.f32 %v1483, %v1365
      %v1485 = vadd.f32 %v1484, %v1367
      %v1486 = vadd.f32 %v1485, %v1408
      %v1487 = vadd.f32 %v1486, %v1410
      %v1488 = vadd.f32 %v1487, %v1451
      %v1489 = vadd.f32 %v1488, %v1453
      %1490 = vadd.xlane.f32.xlu0 %v1489
      %v1491 = vpop.xlane.xlu0 %1490
      %v1492 = vadd.f32 %v810, %v812
      %v1493 = vadd.f32 %v1492, %v853
      %v1494 = vadd.f32 %v1493, %v855
      %v1495 = vadd.f32 %v1494, %v896
      %v1496 = vadd.f32 %v1495, %v898
      %v1497 = vadd.f32 %v1496, %v939
      %v1498 = vadd.f32 %v1497, %v941
      %v1499 = vadd.f32 %v1498, %v982
      %v1500 = vadd.f32 %v1499, %v984
      %v1501 = vadd.f32 %v1500, %v1025
      %v1502 = vadd.f32 %v1501, %v1027
      %v1503 = vadd.f32 %v1502, %v1068
      %v1504 = vadd.f32 %v1503, %v1070
      %v1505 = vadd.f32 %v1504, %v1111
      %v1506 = vadd.f32 %v1505, %v1113
      %v1507 = vadd.f32 %v1506, %v1154
      %v1508 = vadd.f32 %v1507, %v1156
      %v1509 = vadd.f32 %v1508, %v1197
      %v1510 = vadd.f32 %v1509, %v1199
      %v1511 = vadd.f32 %v1510, %v1240
      %v1512 = vadd.f32 %v1511, %v1242
      %v1513 = vadd.f32 %v1512, %v1283
      %v1514 = vadd.f32 %v1513, %v1285
      %v1515 = vadd.f32 %v1514, %v1326
      %v1516 = vadd.f32 %v1515, %v1328
      %v1517 = vadd.f32 %v1516, %v1369
      %v1518 = vadd.f32 %v1517, %v1371
      %v1519 = vadd.f32 %v1518, %v1412
      %v1520 = vadd.f32 %v1519, %v1414
      %v1521 = vadd.f32 %v1520, %v1455
      %v1522 = vadd.f32 %v1521, %v1457
      %1523 = vadd.xlane.f32.xlu0 %v1522
      %v1524 = vpop.xlane.xlu0 %1523
      %v1525 = vmul.f32 %v806, %v806
      %v1526 = vmul.f32 %v808, %v808
      %v1527 = vmul.f32 %v849, %v849
      %v1528 = vmul.f32 %v851, %v851
      %v1529 = vmul.f32 %v892, %v892
      %v1530 = vmul.f32 %v894, %v894
      %v1531 = vmul.f32 %v935, %v935
      %v1532 = vmul.f32 %v937, %v937
      %v1533 = vmul.f32 %v978, %v978
      %v1534 = vmul.f32 %v980, %v980
      %v1535 = vmul.f32 %v1021, %v1021
      %v1536 = vmul.f32 %v1023, %v1023
      %v1537 = vmul.f32 %v1064, %v1064
      %v1538 = vmul.f32 %v1066, %v1066
      %v1539 = vmul.f32 %v1107, %v1107
      %v1540 = vmul.f32 %v1109, %v1109
      %v1541 = vmul.f32 %v1150, %v1150
      %v1542 = vmul.f32 %v1152, %v1152
      %v1543 = vmul.f32 %v1193, %v1193
      %v1544 = vmul.f32 %v1195, %v1195
      %v1545 = vmul.f32 %v1236, %v1236
      %v1546 = vmul.f32 %v1238, %v1238
      %v1547 = vmul.f32 %v1279, %v1279
      %v1548 = vmul.f32 %v1281, %v1281
      %v1549 = vmul.f32 %v1322, %v1322
      %v1550 = vmul.f32 %v1324, %v1324
      %v1551 = vmul.f32 %v1365, %v1365
      %v1552 = vmul.f32 %v1367, %v1367
      %v1553 = vmul.f32 %v1408, %v1408
      %v1554 = vmul.f32 %v1410, %v1410
      %v1555 = vmul.f32 %v1451, %v1451
      %v1556 = vmul.f32 %v1453, %v1453
      %v1557 = vmul.f32 %v810, %v810
      %v1558 = vmul.f32 %v812, %v812
      %v1559 = vmul.f32 %v853, %v853
      %v1560 = vmul.f32 %v855, %v855
      %v1561 = vmul.f32 %v896, %v896
      %v1562 = vmul.f32 %v898, %v898
      %v1563 = vmul.f32 %v939, %v939
      %v1564 = vmul.f32 %v941, %v941
      %v1565 = vmul.f32 %v982, %v982
      %v1566 = vmul.f32 %v984, %v984
      %v1567 = vmul.f32 %v1025, %v1025
      %v1568 = vmul.f32 %v1027, %v1027
      %v1569 = vmul.f32 %v1068, %v1068
      %v1570 = vmul.f32 %v1070, %v1070
      %v1571 = vmul.f32 %v1111, %v1111
      %v1572 = vmul.f32 %v1113, %v1113
      %v1573 = vmul.f32 %v1154, %v1154
      %v1574 = vmul.f32 %v1156, %v1156
      %v1575 = vmul.f32 %v1197, %v1197
      %v1576 = vmul.f32 %v1199, %v1199
      %v1577 = vmul.f32 %v1240, %v1240
      %v1578 = vmul.f32 %v1242, %v1242
      %v1579 = vmul.f32 %v1283, %v1283
      %v1580 = vmul.f32 %v1285, %v1285
      %v1581 = vmul.f32 %v1326, %v1326
      %v1582 = vmul.f32 %v1328, %v1328
      %v1583 = vmul.f32 %v1369, %v1369
      %v1584 = vmul.f32 %v1371, %v1371
      %v1585 = vmul.f32 %v1412, %v1412
      %v1586 = vmul.f32 %v1414, %v1414
      %v1587 = vmul.f32 %v1455, %v1455
      %v1588 = vmul.f32 %v1457, %v1457
      %v1589 = vadd.f32 %v1525, %v1526
      %v1590 = vadd.f32 %v1589, %v1527
      %v1591 = vadd.f32 %v1590, %v1528
      %v1592 = vadd.f32 %v1591, %v1529
      %v1593 = vadd.f32 %v1592, %v1530
      %v1594 = vadd.f32 %v1593, %v1531
      %v1595 = vadd.f32 %v1594, %v1532
      %v1596 = vadd.f32 %v1595, %v1533
      %v1597 = vadd.f32 %v1596, %v1534
      %v1598 = vadd.f32 %v1597, %v1535
      %v1599 = vadd.f32 %v1598, %v1536
      %v1600 = vadd.f32 %v1599, %v1537
      %v1601 = vadd.f32 %v1600, %v1538
      %v1602 = vadd.f32 %v1601, %v1539
      %v1603 = vadd.f32 %v1602, %v1540
      %v1604 = vadd.f32 %v1603, %v1541
      %v1605 = vadd.f32 %v1604, %v1542
      %v1606 = vadd.f32 %v1605, %v1543
      %v1607 = vadd.f32 %v1606, %v1544
      %v1608 = vadd.f32 %v1607, %v1545
      %v1609 = vadd.f32 %v1608, %v1546
      %v1610 = vadd.f32 %v1609, %v1547
      %v1611 = vadd.f32 %v1610, %v1548
      %v1612 = vadd.f32 %v1611, %v1549
      %v1613 = vadd.f32 %v1612, %v1550
      %v1614 = vadd.f32 %v1613, %v1551
      %v1615 = vadd.f32 %v1614, %v1552
      %v1616 = vadd.f32 %v1615, %v1553
      %v1617 = vadd.f32 %v1616, %v1554
      %v1618 = vadd.f32 %v1617, %v1555
      %v1619 = vadd.f32 %v1618, %v1556
      %1620 = vadd.xlane.f32.xlu0 %v1619
      %v1621 = vpop.xlane.xlu0 %1620
      %v1622 = vadd.f32 %v1557, %v1558
      %v1623 = vadd.f32 %v1622, %v1559
      %v1624 = vadd.f32 %v1623, %v1560
      %v1625 = vadd.f32 %v1624, %v1561
      %v1626 = vadd.f32 %v1625, %v1562
      %v1627 = vadd.f32 %v1626, %v1563
      %v1628 = vadd.f32 %v1627, %v1564
      %v1629 = vadd.f32 %v1628, %v1565
      %v1630 = vadd.f32 %v1629, %v1566
      %v1631 = vadd.f32 %v1630, %v1567
      %v1632 = vadd.f32 %v1631, %v1568
      %v1633 = vadd.f32 %v1632, %v1569
      %v1634 = vadd.f32 %v1633, %v1570
      %v1635 = vadd.f32 %v1634, %v1571
      %v1636 = vadd.f32 %v1635, %v1572
      %v1637 = vadd.f32 %v1636, %v1573
      %v1638 = vadd.f32 %v1637, %v1574
      %v1639 = vadd.f32 %v1638, %v1575
      %v1640 = vadd.f32 %v1639, %v1576
      %v1641 = vadd.f32 %v1640, %v1577
      %v1642 = vadd.f32 %v1641, %v1578
      %v1643 = vadd.f32 %v1642, %v1579
      %v1644 = vadd.f32 %v1643, %v1580
      %v1645 = vadd.f32 %v1644, %v1581
      %v1646 = vadd.f32 %v1645, %v1582
      %v1647 = vadd.f32 %v1646, %v1583
      %v1648 = vadd.f32 %v1647, %v1584
      %v1649 = vadd.f32 %v1648, %v1585
      %v1650 = vadd.f32 %v1649, %v1586
      %v1651 = vadd.f32 %v1650, %v1587
      %v1652 = vadd.f32 %v1651, %v1588
      %1653 = vadd.xlane.f32.xlu0 %v1652
      %v1654 = vpop.xlane.xlu0 %1653
      %v1655 = vmul.f32 %v1491, 0.00024414063
      %v1656 = vmul.f32 %v1524, 0.00024414063
      %v1657 = vmul.f32 %v1621, 0.00024414063
      %v1658 = vmul.f32 %v1654, 0.00024414063
      %v1659 = vmul.f32 %v1655, %v1655
      %v1660 = vmul.f32 %v1656, %v1656
      %v1661 = vsub.f32 %v1657, %v1659
      %v1662 = vsub.f32 %v1658, %v1660
      %v1663 = vmax.f32 %v1661, 0.0
      %v1664 = vmax.f32 %v1662, 0.0
      %v1665 = vadd.f32 %v1663, 1e-05
      %v1666 = vadd.f32 %v1664, 1e-05
      %v1667 = vrsqrt.pop %v1665
      %v1668 = vrsqrt.pop %v1666
      %v1669 = vsub.f32 %v806, %v1655
      %v1670 = vsub.f32 %v808, %v1655
      %v1671 = vsub.f32 %v849, %v1655
      %v1672 = vsub.f32 %v851, %v1655
      %v1673 = vsub.f32 %v892, %v1655
      %v1674 = vsub.f32 %v894, %v1655
      %v1675 = vsub.f32 %v935, %v1655
      %v1676 = vsub.f32 %v937, %v1655
      %v1677 = vsub.f32 %v978, %v1655
      %v1678 = vsub.f32 %v980, %v1655
      %v1679 = vsub.f32 %v1021, %v1655
      %v1680 = vsub.f32 %v1023, %v1655
      %v1681 = vsub.f32 %v1064, %v1655
      %v1682 = vsub.f32 %v1066, %v1655
      %v1683 = vsub.f32 %v1107, %v1655
      %v1684 = vsub.f32 %v1109, %v1655
      %v1685 = vsub.f32 %v1150, %v1655
      %v1686 = vsub.f32 %v1152, %v1655
      %v1687 = vsub.f32 %v1193, %v1655
      %v1688 = vsub.f32 %v1195, %v1655
      %v1689 = vsub.f32 %v1236, %v1655
      %v1690 = vsub.f32 %v1238, %v1655
      %v1691 = vsub.f32 %v1279, %v1655
      %v1692 = vsub.f32 %v1281, %v1655
      %v1693 = vsub.f32 %v1322, %v1655
      %v1694 = vsub.f32 %v1324, %v1655
      %v1695 = vsub.f32 %v1365, %v1655
      %v1696 = vsub.f32 %v1367, %v1655
      %v1697 = vsub.f32 %v1408, %v1655
      %v1698 = vsub.f32 %v1410, %v1655
      %v1699 = vsub.f32 %v1451, %v1655
      %v1700 = vsub.f32 %v1453, %v1655
      %v1701 = vsub.f32 %v810, %v1656
      %v1702 = vsub.f32 %v812, %v1656
      %v1703 = vsub.f32 %v853, %v1656
      %v1704 = vsub.f32 %v855, %v1656
      %v1705 = vsub.f32 %v896, %v1656
      %v1706 = vsub.f32 %v898, %v1656
      %v1707 = vsub.f32 %v939, %v1656
      %v1708 = vsub.f32 %v941, %v1656
      %v1709 = vsub.f32 %v982, %v1656
      %v1710 = vsub.f32 %v984, %v1656
      %v1711 = vsub.f32 %v1025, %v1656
      %v1712 = vsub.f32 %v1027, %v1656
      %v1713 = vsub.f32 %v1068, %v1656
      %v1714 = vsub.f32 %v1070, %v1656
      %v1715 = vsub.f32 %v1111, %v1656
      %v1716 = vsub.f32 %v1113, %v1656
      %v1717 = vsub.f32 %v1154, %v1656
      %v1718 = vsub.f32 %v1156, %v1656
      %v1719 = vsub.f32 %v1197, %v1656
      %v1720 = vsub.f32 %v1199, %v1656
      %v1721 = vsub.f32 %v1240, %v1656
      %v1722 = vsub.f32 %v1242, %v1656
      %v1723 = vsub.f32 %v1283, %v1656
      %v1724 = vsub.f32 %v1285, %v1656
      %v1725 = vsub.f32 %v1326, %v1656
      %v1726 = vsub.f32 %v1328, %v1656
      %v1727 = vsub.f32 %v1369, %v1656
      %v1728 = vsub.f32 %v1371, %v1656
      %v1729 = vsub.f32 %v1412, %v1656
      %v1730 = vsub.f32 %v1414, %v1656
      %v1731 = vsub.f32 %v1455, %v1656
      %v1732 = vsub.f32 %v1457, %v1656
      %v1733 = vmul.f32 %v1669, %v1667
      %v1734 = vmul.f32 %v1670, %v1667
      %v1735 = vmul.f32 %v1671, %v1667
      %v1736 = vmul.f32 %v1672, %v1667
      %v1737 = vmul.f32 %v1673, %v1667
      %v1738 = vmul.f32 %v1674, %v1667
      %v1739 = vmul.f32 %v1675, %v1667
      %v1740 = vmul.f32 %v1676, %v1667
      %v1741 = vmul.f32 %v1677, %v1667
      %v1742 = vmul.f32 %v1678, %v1667
      %v1743 = vmul.f32 %v1679, %v1667
      %v1744 = vmul.f32 %v1680, %v1667
      %v1745 = vmul.f32 %v1681, %v1667
      %v1746 = vmul.f32 %v1682, %v1667
      %v1747 = vmul.f32 %v1683, %v1667
      %v1748 = vmul.f32 %v1684, %v1667
      %v1749 = vmul.f32 %v1685, %v1667
      %v1750 = vmul.f32 %v1686, %v1667
      %v1751 = vmul.f32 %v1687, %v1667
      %v1752 = vmul.f32 %v1688, %v1667
      %v1753 = vmul.f32 %v1689, %v1667
      %v1754 = vmul.f32 %v1690, %v1667
      %v1755 = vmul.f32 %v1691, %v1667
      %v1756 = vmul.f32 %v1692, %v1667
      %v1757 = vmul.f32 %v1693, %v1667
      %v1758 = vmul.f32 %v1694, %v1667
      %v1759 = vmul.f32 %v1695, %v1667
      %v1760 = vmul.f32 %v1696, %v1667
      %v1761 = vmul.f32 %v1697, %v1667
      %v1762 = vmul.f32 %v1698, %v1667
      %v1763 = vmul.f32 %v1699, %v1667
      %v1764 = vmul.f32 %v1700, %v1667
      %v1765 = vmul.f32 %v1701, %v1668
      %v1766 = vmul.f32 %v1702, %v1668
      %v1767 = vmul.f32 %v1703, %v1668
      %v1768 = vmul.f32 %v1704, %v1668
      %v1769 = vmul.f32 %v1705, %v1668
      %v1770 = vmul.f32 %v1706, %v1668
      %v1771 = vmul.f32 %v1707, %v1668
      %v1772 = vmul.f32 %v1708, %v1668
      %v1773 = vmul.f32 %v1709, %v1668
      %v1774 = vmul.f32 %v1710, %v1668
      %v1775 = vmul.f32 %v1711, %v1668
      %v1776 = vmul.f32 %v1712, %v1668
      %v1777 = vmul.f32 %v1713, %v1668
      %v1778 = vmul.f32 %v1714, %v1668
      %v1779 = vmul.f32 %v1715, %v1668
      %v1780 = vmul.f32 %v1716, %v1668
      %v1781 = vmul.f32 %v1717, %v1668
      %v1782 = vmul.f32 %v1718, %v1668
      %v1783 = vmul.f32 %v1719, %v1668
      %v1784 = vmul.f32 %v1720, %v1668
      %v1785 = vmul.f32 %v1721, %v1668
      %v1786 = vmul.f32 %v1722, %v1668
      %v1787 = vmul.f32 %v1723, %v1668
      %v1788 = vmul.f32 %v1724, %v1668
      %v1789 = vmul.f32 %v1725, %v1668
      %v1790 = vmul.f32 %v1726, %v1668
      %v1791 = vmul.f32 %v1727, %v1668
      %v1792 = vmul.f32 %v1728, %v1668
      %v1793 = vmul.f32 %v1729, %v1668
      %v1794 = vmul.f32 %v1730, %v1668
      %v1795 = vmul.f32 %v1731, %v1668
      %v1796 = vmul.f32 %v1732, %v1668
      %vm1797 = vcmp.gt.f32.partialorder %v1733, 0.0
      %vm1798 = vcmp.gt.f32.partialorder %v1734, 0.0
      %vm1799 = vcmp.gt.f32.partialorder %v1735, 0.0
      %vm1800 = vcmp.gt.f32.partialorder %v1736, 0.0
      %vm1801 = vcmp.gt.f32.partialorder %v1737, 0.0
      %vm1802 = vcmp.gt.f32.partialorder %v1738, 0.0
      %vm1803 = vcmp.gt.f32.partialorder %v1739, 0.0
      %vm1804 = vcmp.gt.f32.partialorder %v1740, 0.0
      %vm1805 = vcmp.gt.f32.partialorder %v1741, 0.0
      %vm1806 = vcmp.gt.f32.partialorder %v1742, 0.0
      %vm1807 = vcmp.gt.f32.partialorder %v1743, 0.0
      %vm1808 = vcmp.gt.f32.partialorder %v1744, 0.0
      %vm1809 = vcmp.gt.f32.partialorder %v1745, 0.0
      %vm1810 = vcmp.gt.f32.partialorder %v1746, 0.0
      %vm1811 = vcmp.gt.f32.partialorder %v1747, 0.0
      %vm1812 = vcmp.gt.f32.partialorder %v1748, 0.0
      %vm1813 = vcmp.gt.f32.partialorder %v1749, 0.0
      %vm1814 = vcmp.gt.f32.partialorder %v1750, 0.0
      %vm1815 = vcmp.gt.f32.partialorder %v1751, 0.0
      %vm1816 = vcmp.gt.f32.partialorder %v1752, 0.0
      %vm1817 = vcmp.gt.f32.partialorder %v1753, 0.0
      %vm1818 = vcmp.gt.f32.partialorder %v1754, 0.0
      %vm1819 = vcmp.gt.f32.partialorder %v1755, 0.0
      %vm1820 = vcmp.gt.f32.partialorder %v1756, 0.0
      %vm1821 = vcmp.gt.f32.partialorder %v1757, 0.0
      %vm1822 = vcmp.gt.f32.partialorder %v1758, 0.0
      %vm1823 = vcmp.gt.f32.partialorder %v1759, 0.0
      %vm1824 = vcmp.gt.f32.partialorder %v1760, 0.0
      %vm1825 = vcmp.gt.f32.partialorder %v1761, 0.0
      %vm1826 = vcmp.gt.f32.partialorder %v1762, 0.0
      %vm1827 = vcmp.gt.f32.partialorder %v1763, 0.0
      %vm1828 = vcmp.gt.f32.partialorder %v1764, 0.0
      %vm1829 = vcmp.gt.f32.partialorder %v1765, 0.0
      %vm1830 = vcmp.gt.f32.partialorder %v1766, 0.0
      %vm1831 = vcmp.gt.f32.partialorder %v1767, 0.0
      %vm1832 = vcmp.gt.f32.partialorder %v1768, 0.0
      %vm1833 = vcmp.gt.f32.partialorder %v1769, 0.0
      %vm1834 = vcmp.gt.f32.partialorder %v1770, 0.0
      %vm1835 = vcmp.gt.f32.partialorder %v1771, 0.0
      %vm1836 = vcmp.gt.f32.partialorder %v1772, 0.0
      %vm1837 = vcmp.gt.f32.partialorder %v1773, 0.0
      %vm1838 = vcmp.gt.f32.partialorder %v1774, 0.0
      %vm1839 = vcmp.gt.f32.partialorder %v1775, 0.0
      %vm1840 = vcmp.gt.f32.partialorder %v1776, 0.0
      %vm1841 = vcmp.gt.f32.partialorder %v1777, 0.0
      %vm1842 = vcmp.gt.f32.partialorder %v1778, 0.0
      %vm1843 = vcmp.gt.f32.partialorder %v1779, 0.0
      %vm1844 = vcmp.gt.f32.partialorder %v1780, 0.0
      %vm1845 = vcmp.gt.f32.partialorder %v1781, 0.0
      %vm1846 = vcmp.gt.f32.partialorder %v1782, 0.0
      %vm1847 = vcmp.gt.f32.partialorder %v1783, 0.0
      %vm1848 = vcmp.gt.f32.partialorder %v1784, 0.0
      %vm1849 = vcmp.gt.f32.partialorder %v1785, 0.0
      %vm1850 = vcmp.gt.f32.partialorder %v1786, 0.0
      %vm1851 = vcmp.gt.f32.partialorder %v1787, 0.0
      %vm1852 = vcmp.gt.f32.partialorder %v1788, 0.0
      %vm1853 = vcmp.gt.f32.partialorder %v1789, 0.0
      %vm1854 = vcmp.gt.f32.partialorder %v1790, 0.0
      %vm1855 = vcmp.gt.f32.partialorder %v1791, 0.0
      %vm1856 = vcmp.gt.f32.partialorder %v1792, 0.0
      %vm1857 = vcmp.gt.f32.partialorder %v1793, 0.0
      %vm1858 = vcmp.gt.f32.partialorder %v1794, 0.0
      %vm1859 = vcmp.gt.f32.partialorder %v1795, 0.0
      %vm1860 = vcmp.gt.f32.partialorder %v1796, 0.0
      %v1861 = vmul.f32 %v1733, 0.2
      %v1862 = vmul.f32 %v1734, 0.2
      %v1863 = vmul.f32 %v1735, 0.2
      %v1864 = vmul.f32 %v1736, 0.2
      %v1865 = vmul.f32 %v1737, 0.2
      %v1866 = vmul.f32 %v1738, 0.2
      %v1867 = vmul.f32 %v1739, 0.2
      %v1868 = vmul.f32 %v1740, 0.2
      %v1869 = vmul.f32 %v1741, 0.2
      %v1870 = vmul.f32 %v1742, 0.2
      %v1871 = vmul.f32 %v1743, 0.2
      %v1872 = vmul.f32 %v1744, 0.2
      %v1873 = vmul.f32 %v1745, 0.2
      %v1874 = vmul.f32 %v1746, 0.2
      %v1875 = vmul.f32 %v1747, 0.2
      %v1876 = vmul.f32 %v1748, 0.2
      %v1877 = vmul.f32 %v1749, 0.2
      %v1878 = vmul.f32 %v1750, 0.2
      %v1879 = vmul.f32 %v1751, 0.2
      %v1880 = vmul.f32 %v1752, 0.2
      %v1881 = vmul.f32 %v1753, 0.2
      %v1882 = vmul.f32 %v1754, 0.2
      %v1883 = vmul.f32 %v1755, 0.2
      %v1884 = vmul.f32 %v1756, 0.2
      %v1885 = vmul.f32 %v1757, 0.2
      %v1886 = vmul.f32 %v1758, 0.2
      %v1887 = vmul.f32 %v1759, 0.2
      %v1888 = vmul.f32 %v1760, 0.2
      %v1889 = vmul.f32 %v1761, 0.2
      %v1890 = vmul.f32 %v1762, 0.2
      %v1891 = vmul.f32 %v1763, 0.2
      %v1892 = vmul.f32 %v1764, 0.2
      %v1893 = vmul.f32 %v1765, 0.2
      %v1894 = vmul.f32 %v1766, 0.2
      %v1895 = vmul.f32 %v1767, 0.2
      %v1896 = vmul.f32 %v1768, 0.2
      %v1897 = vmul.f32 %v1769, 0.2
      %v1898 = vmul.f32 %v1770, 0.2
      %v1899 = vmul.f32 %v1771, 0.2
      %v1900 = vmul.f32 %v1772, 0.2
      %v1901 = vmul.f32 %v1773, 0.2
      %v1902 = vmul.f32 %v1774, 0.2
      %v1903 = vmul.f32 %v1775, 0.2
      %v1904 = vmul.f32 %v1776, 0.2
      %v1905 = vmul.f32 %v1777, 0.2
      %v1906 = vmul.f32 %v1778, 0.2
      %v1907 = vmul.f32 %v1779, 0.2
      %v1908 = vmul.f32 %v1780, 0.2
      %v1909 = vmul.f32 %v1781, 0.2
      %v1910 = vmul.f32 %v1782, 0.2
      %v1911 = vmul.f32 %v1783, 0.2
      %v1912 = vmul.f32 %v1784, 0.2
      %v1913 = vmul.f32 %v1785, 0.2
      %v1914 = vmul.f32 %v1786, 0.2
      %v1915 = vmul.f32 %v1787, 0.2
      %v1916 = vmul.f32 %v1788, 0.2
      %v1917 = vmul.f32 %v1789, 0.2
      %v1918 = vmul.f32 %v1790, 0.2
      %v1919 = vmul.f32 %v1791, 0.2
      %v1920 = vmul.f32 %v1792, 0.2
      %v1921 = vmul.f32 %v1793, 0.2
      %v1922 = vmul.f32 %v1794, 0.2
      %v1923 = vmul.f32 %v1795, 0.2
      %v1924 = vmul.f32 %v1796, 0.2
      %v1925 = vsel %vm1797, %v1733, %v1861
      %v1926 = vsel %vm1798, %v1734, %v1862
      %v1927 = vsel %vm1799, %v1735, %v1863
      %v1928 = vsel %vm1800, %v1736, %v1864
      %v1929 = vsel %vm1801, %v1737, %v1865
      %v1930 = vsel %vm1802, %v1738, %v1866
      %v1931 = vsel %vm1803, %v1739, %v1867
      %v1932 = vsel %vm1804, %v1740, %v1868
      %v1933 = vsel %vm1805, %v1741, %v1869
      %v1934 = vsel %vm1806, %v1742, %v1870
      %v1935 = vsel %vm1807, %v1743, %v1871
      %v1936 = vsel %vm1808, %v1744, %v1872
      %v1937 = vsel %vm1809, %v1745, %v1873
      %v1938 = vsel %vm1810, %v1746, %v1874
      %v1939 = vsel %vm1811, %v1747, %v1875
      %v1940 = vsel %vm1812, %v1748, %v1876
      %v1941 = vsel %vm1813, %v1749, %v1877
      %v1942 = vsel %vm1814, %v1750, %v1878
      %v1943 = vsel %vm1815, %v1751, %v1879
      %v1944 = vsel %vm1816, %v1752, %v1880
      %v1945 = vsel %vm1817, %v1753, %v1881
      %v1946 = vsel %vm1818, %v1754, %v1882
      %v1947 = vsel %vm1819, %v1755, %v1883
      %v1948 = vsel %vm1820, %v1756, %v1884
      %v1949 = vsel %vm1821, %v1757, %v1885
      %v1950 = vsel %vm1822, %v1758, %v1886
      %v1951 = vsel %vm1823, %v1759, %v1887
      %v1952 = vsel %vm1824, %v1760, %v1888
      %v1953 = vsel %vm1825, %v1761, %v1889
      %v1954 = vsel %vm1826, %v1762, %v1890
      %v1955 = vsel %vm1827, %v1763, %v1891
      %v1956 = vsel %vm1828, %v1764, %v1892
      %v1957 = vsel %vm1829, %v1765, %v1893
      %v1958 = vsel %vm1830, %v1766, %v1894
      %v1959 = vsel %vm1831, %v1767, %v1895
      %v1960 = vsel %vm1832, %v1768, %v1896
      %v1961 = vsel %vm1833, %v1769, %v1897
      %v1962 = vsel %vm1834, %v1770, %v1898
      %v1963 = vsel %vm1835, %v1771, %v1899
      %v1964 = vsel %vm1836, %v1772, %v1900
      %v1965 = vsel %vm1837, %v1773, %v1901
      %v1966 = vsel %vm1838, %v1774, %v1902
      %v1967 = vsel %vm1839, %v1775, %v1903
      %v1968 = vsel %vm1840, %v1776, %v1904
      %v1969 = vsel %vm1841, %v1777, %v1905
      %v1970 = vsel %vm1842, %v1778, %v1906
      %v1971 = vsel %vm1843, %v1779, %v1907
      %v1972 = vsel %vm1844, %v1780, %v1908
      %v1973 = vsel %vm1845, %v1781, %v1909
      %v1974 = vsel %vm1846, %v1782, %v1910
      %v1975 = vsel %vm1847, %v1783, %v1911
      %v1976 = vsel %vm1848, %v1784, %v1912
      %v1977 = vsel %vm1849, %v1785, %v1913
      %v1978 = vsel %vm1850, %v1786, %v1914
      %v1979 = vsel %vm1851, %v1787, %v1915
      %v1980 = vsel %vm1852, %v1788, %v1916
      %v1981 = vsel %vm1853, %v1789, %v1917
      %v1982 = vsel %vm1854, %v1790, %v1918
      %v1983 = vsel %vm1855, %v1791, %v1919
      %v1984 = vsel %vm1856, %v1792, %v1920
      %v1985 = vsel %vm1857, %v1793, %v1921
      %v1986 = vsel %vm1858, %v1794, %v1922
      %v1987 = vsel %vm1859, %v1795, %v1923
      %v1988 = vsel %vm1860, %v1796, %v1924
      %1989 = vst [vmem:[%s170] sm:$0xff] %v1925
      %1990 = vst [vmem:[%s170 + $0x8] sm:$0xff] %v1926
      %1991 = vst [vmem:[%s170 + $0x10] sm:$0xff] %v1927
      %1992 = vst [vmem:[%s170 + $0x18] sm:$0xff] %v1928
      %1993 = vst [vmem:[%s170 + $0x20] sm:$0xff] %v1929
      %1994 = vst [vmem:[%s170 + $0x28] sm:$0xff] %v1930
      %1995 = vst [vmem:[%s170 + $0x30] sm:$0xff] %v1931
      %1996 = vst [vmem:[%s170 + $0x38] sm:$0xff] %v1932
      %1997 = vst [vmem:[%s170 + $0x40] sm:$0xff] %v1933
      %1998 = vst [vmem:[%s170 + $0x48] sm:$0xff] %v1934
      %1999 = vst [vmem:[%s170 + $0x50] sm:$0xff] %v1935
      %2000 = vst [vmem:[%s170 + $0x58] sm:$0xff] %v1936
      %2001 = vst [vmem:[%s170 + $0x60] sm:$0xff] %v1937
      %2002 = vst [vmem:[%s170 + $0x68] sm:$0xff] %v1938
      %2003 = vst [vmem:[%s170 + $0x70] sm:$0xff] %v1939
      %2004 = vst [vmem:[%s170 + $0x78] sm:$0xff] %v1940
      %2005 = vst [vmem:[%s170 + $0x80] sm:$0xff] %v1941
      %2006 = vst [vmem:[%s170 + $0x88] sm:$0xff] %v1942
      %2007 = vst [vmem:[%s170 + $0x90] sm:$0xff] %v1943
      %2008 = vst [vmem:[%s170 + $0x98] sm:$0xff] %v1944
      %2009 = vst [vmem:[%s170 + $0xa0] sm:$0xff] %v1945
      %2010 = vst [vmem:[%s170 + $0xa8] sm:$0xff] %v1946
      %2011 = vst [vmem:[%s170 + $0xb0] sm:$0xff] %v1947
      %2012 = vst [vmem:[%s170 + $0xb8] sm:$0xff] %v1948
      %2013 = vst [vmem:[%s170 + $0xc0] sm:$0xff] %v1949
      %2014 = vst [vmem:[%s170 + $0xc8] sm:$0xff] %v1950
      %2015 = vst [vmem:[%s170 + $0xd0] sm:$0xff] %v1951
      %2016 = vst [vmem:[%s170 + $0xd8] sm:$0xff] %v1952
      %2017 = vst [vmem:[%s170 + $0xe0] sm:$0xff] %v1953
      %2018 = vst [vmem:[%s170 + $0xe8] sm:$0xff] %v1954
      %2019 = vst [vmem:[%s170 + $0xf0] sm:$0xff] %v1955
      %2020 = vst [vmem:[%s170 + $0xf8] sm:$0xff] %v1956
      %2021 = vst [vmem:[%s170 + $0x100] sm:$0xff] %v1957
      %2022 = vst [vmem:[%s170 + $0x108] sm:$0xff] %v1958
      %2023 = vst [vmem:[%s170 + $0x110] sm:$0xff] %v1959
      %2024 = vst [vmem:[%s170 + $0x118] sm:$0xff] %v1960
      %2025 = vst [vmem:[%s170 + $0x120] sm:$0xff] %v1961
      %2026 = vst [vmem:[%s170 + $0x128] sm:$0xff] %v1962
      %2027 = vst [vmem:[%s170 + $0x130] sm:$0xff] %v1963
      %2028 = vst [vmem:[%s170 + $0x138] sm:$0xff] %v1964
      %2029 = vst [vmem:[%s170 + $0x140] sm:$0xff] %v1965
      %2030 = vst [vmem:[%s170 + $0x148] sm:$0xff] %v1966
      %2031 = vst [vmem:[%s170 + $0x150] sm:$0xff] %v1967
      %2032 = vst [vmem:[%s170 + $0x158] sm:$0xff] %v1968
      %2033 = vst [vmem:[%s170 + $0x160] sm:$0xff] %v1969
      %2034 = vst [vmem:[%s170 + $0x168] sm:$0xff] %v1970
      %2035 = vst [vmem:[%s170 + $0x170] sm:$0xff] %v1971
      %2036 = vst [vmem:[%s170 + $0x178] sm:$0xff] %v1972
      %2037 = vst [vmem:[%s170 + $0x180] sm:$0xff] %v1973
      %2038 = vst [vmem:[%s170 + $0x188] sm:$0xff] %v1974
      %2039 = vst [vmem:[%s170 + $0x190] sm:$0xff] %v1975
      %2040 = vst [vmem:[%s170 + $0x198] sm:$0xff] %v1976
      %2041 = vst [vmem:[%s170 + $0x1a0] sm:$0xff] %v1977
      %2042 = vst [vmem:[%s170 + $0x1a8] sm:$0xff] %v1978
      %2043 = vst [vmem:[%s170 + $0x1b0] sm:$0xff] %v1979
      %2044 = vst [vmem:[%s170 + $0x1b8] sm:$0xff] %v1980
      %2045 = vst [vmem:[%s170 + $0x1c0] sm:$0xff] %v1981
      %2046 = vst [vmem:[%s170 + $0x1c8] sm:$0xff] %v1982
      %2047 = vst [vmem:[%s170 + $0x1d0] sm:$0xff] %v1983
      %2048 = vst [vmem:[%s170 + $0x1d8] sm:$0xff] %v1984
      %2049 = vst [vmem:[%s170 + $0x1e0] sm:$0xff] %v1985
      %2050 = vst [vmem:[%s170 + $0x1e8] sm:$0xff] %v1986
      %2051 = vst [vmem:[%s170 + $0x1f0] sm:$0xff] %v1987
      %2052 = vst [vmem:[%s170 + $0x1f8] sm:$0xff] %v1988
      %p2053 = scmp.lt.s32.totalorder %s14, 1
      %s2054 = scalar_select %p2053, %s14, 1
      %s2055 = smul.addr %s2054, 64
      %s2056 = smul.addr %s2055, 8
      %s2057 = scalar_lea.vmem %s3, %s2056
      // Predicated region
      $region33: #{critic_forward.5} parent=31 // pred_check
        %p2058 = pneg %p100
      $region34: #{critic_forward.5} parent=31 // pred_check_branch
        %2060 = sbr.rel (%p2058) target = $region36
      $region35: #{critic_forward.5} parent=31 // pred_region
        _
      $region36: #{critic_forward.5} parent=31 // pred_fallthru
        _
    $region32: #{critic_forward.5} parent=5 // pred_fallthru
      _
    %p2061 = scmp.le.s32.totalorder 2, %s9
    // Predicated region
    $region37: #{critic_forward.5} parent=5 // pred_check
      %p2062 = pneg %p2061
    $region38: #{critic_forward.5} parent=5 // pred_check_branch
      %2064 = sbr.rel (%p2062) target = $region40
    $region39: #{critic_forward.5} parent=5 // pred_region
      %s2065 = ssub.s32 %s9, 2
      // Predicated region
      $region41: #{critic_forward.5} parent=39 // pred_check
        %p2066 = pneg %p106
      $region42: #{critic_forward.5} parent=39 // pred_check_branch
        %2068 = sbr.rel (%p2066) target = $region44
      $region43: #{critic_forward.5} parent=39 // pred_region
        %p2069 = scmp.lt.s32.totalorder %s15, 1
        %s2070 = scalar_select %p2069, %s15, 1
        %s2071 = smul.addr %s2070, 64
        %s2072 = smul.addr %s2071, 8
        %s2073 = scalar_lea.vmem %s3, %s2072
      $region44: #{critic_forward.5} parent=39 // pred_fallthru
        _
    $region40: #{critic_forward.5} parent=5 // pred_fallthru
      _
  $region6: #{critic_forward.5} parent=0 // loop_footer
    %s13 = sadd.s32 1, %s9
  $region7: #{critic_forward.5} parent=0 // loop_footer_branch
    %8 = sbr.rel target = $region3
  $region8: #{critic_forward.5} parent=0 // loop_exit
    _

// kernel: critic_forward.6
$region0: #{critic_forward.6}
  #allocation0 [shape = 'u32[]', space=smem, size = 0x4, offset = 0x4, fixed_abs, tag = 'smem constant byte address 0x4 - core index']
  #allocation1 [shape = 'u32[144,128]{1,0:T(1,128)}', space=vmem, size = 0x12000, scoped, tag = 'internal scratch']
  %s0 = inlined_call_operand.vmem [shape: bf16[2,256,1024], index: 0, kind: input, shape index: {}]
  %s1 = inlined_call_operand.vmem [shape: bf16[32,256], index: 1, kind: input, shape index: {}]
  %s2 = inlined_call_operand.vmem [shape: f32[32,1], index: 2, kind: input, shape index: {}]
  %s3 = inlined_call_operand.vmem [shape: f32[2,32,1024], index: 3, kind: output, shape index: {}]
  %s4 = sld [smem:[#allocation0]]
  $region45: #{critic_forward.6} parent=0
    _
  %s6 = ssub.s32 1, %s4
  %s7 = scalar_select 0, %s6, %s4
  loop: start=0, step=1, limit=4
  $region2: #{critic_forward.6} parent=0 // loop_pre_header
    _
  $region3: #{critic_forward.6} parent=0 // loop_header
    %s9 = sphi 0, %s13
    %p10 = scmp.ge.s32.totalorder %s9, 4
    %s19 = sphi 0, %s21
    %s22 = sphi 0, %s19
    %s23 = sphi 0, %s22
    %s39 = sphi 0, %s23
    %s43 = sphi 0, %s43
    %s45 = sphi 0, %s43
    %s46 = sphi 0, %s45
    %s60 = sphi 0, %s46
    %s64 = sphi 0, %s64
    %s66 = sphi 0, %s64
    %s67 = sphi 0, %s66
    %s81 = sphi 0, %s67
    %s87 = sphi 0, %s89
    %s90 = sphi 0, %s87
    %s91 = sphi 0, %s90
    %s107 = sphi 0, %s91
  $region4: #{critic_forward.6} parent=0 // loop_header_branch
    %12 = sbr.rel (%p10) target = $region8
  $region5: #{critic_forward.6} parent=0 // loop_body
    %s14 = ssub.s32 %s9, 1
    %s15 = ssub.s32 %s9, 2
    %s16 = sadd.s32 %s9, 1
    %s17 = ssub.s32 %s9, %s16
    %p18 = scmp.eq.s32.totalorder %s17, 0
    %s20 = sadd.s32 %s19, 1
    %s21 = scalar_select %p18, %s19, %s20
    %p24 = pneg %p18
    %p25 = scmp.eq.s32.totalorder %s9, 1
    %p26 = por %p24, %p25
    %p27 = scmp.ne.s32.totalorder %s19, %s22
    %p28 = scmp.eq.s32.totalorder %s9, 0
    %p29 = por %p27, %p28
    %p30 = scmp.ne.s32.totalorder %s19, %s22
    %p31 = scmp.eq.s32.totalorder %s14, 1
    %p32 = por %p30, %p31
    %p33 = scmp.ne.s32.totalorder %s22, %s23
    %p34 = scmp.eq.s32.totalorder %s14, 0
    %p35 = por %p33, %p34
    %p36 = scmp.ne.s32.totalorder %s22, %s23
    %p37 = scmp.eq.s32.totalorder %s15, 1
    %p38 = por %p36, %p37
    %p40 = scmp.ne.s32.totalorder %s23, %s39
    %p41 = scmp.eq.s32.totalorder %s15, 0
    %p42 = por %p40, %p41
    %s44 = sadd.s32 %s43, 1
    %p47 = scmp.eq.s32.totalorder %s9, 1
    %p48 = scmp.ne.s32.totalorder %s43, %s45
    %p49 = scmp.eq.s32.totalorder %s9, 0
    %p50 = por %p48, %p49
    %p51 = scmp.ne.s32.totalorder %s43, %s45
    %p52 = scmp.eq.s32.totalorder %s14, 1
    %p53 = por %p51, %p52
    %p54 = scmp.ne.s32.totalorder %s45, %s46
    %p55 = scmp.eq.s32.totalorder %s14, 0
    %p56 = por %p54, %p55
    %p57 = scmp.ne.s32.totalorder %s45, %s46
    %p58 = scmp.eq.s32.totalorder %s15, 1
    %p59 = por %p57, %p58
    %p61 = scmp.ne.s32.totalorder %s46, %s60
    %p62 = scmp.eq.s32.totalorder %s15, 0
    %p63 = por %p61, %p62
    %s65 = sadd.s32 %s64, 1
    %p68 = scmp.eq.s32.totalorder %s9, 1
    %p69 = scmp.ne.s32.totalorder %s64, %s66
    %p70 = scmp.eq.s32.totalorder %s9, 0
    %p71 = por %p69, %p70
    %p72 = scmp.ne.s32.totalorder %s64, %s66
    %p73 = scmp.eq.s32.totalorder %s14, 1
    %p74 = por %p72, %p73
    %p75 = scmp.ne.s32.totalorder %s66, %s67
    %p76 = scmp.eq.s32.totalorder %s14, 0
    %p77 = por %p75, %p76
    %p78 = scmp.ne.s32.totalorder %s66, %s67
    %p79 = scmp.eq.s32.totalorder %s15, 1
    %p80 = por %p78, %p79
    %p82 = scmp.ne.s32.totalorder %s67, %s81
    %p83 = scmp.eq.s32.totalorder %s15, 0
    %p84 = por %p82, %p83
    %s85 = ssub.s32 %s9, %s16
    %p86 = scmp.eq.s32.totalorder %s85, 0
    %s88 = sadd.s32 %s87, 1
    %s89 = scalar_select %p86, %s87, %s88
    %p92 = pneg %p86
    %p93 = scmp.eq.s32.totalorder %s9, 1
    %p94 = por %p92, %p93
    %p95 = scmp.ne.s32.totalorder %s87, %s90
    %p96 = scmp.eq.s32.totalorder %s9, 0
    %p97 = por %p95, %p96
    %p98 = scmp.ne.s32.totalorder %s87, %s90
    %p99 = scmp.eq.s32.totalorder %s14, 1
    %p100 = por %p98, %p99
    %p101 = scmp.ne.s32.totalorder %s90, %s91
    %p102 = scmp.eq.s32.totalorder %s14, 0
    %p103 = por %p101, %p102
    %p104 = scmp.ne.s32.totalorder %s90, %s91
    %p105 = scmp.eq.s32.totalorder %s15, 1
    %p106 = por %p104, %p105
    %p108 = scmp.ne.s32.totalorder %s91, %s107
    %p109 = scmp.eq.s32.totalorder %s15, 0
    %p110 = por %p108, %p109
    %p111 = scmp.le.s32.totalorder 1, %s9
    %p112 = scmp.lt.s32.totalorder %s9, 3
    %p113 = pnand %p111, %p112
    %p114 = pneg %p113
    // Predicated region
    $region9: #{critic_forward.6} parent=5 // pred_check
      _
    $region10: #{critic_forward.6} parent=5 // pred_check_branch
      %116 = sbr.rel (%p113) target = $region12
    $region11: #{critic_forward.6} parent=5 // pred_region
      %s117 = ssub.s32 %s9, 1
      // Predicated region
      $region13: #{critic_forward.6} parent=11 // pred_check
        %p118 = pneg %p56
      $region14: #{critic_forward.6} parent=11 // pred_check_branch
        %120 = sbr.rel (%p118) target = $region16
      $region15: #{critic_forward.6} parent=11 // pred_region
        _
      $region16: #{critic_forward.6} parent=11 // pred_fallthru
        _
      // Predicated region
      $region17: #{critic_forward.6} parent=11 // pred_check
        %p121 = pneg %p77
      $region18: #{critic_forward.6} parent=11 // pred_check_branch
        %123 = sbr.rel (%p121) target = $region20
      $region19: #{critic_forward.6} parent=11 // pred_region
        _
      $region20: #{critic_forward.6} parent=11 // pred_fallthru
        _
    $region12: #{critic_forward.6} parent=5 // pred_fallthru
      _
    %p124 = scmp.lt.s32.totalorder %s9, 2
    // Predicated region
    $region21: #{critic_forward.6} parent=5 // pred_check
      %p125 = pneg %p124
    $region22: #{critic_forward.6} parent=5 // pred_check_branch
      %127 = sbr.rel (%p125) target = $region24
    $region23: #{critic_forward.6} parent=5 // pred_region
      // Predicated region
      $region25: #{critic_forward.6} parent=23 // pred_check
        %p128 = pneg %p29
      $region26: #{critic_forward.6} parent=23 // pred_check_branch
        %130 = sbr.rel (%p128) target = $region28
      $region27: #{critic_forward.6} parent=23 // pred_region
        %p131 = scmp.lt.s32.totalorder %s9, 1
        %s132 = scalar_select %p131, %s9, 1
        %s133 = smul.addr %s132, 256
        %s134 = smul.addr %s133, 4
        %s135 = scalar_lea.vmem %s0, %s134
      $region28: #{critic_forward.6} parent=23 // pred_fallthru
        _
    $region24: #{critic_forward.6} parent=5 // pred_fallthru
      _
    %p136 = scmp.le.s32.totalorder 1, %s9
    %p137 = scmp.lt.s32.totalorder %s9, 3
    %p138 = pnand %p136, %p137
    %p139 = pneg %p138
    // Predicated region
    $region29: #{critic_forward.6} parent=5 // pred_check
      _
    $region30: #{critic_forward.6} parent=5 // pred_check_branch
      %141 = sbr.rel (%p138) target = $region32
    $region31: #{critic_forward.6} parent=5 // pred_region
      %s142 = ssub.s32 %s9, 1
      %p143 = scmp.lt.s32.totalorder %s14, 1
      %s144 = scalar_select %p143, %s14, 1
      %s145 = smul.addr %s144, 256
      %s146 = smul.addr %s145, 4
      %s147 = scalar_lea.vmem %s0, %s146
      %p148 = pneg %p35
      %p149 = pneg %p32
      %p150 = pneg %p56
      %p151 = pneg %p53
      %p152 = pneg %p77
      %p153 = pneg %p74
      %p154 = pneg %p103
      %p155 = pneg %p100
      %p156 = scmp.lt.s32.totalorder %s14, 1
      %s157 = scalar_select %p156, %s14, 1
      %s158 = smul.addr %s157, 32
      %s159 = smul.addr %s158, 8
      %s160 = scalar_lea.vmem %s3, %s159
      %p161 = scmp.lt.s32.totalorder %s14, 1
      %s162 = scalar_select %p161, %s14, 1
      %s163 = smul.addr %s162, 256
      %s164 = smul.addr %s163, 4
      %s165 = scalar_lea.vmem %s0, %s164
      %p166 = scmp.lt.s32.totalorder %s14, 1
      %s167 = scalar_select %p166, %s14, 1
      %s168 = smul.addr %s167, 32
      %s169 = smul.addr %s168, 8
      %s170 = scalar_lea.vmem %s3, %s169
      %v171 = vld [vmem:[%s1] sm:$0xff]
      %v172 = vld [vmem:[%s1 + $0x8] sm:$0xff]
      %v173 = vld [vmem:[%s1 + $0x10] sm:$0xff]
      %v174 = vld [vmem:[%s1 + $0x18] sm:$0xff]
      %v175 = vld [vmem:[%s165] sm:$0xff]
      %v176 = vld [vmem:[%s165 + $0x8] sm:$0xff]
      %v177 = vld [vmem:[%s165 + $0x10] sm:$0xff]
      %v178 = vld [vmem:[%s165 + $0x18] sm:$0xff]
      %v179 = vld [vmem:[%s165 + $0x20] sm:$0xff]
      %v180 = vld [vmem:[%s165 + $0x28] sm:$0xff]
      %v181 = vld [vmem:[%s165 + $0x30] sm:$0xff]
      %v182 = vld [vmem:[%s165 + $0x38] sm:$0xff]
      %v183 = vld [vmem:[%s165 + $0x40] sm:$0xff]
      %v184 = vld [vmem:[%s165 + $0x48] sm:$0xff]
      %v185 = vld [vmem:[%s165 + $0x50] sm:$0xff]
      %v186 = vld [vmem:[%s165 + $0x58] sm:$0xff]
      %v187 = vld [vmem:[%s165 + $0x60] sm:$0xff]
      %v188 = vld [vmem:[%s165 + $0x68] sm:$0xff]
      %v189 = vld [vmem:[%s165 + $0x70] sm:$0xff]
      %v190 = vld [vmem:[%s165 + $0x78] sm:$0xff]
      %v191 = vld [vmem:[%s165 + $0x80] sm:$0xff]
      %v192 = vld [vmem:[%s165 + $0x88] sm:$0xff]
      %v193 = vld [vmem:[%s165 + $0x90] sm:$0xff]
      %v194 = vld [vmem:[%s165 + $0x98] sm:$0xff]
      %v195 = vld [vmem:[%s165 + $0xa0] sm:$0xff]
      %v196 = vld [vmem:[%s165 + $0xa8] sm:$0xff]
      %v197 = vld [vmem:[%s165 + $0xb0] sm:$0xff]
      %v198 = vld [vmem:[%s165 + $0xb8] sm:$0xff]
      %v199 = vld [vmem:[%s165 + $0xc0] sm:$0xff]
      %v200 = vld [vmem:[%s165 + $0xc8] sm:$0xff]
      %v201 = vld [vmem:[%s165 + $0xd0] sm:$0xff]
      %v202 = vld [vmem:[%s165 + $0xd8] sm:$0xff]
      %v203 = vld [vmem:[%s165 + $0xe0] sm:$0xff]
      %v204 = vld [vmem:[%s165 + $0xe8] sm:$0xff]
      %v205 = vld [vmem:[%s165 + $0xf0] sm:$0xff]
      %v206 = vld [vmem:[%s165 + $0xf8] sm:$0xff]
      %v207 = vld [vmem:[%s165 + $0x100] sm:$0xff]
      %v208 = vld [vmem:[%s165 + $0x108] sm:$0xff]
      %v209 = vld [vmem:[%s165 + $0x110] sm:$0xff]
      %v210 = vld [vmem:[%s165 + $0x118] sm:$0xff]
      %v211 = vld [vmem:[%s165 + $0x120] sm:$0xff]
      %v212 = vld [vmem:[%s165 + $0x128] sm:$0xff]
      %v213 = vld [vmem:[%s165 + $0x130] sm:$0xff]
      %v214 = vld [vmem:[%s165 + $0x138] sm:$0xff]
      %v215 = vld [vmem:[%s165 + $0x140] sm:$0xff]
      %v216 = vld [vmem:[%s165 + $0x148] sm:$0xff]
      %v217 = vld [vmem:[%s165 + $0x150] sm:$0xff]
      %v218 = vld [vmem:[%s165 + $0x158] sm:$0xff]
      %v219 = vld [vmem:[%s165 + $0x160] sm:$0xff]
      %v220 = vld [vmem:[%s165 + $0x168] sm:$0xff]
      %v221 = vld [vmem:[%s165 + $0x170] sm:$0xff]
      %v222 = vld [vmem:[%s165 + $0x178] sm:$0xff]
      %v223 = vld [vmem:[%s165 + $0x180] sm:$0xff]
      %v224 = vld [vmem:[%s165 + $0x188] sm:$0xff]
      %v225 = vld [vmem:[%s165 + $0x190] sm:$0xff]
      %v226 = vld [vmem:[%s165 + $0x198] sm:$0xff]
      %v227 = vld [vmem:[%s165 + $0x1a0] sm:$0xff]
      %v228 = vld [vmem:[%s165 + $0x1a8] sm:$0xff]
      %v229 = vld [vmem:[%s165 + $0x1b0] sm:$0xff]
      %v230 = vld [vmem:[%s165 + $0x1b8] sm:$0xff]
      %v231 = vld [vmem:[%s165 + $0x1c0] sm:$0xff]
      %v232 = vld [vmem:[%s165 + $0x1c8] sm:$0xff]
      %v233 = vld [vmem:[%s165 + $0x1d0] sm:$0xff]
      %v234 = vld [vmem:[%s165 + $0x1d8] sm:$0xff]
      %v235 = vld [vmem:[%s165 + $0x1e0] sm:$0xff]
      %v236 = vld [vmem:[%s165 + $0x1e8] sm:$0xff]
      %v237 = vld [vmem:[%s165 + $0x1f0] sm:$0xff]
      %v238 = vld [vmem:[%s165 + $0x1f8] sm:$0xff]
      %v239 = vld [vmem:[%s165 + $0x200] sm:$0xff]
      %v240 = vld [vmem:[%s165 + $0x208] sm:$0xff]
      %v241 = vld [vmem:[%s165 + $0x210] sm:$0xff]
      %v242 = vld [vmem:[%s165 + $0x218] sm:$0xff]
      %v243 = vld [vmem:[%s165 + $0x220] sm:$0xff]
      %v244 = vld [vmem:[%s165 + $0x228] sm:$0xff]
      %v245 = vld [vmem:[%s165 + $0x230] sm:$0xff]
      %v246 = vld [vmem:[%s165 + $0x238] sm:$0xff]
      %v247 = vld [vmem:[%s165 + $0x240] sm:$0xff]
      %v248 = vld [vmem:[%s165 + $0x248] sm:$0xff]
      %v249 = vld [vmem:[%s165 + $0x250] sm:$0xff]
      %v250 = vld [vmem:[%s165 + $0x258] sm:$0xff]
      %v251 = vld [vmem:[%s165 + $0x260] sm:$0xff]
      %v252 = vld [vmem:[%s165 + $0x268] sm:$0xff]
      %v253 = vld [vmem:[%s165 + $0x270] sm:$0xff]
      %v254 = vld [vmem:[%s165 + $0x278] sm:$0xff]
      %v255 = vld [vmem:[%s165 + $0x280] sm:$0xff]
      %v256 = vld [vmem:[%s165 + $0x288] sm:$0xff]
      %v257 = vld [vmem:[%s165 + $0x290] sm:$0xff]
      %v258 = vld [vmem:[%s165 + $0x298] sm:$0xff]
      %v259 = vld [vmem:[%s165 + $0x2a0] sm:$0xff]
      %v260 = vld [vmem:[%s165 + $0x2a8] sm:$0xff]
      %v261 = vld [vmem:[%s165 + $0x2b0] sm:$0xff]
      %v262 = vld [vmem:[%s165 + $0x2b8] sm:$0xff]
      %v263 = vld [vmem:[%s165 + $0x2c0] sm:$0xff]
      %v264 = vld [vmem:[%s165 + $0x2c8] sm:$0xff]
      %v265 = vld [vmem:[%s165 + $0x2d0] sm:$0xff]
      %v266 = vld [vmem:[%s165 + $0x2d8] sm:$0xff]
      %v267 = vld [vmem:[%s165 + $0x2e0] sm:$0xff]
      %v268 = vld [vmem:[%s165 + $0x2e8] sm:$0xff]
      %v269 = vld [vmem:[%s165 + $0x2f0] sm:$0xff]
      %v270 = vld [vmem:[%s165 + $0x2f8] sm:$0xff]
      %v271 = vld [vmem:[%s165 + $0x300] sm:$0xff]
      %v272 = vld [vmem:[%s165 + $0x308] sm:$0xff]
      %v273 = vld [vmem:[%s165 + $0x310] sm:$0xff]
      %v274 = vld [vmem:[%s165 + $0x318] sm:$0xff]
      %v275 = vld [vmem:[%s165 + $0x320] sm:$0xff]
      %v276 = vld [vmem:[%s165 + $0x328] sm:$0xff]
      %v277 = vld [vmem:[%s165 + $0x330] sm:$0xff]
      %v278 = vld [vmem:[%s165 + $0x338] sm:$0xff]
      %v279 = vld [vmem:[%s165 + $0x340] sm:$0xff]
      %v280 = vld [vmem:[%s165 + $0x348] sm:$0xff]
      %v281 = vld [vmem:[%s165 + $0x350] sm:$0xff]
      %v282 = vld [vmem:[%s165 + $0x358] sm:$0xff]
      %v283 = vld [vmem:[%s165 + $0x360] sm:$0xff]
      %v284 = vld [vmem:[%s165 + $0x368] sm:$0xff]
      %v285 = vld [vmem:[%s165 + $0x370] sm:$0xff]
      %v286 = vld [vmem:[%s165 + $0x378] sm:$0xff]
      %v287 = vld [vmem:[%s165 + $0x380] sm:$0xff]
      %v288 = vld [vmem:[%s165 + $0x388] sm:$0xff]
      %v289 = vld [vmem:[%s165 + $0x390] sm:$0xff]
      %v290 = vld [vmem:[%s165 + $0x398] sm:$0xff]
      %v291 = vld [vmem:[%s165 + $0x3a0] sm:$0xff]
      %v292 = vld [vmem:[%s165 + $0x3a8] sm:$0xff]
      %v293 = vld [vmem:[%s165 + $0x3b0] sm:$0xff]
      %v294 = vld [vmem:[%s165 + $0x3b8] sm:$0xff]
      %v295 = vld [vmem:[%s165 + $0x3c0] sm:$0xff]
      %v296 = vld [vmem:[%s165 + $0x3c8] sm:$0xff]
      %v297 = vld [vmem:[%s165 + $0x3d0] sm:$0xff]
      %v298 = vld [vmem:[%s165 + $0x3d8] sm:$0xff]
      %v299 = vld [vmem:[%s165 + $0x3e0] sm:$0xff]
      %v300 = vld [vmem:[%s165 + $0x3e8] sm:$0xff]
      %v301 = vld [vmem:[%s165 + $0x3f0] sm:$0xff]
      %v302 = vld [vmem:[%s165 + $0x3f8] sm:$0xff]
      %v303 = vld [vmem:[%s2] sm:$0xff]
      %v304 = vld [vmem:[%s2 + $0x8] sm:$0xff]
      %v305 = vld [vmem:[%s2 + $0x10] sm:$0xff]
      %v306 = vld [vmem:[%s2 + $0x18] sm:$0xff]
      %308 = vset.pattern.permute.xlu0 0
      %309 = vperm.xlu0 %308, %v303
      %v310 = vpop.permute.xlu0 %309
      %313 = vset.pattern.permute.xlu0 0
      %314 = vperm.xlu0 %313, %v304
      %v315 = vpop.permute.xlu0 %314
      %318 = vset.pattern.permute.xlu0 0
      %319 = vperm.xlu0 %318, %v305
      %v320 = vpop.permute.xlu0 %319
      %323 = vset.pattern.permute.xlu0 0
      %324 = vperm.xlu0 %323, %v306
      %v325 = vpop.permute.xlu0 %324
      %v331 = vunpack.c.l.b16 %v171
      %v332 = vunpack.c.h.b16 %v171
      %v333 = vunpack.c.l.b16 %v172
      %v334 = vunpack.c.h.b16 %v172
      %v335 = vunpack.c.l.b16 %v173
      %v336 = vunpack.c.h.b16 %v173
      %v337 = vunpack.c.l.b16 %v174
      %v338 = vunpack.c.h.b16 %v174
      %v339 = vpack.c.b16 %v333, %v331
      %v340 = vpack.c.b16 %v334, %v332
      %v341 = vpack.c.b16 %v337, %v335
      %v342 = vpack.c.b16 %v338, %v336
      %v475 = vunpack.c.l.b16 %v175
      %v476 = vunpack.c.h.b16 %v175
      %v477 = vunpack.c.l.b16 %v176
      %v478 = vunpack.c.h.b16 %v176
      %v479 = vunpack.c.l.b16 %v177
      %v480 = vunpack.c.h.b16 %v177
      %v481 = vunpack.c.l.b16 %v178
      %v482 = vunpack.c.h.b16 %v178
      %v483 = vunpack.c.l.b16 %v179
      %v484 = vunpack.c.h.b16 %v179
      %v485 = vunpack.c.l.b16 %v180
      %v486 = vunpack.c.h.b16 %v180
      %v487 = vunpack.c.l.b16 %v181
      %v488 = vunpack.c.h.b16 %v181
      %v489 = vunpack.c.l.b16 %v182
      %v490 = vunpack.c.h.b16 %v182
      %v491 = vunpack.c.l.b16 %v183
      %v492 = vunpack.c.h.b16 %v183
      %v493 = vunpack.c.l.b16 %v184
      %v494 = vunpack.c.h.b16 %v184
      %v495 = vunpack.c.l.b16 %v185
      %v496 = vunpack.c.h.b16 %v185
      %v497 = vunpack.c.l.b16 %v186
      %v498 = vunpack.c.h.b16 %v186
      %v499 = vunpack.c.l.b16 %v187
      %v500 = vunpack.c.h.b16 %v187
      %v501 = vunpack.c.l.b16 %v188
      %v502 = vunpack.c.h.b16 %v188
      %v503 = vunpack.c.l.b16 %v189
      %v504 = vunpack.c.h.b16 %v189
      %v505 = vunpack.c.l.b16 %v190
      %v506 = vunpack.c.h.b16 %v190
      %v507 = vunpack.c.l.b16 %v191
      %v508 = vunpack.c.h.b16 %v191
      %v509 = vunpack.c.l.b16 %v192
      %v510 = vunpack.c.h.b16 %v192
      %v511 = vunpack.c.l.b16 %v193
      %v512 = vunpack.c.h.b16 %v193
      %v513 = vunpack.c.l.b16 %v194
      %v514 = vunpack.c.h.b16 %v194
      %v515 = vunpack.c.l.b16 %v195
      %v516 = vunpack.c.h.b16 %v195
      %v517 = vunpack.c.l.b16 %v196
      %v518 = vunpack.c.h.b16 %v196
      %v519 = vunpack.c.l.b16 %v197
      %v520 = vunpack.c.h.b16 %v197
      %v521 = vunpack.c.l.b16 %v198
      %v522 = vunpack.c.h.b16 %v198
      %v523 = vunpack.c.l.b16 %v199
      %v524 = vunpack.c.h.b16 %v199
      %v525 = vunpack.c.l.b16 %v200
      %v526 = vunpack.c.h.b16 %v200
      %v527 = vunpack.c.l.b16 %v201
      %v528 = vunpack.c.h.b16 %v201
      %v529 = vunpack.c.l.b16 %v202
      %v530 = vunpack.c.h.b16 %v202
      %v531 = vunpack.c.l.b16 %v203
      %v532 = vunpack.c.h.b16 %v203
      %v533 = vunpack.c.l.b16 %v204
      %v534 = vunpack.c.h.b16 %v204
      %v535 = vunpack.c.l.b16 %v205
      %v536 = vunpack.c.h.b16 %v205
      %v537 = vunpack.c.l.b16 %v206
      %v538 = vunpack.c.h.b16 %v206
      %v539 = vunpack.c.l.b16 %v207
      %v540 = vunpack.c.h.b16 %v207
      %v541 = vunpack.c.l.b16 %v208
      %v542 = vunpack.c.h.b16 %v208
      %v543 = vunpack.c.l.b16 %v209
      %v544 = vunpack.c.h.b16 %v209
      %v545 = vunpack.c.l.b16 %v210
      %v546 = vunpack.c.h.b16 %v210
      %v547 = vunpack.c.l.b16 %v211
      %v548 = vunpack.c.h.b16 %v211
      %v549 = vunpack.c.l.b16 %v212
      %v550 = vunpack.c.h.b16 %v212
      %v551 = vunpack.c.l.b16 %v213
      %v552 = vunpack.c.h.b16 %v213
      %v553 = vunpack.c.l.b16 %v214
      %v554 = vunpack.c.h.b16 %v214
      %v555 = vunpack.c.l.b16 %v215
      %v556 = vunpack.c.h.b16 %v215
      %v557 = vunpack.c.l.b16 %v216
      %v558 = vunpack.c.h.b16 %v216
      %v559 = vunpack.c.l.b16 %v217
      %v560 = vunpack.c.h.b16 %v217
      %v561 = vunpack.c.l.b16 %v218
      %v562 = vunpack.c.h.b16 %v218
      %v563 = vunpack.c.l.b16 %v219
      %v564 = vunpack.c.h.b16 %v219
      %v565 = vunpack.c.l.b16 %v220
      %v566 = vunpack.c.h.b16 %v220
      %v567 = vunpack.c.l.b16 %v221
      %v568 = vunpack.c.h.b16 %v221
      %v569 = vunpack.c.l.b16 %v222
      %v570 = vunpack.c.h.b16 %v222
      %v571 = vunpack.c.l.b16 %v223
      %v572 = vunpack.c.h.b16 %v223
      %v573 = vunpack.c.l.b16 %v224
      %v574 = vunpack.c.h.b16 %v224
      %v575 = vunpack.c.l.b16 %v225
      %v576 = vunpack.c.h.b16 %v225
      %v577 = vunpack.c.l.b16 %v226
      %v578 = vunpack.c.h.b16 %v226
      %v579 = vunpack.c.l.b16 %v227
      %v580 = vunpack.c.h.b16 %v227
      %v581 = vunpack.c.l.b16 %v228
      %v582 = vunpack.c.h.b16 %v228
      %v583 = vunpack.c.l.b16 %v229
      %v584 = vunpack.c.h.b16 %v229
      %v585 = vunpack.c.l.b16 %v230
      %v586 = vunpack.c.h.b16 %v230
      %v587 = vunpack.c.l.b16 %v231
      %v588 = vunpack.c.h.b16 %v231
      %v589 = vunpack.c.l.b16 %v232
      %v590 = vunpack.c.h.b16 %v232
      %v591 = vunpack.c.l.b16 %v233
      %v592 = vunpack.c.h.b16 %v233
      %v593 = vunpack.c.l.b16 %v234
      %v594 = vunpack.c.h.b16 %v234
      %v595 = vunpack.c.l.b16 %v235
      %v596 = vunpack.c.h.b16 %v235
      %v597 = vunpack.c.l.b16 %v236
      %v598 = vunpack.c.h.b16 %v236
      %v599 = vunpack.c.l.b16 %v237
      %v600 = vunpack.c.h.b16 %v237
      %v601 = vunpack.c.l.b16 %v238
      %v602 = vunpack.c.h.b16 %v238
      %v603 = vunpack.c.l.b16 %v239
      %v604 = vunpack.c.h.b16 %v239
      %v605 = vunpack.c.l.b16 %v240
      %v606 = vunpack.c.h.b16 %v240
      %v607 = vunpack.c.l.b16 %v241
      %v608 = vunpack.c.h.b16 %v241
      %v609 = vunpack.c.l.b16 %v242
      %v610 = vunpack.c.h.b16 %v242
      %v611 = vunpack.c.l.b16 %v243
      %v612 = vunpack.c.h.b16 %v243
      %v613 = vunpack.c.l.b16 %v244
      %v614 = vunpack.c.h.b16 %v244
      %v615 = vunpack.c.l.b16 %v245
      %v616 = vunpack.c.h.b16 %v245
      %v617 = vunpack.c.l.b16 %v246
      %v618 = vunpack.c.h.b16 %v246
      %v619 = vunpack.c.l.b16 %v247
      %v620 = vunpack.c.h.b16 %v247
      %v621 = vunpack.c.l.b16 %v248
      %v622 = vunpack.c.h.b16 %v248
      %v623 = vunpack.c.l.b16 %v249
      %v624 = vunpack.c.h.b16 %v249
      %v625 = vunpack.c.l.b16 %v250
      %v626 = vunpack.c.h.b16 %v250
      %v627 = vunpack.c.l.b16 %v251
      %v628 = vunpack.c.h.b16 %v251
      %v629 = vunpack.c.l.b16 %v252
      %v630 = vunpack.c.h.b16 %v252
      %v631 = vunpack.c.l.b16 %v253
      %v632 = vunpack.c.h.b16 %v253
      %v633 = vunpack.c.l.b16 %v254
      %v634 = vunpack.c.h.b16 %v254
      %v635 = vunpack.c.l.b16 %v255
      %v636 = vunpack.c.h.b16 %v255
      %v637 = vunpack.c.l.b16 %v256
      %v638 = vunpack.c.h.b16 %v256
      %v639 = vunpack.c.l.b16 %v257
      %v640 = vunpack.c.h.b16 %v257
      %v641 = vunpack.c.l.b16 %v258
      %v642 = vunpack.c.h.b16 %v258
      %v643 = vunpack.c.l.b16 %v259
      %v644 = vunpack.c.h.b16 %v259
      %v645 = vunpack.c.l.b16 %v260
      %v646 = vunpack.c.h.b16 %v260
      %v647 = vunpack.c.l.b16 %v261
      %v648 = vunpack.c.h.b16 %v261
      %v649 = vunpack.c.l.b16 %v262
      %v650 = vunpack.c.h.b16 %v262
      %v651 = vunpack.c.l.b16 %v263
      %v652 = vunpack.c.h.b16 %v263
      %v653 = vunpack.c.l.b16 %v264
      %v654 = vunpack.c.h.b16 %v264
      %v655 = vunpack.c.l.b16 %v265
      %v656 = vunpack.c.h.b16 %v265
      %v657 = vunpack.c.l.b16 %v266
      %v658 = vunpack.c.h.b16 %v266
      %v659 = vunpack.c.l.b16 %v267
      %v660 = vunpack.c.h.b16 %v267
      %v661 = vunpack.c.l.b16 %v268
      %v662 = vunpack.c.h.b16 %v268
      %v663 = vunpack.c.l.b16 %v269
      %v664 = vunpack.c.h.b16 %v269
      %v665 = vunpack.c.l.b16 %v270
      %v666 = vunpack.c.h.b16 %v270
      %v667 = vunpack.c.l.b16 %v271
      %v668 = vunpack.c.h.b16 %v271
      %v669 = vunpack.c.l.b16 %v272
      %v670 = vunpack.c.h.b16 %v272
      %v671 = vunpack.c.l.b16 %v273
      %v672 = vunpack.c.h.b16 %v273
      %v673 = vunpack.c.l.b16 %v274
      %v674 = vunpack.c.h.b16 %v274
      %v675 = vunpack.c.l.b16 %v275
      %v676 = vunpack.c.h.b16 %v275
      %v677 = vunpack.c.l.b16 %v276
      %v678 = vunpack.c.h.b16 %v276
      %v679 = vunpack.c.l.b16 %v277
      %v680 = vunpack.c.h.b16 %v277
      %v681 = vunpack.c.l.b16 %v278
      %v682 = vunpack.c.h.b16 %v278
      %v683 = vunpack.c.l.b16 %v279
      %v684 = vunpack.c.h.b16 %v279
      %v685 = vunpack.c.l.b16 %v280
      %v686 = vunpack.c.h.b16 %v280
      %v687 = vunpack.c.l.b16 %v281
      %v688 = vunpack.c.h.b16 %v281
      %v689 = vunpack.c.l.b16 %v282
      %v690 = vunpack.c.h.b16 %v282
      %v691 = vunpack.c.l.b16 %v283
      %v692 = vunpack.c.h.b16 %v283
      %v693 = vunpack.c.l.b16 %v284
      %v694 = vunpack.c.h.b16 %v284
      %v695 = vunpack.c.l.b16 %v285
      %v696 = vunpack.c.h.b16 %v285
      %v697 = vunpack.c.l.b16 %v286
      %v698 = vunpack.c.h.b16 %v286
      %v699 = vunpack.c.l.b16 %v287
      %v700 = vunpack.c.h.b16 %v287
      %v701 = vunpack.c.l.b16 %v288
      %v702 = vunpack.c.h.b16 %v288
      %v703 = vunpack.c.l.b16 %v289
      %v704 = vunpack.c.h.b16 %v289
      %v705 = vunpack.c.l.b16 %v290
      %v706 = vunpack.c.h.b16 %v290
      %v707 = vunpack.c.l.b16 %v291
      %v708 = vunpack.c.h.b16 %v291
      %v709 = vunpack.c.l.b16 %v292
      %v710 = vunpack.c.h.b16 %v292
      %v711 = vunpack.c.l.b16 %v293
      %v712 = vunpack.c.h.b16 %v293
      %v713 = vunpack.c.l.b16 %v294
      %v714 = vunpack.c.h.b16 %v294
      %v715 = vunpack.c.l.b16 %v295
      %v716 = vunpack.c.h.b16 %v295
      %v717 = vunpack.c.l.b16 %v296
      %v718 = vunpack.c.h.b16 %v296
      %v719 = vunpack.c.l.b16 %v297
      %v720 = vunpack.c.h.b16 %v297
      %v721 = vunpack.c.l.b16 %v298
      %v722 = vunpack.c.h.b16 %v298
      %v723 = vunpack.c.l.b16 %v299
      %v724 = vunpack.c.h.b16 %v299
      %v725 = vunpack.c.l.b16 %v300
      %v726 = vunpack.c.h.b16 %v300
      %v727 = vunpack.c.l.b16 %v301
      %v728 = vunpack.c.h.b16 %v301
      %v729 = vunpack.c.l.b16 %v302
      %v730 = vunpack.c.h.b16 %v302
      %v731 = vpack.c.b16 %v483, %v475
      %v732 = vpack.c.b16 %v484, %v476
      %v733 = vpack.c.b16 %v485, %v477
      %v734 = vpack.c.b16 %v486, %v478
      %v735 = vpack.c.b16 %v487, %v479
      %v736 = vpack.c.b16 %v488, %v480
      %v737 = vpack.c.b16 %v489, %v481
      %v738 = vpack.c.b16 %v490, %v482
      %v739 = vpack.c.b16 %v499, %v491
      %v740 = vpack.c.b16 %v500, %v492
      %v741 = vpack.c.b16 %v501, %v493
      %v742 = vpack.c.b16 %v502, %v494
      %v743 = vpack.c.b16 %v503, %v495
      %v744 = vpack.c.b16 %v504, %v496
      %v745 = vpack.c.b16 %v505, %v497
      %v746 = vpack.c.b16 %v506, %v498
      %v747 = vpack.c.b16 %v515, %v507
      %v748 = vpack.c.b16 %v516, %v508
      %v749 = vpack.c.b16 %v517, %v509
      %v750 = vpack.c.b16 %v518, %v510
      %v751 = vpack.c.b16 %v519, %v511
      %v752 = vpack.c.b16 %v520, %v512
      %v753 = vpack.c.b16 %v521, %v513
      %v754 = vpack.c.b16 %v522, %v514
      %v755 = vpack.c.b16 %v531, %v523
      %v756 = vpack.c.b16 %v532, %v524
      %v757 = vpack.c.b16 %v533, %v525
      %v758 = vpack.c.b16 %v534, %v526
      %v759 = vpack.c.b16 %v535, %v527
      %v760 = vpack.c.b16 %v536, %v528
      %v761 = vpack.c.b16 %v537, %v529
      %v762 = vpack.c.b16 %v538, %v530
      %v763 = vpack.c.b16 %v547, %v539
      %v764 = vpack.c.b16 %v548, %v540
      %v765 = vpack.c.b16 %v549, %v541
      %v766 = vpack.c.b16 %v550, %v542
      %v767 = vpack.c.b16 %v551, %v543
      %v768 = vpack.c.b16 %v552, %v544
      %v769 = vpack.c.b16 %v553, %v545
      %v770 = vpack.c.b16 %v554, %v546
      %v771 = vpack.c.b16 %v563, %v555
      %v772 = vpack.c.b16 %v564, %v556
      %v773 = vpack.c.b16 %v565, %v557
      %v774 = vpack.c.b16 %v566, %v558
      %v775 = vpack.c.b16 %v567, %v559
      %v776 = vpack.c.b16 %v568, %v560
      %v777 = vpack.c.b16 %v569, %v561
      %v778 = vpack.c.b16 %v570, %v562
      %v779 = vpack.c.b16 %v579, %v571
      %v780 = vpack.c.b16 %v580, %v572
      %v781 = vpack.c.b16 %v581, %v573
      %v782 = vpack.c.b16 %v582, %v574
      %v783 = vpack.c.b16 %v583, %v575
      %v784 = vpack.c.b16 %v584, %v576
      %v785 = vpack.c.b16 %v585, %v577
      %v786 = vpack.c.b16 %v586, %v578
      %v787 = vpack.c.b16 %v595, %v587
      %v788 = vpack.c.b16 %v596, %v588
      %v789 = vpack.c.b16 %v597, %v589
      %v790 = vpack.c.b16 %v598, %v590
      %v791 = vpack.c.b16 %v599, %v591
      %v792 = vpack.c.b16 %v600, %v592
      %v793 = vpack.c.b16 %v601, %v593
      %v794 = vpack.c.b16 %v602, %v594
      %v795 = vpack.c.b16 %v611, %v603
      %v796 = vpack.c.b16 %v612, %v604
      %v797 = vpack.c.b16 %v613, %v605
      %v798 = vpack.c.b16 %v614, %v606
      %v799 = vpack.c.b16 %v615, %v607
      %v800 = vpack.c.b16 %v616, %v608
      %v801 = vpack.c.b16 %v617, %v609
      %v802 = vpack.c.b16 %v618, %v610
      %v803 = vpack.c.b16 %v627, %v619
      %v804 = vpack.c.b16 %v628, %v620
      %v805 = vpack.c.b16 %v629, %v621
      %v806 = vpack.c.b16 %v630, %v622
      %v807 = vpack.c.b16 %v631, %v623
      %v808 = vpack.c.b16 %v632, %v624
      %v809 = vpack.c.b16 %v633, %v625
      %v810 = vpack.c.b16 %v634, %v626
      %v811 = vpack.c.b16 %v643, %v635
      %v812 = vpack.c.b16 %v644, %v636
      %v813 = vpack.c.b16 %v645, %v637
      %v814 = vpack.c.b16 %v646, %v638
      %v815 = vpack.c.b16 %v647, %v639
      %v816 = vpack.c.b16 %v648, %v640
      %v817 = vpack.c.b16 %v649, %v641
      %v818 = vpack.c.b16 %v650, %v642
      %v819 = vpack.c.b16 %v659, %v651
      %v820 = vpack.c.b16 %v660, %v652
      %v821 = vpack.c.b16 %v661, %v653
      %v822 = vpack.c.b16 %v662, %v654
      %v823 = vpack.c.b16 %v663, %v655
      %v824 = vpack.c.b16 %v664, %v656
      %v825 = vpack.c.b16 %v665, %v657
      %v826 = vpack.c.b16 %v666, %v658
      %v827 = vpack.c.b16 %v675, %v667
      %v828 = vpack.c.b16 %v676, %v668
      %v829 = vpack.c.b16 %v677, %v669
      %v830 = vpack.c.b16 %v678, %v670
      %v831 = vpack.c.b16 %v679, %v671
      %v832 = vpack.c.b16 %v680, %v672
      %v833 = vpack.c.b16 %v681, %v673
      %v834 = vpack.c.b16 %v682, %v674
      %v835 = vpack.c.b16 %v691, %v683
      %v836 = vpack.c.b16 %v692, %v684
      %v837 = vpack.c.b16 %v693, %v685
      %v838 = vpack.c.b16 %v694, %v686
      %v839 = vpack.c.b16 %v695, %v687
      %v840 = vpack.c.b16 %v696, %v688
      %v841 = vpack.c.b16 %v697, %v689
      %v842 = vpack.c.b16 %v698, %v690
      %v843 = vpack.c.b16 %v707, %v699
      %v844 = vpack.c.b16 %v708, %v700
      %v845 = vpack.c.b16 %v709, %v701
      %v846 = vpack.c.b16 %v710, %v702
      %v847 = vpack.c.b16 %v711, %v703
      %v848 = vpack.c.b16 %v712, %v704
      %v849 = vpack.c.b16 %v713, %v705
      %v850 = vpack.c.b16 %v714, %v706
      %v851 = vpack.c.b16 %v723, %v715
      %v852 = vpack.c.b16 %v724, %v716
      %v853 = vpack.c.b16 %v725, %v717
      %v854 = vpack.c.b16 %v726, %v718
      %v855 = vpack.c.b16 %v727, %v719
      %v856 = vpack.c.b16 %v728, %v720
      %v857 = vpack.c.b16 %v729, %v721
      %v858 = vpack.c.b16 %v730, %v722
      %987 = vmatprep.subr.bf16.mxu0 %v732
      %988 = vmatpush1.bf16.msra.mxu0 %v731
      %989 = vmatprep.subr.bf16.mxu0 %v740
      %990 = vmatpush1.bf16.msra.mxu0 %v739
      %991 = vmatprep.subr.bf16.mxu0 %v748
      %992 = vmatpush1.bf16.msra.mxu0 %v747
      %993 = vmatprep.subr.bf16.mxu0 %v756
      %994 = vmatpush1.bf16.msra.mxu0 %v755
      %995 = vmatprep.subr.bf16.mxu0 %v764
      %996 = vmatpush1.bf16.msra.mxu0 %v763
      %997 = vmatprep.subr.bf16.mxu0 %v772
      %998 = vmatpush1.bf16.msra.mxu0 %v771
      %999 = vmatprep.subr.bf16.mxu0 %v780
      %1000 = vmatpush1.bf16.msra.mxu0 %v779
      %1001 = vmatprep.subr.bf16.mxu0 %v788
      %1002 = vmatpush1.bf16.msra.mxu0 %v787
      %1003 = vmatprep.subr.bf16.mxu0 %v796
      %1004 = vmatpush1.bf16.msra.mxu0 %v795
      %1005 = vmatprep.subr.bf16.mxu0 %v804
      %1006 = vmatpush1.bf16.msra.mxu0 %v803
      %1007 = vmatprep.subr.bf16.mxu0 %v812
      %1008 = vmatpush1.bf16.msra.mxu0 %v811
      %1009 = vmatprep.subr.bf16.mxu0 %v820
      %1010 = vmatpush1.bf16.msra.mxu0 %v819
      %1011 = vmatprep.subr.bf16.mxu0 %v828
      %1012 = vmatpush1.bf16.msra.mxu0 %v827
      %1013 = vmatprep.subr.bf16.mxu0 %v836
      %1014 = vmatpush1.bf16.msra.mxu0 %v835
      %1015 = vmatprep.subr.bf16.mxu0 %v844
      %1016 = vmatpush1.bf16.msra.mxu0 %v843
      %1017 = vmatprep.subr.bf16.mxu0 %v852
      %1018 = vmatpush1.bf16.msra.mxu0 %v851
      %1019 = vmatprep.mubr.bf16.mxu0 %v340
      %1020 = vmatmul.mubr.bf16.gmra.mrb[0].mxu0 %v339
      %v1021 = vpop.f32.mrb[0].mxu0
      %v1022 = vadd.f32 %v310, %v1021
      %v1023 = vpop.f32.mrb[0].mxu0
      %v1024 = vadd.f32 %v310, %v1023
      %v1025 = vpop.f32.mrb[0].mxu0
      %v1026 = vadd.f32 %v315, %v1025
      %v1027 = vpop.f32.mrb[0].mxu0
      %v1028 = vadd.f32 %v315, %v1027
      %1029 = vmatprep.mubr.bf16.mxu0 %v342
      %1030 = vmatmul.mubr.bf16.gmra.mrb[0].mxu0 %v341
      %v1031 = vpop.f32.mrb[0].mxu0
      %v1032 = vadd.f32 %v320, %v1031
      %v1033 = vpop.f32.mrb[0].mxu0
      %v1034 = vadd.f32 %v320, %v1033
      %v1035 = vpop.f32.mrb[0].mxu0
      %v1036 = vadd.f32 %v325, %v1035
      %v1037 = vpop.f32.mrb[0].mxu0
      %v1038 = vadd.f32 %v325, %v1037
      %1039 = vdwg.mxu0
      %1040 = vmatprep.subr.bf16.mxu0 %v734
      %1041 = vmatpush1.bf16.msra.mxu0 %v733
      %1042 = vmatprep.subr.bf16.mxu0 %v742
      %1043 = vmatpush1.bf16.msra.mxu0 %v741
      %1044 = vmatprep.subr.bf16.mxu0 %v750
      %1045 = vmatpush1.bf16.msra.mxu0 %v749
      %1046 = vmatprep.subr.bf16.mxu0 %v758
      %1047 = vmatpush1.bf16.msra.mxu0 %v757
      %1048 = vmatprep.subr.bf16.mxu0 %v766
      %1049 = vmatpush1.bf16.msra.mxu0 %v765
      %1050 = vmatprep.subr.bf16.mxu0 %v774
      %1051 = vmatpush1.bf16.msra.mxu0 %v773
      %1052 = vmatprep.subr.bf16.mxu0 %v782
      %1053 = vmatpush1.bf16.msra.mxu0 %v781
      %1054 = vmatprep.subr.bf16.mxu0 %v790
      %1055 = vmatpush1.bf16.msra.mxu0 %v789
      %1056 = vmatprep.subr.bf16.mxu0 %v798
      %1057 = vmatpush1.bf16.msra.mxu0 %v797
      %1058 = vmatprep.subr.bf16.mxu0 %v806
      %1059 = vmatpush1.bf16.msra.mxu0 %v805
      %1060 = vmatprep.subr.bf16.mxu0 %v814
      %1061 = vmatpush1.bf16.msra.mxu0 %v813
      %1062 = vmatprep.subr.bf16.mxu0 %v822
      %1063 = vmatpush1.bf16.msra.mxu0 %v821
      %1064 = vmatprep.subr.bf16.mxu0 %v830
      %1065 = vmatpush1.bf16.msra.mxu0 %v829
      %1066 = vmatprep.subr.bf16.mxu0 %v838
      %1067 = vmatpush1.bf16.msra.mxu0 %v837
      %1068 = vmatprep.subr.bf16.mxu0 %v846
      %1069 = vmatpush1.bf16.msra.mxu0 %v845
      %1070 = vmatprep.subr.bf16.mxu0 %v854
      %1071 = vmatpush1.bf16.msra.mxu0 %v853
      %1072 = vmatprep.mubr.bf16.mxu0 %v340
      %1073 = vmatmul.mubr.bf16.gmra.mrb[0].mxu0 %v339
      %v1074 = vpop.f32.mrb[0].mxu0
      %v1075 = vadd.f32 %v310, %v1074
      %v1076 = vpop.f32.mrb[0].mxu0
      %v1077 = vadd.f32 %v310, %v1076
      %v1078 = vpop.f32.mrb[0].mxu0
      %v1079 = vadd.f32 %v315, %v1078
      %v1080 = vpop.f32.mrb[0].mxu0
      %v1081 = vadd.f32 %v315, %v1080
      %1082 = vmatprep.mubr.bf16.mxu0 %v342
      %1083 = vmatmul.mubr.bf16.gmra.mrb[0].mxu0 %v341
      %v1084 = vpop.f32.mrb[0].mxu0
      %v1085 = vadd.f32 %v320, %v1084
      %v1086 = vpop.f32.mrb[0].mxu0
      %v1087 = vadd.f32 %v320, %v1086
      %v1088 = vpop.f32.mrb[0].mxu0
      %v1089 = vadd.f32 %v325, %v1088
      %v1090 = vpop.f32.mrb[0].mxu0
      %v1091 = vadd.f32 %v325, %v1090
      %1092 = vdwg.mxu0
      %1093 = vmatprep.subr.bf16.mxu0 %v736
      %1094 = vmatpush1.bf16.msra.mxu0 %v735
      %1095 = vmatprep.subr.bf16.mxu0 %v744
      %1096 = vmatpush1.bf16.msra.mxu0 %v743
      %1097 = vmatprep.subr.bf16.mxu0 %v752
      %1098 = vmatpush1.bf16.msra.mxu0 %v751
      %1099 = vmatprep.subr.bf16.mxu0 %v760
      %1100 = vmatpush1.bf16.msra.mxu0 %v759
      %1101 = vmatprep.subr.bf16.mxu0 %v768
      %1102 = vmatpush1.bf16.msra.mxu0 %v767
      %1103 = vmatprep.subr.bf16.mxu0 %v776
      %1104 = vmatpush1.bf16.msra.mxu0 %v775
      %1105 = vmatprep.subr.bf16.mxu0 %v784
      %1106 = vmatpush1.bf16.msra.mxu0 %v783
      %1107 = vmatprep.subr.bf16.mxu0 %v792
      %1108 = vmatpush1.bf16.msra.mxu0 %v791
      %1109 = vmatprep.subr.bf16.mxu0 %v800
      %1110 = vmatpush1.bf16.msra.mxu0 %v799
      %1111 = vmatprep.subr.bf16.mxu0 %v808
      %1112 = vmatpush1.bf16.msra.mxu0 %v807
      %1113 = vmatprep.subr.bf16.mxu0 %v816
      %1114 = vmatpush1.bf16.msra.mxu0 %v815
      %1115 = vmatprep.subr.bf16.mxu0 %v824
      %1116 = vmatpush1.bf16.msra.mxu0 %v823
      %1117 = vmatprep.subr.bf16.mxu0 %v832
      %1118 = vmatpush1.bf16.msra.mxu0 %v831
      %1119 = vmatprep.subr.bf16.mxu0 %v840
      %1120 = vmatpush1.bf16.msra.mxu0 %v839
      %1121 = vmatprep.subr.bf16.mxu0 %v848
      %1122 = vmatpush1.bf16.msra.mxu0 %v847
      %1123 = vmatprep.subr.bf16.mxu0 %v856
      %1124 = vmatpush1.bf16.msra.mxu0 %v855
      %1125 = vmatprep.mubr.bf16.mxu0 %v340
      %1126 = vmatmul.mubr.bf16.gmra.mrb[0].mxu0 %v339
      %v1127 = vpop.f32.mrb[0].mxu0
      %v1128 = vadd.f32 %v310, %v1127
      %v1129 = vpop.f32.mrb[0].mxu0
      %v1130 = vadd.f32 %v310, %v1129
      %v1131 = vpop.f32.mrb[0].mxu0
      %v1132 = vadd.f32 %v315, %v1131
      %v1133 = vpop.f32.mrb[0].mxu0
      %v1134 = vadd.f32 %v315, %v1133
      %1135 = vmatprep.mubr.bf16.mxu0 %v342
      %1136 = vmatmul.mubr.bf16.gmra.mrb[0].mxu0 %v341
      %v1137 = vpop.f32.mrb[0].mxu0
      %v1138 = vadd.f32 %v320, %v1137
      %v1139 = vpop.f32.mrb[0].mxu0
      %v1140 = vadd.f32 %v320, %v1139
      %v1141 = vpop.f32.mrb[0].mxu0
      %v1142 = vadd.f32 %v325, %v1141
      %v1143 = vpop.f32.mrb[0].mxu0
      %v1144 = vadd.f32 %v325, %v1143
      %1145 = vdwg.mxu0
      %1146 = vmatprep.subr.bf16.mxu0 %v738
      %1147 = vmatpush1.bf16.msra.mxu0 %v737
      %1148 = vmatprep.subr.bf16.mxu0 %v746
      %1149 = vmatpush1.bf16.msra.mxu0 %v745
      %1150 = vmatprep.subr.bf16.mxu0 %v754
      %1151 = vmatpush1.bf16.msra.mxu0 %v753
      %1152 = vmatprep.subr.bf16.mxu0 %v762
      %1153 = vmatpush1.bf16.msra.mxu0 %v761
      %1154 = vmatprep.subr.bf16.mxu0 %v770
      %1155 = vmatpush1.bf16.msra.mxu0 %v769
      %1156 = vmatprep.subr.bf16.mxu0 %v778
      %1157 = vmatpush1.bf16.msra.mxu0 %v777
      %1158 = vmatprep.subr.bf16.mxu0 %v786
      %1159 = vmatpush1.bf16.msra.mxu0 %v785
      %1160 = vmatprep.subr.bf16.mxu0 %v794
      %1161 = vmatpush1.bf16.msra.mxu0 %v793
      %1162 = vmatprep.subr.bf16.mxu0 %v802
      %1163 = vmatpush1.bf16.msra.mxu0 %v801
      %1164 = vmatprep.subr.bf16.mxu0 %v810
      %1165 = vmatpush1.bf16.msra.mxu0 %v809
      %1166 = vmatprep.subr.bf16.mxu0 %v818
      %1167 = vmatpush1.bf16.msra.mxu0 %v817
      %1168 = vmatprep.subr.bf16.mxu0 %v826
      %1169 = vmatpush1.bf16.msra.mxu0 %v825
      %1170 = vmatprep.subr.bf16.mxu0 %v834
      %1171 = vmatpush1.bf16.msra.mxu0 %v833
      %1172 = vmatprep.subr.bf16.mxu0 %v842
      %1173 = vmatpush1.bf16.msra.mxu0 %v841
      %1174 = vmatprep.subr.bf16.mxu0 %v850
      %1175 = vmatpush1.bf16.msra.mxu0 %v849
      %1176 = vmatprep.subr.bf16.mxu0 %v858
      %1177 = vmatpush1.bf16.msra.mxu0 %v857
      %1178 = vmatprep.mubr.bf16.mxu0 %v340
      %1179 = vmatmul.mubr.bf16.gmra.mrb[0].mxu0 %v339
      %v1180 = vpop.f32.mrb[0].mxu0
      %v1181 = vadd.f32 %v310, %v1180
      %v1182 = vpop.f32.mrb[0].mxu0
      %v1183 = vadd.f32 %v310, %v1182
      %v1184 = vpop.f32.mrb[0].mxu0
      %v1185 = vadd.f32 %v315, %v1184
      %v1186 = vpop.f32.mrb[0].mxu0
      %v1187 = vadd.f32 %v315, %v1186
      %1188 = vmatprep.mubr.bf16.mxu0 %v342
      %1189 = vmatmul.mubr.bf16.gmra.mrb[0].mxu0 %v341
      %v1190 = vpop.f32.mrb[0].mxu0
      %v1191 = vadd.f32 %v320, %v1190
      %v1192 = vpop.f32.mrb[0].mxu0
      %v1193 = vadd.f32 %v320, %v1192
      %v1194 = vpop.f32.mrb[0].mxu0
      %v1195 = vadd.f32 %v325, %v1194
      %v1196 = vpop.f32.mrb[0].mxu0
      %v1197 = vadd.f32 %v325, %v1196
      %1198 = vdwg.mxu0
      %v1199 = vadd.f32 %v1022, %v1024
      %v1200 = vadd.f32 %v1199, %v1075
      %v1201 = vadd.f32 %v1200, %v1077
      %v1202 = vadd.f32 %v1201, %v1128
      %v1203 = vadd.f32 %v1202, %v1130
      %v1204 = vadd.f32 %v1203, %v1181
      %v1205 = vadd.f32 %v1204, %v1183
      %1206 = vadd.xlane.f32.xlu0 %v1205
      %v1207 = vpop.xlane.xlu0 %1206
      %v1208 = vadd.f32 %v1026, %v1028
      %v1209 = vadd.f32 %v1208, %v1079
      %v1210 = vadd.f32 %v1209, %v1081
      %v1211 = vadd.f32 %v1210, %v1132
      %v1212 = vadd.f32 %v1211, %v1134
      %v1213 = vadd.f32 %v1212, %v1185
      %v1214 = vadd.f32 %v1213, %v1187
      %1215 = vadd.xlane.f32.xlu0 %v1214
      %v1216 = vpop.xlane.xlu0 %1215
      %v1217 = vadd.f32 %v1032, %v1034
      %v1218 = vadd.f32 %v1217, %v1085
      %v1219 = vadd.f32 %v1218, %v1087
      %v1220 = vadd.f32 %v1219, %v1138
      %v1221 = vadd.f32 %v1220, %v1140
      %v1222 = vadd.f32 %v1221, %v1191
      %v1223 = vadd.f32 %v1222, %v1193
      %1224 = vadd.xlane.f32.xlu0 %v1223
      %v1225 = vpop.xlane.xlu0 %1224
      %v1226 = vadd.f32 %v1036, %v1038
      %v1227 = vadd.f32 %v1226, %v1089
      %v1228 = vadd.f32 %v1227, %v1091
      %v1229 = vadd.f32 %v1228, %v1142
      %v1230 = vadd.f32 %v1229, %v1144
      %v1231 = vadd.f32 %v1230, %v1195
      %v1232 = vadd.f32 %v1231, %v1197
      %1233 = vadd.xlane.f32.xlu0 %v1232
      %v1234 = vpop.xlane.xlu0 %1233
      %v1235 = vmul.f32 %v1022, %v1022
      %v1236 = vmul.f32 %v1024, %v1024
      %v1237 = vmul.f32 %v1075, %v1075
      %v1238 = vmul.f32 %v1077, %v1077
      %v1239 = vmul.f32 %v1128, %v1128
      %v1240 = vmul.f32 %v1130, %v1130
      %v1241 = vmul.f32 %v1181, %v1181
      %v1242 = vmul.f32 %v1183, %v1183
      %v1243 = vmul.f32 %v1026, %v1026
      %v1244 = vmul.f32 %v1028, %v1028
      %v1245 = vmul.f32 %v1079, %v1079
      %v1246 = vmul.f32 %v1081, %v1081
      %v1247 = vmul.f32 %v1132, %v1132
      %v1248 = vmul.f32 %v1134, %v1134
      %v1249 = vmul.f32 %v1185, %v1185
      %v1250 = vmul.f32 %v1187, %v1187
      %v1251 = vmul.f32 %v1032, %v1032
      %v1252 = vmul.f32 %v1034, %v1034
      %v1253 = vmul.f32 %v1085, %v1085
      %v1254 = vmul.f32 %v1087, %v1087
      %v1255 = vmul.f32 %v1138, %v1138
      %v1256 = vmul.f32 %v1140, %v1140
      %v1257 = vmul.f32 %v1191, %v1191
      %v1258 = vmul.f32 %v1193, %v1193
      %v1259 = vmul.f32 %v1036, %v1036
      %v1260 = vmul.f32 %v1038, %v1038
      %v1261 = vmul.f32 %v1089, %v1089
      %v1262 = vmul.f32 %v1091, %v1091
      %v1263 = vmul.f32 %v1142, %v1142
      %v1264 = vmul.f32 %v1144, %v1144
      %v1265 = vmul.f32 %v1195, %v1195
      %v1266 = vmul.f32 %v1197, %v1197
      %v1267 = vadd.f32 %v1235, %v1236
      %v1268 = vadd.f32 %v1267, %v1237
      %v1269 = vadd.f32 %v1268, %v1238
      %v1270 = vadd.f32 %v1269, %v1239
      %v1271 = vadd.f32 %v1270, %v1240
      %v1272 = vadd.f32 %v1271, %v1241
      %v1273 = vadd.f32 %v1272, %v1242
      %1274 = vadd.xlane.f32.xlu0 %v1273
      %v1275 = vpop.xlane.xlu0 %1274
      %v1276 = vadd.f32 %v1243, %v1244
      %v1277 = vadd.f32 %v1276, %v1245
      %v1278 = vadd.f32 %v1277, %v1246
      %v1279 = vadd.f32 %v1278, %v1247
      %v1280 = vadd.f32 %v1279, %v1248
      %v1281 = vadd.f32 %v1280, %v1249
      %v1282 = vadd.f32 %v1281, %v1250
      %1283 = vadd.xlane.f32.xlu0 %v1282
      %v1284 = vpop.xlane.xlu0 %1283
      %v1285 = vadd.f32 %v1251, %v1252
      %v1286 = vadd.f32 %v1285, %v1253
      %v1287 = vadd.f32 %v1286, %v1254
      %v1288 = vadd.f32 %v1287, %v1255
      %v1289 = vadd.f32 %v1288, %v1256
      %v1290 = vadd.f32 %v1289, %v1257
      %v1291 = vadd.f32 %v1290, %v1258
      %1292 = vadd.xlane.f32.xlu0 %v1291
      %v1293 = vpop.xlane.xlu0 %1292
      %v1294 = vadd.f32 %v1259, %v1260
      %v1295 = vadd.f32 %v1294, %v1261
      %v1296 = vadd.f32 %v1295, %v1262
      %v1297 = vadd.f32 %v1296, %v1263
      %v1298 = vadd.f32 %v1297, %v1264
      %v1299 = vadd.f32 %v1298, %v1265
      %v1300 = vadd.f32 %v1299, %v1266
      %1301 = vadd.xlane.f32.xlu0 %v1300
      %v1302 = vpop.xlane.xlu0 %1301
      %v1303 = vmul.f32 %v1207, 0.0009765625
      %v1304 = vmul.f32 %v1216, 0.0009765625
      %v1305 = vmul.f32 %v1225, 0.0009765625
      %v1306 = vmul.f32 %v1234, 0.0009765625
      %v1307 = vmul.f32 %v1275, 0.0009765625
      %v1308 = vmul.f32 %v1284, 0.0009765625
      %v1309 = vmul.f32 %v1293, 0.0009765625
      %v1310 = vmul.f32 %v1302, 0.0009765625
      %v1311 = vmul.f32 %v1303, %v1303
      %v1312 = vmul.f32 %v1304, %v1304
      %v1313 = vmul.f32 %v1305, %v1305
      %v1314 = vmul.f32 %v1306, %v1306
      %v1315 = vsub.f32 %v1307, %v1311
      %v1316 = vsub.f32 %v1308, %v1312
      %v1317 = vsub.f32 %v1309, %v1313
      %v1318 = vsub.f32 %v1310, %v1314
      %v1319 = vmax.f32 %v1315, 0.0
      %v1320 = vmax.f32 %v1316, 0.0
      %v1321 = vmax.f32 %v1317, 0.0
      %v1322 = vmax.f32 %v1318, 0.0
      %v1323 = vadd.f32 %v1319, 1e-05
      %v1324 = vadd.f32 %v1320, 1e-05
      %v1325 = vadd.f32 %v1321, 1e-05
      %v1326 = vadd.f32 %v1322, 1e-05
      %v1327 = vrsqrt.pop %v1323
      %v1328 = vrsqrt.pop %v1324
      %v1329 = vrsqrt.pop %v1325
      %v1330 = vrsqrt.pop %v1326
      %v1331 = vsub.f32 %v1022, %v1303
      %v1332 = vsub.f32 %v1024, %v1303
      %v1333 = vsub.f32 %v1075, %v1303
      %v1334 = vsub.f32 %v1077, %v1303
      %v1335 = vsub.f32 %v1128, %v1303
      %v1336 = vsub.f32 %v1130, %v1303
      %v1337 = vsub.f32 %v1181, %v1303
      %v1338 = vsub.f32 %v1183, %v1303
      %v1339 = vsub.f32 %v1026, %v1304
      %v1340 = vsub.f32 %v1028, %v1304
      %v1341 = vsub.f32 %v1079, %v1304
      %v1342 = vsub.f32 %v1081, %v1304
      %v1343 = vsub.f32 %v1132, %v1304
      %v1344 = vsub.f32 %v1134, %v1304
      %v1345 = vsub.f32 %v1185, %v1304
      %v1346 = vsub.f32 %v1187, %v1304
      %v1347 = vsub.f32 %v1032, %v1305
      %v1348 = vsub.f32 %v1034, %v1305
      %v1349 = vsub.f32 %v1085, %v1305
      %v1350 = vsub.f32 %v1087, %v1305
      %v1351 = vsub.f32 %v1138, %v1305
      %v1352 = vsub.f32 %v1140, %v1305
      %v1353 = vsub.f32 %v1191, %v1305
      %v1354 = vsub.f32 %v1193, %v1305
      %v1355 = vsub.f32 %v1036, %v1306
      %v1356 = vsub.f32 %v1038, %v1306
      %v1357 = vsub.f32 %v1089, %v1306
      %v1358 = vsub.f32 %v1091, %v1306
      %v1359 = vsub.f32 %v1142, %v1306
      %v1360 = vsub.f32 %v1144, %v1306
      %v1361 = vsub.f32 %v1195, %v1306
      %v1362 = vsub.f32 %v1197, %v1306
      %v1363 = vmul.f32 %v1331, %v1327
      %v1364 = vmul.f32 %v1332, %v1327
      %v1365 = vmul.f32 %v1333, %v1327
      %v1366 = vmul.f32 %v1334, %v1327
      %v1367 = vmul.f32 %v1335, %v1327
      %v1368 = vmul.f32 %v1336, %v1327
      %v1369 = vmul.f32 %v1337, %v1327
      %v1370 = vmul.f32 %v1338, %v1327
      %v1371 = vmul.f32 %v1339, %v1328
      %v1372 = vmul.f32 %v1340, %v1328
      %v1373 = vmul.f32 %v1341, %v1328
      %v1374 = vmul.f32 %v1342, %v1328
      %v1375 = vmul.f32 %v1343, %v1328
      %v1376 = vmul.f32 %v1344, %v1328
      %v1377 = vmul.f32 %v1345, %v1328
      %v1378 = vmul.f32 %v1346, %v1328
      %v1379 = vmul.f32 %v1347, %v1329
      %v1380 = vmul.f32 %v1348, %v1329
      %v1381 = vmul.f32 %v1349, %v1329
      %v1382 = vmul.f32 %v1350, %v1329
      %v1383 = vmul.f32 %v1351, %v1329
      %v1384 = vmul.f32 %v1352, %v1329
      %v1385 = vmul.f32 %v1353, %v1329
      %v1386 = vmul.f32 %v1354, %v1329
      %v1387 = vmul.f32 %v1355, %v1330
      %v1388 = vmul.f32 %v1356, %v1330
      %v1389 = vmul.f32 %v1357, %v1330
      %v1390 = vmul.f32 %v1358, %v1330
      %v1391 = vmul.f32 %v1359, %v1330
      %v1392 = vmul.f32 %v1360, %v1330
      %v1393 = vmul.f32 %v1361, %v1330
      %v1394 = vmul.f32 %v1362, %v1330
      %vm1395 = vcmp.gt.f32.partialorder %v1363, 0.0
      %vm1396 = vcmp.gt.f32.partialorder %v1364, 0.0
      %vm1397 = vcmp.gt.f32.partialorder %v1365, 0.0
      %vm1398 = vcmp.gt.f32.partialorder %v1366, 0.0
      %vm1399 = vcmp.gt.f32.partialorder %v1367, 0.0
      %vm1400 = vcmp.gt.f32.partialorder %v1368, 0.0
      %vm1401 = vcmp.gt.f32.partialorder %v1369, 0.0
      %vm1402 = vcmp.gt.f32.partialorder %v1370, 0.0
      %vm1403 = vcmp.gt.f32.partialorder %v1371, 0.0
      %vm1404 = vcmp.gt.f32.partialorder %v1372, 0.0
      %vm1405 = vcmp.gt.f32.partialorder %v1373, 0.0
      %vm1406 = vcmp.gt.f32.partialorder %v1374, 0.0
      %vm1407 = vcmp.gt.f32.partialorder %v1375, 0.0
      %vm1408 = vcmp.gt.f32.partialorder %v1376, 0.0
      %vm1409 = vcmp.gt.f32.partialorder %v1377, 0.0
      %vm1410 = vcmp.gt.f32.partialorder %v1378, 0.0
      %vm1411 = vcmp.gt.f32.partialorder %v1379, 0.0
      %vm1412 = vcmp.gt.f32.partialorder %v1380, 0.0
      %vm1413 = vcmp.gt.f32.partialorder %v1381, 0.0
      %vm1414 = vcmp.gt.f32.partialorder %v1382, 0.0
      %vm1415 = vcmp.gt.f32.partialorder %v1383, 0.0
      %vm1416 = vcmp.gt.f32.partialorder %v1384, 0.0
      %vm1417 = vcmp.gt.f32.partialorder %v1385, 0.0
      %vm1418 = vcmp.gt.f32.partialorder %v1386, 0.0
      %vm1419 = vcmp.gt.f32.partialorder %v1387, 0.0
      %vm1420 = vcmp.gt.f32.partialorder %v1388, 0.0
      %vm1421 = vcmp.gt.f32.partialorder %v1389, 0.0
      %vm1422 = vcmp.gt.f32.partialorder %v1390, 0.0
      %vm1423 = vcmp.gt.f32.partialorder %v1391, 0.0
      %vm1424 = vcmp.gt.f32.partialorder %v1392, 0.0
      %vm1425 = vcmp.gt.f32.partialorder %v1393, 0.0
      %vm1426 = vcmp.gt.f32.partialorder %v1394, 0.0
      %v1427 = vmul.f32 %v1363, 0.2
      %v1428 = vmul.f32 %v1364, 0.2
      %v1429 = vmul.f32 %v1365, 0.2
      %v1430 = vmul.f32 %v1366, 0.2
      %v1431 = vmul.f32 %v1367, 0.2
      %v1432 = vmul.f32 %v1368, 0.2
      %v1433 = vmul.f32 %v1369, 0.2
      %v1434 = vmul.f32 %v1370, 0.2
      %v1435 = vmul.f32 %v1371, 0.2
      %v1436 = vmul.f32 %v1372, 0.2
      %v1437 = vmul.f32 %v1373, 0.2
      %v1438 = vmul.f32 %v1374, 0.2
      %v1439 = vmul.f32 %v1375, 0.2
      %v1440 = vmul.f32 %v1376, 0.2
      %v1441 = vmul.f32 %v1377, 0.2
      %v1442 = vmul.f32 %v1378, 0.2
      %v1443 = vmul.f32 %v1379, 0.2
      %v1444 = vmul.f32 %v1380, 0.2
      %v1445 = vmul.f32 %v1381, 0.2
      %v1446 = vmul.f32 %v1382, 0.2
      %v1447 = vmul.f32 %v1383, 0.2
      %v1448 = vmul.f32 %v1384, 0.2
      %v1449 = vmul.f32 %v1385, 0.2
      %v1450 = vmul.f32 %v1386, 0.2
      %v1451 = vmul.f32 %v1387, 0.2
      %v1452 = vmul.f32 %v1388, 0.2
      %v1453 = vmul.f32 %v1389, 0.2
      %v1454 = vmul.f32 %v1390, 0.2
      %v1455 = vmul.f32 %v1391, 0.2
      %v1456 = vmul.f32 %v1392, 0.2
      %v1457 = vmul.f32 %v1393, 0.2
      %v1458 = vmul.f32 %v1394, 0.2
      %v1459 = vsel %vm1395, %v1363, %v1427
      %v1460 = vsel %vm1396, %v1364, %v1428
      %v1461 = vsel %vm1397, %v1365, %v1429
      %v1462 = vsel %vm1398, %v1366, %v1430
      %v1463 = vsel %vm1399, %v1367, %v1431
      %v1464 = vsel %vm1400, %v1368, %v1432
      %v1465 = vsel %vm1401, %v1369, %v1433
      %v1466 = vsel %vm1402, %v1370, %v1434
      %v1467 = vsel %vm1403, %v1371, %v1435
      %v1468 = vsel %vm1404, %v1372, %v1436
      %v1469 = vsel %vm1405, %v1373, %v1437
      %v1470 = vsel %vm1406, %v1374, %v1438
      %v1471 = vsel %vm1407, %v1375, %v1439
      %v1472 = vsel %vm1408, %v1376, %v1440
      %v1473 = vsel %vm1409, %v1377, %v1441
      %v1474 = vsel %vm1410, %v1378, %v1442
      %v1475 = vsel %vm1411, %v1379, %v1443
      %v1476 = vsel %vm1412, %v1380, %v1444
      %v1477 = vsel %vm1413, %v1381, %v1445
      %v1478 = vsel %vm1414, %v1382, %v1446
      %v1479 = vsel %vm1415, %v1383, %v1447
      %v1480 = vsel %vm1416, %v1384, %v1448
      %v1481 = vsel %vm1417, %v1385, %v1449
      %v1482 = vsel %vm1418, %v1386, %v1450
      %v1483 = vsel %vm1419, %v1387, %v1451
      %v1484 = vsel %vm1420, %v1388, %v1452
      %v1485 = vsel %vm1421, %v1389, %v1453
      %v1486 = vsel %vm1422, %v1390, %v1454
      %v1487 = vsel %vm1423, %v1391, %v1455
      %v1488 = vsel %vm1424, %v1392, %v1456
      %v1489 = vsel %vm1425, %v1393, %v1457
      %v1490 = vsel %vm1426, %v1394, %v1458
      %1491 = vst [vmem:[%s170] sm:$0xff] %v1459
      %1492 = vst [vmem:[%s170 + $0x8] sm:$0xff] %v1460
      %1493 = vst [vmem:[%s170 + $0x10] sm:$0xff] %v1461
      %1494 = vst [vmem:[%s170 + $0x18] sm:$0xff] %v1462
      %1495 = vst [vmem:[%s170 + $0x20] sm:$0xff] %v1463
      %1496 = vst [vmem:[%s170 + $0x28] sm:$0xff] %v1464
      %1497 = vst [vmem:[%s170 + $0x30] sm:$0xff] %v1465
      %1498 = vst [vmem:[%s170 + $0x38] sm:$0xff] %v1466
      %1499 = vst [vmem:[%s170 + $0x40] sm:$0xff] %v1467
      %1500 = vst [vmem:[%s170 + $0x48] sm:$0xff] %v1468
      %1501 = vst [vmem:[%s170 + $0x50] sm:$0xff] %v1469
      %1502 = vst [vmem:[%s170 + $0x58] sm:$0xff] %v1470
      %1503 = vst [vmem:[%s170 + $0x60] sm:$0xff] %v1471
      %1504 = vst [vmem:[%s170 + $0x68] sm:$0xff] %v1472
      %1505 = vst [vmem:[%s170 + $0x70] sm:$0xff] %v1473
      %1506 = vst [vmem:[%s170 + $0x78] sm:$0xff] %v1474
      %1507 = vst [vmem:[%s170 + $0x80] sm:$0xff] %v1475
      %1508 = vst [vmem:[%s170 + $0x88] sm:$0xff] %v1476
      %1509 = vst [vmem:[%s170 + $0x90] sm:$0xff] %v1477
      %1510 = vst [vmem:[%s170 + $0x98] sm:$0xff] %v1478
      %1511 = vst [vmem:[%s170 + $0xa0] sm:$0xff] %v1479
      %1512 = vst [vmem:[%s170 + $0xa8] sm:$0xff] %v1480
      %1513 = vst [vmem:[%s170 + $0xb0] sm:$0xff] %v1481
      %1514 = vst [vmem:[%s170 + $0xb8] sm:$0xff] %v1482
      %1515 = vst [vmem:[%s170 + $0xc0] sm:$0xff] %v1483
      %1516 = vst [vmem:[%s170 + $0xc8] sm:$0xff] %v1484
      %1517 = vst [vmem:[%s170 + $0xd0] sm:$0xff] %v1485
      %1518 = vst [vmem:[%s170 + $0xd8] sm:$0xff] %v1486
      %1519 = vst [vmem:[%s170 + $0xe0] sm:$0xff] %v1487
      %1520 = vst [vmem:[%s170 + $0xe8] sm:$0xff] %v1488
      %1521 = vst [vmem:[%s170 + $0xf0] sm:$0xff] %v1489
      %1522 = vst [vmem:[%s170 + $0xf8] sm:$0xff] %v1490
      %p1523 = scmp.lt.s32.totalorder %s14, 1
      %s1524 = scalar_select %p1523, %s14, 1
      %s1525 = smul.addr %s1524, 32
      %s1526 = smul.addr %s1525, 8
      %s1527 = scalar_lea.vmem %s3, %s1526
      // Predicated region
      $region33: #{critic_forward.6} parent=31 // pred_check
        %p1528 = pneg %p100
      $region34: #{critic_forward.6} parent=31 // pred_check_branch
        %1530 = sbr.rel (%p1528) target = $region36
      $region35: #{critic_forward.6} parent=31 // pred_region
        _
      $region36: #{critic_forward.6} parent=31 // pred_fallthru
        _
    $region32: #{critic_forward.6} parent=5 // pred_fallthru
      _
    %p1531 = scmp.le.s32.totalorder 2, %s9
    // Predicated region
    $region37: #{critic_forward.6} parent=5 // pred_check
      %p1532 = pneg %p1531
    $region38: #{critic_forward.6} parent=5 // pred_check_branch
      %1534 = sbr.rel (%p1532) target = $region40
    $region39: #{critic_forward.6} parent=5 // pred_region
      %s1535 = ssub.s32 %s9, 2
      // Predicated region
      $region41: #{critic_forward.6} parent=39 // pred_check
        %p1536 = pneg %p106
      $region42: #{critic_forward.6} parent=39 // pred_check_branch
        %1538 = sbr.rel (%p1536) target = $region44
      $region43: #{critic_forward.6} parent=39 // pred_region
        %p1539 = scmp.lt.s32.totalorder %s15, 1
        %s1540 = scalar_select %p1539, %s15, 1
        %s1541 = smul.addr %s1540, 32
        %s1542 = smul.addr %s1541, 8
        %s1543 = scalar_lea.vmem %s3, %s1542
      $region44: #{critic_forward.6} parent=39 // pred_fallthru
        _
    $region40: #{critic_forward.6} parent=5 // pred_fallthru
      _
  $region6: #{critic_forward.6} parent=0 // loop_footer
    %s13 = sadd.s32 1, %s9
  $region7: #{critic_forward.6} parent=0 // loop_footer_branch
    %8 = sbr.rel target = $region3
  $region8: #{critic_forward.6} parent=0 // loop_exit
    _

// kernel: critic_forward.7
$region0: #{critic_forward.7}
  #allocation0 [shape = 'u32[]', space=smem, size = 0x4, offset = 0x4, fixed_abs, tag = 'smem constant byte address 0x4 - core index']
  #allocation1 [shape = 'u32[144,128]{1,0:T(1,128)}', space=vmem, size = 0x12000, scoped, tag = 'internal scratch']
  %s0 = inlined_call_operand.vmem [shape: bf16[2,512,256], index: 0, kind: input, shape index: {}]
  %s1 = inlined_call_operand.vmem [shape: bf16[64,512], index: 1, kind: input, shape index: {}]
  %s2 = inlined_call_operand.vmem [shape: f32[64,1], index: 2, kind: input, shape index: {}]
  %s3 = inlined_call_operand.vmem [shape: f32[2,64,256], index: 3, kind: output, shape index: {}]
  %s4 = sld [smem:[#allocation0]]
  $region45: #{critic_forward.7} parent=0
    _
  %s6 = ssub.s32 1, %s4
  %s7 = scalar_select 0, %s6, %s4
  loop: start=0, step=1, limit=4
  $region2: #{critic_forward.7} parent=0 // loop_pre_header
    _
  $region3: #{critic_forward.7} parent=0 // loop_header
    %s9 = sphi 0, %s13
    %p10 = scmp.ge.s32.totalorder %s9, 4
    %s19 = sphi 0, %s21
    %s22 = sphi 0, %s19
    %s23 = sphi 0, %s22
    %s39 = sphi 0, %s23
    %s43 = sphi 0, %s43
    %s45 = sphi 0, %s43
    %s46 = sphi 0, %s45
    %s60 = sphi 0, %s46
    %s64 = sphi 0, %s64
    %s66 = sphi 0, %s64
    %s67 = sphi 0, %s66
    %s81 = sphi 0, %s67
    %s87 = sphi 0, %s89
    %s90 = sphi 0, %s87
    %s91 = sphi 0, %s90
    %s107 = sphi 0, %s91
  $region4: #{critic_forward.7} parent=0 // loop_header_branch
    %12 = sbr.rel (%p10) target = $region8
  $region5: #{critic_forward.7} parent=0 // loop_body
    %s14 = ssub.s32 %s9, 1
    %s15 = ssub.s32 %s9, 2
    %s16 = sadd.s32 %s9, 1
    %s17 = ssub.s32 %s9, %s16
    %p18 = scmp.eq.s32.totalorder %s17, 0
    %s20 = sadd.s32 %s19, 1
    %s21 = scalar_select %p18, %s19, %s20
    %p24 = pneg %p18
    %p25 = scmp.eq.s32.totalorder %s9, 1
    %p26 = por %p24, %p25
    %p27 = scmp.ne.s32.totalorder %s19, %s22
    %p28 = scmp.eq.s32.totalorder %s9, 0
    %p29 = por %p27, %p28
    %p30 = scmp.ne.s32.totalorder %s19, %s22
    %p31 = scmp.eq.s32.totalorder %s14, 1
    %p32 = por %p30, %p31
    %p33 = scmp.ne.s32.totalorder %s22, %s23
    %p34 = scmp.eq.s32.totalorder %s14, 0
    %p35 = por %p33, %p34
    %p36 = scmp.ne.s32.totalorder %s22, %s23
    %p37 = scmp.eq.s32.totalorder %s15, 1
    %p38 = por %p36, %p37
    %p40 = scmp.ne.s32.totalorder %s23, %s39
    %p41 = scmp.eq.s32.totalorder %s15, 0
    %p42 = por %p40, %p41
    %s44 = sadd.s32 %s43, 1
    %p47 = scmp.eq.s32.totalorder %s9, 1
    %p48 = scmp.ne.s32.totalorder %s43, %s45
    %p49 = scmp.eq.s32.totalorder %s9, 0
    %p50 = por %p48, %p49
    %p51 = scmp.ne.s32.totalorder %s43, %s45
    %p52 = scmp.eq.s32.totalorder %s14, 1
    %p53 = por %p51, %p52
    %p54 = scmp.ne.s32.totalorder %s45, %s46
    %p55 = scmp.eq.s32.totalorder %s14, 0
    %p56 = por %p54, %p55
    %p57 = scmp.ne.s32.totalorder %s45, %s46
    %p58 = scmp.eq.s32.totalorder %s15, 1
    %p59 = por %p57, %p58
    %p61 = scmp.ne.s32.totalorder %s46, %s60
    %p62 = scmp.eq.s32.totalorder %s15, 0
    %p63 = por %p61, %p62
    %s65 = sadd.s32 %s64, 1
    %p68 = scmp.eq.s32.totalorder %s9, 1
    %p69 = scmp.ne.s32.totalorder %s64, %s66
    %p70 = scmp.eq.s32.totalorder %s9, 0
    %p71 = por %p69, %p70
    %p72 = scmp.ne.s32.totalorder %s64, %s66
    %p73 = scmp.eq.s32.totalorder %s14, 1
    %p74 = por %p72, %p73
    %p75 = scmp.ne.s32.totalorder %s66, %s67
    %p76 = scmp.eq.s32.totalorder %s14, 0
    %p77 = por %p75, %p76
    %p78 = scmp.ne.s32.totalorder %s66, %s67
    %p79 = scmp.eq.s32.totalorder %s15, 1
    %p80 = por %p78, %p79
    %p82 = scmp.ne.s32.totalorder %s67, %s81
    %p83 = scmp.eq.s32.totalorder %s15, 0
    %p84 = por %p82, %p83
    %s85 = ssub.s32 %s9, %s16
    %p86 = scmp.eq.s32.totalorder %s85, 0
    %s88 = sadd.s32 %s87, 1
    %s89 = scalar_select %p86, %s87, %s88
    %p92 = pneg %p86
    %p93 = scmp.eq.s32.totalorder %s9, 1
    %p94 = por %p92, %p93
    %p95 = scmp.ne.s32.totalorder %s87, %s90
    %p96 = scmp.eq.s32.totalorder %s9, 0
    %p97 = por %p95, %p96
    %p98 = scmp.ne.s32.totalorder %s87, %s90
    %p99 = scmp.eq.s32.totalorder %s14, 1
    %p100 = por %p98, %p99
    %p101 = scmp.ne.s32.totalorder %s90, %s91
    %p102 = scmp.eq.s32.totalorder %s14, 0
    %p103 = por %p101, %p102
    %p104 = scmp.ne.s32.totalorder %s90, %s91
    %p105 = scmp.eq.s32.totalorder %s15, 1
    %p106 = por %p104, %p105
    %p108 = scmp.ne.s32.totalorder %s91, %s107
    %p109 = scmp.eq.s32.totalorder %s15, 0
    %p110 = por %p108, %p109
    %p111 = scmp.le.s32.totalorder 1, %s9
    %p112 = scmp.lt.s32.totalorder %s9, 3
    %p113 = pnand %p111, %p112
    %p114 = pneg %p113
    // Predicated region
    $region9: #{critic_forward.7} parent=5 // pred_check
      _
    $region10: #{critic_forward.7} parent=5 // pred_check_branch
      %116 = sbr.rel (%p113) target = $region12
    $region11: #{critic_forward.7} parent=5 // pred_region
      %s117 = ssub.s32 %s9, 1
      // Predicated region
      $region13: #{critic_forward.7} parent=11 // pred_check
        %p118 = pneg %p56
      $region14: #{critic_forward.7} parent=11 // pred_check_branch
        %120 = sbr.rel (%p118) target = $region16
      $region15: #{critic_forward.7} parent=11 // pred_region
        _
      $region16: #{critic_forward.7} parent=11 // pred_fallthru
        _
      // Predicated region
      $region17: #{critic_forward.7} parent=11 // pred_check
        %p121 = pneg %p77
      $region18: #{critic_forward.7} parent=11 // pred_check_branch
        %123 = sbr.rel (%p121) target = $region20
      $region19: #{critic_forward.7} parent=11 // pred_region
        _
      $region20: #{critic_forward.7} parent=11 // pred_fallthru
        _
    $region12: #{critic_forward.7} parent=5 // pred_fallthru
      _
    %p124 = scmp.lt.s32.totalorder %s9, 2
    // Predicated region
    $region21: #{critic_forward.7} parent=5 // pred_check
      %p125 = pneg %p124
    $region22: #{critic_forward.7} parent=5 // pred_check_branch
      %127 = sbr.rel (%p125) target = $region24
    $region23: #{critic_forward.7} parent=5 // pred_region
      // Predicated region
      $region25: #{critic_forward.7} parent=23 // pred_check
        %p128 = pneg %p29
      $region26: #{critic_forward.7} parent=23 // pred_check_branch
        %130 = sbr.rel (%p128) target = $region28
      $region27: #{critic_forward.7} parent=23 // pred_region
        %p131 = scmp.lt.s32.totalorder %s9, 1
        %s132 = scalar_select %p131, %s9, 1
        %s133 = smul.addr %s132, 128
        %s134 = smul.addr %s133, 4
        %s135 = scalar_lea.vmem %s0, %s134
      $region28: #{critic_forward.7} parent=23 // pred_fallthru
        _
    $region24: #{critic_forward.7} parent=5 // pred_fallthru
      _
    %p136 = scmp.le.s32.totalorder 1, %s9
    %p137 = scmp.lt.s32.totalorder %s9, 3
    %p138 = pnand %p136, %p137
    %p139 = pneg %p138
    // Predicated region
    $region29: #{critic_forward.7} parent=5 // pred_check
      _
    $region30: #{critic_forward.7} parent=5 // pred_check_branch
      %141 = sbr.rel (%p138) target = $region32
    $region31: #{critic_forward.7} parent=5 // pred_region
      %s142 = ssub.s32 %s9, 1
      %p143 = scmp.lt.s32.totalorder %s14, 1
      %s144 = scalar_select %p143, %s14, 1
      %s145 = smul.addr %s144, 128
      %s146 = smul.addr %s145, 4
      %s147 = scalar_lea.vmem %s0, %s146
      %p148 = pneg %p35
      %p149 = pneg %p32
      %p150 = pneg %p56
      %p151 = pneg %p53
      %p152 = pneg %p77
      %p153 = pneg %p74
      %p154 = pneg %p103
      %p155 = pneg %p100
      %p156 = scmp.lt.s32.totalorder %s14, 1
      %s157 = scalar_select %p156, %s14, 1
      %s158 = smul.addr %s157, 16
      %s159 = smul.addr %s158, 8
      %s160 = scalar_lea.vmem %s3, %s159
      %p161 = scmp.lt.s32.totalorder %s14, 1
      %s162 = scalar_select %p161, %s14, 1
      %s163 = smul.addr %s162, 128
      %s164 = smul.addr %s163, 4
      %s165 = scalar_lea.vmem %s0, %s164
      %p166 = scmp.lt.s32.totalorder %s14, 1
      %s167 = scalar_select %p166, %s14, 1
      %s168 = smul.addr %s167, 16
      %s169 = smul.addr %s168, 8
      %s170 = scalar_lea.vmem %s3, %s169
      %v171 = vld [vmem:[%s1] sm:$0xff]
      %v172 = vld [vmem:[%s1 + $0x8] sm:$0xff]
      %v173 = vld [vmem:[%s1 + $0x10] sm:$0xff]
      %v174 = vld [vmem:[%s1 + $0x18] sm:$0xff]
      %v175 = vld [vmem:[%s1 + $0x20] sm:$0xff]
      %v176 = vld [vmem:[%s1 + $0x28] sm:$0xff]
      %v177 = vld [vmem:[%s1 + $0x30] sm:$0xff]
      %v178 = vld [vmem:[%s1 + $0x38] sm:$0xff]
      %v179 = vld [vmem:[%s1 + $0x40] sm:$0xff]
      %v180 = vld [vmem:[%s1 + $0x48] sm:$0xff]
      %v181 = vld [vmem:[%s1 + $0x50] sm:$0xff]
      %v182 = vld [vmem:[%s1 + $0x58] sm:$0xff]
      %v183 = vld [vmem:[%s1 + $0x60] sm:$0xff]
      %v184 = vld [vmem:[%s1 + $0x68] sm:$0xff]
      %v185 = vld [vmem:[%s1 + $0x70] sm:$0xff]
      %v186 = vld [vmem:[%s1 + $0x78] sm:$0xff]
      %v187 = vld [vmem:[%s165] sm:$0xff]
      %v188 = vld [vmem:[%s165 + $0x8] sm:$0xff]
      %v189 = vld [vmem:[%s165 + $0x10] sm:$0xff]
      %v190 = vld [vmem:[%s165 + $0x18] sm:$0xff]
      %v191 = vld [vmem:[%s165 + $0x20] sm:$0xff]
      %v192 = vld [vmem:[%s165 + $0x28] sm:$0xff]
      %v193 = vld [vmem:[%s165 + $0x30] sm:$0xff]
      %v194 = vld [vmem:[%s165 + $0x38] sm:$0xff]
      %v195 = vld [vmem:[%s165 + $0x40] sm:$0xff]
      %v196 = vld [vmem:[%s165 + $0x48] sm:$0xff]
      %v197 = vld [vmem:[%s165 + $0x50] sm:$0xff]
      %v198 = vld [vmem:[%s165 + $0x58] sm:$0xff]
      %v199 = vld [vmem:[%s165 + $0x60] sm:$0xff]
      %v200 = vld [vmem:[%s165 + $0x68] sm:$0xff]
      %v201 = vld [vmem:[%s165 + $0x70] sm:$0xff]
      %v202 = vld [vmem:[%s165 + $0x78] sm:$0xff]
      %v203 = vld [vmem:[%s165 + $0x80] sm:$0xff]
      %v204 = vld [vmem:[%s165 + $0x88] sm:$0xff]
      %v205 = vld [vmem:[%s165 + $0x90] sm:$0xff]
      %v206 = vld [vmem:[%s165 + $0x98] sm:$0xff]
      %v207 = vld [vmem:[%s165 + $0xa0] sm:$0xff]
      %v208 = vld [vmem:[%s165 + $0xa8] sm:$0xff]
      %v209 = vld [vmem:[%s165 + $0xb0] sm:$0xff]
      %v210 = vld [vmem:[%s165 + $0xb8] sm:$0xff]
      %v211 = vld [vmem:[%s165 + $0xc0] sm:$0xff]
      %v212 = vld [vmem:[%s165 + $0xc8] sm:$0xff]
      %v213 = vld [vmem:[%s165 + $0xd0] sm:$0xff]
      %v214 = vld [vmem:[%s165 + $0xd8] sm:$0xff]
      %v215 = vld [vmem:[%s165 + $0xe0] sm:$0xff]
      %v216 = vld [vmem:[%s165 + $0xe8] sm:$0xff]
      %v217 = vld [vmem:[%s165 + $0xf0] sm:$0xff]
      %v218 = vld [vmem:[%s165 + $0xf8] sm:$0xff]
      %v219 = vld [vmem:[%s165 + $0x100] sm:$0xff]
      %v220 = vld [vmem:[%s165 + $0x108] sm:$0xff]
      %v221 = vld [vmem:[%s165 + $0x110] sm:$0xff]
      %v222 = vld [vmem:[%s165 + $0x118] sm:$0xff]
      %v223 = vld [vmem:[%s165 + $0x120] sm:$0xff]
      %v224 = vld [vmem:[%s165 + $0x128] sm:$0xff]
      %v225 = vld [vmem:[%s165 + $0x130] sm:$0xff]
      %v226 = vld [vmem:[%s165 + $0x138] sm:$0xff]
      %v227 = vld [vmem:[%s165 + $0x140] sm:$0xff]
      %v228 = vld [vmem:[%s165 + $0x148] sm:$0xff]
      %v229 = vld [vmem:[%s165 + $0x150] sm:$0xff]
      %v230 = vld [vmem:[%s165 + $0x158] sm:$0xff]
      %v231 = vld [vmem:[%s165 + $0x160] sm:$0xff]
      %v232 = vld [vmem:[%s165 + $0x168] sm:$0xff]
      %v233 = vld [vmem:[%s165 + $0x170] sm:$0xff]
      %v234 = vld [vmem:[%s165 + $0x178] sm:$0xff]
      %v235 = vld [vmem:[%s165 + $0x180] sm:$0xff]
      %v236 = vld [vmem:[%s165 + $0x188] sm:$0xff]
      %v237 = vld [vmem:[%s165 + $0x190] sm:$0xff]
      %v238 = vld [vmem:[%s165 + $0x198] sm:$0xff]
      %v239 = vld [vmem:[%s165 + $0x1a0] sm:$0xff]
      %v240 = vld [vmem:[%s165 + $0x1a8] sm:$0xff]
      %v241 = vld [vmem:[%s165 + $0x1b0] sm:$0xff]
      %v242 = vld [vmem:[%s165 + $0x1b8] sm:$0xff]
      %v243 = vld [vmem:[%s165 + $0x1c0] sm:$0xff]
      %v244 = vld [vmem:[%s165 + $0x1c8] sm:$0xff]
      %v245 = vld [vmem:[%s165 + $0x1d0] sm:$0xff]
      %v246 = vld [vmem:[%s165 + $0x1d8] sm:$0xff]
      %v247 = vld [vmem:[%s165 + $0x1e0] sm:$0xff]
      %v248 = vld [vmem:[%s165 + $0x1e8] sm:$0xff]
      %v249 = vld [vmem:[%s165 + $0x1f0] sm:$0xff]
      %v250 = vld [vmem:[%s165 + $0x1f8] sm:$0xff]
      %v251 = vld [vmem:[%s2] sm:$0xff]
      %v252 = vld [vmem:[%s2 + $0x8] sm:$0xff]
      %v253 = vld [vmem:[%s2 + $0x10] sm:$0xff]
      %v254 = vld [vmem:[%s2 + $0x18] sm:$0xff]
      %v255 = vld [vmem:[%s2 + $0x20] sm:$0xff]
      %v256 = vld [vmem:[%s2 + $0x28] sm:$0xff]
      %v257 = vld [vmem:[%s2 + $0x30] sm:$0xff]
      %v258 = vld [vmem:[%s2 + $0x38] sm:$0xff]
      %260 = vset.pattern.permute.xlu0 0
      %261 = vperm.xlu0 %260, %v251
      %v262 = vpop.permute.xlu0 %261
      %265 = vset.pattern.permute.xlu0 0
      %266 = vperm.xlu0 %265, %v252
      %v267 = vpop.permute.xlu0 %266
      %270 = vset.pattern.permute.xlu0 0
      %271 = vperm.xlu0 %270, %v253
      %v272 = vpop.permute.xlu0 %271
      %275 = vset.pattern.permute.xlu0 0
      %276 = vperm.xlu0 %275, %v254
      %v277 = vpop.permute.xlu0 %276
      %280 = vset.pattern.permute.xlu0 0
      %281 = vperm.xlu0 %280, %v255
      %v282 = vpop.permute.xlu0 %281
      %285 = vset.pattern.permute.xlu0 0
      %286 = vperm.xlu0 %285, %v256
      %v287 = vpop.permute.xlu0 %286
      %290 = vset.pattern.permute.xlu0 0
      %291 = vperm.xlu0 %290, %v257
      %v292 = vpop.permute.xlu0 %291
      %295 = vset.pattern.permute.xlu0 0
      %296 = vperm.xlu0 %295, %v258
      %v297 = vpop.permute.xlu0 %296
      %v315 = vunpack.c.l.b16 %v171
      %v316 = vunpack.c.h.b16 %v171
      %v317 = vunpack.c.l.b16 %v172
      %v318 = vunpack.c.h.b16 %v172
      %v319 = vunpack.c.l.b16 %v173
      %v320 = vunpack.c.h.b16 %v173
      %v321 = vunpack.c.l.b16 %v174
      %v322 = vunpack.c.h.b16 %v174
      %v323 = vunpack.c.l.b16 %v175
      %v324 = vunpack.c.h.b16 %v175
      %v325 = vunpack.c.l.b16 %v176
      %v326 = vunpack.c.h.b16 %v176
      %v327 = vunpack.c.l.b16 %v177
      %v328 = vunpack.c.h.b16 %v177
      %v329 = vunpack.c.l.b16 %v178
      %v330 = vunpack.c.h.b16 %v178
      %v331 = vunpack.c.l.b16 %v179
      %v332 = vunpack.c.h.b16 %v179
      %v333 = vunpack.c.l.b16 %v180
      %v334 = vunpack.c.h.b16 %v180
      %v335 = vunpack.c.l.b16 %v181
      %v336 = vunpack.c.h.b16 %v181
      %v337 = vunpack.c.l.b16 %v182
      %v338 = vunpack.c.h.b16 %v182
      %v339 = vunpack.c.l.b16 %v183
      %v340 = vunpack.c.h.b16 %v183
      %v341 = vunpack.c.l.b16 %v184
      %v342 = vunpack.c.h.b16 %v184
      %v343 = vunpack.c.l.b16 %v185
      %v344 = vunpack.c.h.b16 %v185
      %v345 = vunpack.c.l.b16 %v186
      %v346 = vunpack.c.h.b16 %v186
      %v347 = vpack.c.b16 %v319, %v315
      %v348 = vpack.c.b16 %v320, %v316
      %v349 = vpack.c.b16 %v321, %v317
      %v350 = vpack.c.b16 %v322, %v318
      %v351 = vpack.c.b16 %v327, %v323
      %v352 = vpack.c.b16 %v328, %v324
      %v353 = vpack.c.b16 %v329, %v325
      %v354 = vpack.c.b16 %v330, %v326
      %v355 = vpack.c.b16 %v335, %v331
      %v356 = vpack.c.b16 %v336, %v332
      %v357 = vpack.c.b16 %v337, %v333
      %v358 = vpack.c.b16 %v338, %v334
      %v359 = vpack.c.b16 %v343, %v339
      %v360 = vpack.c.b16 %v344, %v340
      %v361 = vpack.c.b16 %v345, %v341
      %v362 = vpack.c.b16 %v346, %v342
      %v443 = vunpack.c.l.b16 %v187
      %v444 = vunpack.c.h.b16 %v187
      %v445 = vunpack.c.l.b16 %v188
      %v446 = vunpack.c.h.b16 %v188
      %v447 = vunpack.c.l.b16 %v189
      %v448 = vunpack.c.h.b16 %v189
      %v449 = vunpack.c.l.b16 %v190
      %v450 = vunpack.c.h.b16 %v190
      %v451 = vunpack.c.l.b16 %v191
      %v452 = vunpack.c.h.b16 %v191
      %v453 = vunpack.c.l.b16 %v192
      %v454 = vunpack.c.h.b16 %v192
      %v455 = vunpack.c.l.b16 %v193
      %v456 = vunpack.c.h.b16 %v193
      %v457 = vunpack.c.l.b16 %v194
      %v458 = vunpack.c.h.b16 %v194
      %v459 = vunpack.c.l.b16 %v195
      %v460 = vunpack.c.h.b16 %v195
      %v461 = vunpack.c.l.b16 %v196
      %v462 = vunpack.c.h.b16 %v196
      %v463 = vunpack.c.l.b16 %v197
      %v464 = vunpack.c.h.b16 %v197
      %v465 = vunpack.c.l.b16 %v198
      %v466 = vunpack.c.h.b16 %v198
      %v467 = vunpack.c.l.b16 %v199
      %v468 = vunpack.c.h.b16 %v199
      %v469 = vunpack.c.l.b16 %v200
      %v470 = vunpack.c.h.b16 %v200
      %v471 = vunpack.c.l.b16 %v201
      %v472 = vunpack.c.h.b16 %v201
      %v473 = vunpack.c.l.b16 %v202
      %v474 = vunpack.c.h.b16 %v202
      %v475 = vunpack.c.l.b16 %v203
      %v476 = vunpack.c.h.b16 %v203
      %v477 = vunpack.c.l.b16 %v204
      %v478 = vunpack.c.h.b16 %v204
      %v479 = vunpack.c.l.b16 %v205
      %v480 = vunpack.c.h.b16 %v205
      %v481 = vunpack.c.l.b16 %v206
      %v482 = vunpack.c.h.b16 %v206
      %v483 = vunpack.c.l.b16 %v207
      %v484 = vunpack.c.h.b16 %v207
      %v485 = vunpack.c.l.b16 %v208
      %v486 = vunpack.c.h.b16 %v208
      %v487 = vunpack.c.l.b16 %v209
      %v488 = vunpack.c.h.b16 %v209
      %v489 = vunpack.c.l.b16 %v210
      %v490 = vunpack.c.h.b16 %v210
      %v491 = vunpack.c.l.b16 %v211
      %v492 = vunpack.c.h.b16 %v211
      %v493 = vunpack.c.l.b16 %v212
      %v494 = vunpack.c.h.b16 %v212
      %v495 = vunpack.c.l.b16 %v213
      %v496 = vunpack.c.h.b16 %v213
      %v497 = vunpack.c.l.b16 %v214
      %v498 = vunpack.c.h.b16 %v214
      %v499 = vunpack.c.l.b16 %v215
      %v500 = vunpack.c.h.b16 %v215
      %v501 = vunpack.c.l.b16 %v216
      %v502 = vunpack.c.h.b16 %v216
      %v503 = vunpack.c.l.b16 %v217
      %v504 = vunpack.c.h.b16 %v217
      %v505 = vunpack.c.l.b16 %v218
      %v506 = vunpack.c.h.b16 %v218
      %v507 = vunpack.c.l.b16 %v219
      %v508 = vunpack.c.h.b16 %v219
      %v509 = vunpack.c.l.b16 %v220
      %v510 = vunpack.c.h.b16 %v220
      %v511 = vunpack.c.l.b16 %v221
      %v512 = vunpack.c.h.b16 %v221
      %v513 = vunpack.c.l.b16 %v222
      %v514 = vunpack.c.h.b16 %v222
      %v515 = vunpack.c.l.b16 %v223
      %v516 = vunpack.c.h.b16 %v223
      %v517 = vunpack.c.l.b16 %v224
      %v518 = vunpack.c.h.b16 %v224
      %v519 = vunpack.c.l.b16 %v225
      %v520 = vunpack.c.h.b16 %v225
      %v521 = vunpack.c.l.b16 %v226
      %v522 = vunpack.c.h.b16 %v226
      %v523 = vunpack.c.l.b16 %v227
      %v524 = vunpack.c.h.b16 %v227
      %v525 = vunpack.c.l.b16 %v228
      %v526 = vunpack.c.h.b16 %v228
      %v527 = vunpack.c.l.b16 %v229
      %v528 = vunpack.c.h.b16 %v229
      %v529 = vunpack.c.l.b16 %v230
      %v530 = vunpack.c.h.b16 %v230
      %v531 = vunpack.c.l.b16 %v231
      %v532 = vunpack.c.h.b16 %v231
      %v533 = vunpack.c.l.b16 %v232
      %v534 = vunpack.c.h.b16 %v232
      %v535 = vunpack.c.l.b16 %v233
      %v536 = vunpack.c.h.b16 %v233
      %v537 = vunpack.c.l.b16 %v234
      %v538 = vunpack.c.h.b16 %v234
      %v539 = vunpack.c.l.b16 %v235
      %v540 = vunpack.c.h.b16 %v235
      %v541 = vunpack.c.l.b16 %v236
      %v542 = vunpack.c.h.b16 %v236
      %v543 = vunpack.c.l.b16 %v237
      %v544 = vunpack.c.h.b16 %v237
      %v545 = vunpack.c.l.b16 %v238
      %v546 = vunpack.c.h.b16 %v238
      %v547 = vunpack.c.l.b16 %v239
      %v548 = vunpack.c.h.b16 %v239
      %v549 = vunpack.c.l.b16 %v240
      %v550 = vunpack.c.h.b16 %v240
      %v551 = vunpack.c.l.b16 %v241
      %v552 = vunpack.c.h.b16 %v241
      %v553 = vunpack.c.l.b16 %v242
      %v554 = vunpack.c.h.b16 %v242
      %v555 = vunpack.c.l.b16 %v243
      %v556 = vunpack.c.h.b16 %v243
      %v557 = vunpack.c.l.b16 %v244
      %v558 = vunpack.c.h.b16 %v244
      %v559 = vunpack.c.l.b16 %v245
      %v560 = vunpack.c.h.b16 %v245
      %v561 = vunpack.c.l.b16 %v246
      %v562 = vunpack.c.h.b16 %v246
      %v563 = vunpack.c.l.b16 %v247
      %v564 = vunpack.c.h.b16 %v247
      %v565 = vunpack.c.l.b16 %v248
      %v566 = vunpack.c.h.b16 %v248
      %v567 = vunpack.c.l.b16 %v249
      %v568 = vunpack.c.h.b16 %v249
      %v569 = vunpack.c.l.b16 %v250
      %v570 = vunpack.c.h.b16 %v250
      %v571 = vpack.c.b16 %v445, %v443
      %v572 = vpack.c.b16 %v446, %v444
      %v573 = vpack.c.b16 %v449, %v447
      %v574 = vpack.c.b16 %v450, %v448
      %v575 = vpack.c.b16 %v453, %v451
      %v576 = vpack.c.b16 %v454, %v452
      %v577 = vpack.c.b16 %v457, %v455
      %v578 = vpack.c.b16 %v458, %v456
      %v579 = vpack.c.b16 %v461, %v459
      %v580 = vpack.c.b16 %v462, %v460
      %v581 = vpack.c.b16 %v465, %v463
      %v582 = vpack.c.b16 %v466, %v464
      %v583 = vpack.c.b16 %v469, %v467
      %v584 = vpack.c.b16 %v470, %v468
      %v585 = vpack.c.b16 %v473, %v471
      %v586 = vpack.c.b16 %v474, %v472
      %v587 = vpack.c.b16 %v477, %v475
      %v588 = vpack.c.b16 %v478, %v476
      %v589 = vpack.c.b16 %v481, %v479
      %v590 = vpack.c.b16 %v482, %v480
      %v591 = vpack.c.b16 %v485, %v483
      %v592 = vpack.c.b16 %v486, %v484
      %v593 = vpack.c.b16 %v489, %v487
      %v594 = vpack.c.b16 %v490, %v488
      %v595 = vpack.c.b16 %v493, %v491
      %v596 = vpack.c.b16 %v494, %v492
      %v597 = vpack.c.b16 %v497, %v495
      %v598 = vpack.c.b16 %v498, %v496
      %v599 = vpack.c.b16 %v501, %v499
      %v600 = vpack.c.b16 %v502, %v500
      %v601 = vpack.c.b16 %v505, %v503
      %v602 = vpack.c.b16 %v506, %v504
      %v603 = vpack.c.b16 %v509, %v507
      %v604 = vpack.c.b16 %v510, %v508
      %v605 = vpack.c.b16 %v513, %v511
      %v606 = vpack.c.b16 %v514, %v512
      %v607 = vpack.c.b16 %v517, %v515
      %v608 = vpack.c.b16 %v518, %v516
      %v609 = vpack.c.b16 %v521, %v519
      %v610 = vpack.c.b16 %v522, %v520
      %v611 = vpack.c.b16 %v525, %v523
      %v612 = vpack.c.b16 %v526, %v524
      %v613 = vpack.c.b16 %v529, %v527
      %v614 = vpack.c.b16 %v530, %v528
      %v615 = vpack.c.b16 %v533, %v531
      %v616 = vpack.c.b16 %v534, %v532
      %v617 = vpack.c.b16 %v537, %v535
      %v618 = vpack.c.b16 %v538, %v536
      %v619 = vpack.c.b16 %v541, %v539
      %v620 = vpack.c.b16 %v542, %v540
      %v621 = vpack.c.b16 %v545, %v543
      %v622 = vpack.c.b16 %v546, %v544
      %v623 = vpack.c.b16 %v549, %v547
      %v624 = vpack.c.b16 %v550, %v548
      %v625 = vpack.c.b16 %v553, %v551
      %v626 = vpack.c.b16 %v554, %v552
      %v627 = vpack.c.b16 %v557, %v555
      %v628 = vpack.c.b16 %v558, %v556
      %v629 = vpack.c.b16 %v561, %v559
      %v630 = vpack.c.b16 %v562, %v560
      %v631 = vpack.c.b16 %v565, %v563
      %v632 = vpack.c.b16 %v566, %v564
      %v633 = vpack.c.b16 %v569, %v567
      %v634 = vpack.c.b16 %v570, %v568
      %699 = vmatprep.subr.bf16.mxu0 %v572
      %700 = vmatpush1.bf16.msra.mxu0 %v571
      %701 = vmatprep.subr.bf16.mxu0 %v574
      %702 = vmatpush1.bf16.msra.mxu0 %v573
      %703 = vmatprep.subr.bf16.mxu0 %v576
      %704 = vmatpush1.bf16.msra.mxu0 %v575
      %705 = vmatprep.subr.bf16.mxu0 %v578
      %706 = vmatpush1.bf16.msra.mxu0 %v577
      %707 = vmatprep.subr.bf16.mxu0 %v580
      %708 = vmatpush1.bf16.msra.mxu0 %v579
      %709 = vmatprep.subr.bf16.mxu0 %v582
      %710 = vmatpush1.bf16.msra.mxu0 %v581
      %711 = vmatprep.subr.bf16.mxu0 %v584
      %712 = vmatpush1.bf16.msra.mxu0 %v583
      %713 = vmatprep.subr.bf16.mxu0 %v586
      %714 = vmatpush1.bf16.msra.mxu0 %v585
      %715 = vmatprep.subr.bf16.mxu0 %v588
      %716 = vmatpush1.bf16.msra.mxu0 %v587
      %717 = vmatprep.subr.bf16.mxu0 %v590
      %718 = vmatpush1.bf16.msra.mxu0 %v589
      %719 = vmatprep.subr.bf16.mxu0 %v592
      %720 = vmatpush1.bf16.msra.mxu0 %v591
      %721 = vmatprep.subr.bf16.mxu0 %v594
      %722 = vmatpush1.bf16.msra.mxu0 %v593
      %723 = vmatprep.subr.bf16.mxu0 %v596
      %724 = vmatpush1.bf16.msra.mxu0 %v595
      %725 = vmatprep.subr.bf16.mxu0 %v598
      %726 = vmatpush1.bf16.msra.mxu0 %v597
      %727 = vmatprep.subr.bf16.mxu0 %v600
      %728 = vmatpush1.bf16.msra.mxu0 %v599
      %729 = vmatprep.subr.bf16.mxu0 %v602
      %730 = vmatpush1.bf16.msra.mxu0 %v601
      %731 = vmatprep.mubr.bf16.mxu0 %v348
      %732 = vmatmul.mubr.bf16.gmra.mrb[0].mxu0 %v347
      %v733 = vpop.f32.mrb[0].mxu0
      %v734 = vadd.f32 %v262, %v733
      %v735 = vpop.f32.mrb[0].mxu0
      %v736 = vadd.f32 %v262, %v735
      %v737 = vpop.f32.mrb[0].mxu0
      %v738 = vadd.f32 %v267, %v737
      %v739 = vpop.f32.mrb[0].mxu0
      %v740 = vadd.f32 %v267, %v739
      %741 = vmatprep.mubr.bf16.mxu0 %v352
      %742 = vmatmul.mubr.bf16.gmra.mrb[0].mxu0 %v351
      %v743 = vpop.f32.mrb[0].mxu0
      %v744 = vadd.f32 %v272, %v743
      %v745 = vpop.f32.mrb[0].mxu0
      %v746 = vadd.f32 %v272, %v745
      %v747 = vpop.f32.mrb[0].mxu0
      %v748 = vadd.f32 %v277, %v747
      %v749 = vpop.f32.mrb[0].mxu0
      %v750 = vadd.f32 %v277, %v749
      %751 = vmatprep.mubr.bf16.mxu0 %v356
      %752 = vmatmul.mubr.bf16.gmra.mrb[0].mxu0 %v355
      %v753 = vpop.f32.mrb[0].mxu0
      %v754 = vadd.f32 %v282, %v753
      %v755 = vpop.f32.mrb[0].mxu0
      %v756 = vadd.f32 %v282, %v755
      %v757 = vpop.f32.mrb[0].mxu0
      %v758 = vadd.f32 %v287, %v757
      %v759 = vpop.f32.mrb[0].mxu0
      %v760 = vadd.f32 %v287, %v759
      %761 = vmatprep.mubr.bf16.mxu0 %v360
      %762 = vmatmul.mubr.bf16.gmra.mrb[0].mxu0 %v359
      %v763 = vpop.f32.mrb[0].mxu0
      %v764 = vadd.f32 %v292, %v763
      %v765 = vpop.f32.mrb[0].mxu0
      %v766 = vadd.f32 %v292, %v765
      %v767 = vpop.f32.mrb[0].mxu0
      %v768 = vadd.f32 %v297, %v767
      %v769 = vpop.f32.mrb[0].mxu0
      %v770 = vadd.f32 %v297, %v769
      %771 = vdwg.mxu0
      %772 = vmatprep.subr.bf16.mxu0 %v604
      %773 = vmatpush1.bf16.msra.mxu0 %v603
      %774 = vmatprep.subr.bf16.mxu0 %v606
      %775 = vmatpush1.bf16.msra.mxu0 %v605
      %776 = vmatprep.subr.bf16.mxu0 %v608
      %777 = vmatpush1.bf16.msra.mxu0 %v607
      %778 = vmatprep.subr.bf16.mxu0 %v610
      %779 = vmatpush1.bf16.msra.mxu0 %v609
      %780 = vmatprep.subr.bf16.mxu0 %v612
      %781 = vmatpush1.bf16.msra.mxu0 %v611
      %782 = vmatprep.subr.bf16.mxu0 %v614
      %783 = vmatpush1.bf16.msra.mxu0 %v613
      %784 = vmatprep.subr.bf16.mxu0 %v616
      %785 = vmatpush1.bf16.msra.mxu0 %v615
      %786 = vmatprep.subr.bf16.mxu0 %v618
      %787 = vmatpush1.bf16.msra.mxu0 %v617
      %788 = vmatprep.subr.bf16.mxu0 %v620
      %789 = vmatpush1.bf16.msra.mxu0 %v619
      %790 = vmatprep.subr.bf16.mxu0 %v622
      %791 = vmatpush1.bf16.msra.mxu0 %v621
      %792 = vmatprep.subr.bf16.mxu0 %v624
      %793 = vmatpush1.bf16.msra.mxu0 %v623
      %794 = vmatprep.subr.bf16.mxu0 %v626
      %795 = vmatpush1.bf16.msra.mxu0 %v625
      %796 = vmatprep.subr.bf16.mxu0 %v628
      %797 = vmatpush1.bf16.msra.mxu0 %v627
      %798 = vmatprep.subr.bf16.mxu0 %v630
      %799 = vmatpush1.bf16.msra.mxu0 %v629
      %800 = vmatprep.subr.bf16.mxu0 %v632
      %801 = vmatpush1.bf16.msra.mxu0 %v631
      %802 = vmatprep.subr.bf16.mxu0 %v634
      %803 = vmatpush1.bf16.msra.mxu0 %v633
      %804 = vmatprep.mubr.bf16.mxu0 %v350
      %805 = vmatmul.mubr.bf16.gmra.mrb[0].mxu0 %v349
      %v806 = vpop.f32.mrb[0].mxu0
      %v807 = vadd.f32 %v734, %v806
      %v808 = vpop.f32.mrb[0].mxu0
      %v809 = vadd.f32 %v736, %v808
      %v810 = vpop.f32.mrb[0].mxu0
      %v811 = vadd.f32 %v738, %v810
      %v812 = vpop.f32.mrb[0].mxu0
      %v813 = vadd.f32 %v740, %v812
      %814 = vmatprep.mubr.bf16.mxu0 %v354
      %815 = vmatmul.mubr.bf16.gmra.mrb[0].mxu0 %v353
      %v816 = vpop.f32.mrb[0].mxu0
      %v817 = vadd.f32 %v744, %v816
      %v818 = vpop.f32.mrb[0].mxu0
      %v819 = vadd.f32 %v746, %v818
      %v820 = vpop.f32.mrb[0].mxu0
      %v821 = vadd.f32 %v748, %v820
      %v822 = vpop.f32.mrb[0].mxu0
      %v823 = vadd.f32 %v750, %v822
      %824 = vmatprep.mubr.bf16.mxu0 %v358
      %825 = vmatmul.mubr.bf16.gmra.mrb[0].mxu0 %v357
      %v826 = vpop.f32.mrb[0].mxu0
      %v827 = vadd.f32 %v754, %v826
      %v828 = vpop.f32.mrb[0].mxu0
      %v829 = vadd.f32 %v756, %v828
      %v830 = vpop.f32.mrb[0].mxu0
      %v831 = vadd.f32 %v758, %v830
      %v832 = vpop.f32.mrb[0].mxu0
      %v833 = vadd.f32 %v760, %v832
      %834 = vmatprep.mubr.bf16.mxu0 %v362
      %835 = vmatmul.mubr.bf16.gmra.mrb[0].mxu0 %v361
      %v836 = vpop.f32.mrb[0].mxu0
      %v837 = vadd.f32 %v764, %v836
      %v838 = vpop.f32.mrb[0].mxu0
      %v839 = vadd.f32 %v766, %v838
      %v840 = vpop.f32.mrb[0].mxu0
      %v841 = vadd.f32 %v768, %v840
      %v842 = vpop.f32.mrb[0].mxu0
      %v843 = vadd.f32 %v770, %v842
      %844 = vdwg.mxu0
      %v845 = vadd.f32 %v807, %v809
      %846 = vadd.xlane.f32.xlu0 %v845
      %v847 = vpop.xlane.xlu0 %846
      %v848 = vadd.f32 %v811, %v813
      %849 = vadd.xlane.f32.xlu0 %v848
      %v850 = vpop.xlane.xlu0 %849
      %v851 = vadd.f32 %v817, %v819
      %852 = vadd.xlane.f32.xlu0 %v851
      %v853 = vpop.xlane.xlu0 %852
      %v854 = vadd.f32 %v821, %v823
      %855 = vadd.xlane.f32.xlu0 %v854
      %v856 = vpop.xlane.xlu0 %855
      %v857 = vadd.f32 %v827, %v829
      %858 = vadd.xlane.f32.xlu0 %v857
      %v859 = vpop.xlane.xlu0 %858
      %v860 = vadd.f32 %v831, %v833
      %861 = vadd.xlane.f32.xlu0 %v860
      %v862 = vpop.xlane.xlu0 %861
      %v863 = vadd.f32 %v837, %v839
      %864 = vadd.xlane.f32.xlu0 %v863
      %v865 = vpop.xlane.xlu0 %864
      %v866 = vadd.f32 %v841, %v843
      %867 = vadd.xlane.f32.xlu0 %v866
      %v868 = vpop.xlane.xlu0 %867
      %v869 = vmul.f32 %v807, %v807
      %v870 = vmul.f32 %v809, %v809
      %v871 = vmul.f32 %v811, %v811
      %v872 = vmul.f32 %v813, %v813
      %v873 = vmul.f32 %v817, %v817
      %v874 = vmul.f32 %v819, %v819
      %v875 = vmul.f32 %v821, %v821
      %v876 = vmul.f32 %v823, %v823
      %v877 = vmul.f32 %v827, %v827
      %v878 = vmul.f32 %v829, %v829
      %v879 = vmul.f32 %v831, %v831
      %v880 = vmul.f32 %v833, %v833
      %v881 = vmul.f32 %v837, %v837
      %v882 = vmul.f32 %v839, %v839
      %v883 = vmul.f32 %v841, %v841
      %v884 = vmul.f32 %v843, %v843
      %v885 = vadd.f32 %v869, %v870
      %886 = vadd.xlane.f32.xlu0 %v885
      %v887 = vpop.xlane.xlu0 %886
      %v888 = vadd.f32 %v871, %v872
      %889 = vadd.xlane.f32.xlu0 %v888
      %v890 = vpop.xlane.xlu0 %889
      %v891 = vadd.f32 %v873, %v874
      %892 = vadd.xlane.f32.xlu0 %v891
      %v893 = vpop.xlane.xlu0 %892
      %v894 = vadd.f32 %v875, %v876
      %895 = vadd.xlane.f32.xlu0 %v894
      %v896 = vpop.xlane.xlu0 %895
      %v897 = vadd.f32 %v877, %v878
      %898 = vadd.xlane.f32.xlu0 %v897
      %v899 = vpop.xlane.xlu0 %898
      %v900 = vadd.f32 %v879, %v880
      %901 = vadd.xlane.f32.xlu0 %v900
      %v902 = vpop.xlane.xlu0 %901
      %v903 = vadd.f32 %v881, %v882
      %904 = vadd.xlane.f32.xlu0 %v903
      %v905 = vpop.xlane.xlu0 %904
      %v906 = vadd.f32 %v883, %v884
      %907 = vadd.xlane.f32.xlu0 %v906
      %v908 = vpop.xlane.xlu0 %907
      %v909 = vmul.f32 %v847, 0.00390625
      %v910 = vmul.f32 %v850, 0.00390625
      %v911 = vmul.f32 %v853, 0.00390625
      %v912 = vmul.f32 %v856, 0.00390625
      %v913 = vmul.f32 %v859, 0.00390625
      %v914 = vmul.f32 %v862, 0.00390625
      %v915 = vmul.f32 %v865, 0.00390625
      %v916 = vmul.f32 %v868, 0.00390625
      %v917 = vmul.f32 %v887, 0.00390625
      %v918 = vmul.f32 %v890, 0.00390625
      %v919 = vmul.f32 %v893, 0.00390625
      %v920 = vmul.f32 %v896, 0.00390625
      %v921 = vmul.f32 %v899, 0.00390625
      %v922 = vmul.f32 %v902, 0.00390625
      %v923 = vmul.f32 %v905, 0.00390625
      %v924 = vmul.f32 %v908, 0.00390625
      %v925 = vmul.f32 %v909, %v909
      %v926 = vmul.f32 %v910, %v910
      %v927 = vmul.f32 %v911, %v911
      %v928 = vmul.f32 %v912, %v912
      %v929 = vmul.f32 %v913, %v913
      %v930 = vmul.f32 %v914, %v914
      %v931 = vmul.f32 %v915, %v915
      %v932 = vmul.f32 %v916, %v916
      %v933 = vsub.f32 %v917, %v925
      %v934 = vsub.f32 %v918, %v926
      %v935 = vsub.f32 %v919, %v927
      %v936 = vsub.f32 %v920, %v928
      %v937 = vsub.f32 %v921, %v929
      %v938 = vsub.f32 %v922, %v930
      %v939 = vsub.f32 %v923, %v931
      %v940 = vsub.f32 %v924, %v932
      %v941 = vmax.f32 %v933, 0.0
      %v942 = vmax.f32 %v934, 0.0
      %v943 = vmax.f32 %v935, 0.0
      %v944 = vmax.f32 %v936, 0.0
      %v945 = vmax.f32 %v937, 0.0
      %v946 = vmax.f32 %v938, 0.0
      %v947 = vmax.f32 %v939, 0.0
      %v948 = vmax.f32 %v940, 0.0
      %v949 = vadd.f32 %v941, 1e-05
      %v950 = vadd.f32 %v942, 1e-05
      %v951 = vadd.f32 %v943, 1e-05
      %v952 = vadd.f32 %v944, 1e-05
      %v953 = vadd.f32 %v945, 1e-05
      %v954 = vadd.f32 %v946, 1e-05
      %v955 = vadd.f32 %v947, 1e-05
      %v956 = vadd.f32 %v948, 1e-05
      %v957 = vrsqrt.pop %v949
      %v958 = vrsqrt.pop %v950
      %v959 = vrsqrt.pop %v951
      %v960 = vrsqrt.pop %v952
      %v961 = vrsqrt.pop %v953
      %v962 = vrsqrt.pop %v954
      %v963 = vrsqrt.pop %v955
      %v964 = vrsqrt.pop %v956
      %v965 = vsub.f32 %v807, %v909
      %v966 = vsub.f32 %v809, %v909
      %v967 = vsub.f32 %v811, %v910
      %v968 = vsub.f32 %v813, %v910
      %v969 = vsub.f32 %v817, %v911
      %v970 = vsub.f32 %v819, %v911
      %v971 = vsub.f32 %v821, %v912
      %v972 = vsub.f32 %v823, %v912
      %v973 = vsub.f32 %v827, %v913
      %v974 = vsub.f32 %v829, %v913
      %v975 = vsub.f32 %v831, %v914
      %v976 = vsub.f32 %v833, %v914
      %v977 = vsub.f32 %v837, %v915
      %v978 = vsub.f32 %v839, %v915
      %v979 = vsub.f32 %v841, %v916
      %v980 = vsub.f32 %v843, %v916
      %v981 = vmul.f32 %v965, %v957
      %v982 = vmul.f32 %v966, %v957
      %v983 = vmul.f32 %v967, %v958
      %v984 = vmul.f32 %v968, %v958
      %v985 = vmul.f32 %v969, %v959
      %v986 = vmul.f32 %v970, %v959
      %v987 = vmul.f32 %v971, %v960
      %v988 = vmul.f32 %v972, %v960
      %v989 = vmul.f32 %v973, %v961
      %v990 = vmul.f32 %v974, %v961
      %v991 = vmul.f32 %v975, %v962
      %v992 = vmul.f32 %v976, %v962
      %v993 = vmul.f32 %v977, %v963
      %v994 = vmul.f32 %v978, %v963
      %v995 = vmul.f32 %v979, %v964
      %v996 = vmul.f32 %v980, %v964
      %vm997 = vcmp.gt.f32.partialorder %v981, 0.0
      %vm998 = vcmp.gt.f32.partialorder %v982, 0.0
      %vm999 = vcmp.gt.f32.partialorder %v983, 0.0
      %vm1000 = vcmp.gt.f32.partialorder %v984, 0.0
      %vm1001 = vcmp.gt.f32.partialorder %v985, 0.0
      %vm1002 = vcmp.gt.f32.partialorder %v986, 0.0
      %vm1003 = vcmp.gt.f32.partialorder %v987, 0.0
      %vm1004 = vcmp.gt.f32.partialorder %v988, 0.0
      %vm1005 = vcmp.gt.f32.partialorder %v989, 0.0
      %vm1006 = vcmp.gt.f32.partialorder %v990, 0.0
      %vm1007 = vcmp.gt.f32.partialorder %v991, 0.0
      %vm1008 = vcmp.gt.f32.partialorder %v992, 0.0
      %vm1009 = vcmp.gt.f32.partialorder %v993, 0.0
      %vm1010 = vcmp.gt.f32.partialorder %v994, 0.0
      %vm1011 = vcmp.gt.f32.partialorder %v995, 0.0
      %vm1012 = vcmp.gt.f32.partialorder %v996, 0.0
      %v1013 = vmul.f32 %v981, 0.2
      %v1014 = vmul.f32 %v982, 0.2
      %v1015 = vmul.f32 %v983, 0.2
      %v1016 = vmul.f32 %v984, 0.2
      %v1017 = vmul.f32 %v985, 0.2
      %v1018 = vmul.f32 %v986, 0.2
      %v1019 = vmul.f32 %v987, 0.2
      %v1020 = vmul.f32 %v988, 0.2
      %v1021 = vmul.f32 %v989, 0.2
      %v1022 = vmul.f32 %v990, 0.2
      %v1023 = vmul.f32 %v991, 0.2
      %v1024 = vmul.f32 %v992, 0.2
      %v1025 = vmul.f32 %v993, 0.2
      %v1026 = vmul.f32 %v994, 0.2
      %v1027 = vmul.f32 %v995, 0.2
      %v1028 = vmul.f32 %v996, 0.2
      %v1029 = vsel %vm997, %v981, %v1013
      %v1030 = vsel %vm998, %v982, %v1014
      %v1031 = vsel %vm999, %v983, %v1015
      %v1032 = vsel %vm1000, %v984, %v1016
      %v1033 = vsel %vm1001, %v985, %v1017
      %v1034 = vsel %vm1002, %v986, %v1018
      %v1035 = vsel %vm1003, %v987, %v1019
      %v1036 = vsel %vm1004, %v988, %v1020
      %v1037 = vsel %vm1005, %v989, %v1021
      %v1038 = vsel %vm1006, %v990, %v1022
      %v1039 = vsel %vm1007, %v991, %v1023
      %v1040 = vsel %vm1008, %v992, %v1024
      %v1041 = vsel %vm1009, %v993, %v1025
      %v1042 = vsel %vm1010, %v994, %v1026
      %v1043 = vsel %vm1011, %v995, %v1027
      %v1044 = vsel %vm1012, %v996, %v1028
      %1045 = vst [vmem:[%s170] sm:$0xff] %v1029
      %1046 = vst [vmem:[%s170 + $0x8] sm:$0xff] %v1030
      %1047 = vst [vmem:[%s170 + $0x10] sm:$0xff] %v1031
      %1048 = vst [vmem:[%s170 + $0x18] sm:$0xff] %v1032
      %1049 = vst [vmem:[%s170 + $0x20] sm:$0xff] %v1033
      %1050 = vst [vmem:[%s170 + $0x28] sm:$0xff] %v1034
      %1051 = vst [vmem:[%s170 + $0x30] sm:$0xff] %v1035
      %1052 = vst [vmem:[%s170 + $0x38] sm:$0xff] %v1036
      %1053 = vst [vmem:[%s170 + $0x40] sm:$0xff] %v1037
      %1054 = vst [vmem:[%s170 + $0x48] sm:$0xff] %v1038
      %1055 = vst [vmem:[%s170 + $0x50] sm:$0xff] %v1039
      %1056 = vst [vmem:[%s170 + $0x58] sm:$0xff] %v1040
      %1057 = vst [vmem:[%s170 + $0x60] sm:$0xff] %v1041
      %1058 = vst [vmem:[%s170 + $0x68] sm:$0xff] %v1042
      %1059 = vst [vmem:[%s170 + $0x70] sm:$0xff] %v1043
      %1060 = vst [vmem:[%s170 + $0x78] sm:$0xff] %v1044
      %p1061 = scmp.lt.s32.totalorder %s14, 1
      %s1062 = scalar_select %p1061, %s14, 1
      %s1063 = smul.addr %s1062, 16
      %s1064 = smul.addr %s1063, 8
      %s1065 = scalar_lea.vmem %s3, %s1064
      // Predicated region
      $region33: #{critic_forward.7} parent=31 // pred_check
        %p1066 = pneg %p100
      $region34: #{critic_forward.7} parent=31 // pred_check_branch
        %1068 = sbr.rel (%p1066) target = $region36
      $region35: #{critic_forward.7} parent=31 // pred_region
        _
      $region36: #{critic_forward.7} parent=31 // pred_fallthru
        _
    $region32: #{critic_forward.7} parent=5 // pred_fallthru
      _
    %p1069 = scmp.le.s32.totalorder 2, %s9
    // Predicated region
    $region37: #{critic_forward.7} parent=5 // pred_check
      %p1070 = pneg %p1069
    $region38: #{critic_forward.7} parent=5 // pred_check_branch
      %1072 = sbr.rel (%p1070) target = $region40
    $region39: #{critic_forward.7} parent=5 // pred_region
      %s1073 = ssub.s32 %s9, 2
      // Predicated region
      $region41: #{critic_forward.7} parent=39 // pred_check
        %p1074 = pneg %p106
      $region42: #{critic_forward.7} parent=39 // pred_check_branch
        %1076 = sbr.rel (%p1074) target = $region44
      $region43: #{critic_forward.7} parent=39 // pred_region
        %p1077 = scmp.lt.s32.totalorder %s15, 1
        %s1078 = scalar_select %p1077, %s15, 1
        %s1079 = smul.addr %s1078, 16
        %s1080 = smul.addr %s1079, 8
        %s1081 = scalar_lea.vmem %s3, %s1080
      $region44: #{critic_forward.7} parent=39 // pred_fallthru
        _
    $region40: #{critic_forward.7} parent=5 // pred_fallthru
      _
  $region6: #{critic_forward.7} parent=0 // loop_footer
    %s13 = sadd.s32 1, %s9
  $region7: #{critic_forward.7} parent=0 // loop_footer_branch
    %8 = sbr.rel target = $region3
  $region8: #{critic_forward.7} parent=0 // loop_exit
    _

// kernel: critic_forward.8
$region0: #{critic_forward.8}
  #allocation0 [shape = 'u32[]', space=smem, size = 0x4, offset = 0x4, fixed_abs, tag = 'smem constant byte address 0x4 - core index']
  #allocation1 [shape = 'u32[144,128]{1,0:T(1,128)}', space=vmem, size = 0x12000, scoped, tag = 'internal scratch']
  %s0 = inlined_call_operand.vmem [shape: bf16[2,64,1024], index: 0, kind: input, shape index: {}]
  %s1 = inlined_call_operand.vmem [shape: bf16[1024,128], index: 1, kind: input, shape index: {}]
  %s2 = inlined_call_operand.vmem [shape: f32[1,128], index: 2, kind: input, shape index: {}]
  %s3 = inlined_call_operand.vmem [shape: f32[2,64,128], index: 3, kind: output, shape index: {}]
  %s4 = sld [smem:[#allocation0]]
  $region45: #{critic_forward.8} parent=0
    _
  %s6 = ssub.s32 1, %s4
  %s7 = scalar_select 0, %s6, %s4
  loop: start=0, step=1, limit=4
  $region2: #{critic_forward.8} parent=0 // loop_pre_header
    _
  $region3: #{critic_forward.8} parent=0 // loop_header
    %s9 = sphi 0, %s13
    %p10 = scmp.ge.s32.totalorder %s9, 4
    %s19 = sphi 0, %s21
    %s22 = sphi 0, %s19
    %s23 = sphi 0, %s22
    %s39 = sphi 0, %s23
    %s43 = sphi 0, %s43
    %s45 = sphi 0, %s43
    %s46 = sphi 0, %s45
    %s60 = sphi 0, %s46
    %s64 = sphi 0, %s64
    %s66 = sphi 0, %s64
    %s67 = sphi 0, %s66
    %s81 = sphi 0, %s67
    %s87 = sphi 0, %s89
    %s90 = sphi 0, %s87
    %s91 = sphi 0, %s90
    %s107 = sphi 0, %s91
  $region4: #{critic_forward.8} parent=0 // loop_header_branch
    %12 = sbr.rel (%p10) target = $region8
  $region5: #{critic_forward.8} parent=0 // loop_body
    %s14 = ssub.s32 %s9, 1
    %s15 = ssub.s32 %s9, 2
    %s16 = sadd.s32 %s9, 1
    %s17 = ssub.s32 %s9, %s16
    %p18 = scmp.eq.s32.totalorder %s17, 0
    %s20 = sadd.s32 %s19, 1
    %s21 = scalar_select %p18, %s19, %s20
    %p24 = pneg %p18
    %p25 = scmp.eq.s32.totalorder %s9, 1
    %p26 = por %p24, %p25
    %p27 = scmp.ne.s32.totalorder %s19, %s22
    %p28 = scmp.eq.s32.totalorder %s9, 0
    %p29 = por %p27, %p28
    %p30 = scmp.ne.s32.totalorder %s19, %s22
    %p31 = scmp.eq.s32.totalorder %s14, 1
    %p32 = por %p30, %p31
    %p33 = scmp.ne.s32.totalorder %s22, %s23
    %p34 = scmp.eq.s32.totalorder %s14, 0
    %p35 = por %p33, %p34
    %p36 = scmp.ne.s32.totalorder %s22, %s23
    %p37 = scmp.eq.s32.totalorder %s15, 1
    %p38 = por %p36, %p37
    %p40 = scmp.ne.s32.totalorder %s23, %s39
    %p41 = scmp.eq.s32.totalorder %s15, 0
    %p42 = por %p40, %p41
    %s44 = sadd.s32 %s43, 1
    %p47 = scmp.eq.s32.totalorder %s9, 1
    %p48 = scmp.ne.s32.totalorder %s43, %s45
    %p49 = scmp.eq.s32.totalorder %s9, 0
    %p50 = por %p48, %p49
    %p51 = scmp.ne.s32.totalorder %s43, %s45
    %p52 = scmp.eq.s32.totalorder %s14, 1
    %p53 = por %p51, %p52
    %p54 = scmp.ne.s32.totalorder %s45, %s46
    %p55 = scmp.eq.s32.totalorder %s14, 0
    %p56 = por %p54, %p55
    %p57 = scmp.ne.s32.totalorder %s45, %s46
    %p58 = scmp.eq.s32.totalorder %s15, 1
    %p59 = por %p57, %p58
    %p61 = scmp.ne.s32.totalorder %s46, %s60
    %p62 = scmp.eq.s32.totalorder %s15, 0
    %p63 = por %p61, %p62
    %s65 = sadd.s32 %s64, 1
    %p68 = scmp.eq.s32.totalorder %s9, 1
    %p69 = scmp.ne.s32.totalorder %s64, %s66
    %p70 = scmp.eq.s32.totalorder %s9, 0
    %p71 = por %p69, %p70
    %p72 = scmp.ne.s32.totalorder %s64, %s66
    %p73 = scmp.eq.s32.totalorder %s14, 1
    %p74 = por %p72, %p73
    %p75 = scmp.ne.s32.totalorder %s66, %s67
    %p76 = scmp.eq.s32.totalorder %s14, 0
    %p77 = por %p75, %p76
    %p78 = scmp.ne.s32.totalorder %s66, %s67
    %p79 = scmp.eq.s32.totalorder %s15, 1
    %p80 = por %p78, %p79
    %p82 = scmp.ne.s32.totalorder %s67, %s81
    %p83 = scmp.eq.s32.totalorder %s15, 0
    %p84 = por %p82, %p83
    %s85 = ssub.s32 %s9, %s16
    %p86 = scmp.eq.s32.totalorder %s85, 0
    %s88 = sadd.s32 %s87, 1
    %s89 = scalar_select %p86, %s87, %s88
    %p92 = pneg %p86
    %p93 = scmp.eq.s32.totalorder %s9, 1
    %p94 = por %p92, %p93
    %p95 = scmp.ne.s32.totalorder %s87, %s90
    %p96 = scmp.eq.s32.totalorder %s9, 0
    %p97 = por %p95, %p96
    %p98 = scmp.ne.s32.totalorder %s87, %s90
    %p99 = scmp.eq.s32.totalorder %s14, 1
    %p100 = por %p98, %p99
    %p101 = scmp.ne.s32.totalorder %s90, %s91
    %p102 = scmp.eq.s32.totalorder %s14, 0
    %p103 = por %p101, %p102
    %p104 = scmp.ne.s32.totalorder %s90, %s91
    %p105 = scmp.eq.s32.totalorder %s15, 1
    %p106 = por %p104, %p105
    %p108 = scmp.ne.s32.totalorder %s91, %s107
    %p109 = scmp.eq.s32.totalorder %s15, 0
    %p110 = por %p108, %p109
    %p111 = scmp.le.s32.totalorder 1, %s9
    %p112 = scmp.lt.s32.totalorder %s9, 3
    %p113 = pnand %p111, %p112
    %p114 = pneg %p113
    // Predicated region
    $region9: #{critic_forward.8} parent=5 // pred_check
      _
    $region10: #{critic_forward.8} parent=5 // pred_check_branch
      %116 = sbr.rel (%p113) target = $region12
    $region11: #{critic_forward.8} parent=5 // pred_region
      %s117 = ssub.s32 %s9, 1
      // Predicated region
      $region13: #{critic_forward.8} parent=11 // pred_check
        %p118 = pneg %p56
      $region14: #{critic_forward.8} parent=11 // pred_check_branch
        %120 = sbr.rel (%p118) target = $region16
      $region15: #{critic_forward.8} parent=11 // pred_region
        _
      $region16: #{critic_forward.8} parent=11 // pred_fallthru
        _
      // Predicated region
      $region17: #{critic_forward.8} parent=11 // pred_check
        %p121 = pneg %p77
      $region18: #{critic_forward.8} parent=11 // pred_check_branch
        %123 = sbr.rel (%p121) target = $region20
      $region19: #{critic_forward.8} parent=11 // pred_region
        _
      $region20: #{critic_forward.8} parent=11 // pred_fallthru
        _
    $region12: #{critic_forward.8} parent=5 // pred_fallthru
      _
    %p124 = scmp.lt.s32.totalorder %s9, 2
    // Predicated region
    $region21: #{critic_forward.8} parent=5 // pred_check
      %p125 = pneg %p124
    $region22: #{critic_forward.8} parent=5 // pred_check_branch
      %127 = sbr.rel (%p125) target = $region24
    $region23: #{critic_forward.8} parent=5 // pred_region
      // Predicated region
      $region25: #{critic_forward.8} parent=23 // pred_check
        %p128 = pneg %p29
      $region26: #{critic_forward.8} parent=23 // pred_check_branch
        %130 = sbr.rel (%p128) target = $region28
      $region27: #{critic_forward.8} parent=23 // pred_region
        %p131 = scmp.lt.s32.totalorder %s9, 1
        %s132 = scalar_select %p131, %s9, 1
        %s133 = smul.addr %s132, 64
        %s134 = smul.addr %s133, 4
        %s135 = scalar_lea.vmem %s0, %s134
      $region28: #{critic_forward.8} parent=23 // pred_fallthru
        _
    $region24: #{critic_forward.8} parent=5 // pred_fallthru
      _
    %p136 = scmp.le.s32.totalorder 1, %s9
    %p137 = scmp.lt.s32.totalorder %s9, 3
    %p138 = pnand %p136, %p137
    %p139 = pneg %p138
    // Predicated region
    $region29: #{critic_forward.8} parent=5 // pred_check
      _
    $region30: #{critic_forward.8} parent=5 // pred_check_branch
      %141 = sbr.rel (%p138) target = $region32
    $region31: #{critic_forward.8} parent=5 // pred_region
      %s142 = ssub.s32 %s9, 1
      %p143 = scmp.lt.s32.totalorder %s14, 1
      %s144 = scalar_select %p143, %s14, 1
      %s145 = smul.addr %s144, 64
      %s146 = smul.addr %s145, 4
      %s147 = scalar_lea.vmem %s0, %s146
      %p148 = pneg %p35
      %p149 = pneg %p32
      %p150 = pneg %p56
      %p151 = pneg %p53
      %p152 = pneg %p77
      %p153 = pneg %p74
      %p154 = pneg %p103
      %p155 = pneg %p100
      %p156 = scmp.lt.s32.totalorder %s14, 1
      %s157 = scalar_select %p156, %s14, 1
      %s158 = smul.addr %s157, 8
      %s159 = smul.addr %s158, 8
      %s160 = scalar_lea.vmem %s3, %s159
      %p161 = scmp.lt.s32.totalorder %s14, 1
      %s162 = scalar_select %p161, %s14, 1
      %s163 = smul.addr %s162, 64
      %s164 = smul.addr %s163, 4
      %s165 = scalar_lea.vmem %s0, %s164
      %p166 = scmp.lt.s32.totalorder %s14, 1
      %s167 = scalar_select %p166, %s14, 1
      %s168 = smul.addr %s167, 8
      %s169 = smul.addr %s168, 8
      %s170 = scalar_lea.vmem %s3, %s169
      %v172 = vld [vmem:[%s165] sm:$0xff]
      %v173 = vld [vmem:[%s165 + $0x8] sm:$0xff]
      %v174 = vld [vmem:[%s165 + $0x10] sm:$0xff]
      %v175 = vld [vmem:[%s165 + $0x18] sm:$0xff]
      %v176 = vld [vmem:[%s165 + $0x20] sm:$0xff]
      %v177 = vld [vmem:[%s165 + $0x28] sm:$0xff]
      %v178 = vld [vmem:[%s165 + $0x30] sm:$0xff]
      %v179 = vld [vmem:[%s165 + $0x38] sm:$0xff]
      %v180 = vld [vmem:[%s165 + $0x40] sm:$0xff]
      %v181 = vld [vmem:[%s165 + $0x48] sm:$0xff]
      %v182 = vld [vmem:[%s165 + $0x50] sm:$0xff]
      %v183 = vld [vmem:[%s165 + $0x58] sm:$0xff]
      %v184 = vld [vmem:[%s165 + $0x60] sm:$0xff]
      %v185 = vld [vmem:[%s165 + $0x68] sm:$0xff]
      %v186 = vld [vmem:[%s165 + $0x70] sm:$0xff]
      %v187 = vld [vmem:[%s165 + $0x78] sm:$0xff]
      %v188 = vld [vmem:[%s165 + $0x80] sm:$0xff]
      %v189 = vld [vmem:[%s165 + $0x88] sm:$0xff]
      %v190 = vld [vmem:[%s165 + $0x90] sm:$0xff]
      %v191 = vld [vmem:[%s165 + $0x98] sm:$0xff]
      %v192 = vld [vmem:[%s165 + $0xa0] sm:$0xff]
      %v193 = vld [vmem:[%s165 + $0xa8] sm:$0xff]
      %v194 = vld [vmem:[%s165 + $0xb0] sm:$0xff]
      %v195 = vld [vmem:[%s165 + $0xb8] sm:$0xff]
      %v196 = vld [vmem:[%s165 + $0xc0] sm:$0xff]
      %v197 = vld [vmem:[%s165 + $0xc8] sm:$0xff]
      %v198 = vld [vmem:[%s165 + $0xd0] sm:$0xff]
      %v199 = vld [vmem:[%s165 + $0xd8] sm:$0xff]
      %v200 = vld [vmem:[%s165 + $0xe0] sm:$0xff]
      %v201 = vld [vmem:[%s165 + $0xe8] sm:$0xff]
      %v202 = vld [vmem:[%s165 + $0xf0] sm:$0xff]
      %v203 = vld [vmem:[%s165 + $0xf8] sm:$0xff]
      %v204 = vld [vmem:[%s1] sm:$0xf]
      %v205 = vld [vmem:[%s1 + $0x4] sm:$0xf]
      %v206 = vld [vmem:[%s1 + $0x8] sm:$0xf]
      %v207 = vld [vmem:[%s1 + $0xc] sm:$0xf]
      %v208 = vld [vmem:[%s1 + $0x10] sm:$0xf]
      %v209 = vld [vmem:[%s1 + $0x14] sm:$0xf]
      %v210 = vld [vmem:[%s1 + $0x18] sm:$0xf]
      %v211 = vld [vmem:[%s1 + $0x1c] sm:$0xf]
      %v212 = vld [vmem:[%s1 + $0x20] sm:$0xf]
      %v213 = vld [vmem:[%s1 + $0x24] sm:$0xf]
      %v214 = vld [vmem:[%s1 + $0x28] sm:$0xf]
      %v215 = vld [vmem:[%s1 + $0x2c] sm:$0xf]
      %v216 = vld [vmem:[%s1 + $0x30] sm:$0xf]
      %v217 = vld [vmem:[%s1 + $0x34] sm:$0xf]
      %v218 = vld [vmem:[%s1 + $0x38] sm:$0xf]
      %v219 = vld [vmem:[%s1 + $0x3c] sm:$0xf]
      %v220 = vld [vmem:[%s1 + $0x40] sm:$0xf]
      %v221 = vld [vmem:[%s1 + $0x44] sm:$0xf]
      %v222 = vld [vmem:[%s1 + $0x48] sm:$0xf]
      %v223 = vld [vmem:[%s1 + $0x4c] sm:$0xf]
      %v224 = vld [vmem:[%s1 + $0x50] sm:$0xf]
      %v225 = vld [vmem:[%s1 + $0x54] sm:$0xf]
      %v226 = vld [vmem:[%s1 + $0x58] sm:$0xf]
      %v227 = vld [vmem:[%s1 + $0x5c] sm:$0xf]
      %v228 = vld [vmem:[%s1 + $0x60] sm:$0xf]
      %v229 = vld [vmem:[%s1 + $0x64] sm:$0xf]
      %v230 = vld [vmem:[%s1 + $0x68] sm:$0xf]
      %v231 = vld [vmem:[%s1 + $0x6c] sm:$0xf]
      %v232 = vld [vmem:[%s1 + $0x70] sm:$0xf]
      %v233 = vld [vmem:[%s1 + $0x74] sm:$0xf]
      %v234 = vld [vmem:[%s1 + $0x78] sm:$0xf]
      %v235 = vld [vmem:[%s1 + $0x7c] sm:$0xf]
      %v236 = vld [vmem:[%s1 + $0x80] sm:$0xf]
      %v237 = vld [vmem:[%s1 + $0x84] sm:$0xf]
      %v238 = vld [vmem:[%s1 + $0x88] sm:$0xf]
      %v239 = vld [vmem:[%s1 + $0x8c] sm:$0xf]
      %v240 = vld [vmem:[%s1 + $0x90] sm:$0xf]
      %v241 = vld [vmem:[%s1 + $0x94] sm:$0xf]
      %v242 = vld [vmem:[%s1 + $0x98] sm:$0xf]
      %v243 = vld [vmem:[%s1 + $0x9c] sm:$0xf]
      %v244 = vld [vmem:[%s1 + $0xa0] sm:$0xf]
      %v245 = vld [vmem:[%s1 + $0xa4] sm:$0xf]
      %v246 = vld [vmem:[%s1 + $0xa8] sm:$0xf]
      %v247 = vld [vmem:[%s1 + $0xac] sm:$0xf]
      %v248 = vld [vmem:[%s1 + $0xb0] sm:$0xf]
      %v249 = vld [vmem:[%s1 + $0xb4] sm:$0xf]
      %v250 = vld [vmem:[%s1 + $0xb8] sm:$0xf]
      %v251 = vld [vmem:[%s1 + $0xbc] sm:$0xf]
      %v252 = vld [vmem:[%s1 + $0xc0] sm:$0xf]
      %v253 = vld [vmem:[%s1 + $0xc4] sm:$0xf]
      %v254 = vld [vmem:[%s1 + $0xc8] sm:$0xf]
      %v255 = vld [vmem:[%s1 + $0xcc] sm:$0xf]
      %v256 = vld [vmem:[%s1 + $0xd0] sm:$0xf]
      %v257 = vld [vmem:[%s1 + $0xd4] sm:$0xf]
      %v258 = vld [vmem:[%s1 + $0xd8] sm:$0xf]
      %v259 = vld [vmem:[%s1 + $0xdc] sm:$0xf]
      %v260 = vld [vmem:[%s1 + $0xe0] sm:$0xf]
      %v261 = vld [vmem:[%s1 + $0xe4] sm:$0xf]
      %v262 = vld [vmem:[%s1 + $0xe8] sm:$0xf]
      %v263 = vld [vmem:[%s1 + $0xec] sm:$0xf]
      %v264 = vld [vmem:[%s1 + $0xf0] sm:$0xf]
      %v265 = vld [vmem:[%s1 + $0xf4] sm:$0xf]
      %v266 = vld [vmem:[%s1 + $0xf8] sm:$0xf]
      %v267 = vld [vmem:[%s1 + $0xfc] sm:$0xf]
      %v268 = vld [vmem:[%s1 + $0x100] sm:$0xf]
      %v269 = vld [vmem:[%s1 + $0x104] sm:$0xf]
      %v270 = vld [vmem:[%s1 + $0x108] sm:$0xf]
      %v271 = vld [vmem:[%s1 + $0x10c] sm:$0xf]
      %v272 = vld [vmem:[%s1 + $0x110] sm:$0xf]
      %v273 = vld [vmem:[%s1 + $0x114] sm:$0xf]
      %v274 = vld [vmem:[%s1 + $0x118] sm:$0xf]
      %v275 = vld [vmem:[%s1 + $0x11c] sm:$0xf]
      %v276 = vld [vmem:[%s1 + $0x120] sm:$0xf]
      %v277 = vld [vmem:[%s1 + $0x124] sm:$0xf]
      %v278 = vld [vmem:[%s1 + $0x128] sm:$0xf]
      %v279 = vld [vmem:[%s1 + $0x12c] sm:$0xf]
      %v280 = vld [vmem:[%s1 + $0x130] sm:$0xf]
      %v281 = vld [vmem:[%s1 + $0x134] sm:$0xf]
      %v282 = vld [vmem:[%s1 + $0x138] sm:$0xf]
      %v283 = vld [vmem:[%s1 + $0x13c] sm:$0xf]
      %v284 = vld [vmem:[%s1 + $0x140] sm:$0xf]
      %v285 = vld [vmem:[%s1 + $0x144] sm:$0xf]
      %v286 = vld [vmem:[%s1 + $0x148] sm:$0xf]
      %v287 = vld [vmem:[%s1 + $0x14c] sm:$0xf]
      %v288 = vld [vmem:[%s1 + $0x150] sm:$0xf]
      %v289 = vld [vmem:[%s1 + $0x154] sm:$0xf]
      %v290 = vld [vmem:[%s1 + $0x158] sm:$0xf]
      %v291 = vld [vmem:[%s1 + $0x15c] sm:$0xf]
      %v292 = vld [vmem:[%s1 + $0x160] sm:$0xf]
      %v293 = vld [vmem:[%s1 + $0x164] sm:$0xf]
      %v294 = vld [vmem:[%s1 + $0x168] sm:$0xf]
      %v295 = vld [vmem:[%s1 + $0x16c] sm:$0xf]
      %v296 = vld [vmem:[%s1 + $0x170] sm:$0xf]
      %v297 = vld [vmem:[%s1 + $0x174] sm:$0xf]
      %v298 = vld [vmem:[%s1 + $0x178] sm:$0xf]
      %v299 = vld [vmem:[%s1 + $0x17c] sm:$0xf]
      %v300 = vld [vmem:[%s1 + $0x180] sm:$0xf]
      %v301 = vld [vmem:[%s1 + $0x184] sm:$0xf]
      %v302 = vld [vmem:[%s1 + $0x188] sm:$0xf]
      %v303 = vld [vmem:[%s1 + $0x18c] sm:$0xf]
      %v304 = vld [vmem:[%s1 + $0x190] sm:$0xf]
      %v305 = vld [vmem:[%s1 + $0x194] sm:$0xf]
      %v306 = vld [vmem:[%s1 + $0x198] sm:$0xf]
      %v307 = vld [vmem:[%s1 + $0x19c] sm:$0xf]
      %v308 = vld [vmem:[%s1 + $0x1a0] sm:$0xf]
      %v309 = vld [vmem:[%s1 + $0x1a4] sm:$0xf]
      %v310 = vld [vmem:[%s1 + $0x1a8] sm:$0xf]
      %v311 = vld [vmem:[%s1 + $0x1ac] sm:$0xf]
      %v312 = vld [vmem:[%s1 + $0x1b0] sm:$0xf]
      %v313 = vld [vmem:[%s1 + $0x1b4] sm:$0xf]
      %v314 = vld [vmem:[%s1 + $0x1b8] sm:$0xf]
      %v315 = vld [vmem:[%s1 + $0x1bc] sm:$0xf]
      %v316 = vld [vmem:[%s1 + $0x1c0] sm:$0xf]
      %v317 = vld [vmem:[%s1 + $0x1c4] sm:$0xf]
      %v318 = vld [vmem:[%s1 + $0x1c8] sm:$0xf]
      %v319 = vld [vmem:[%s1 + $0x1cc] sm:$0xf]
      %v320 = vld [vmem:[%s1 + $0x1d0] sm:$0xf]
      %v321 = vld [vmem:[%s1 + $0x1d4] sm:$0xf]
      %v322 = vld [vmem:[%s1 + $0x1d8] sm:$0xf]
      %v323 = vld [vmem:[%s1 + $0x1dc] sm:$0xf]
      %v324 = vld [vmem:[%s1 + $0x1e0] sm:$0xf]
      %v325 = vld [vmem:[%s1 + $0x1e4] sm:$0xf]
      %v326 = vld [vmem:[%s1 + $0x1e8] sm:$0xf]
      %v327 = vld [vmem:[%s1 + $0x1ec] sm:$0xf]
      %v328 = vld [vmem:[%s1 + $0x1f0] sm:$0xf]
      %v329 = vld [vmem:[%s1 + $0x1f4] sm:$0xf]
      %v330 = vld [vmem:[%s1 + $0x1f8] sm:$0xf]
      %v331 = vld [vmem:[%s1 + $0x1fc] sm:$0xf]
      %v332 = vld [vmem:[%s2] sm:$0x1]
      %v334 = vlaneseq
      %v335 = vshrl.u32 %v334, 7
      %v336 = vsub.s32 0, %v335
      %v337 = vrot.slane %v332, %v336
      %v371 = vunpack.c.l.b16 %v172
      %v372 = vunpack.c.h.b16 %v172
      %v373 = vunpack.c.l.b16 %v173
      %v374 = vunpack.c.h.b16 %v173
      %v375 = vunpack.c.l.b16 %v174
      %v376 = vunpack.c.h.b16 %v174
      %v377 = vunpack.c.l.b16 %v175
      %v378 = vunpack.c.h.b16 %v175
      %v379 = vunpack.c.l.b16 %v176
      %v380 = vunpack.c.h.b16 %v176
      %v381 = vunpack.c.l.b16 %v177
      %v382 = vunpack.c.h.b16 %v177
      %v383 = vunpack.c.l.b16 %v178
      %v384 = vunpack.c.h.b16 %v178
      %v385 = vunpack.c.l.b16 %v179
      %v386 = vunpack.c.h.b16 %v179
      %v387 = vunpack.c.l.b16 %v180
      %v388 = vunpack.c.h.b16 %v180
      %v389 = vunpack.c.l.b16 %v181
      %v390 = vunpack.c.h.b16 %v181
      %v391 = vunpack.c.l.b16 %v182
      %v392 = vunpack.c.h.b16 %v182
      %v393 = vunpack.c.l.b16 %v183
      %v394 = vunpack.c.h.b16 %v183
      %v395 = vunpack.c.l.b16 %v184
      %v396 = vunpack.c.h.b16 %v184
      %v397 = vunpack.c.l.b16 %v185
      %v398 = vunpack.c.h.b16 %v185
      %v399 = vunpack.c.l.b16 %v186
      %v400 = vunpack.c.h.b16 %v186
      %v401 = vunpack.c.l.b16 %v187
      %v402 = vunpack.c.h.b16 %v187
      %v403 = vunpack.c.l.b16 %v188
      %v404 = vunpack.c.h.b16 %v188
      %v405 = vunpack.c.l.b16 %v189
      %v406 = vunpack.c.h.b16 %v189
      %v407 = vunpack.c.l.b16 %v190
      %v408 = vunpack.c.h.b16 %v190
      %v409 = vunpack.c.l.b16 %v191
      %v410 = vunpack.c.h.b16 %v191
      %v411 = vunpack.c.l.b16 %v192
      %v412 = vunpack.c.h.b16 %v192
      %v413 = vunpack.c.l.b16 %v193
      %v414 = vunpack.c.h.b16 %v193
      %v415 = vunpack.c.l.b16 %v194
      %v416 = vunpack.c.h.b16 %v194
      %v417 = vunpack.c.l.b16 %v195
      %v418 = vunpack.c.h.b16 %v195
      %v419 = vunpack.c.l.b16 %v196
      %v420 = vunpack.c.h.b16 %v196
      %v421 = vunpack.c.l.b16 %v197
      %v422 = vunpack.c.h.b16 %v197
      %v423 = vunpack.c.l.b16 %v198
      %v424 = vunpack.c.h.b16 %v198
      %v425 = vunpack.c.l.b16 %v199
      %v426 = vunpack.c.h.b16 %v199
      %v427 = vunpack.c.l.b16 %v200
      %v428 = vunpack.c.h.b16 %v200
      %v429 = vunpack.c.l.b16 %v201
      %v430 = vunpack.c.h.b16 %v201
      %v431 = vunpack.c.l.b16 %v202
      %v432 = vunpack.c.h.b16 %v202
      %v433 = vunpack.c.l.b16 %v203
      %v434 = vunpack.c.h.b16 %v203
      %v435 = vpack.c.b16 %v379, %v371
      %v436 = vpack.c.b16 %v380, %v372
      %v437 = vpack.c.b16 %v381, %v373
      %v438 = vpack.c.b16 %v382, %v374
      %v439 = vpack.c.b16 %v383, %v375
      %v440 = vpack.c.b16 %v384, %v376
      %v441 = vpack.c.b16 %v385, %v377
      %v442 = vpack.c.b16 %v386, %v378
      %v443 = vpack.c.b16 %v395, %v387
      %v444 = vpack.c.b16 %v396, %v388
      %v445 = vpack.c.b16 %v397, %v389
      %v446 = vpack.c.b16 %v398, %v390
      %v447 = vpack.c.b16 %v399, %v391
      %v448 = vpack.c.b16 %v400, %v392
      %v449 = vpack.c.b16 %v401, %v393
      %v450 = vpack.c.b16 %v402, %v394
      %v451 = vpack.c.b16 %v411, %v403
      %v452 = vpack.c.b16 %v412, %v404
      %v453 = vpack.c.b16 %v413, %v405
      %v454 = vpack.c.b16 %v414, %v406
      %v455 = vpack.c.b16 %v415, %v407
      %v456 = vpack.c.b16 %v416, %v408
      %v457 = vpack.c.b16 %v417, %v409
      %v458 = vpack.c.b16 %v418, %v410
      %v459 = vpack.c.b16 %v427, %v419
      %v460 = vpack.c.b16 %v428, %v420
      %v461 = vpack.c.b16 %v429, %v421
      %v462 = vpack.c.b16 %v430, %v422
      %v463 = vpack.c.b16 %v431, %v423
      %v464 = vpack.c.b16 %v432, %v424
      %v465 = vpack.c.b16 %v433, %v425
      %v466 = vpack.c.b16 %v434, %v426
      %v627 = vunpack.c.l.b16 %v204
      %v628 = vunpack.c.l.b16 %v205
      %v629 = vunpack.c.l.b16 %v206
      %v630 = vunpack.c.l.b16 %v207
      %v631 = vunpack.c.l.b16 %v208
      %v632 = vunpack.c.l.b16 %v209
      %v633 = vunpack.c.l.b16 %v210
      %v634 = vunpack.c.l.b16 %v211
      %v635 = vunpack.c.l.b16 %v212
      %v636 = vunpack.c.l.b16 %v213
      %v637 = vunpack.c.l.b16 %v214
      %v638 = vunpack.c.l.b16 %v215
      %v639 = vunpack.c.l.b16 %v216
      %v640 = vunpack.c.l.b16 %v217
      %v641 = vunpack.c.l.b16 %v218
      %v642 = vunpack.c.l.b16 %v219
      %v643 = vunpack.c.l.b16 %v220
      %v644 = vunpack.c.l.b16 %v221
      %v645 = vunpack.c.l.b16 %v222
      %v646 = vunpack.c.l.b16 %v223
      %v647 = vunpack.c.l.b16 %v224
      %v648 = vunpack.c.l.b16 %v225
      %v649 = vunpack.c.l.b16 %v226
      %v650 = vunpack.c.l.b16 %v227
      %v651 = vunpack.c.l.b16 %v228
      %v652 = vunpack.c.l.b16 %v229
      %v653 = vunpack.c.l.b16 %v230
      %v654 = vunpack.c.l.b16 %v231
      %v655 = vunpack.c.l.b16 %v232
      %v656 = vunpack.c.l.b16 %v233
      %v657 = vunpack.c.l.b16 %v234
      %v658 = vunpack.c.l.b16 %v235
      %v659 = vunpack.c.l.b16 %v236
      %v660 = vunpack.c.l.b16 %v237
      %v661 = vunpack.c.l.b16 %v238
      %v662 = vunpack.c.l.b16 %v239
      %v663 = vunpack.c.l.b16 %v240
      %v664 = vunpack.c.l.b16 %v241
      %v665 = vunpack.c.l.b16 %v242
      %v666 = vunpack.c.l.b16 %v243
      %v667 = vunpack.c.l.b16 %v244
      %v668 = vunpack.c.l.b16 %v245
      %v669 = vunpack.c.l.b16 %v246
      %v670 = vunpack.c.l.b16 %v247
      %v671 = vunpack.c.l.b16 %v248
      %v672 = vunpack.c.l.b16 %v249
      %v673 = vunpack.c.l.b16 %v250
      %v674 = vunpack.c.l.b16 %v251
      %v675 = vunpack.c.l.b16 %v252
      %v676 = vunpack.c.l.b16 %v253
      %v677 = vunpack.c.l.b16 %v254
      %v678 = vunpack.c.l.b16 %v255
      %v679 = vunpack.c.l.b16 %v256
      %v680 = vunpack.c.l.b16 %v257
      %v681 = vunpack.c.l.b16 %v258
      %v682 = vunpack.c.l.b16 %v259
      %v683 = vunpack.c.l.b16 %v260
      %v684 = vunpack.c.l.b16 %v261
      %v685 = vunpack.c.l.b16 %v262
      %v686 = vunpack.c.l.b16 %v263
      %v687 = vunpack.c.l.b16 %v264
      %v688 = vunpack.c.l.b16 %v265
      %v689 = vunpack.c.l.b16 %v266
      %v690 = vunpack.c.l.b16 %v267
      %v691 = vunpack.c.l.b16 %v268
      %v692 = vunpack.c.l.b16 %v269
      %v693 = vunpack.c.l.b16 %v270
      %v694 = vunpack.c.l.b16 %v271
      %v695 = vunpack.c.l.b16 %v272
      %v696 = vunpack.c.l.b16 %v273
      %v697 = vunpack.c.l.b16 %v274
      %v698 = vunpack.c.l.b16 %v275
      %v699 = vunpack.c.l.b16 %v276
      %v700 = vunpack.c.l.b16 %v277
      %v701 = vunpack.c.l.b16 %v278
      %v702 = vunpack.c.l.b16 %v279
      %v703 = vunpack.c.l.b16 %v280
      %v704 = vunpack.c.l.b16 %v281
      %v705 = vunpack.c.l.b16 %v282
      %v706 = vunpack.c.l.b16 %v283
      %v707 = vunpack.c.l.b16 %v284
      %v708 = vunpack.c.l.b16 %v285
      %v709 = vunpack.c.l.b16 %v286
      %v710 = vunpack.c.l.b16 %v287
      %v711 = vunpack.c.l.b16 %v288
      %v712 = vunpack.c.l.b16 %v289
      %v713 = vunpack.c.l.b16 %v290
      %v714 = vunpack.c.l.b16 %v291
      %v715 = vunpack.c.l.b16 %v292
      %v716 = vunpack.c.l.b16 %v293
      %v717 = vunpack.c.l.b16 %v294
      %v718 = vunpack.c.l.b16 %v295
      %v719 = vunpack.c.l.b16 %v296
      %v720 = vunpack.c.l.b16 %v297
      %v721 = vunpack.c.l.b16 %v298
      %v722 = vunpack.c.l.b16 %v299
      %v723 = vunpack.c.l.b16 %v300
      %v724 = vunpack.c.l.b16 %v301
      %v725 = vunpack.c.l.b16 %v302
      %v726 = vunpack.c.l.b16 %v303
      %v727 = vunpack.c.l.b16 %v304
      %v728 = vunpack.c.l.b16 %v305
      %v729 = vunpack.c.l.b16 %v306
      %v730 = vunpack.c.l.b16 %v307
      %v731 = vunpack.c.l.b16 %v308
      %v732 = vunpack.c.l.b16 %v309
      %v733 = vunpack.c.l.b16 %v310
      %v734 = vunpack.c.l.b16 %v311
      %v735 = vunpack.c.l.b16 %v312
      %v736 = vunpack.c.l.b16 %v313
      %v737 = vunpack.c.l.b16 %v314
      %v738 = vunpack.c.l.b16 %v315
      %v739 = vunpack.c.l.b16 %v316
      %v740 = vunpack.c.l.b16 %v317
      %v741 = vunpack.c.l.b16 %v318
      %v742 = vunpack.c.l.b16 %v319
      %v743 = vunpack.c.l.b16 %v320
      %v744 = vunpack.c.l.b16 %v321
      %v745 = vunpack.c.l.b16 %v322
      %v746 = vunpack.c.l.b16 %v323
      %v747 = vunpack.c.l.b16 %v324
      %v748 = vunpack.c.l.b16 %v325
      %v749 = vunpack.c.l.b16 %v326
      %v750 = vunpack.c.l.b16 %v327
      %v751 = vunpack.c.l.b16 %v328
      %v752 = vunpack.c.l.b16 %v329
      %v753 = vunpack.c.l.b16 %v330
      %v754 = vunpack.c.l.b16 %v331
      %v755 = vpack.c.b16 %v628, %v627
      %v756 = vpack.c.b16 %v630, %v629
      %v757 = vpack.c.b16 %v632, %v631
      %v758 = vpack.c.b16 %v634, %v633
      %v759 = vpack.c.b16 %v636, %v635
      %v760 = vpack.c.b16 %v638, %v637
      %v761 = vpack.c.b16 %v640, %v639
      %v762 = vpack.c.b16 %v642, %v641
      %v763 = vpack.c.b16 %v644, %v643
      %v764 = vpack.c.b16 %v646, %v645
      %v765 = vpack.c.b16 %v648, %v647
      %v766 = vpack.c.b16 %v650, %v649
      %v767 = vpack.c.b16 %v652, %v651
      %v768 = vpack.c.b16 %v654, %v653
      %v769 = vpack.c.b16 %v656, %v655
      %v770 = vpack.c.b16 %v658, %v657
      %v771 = vpack.c.b16 %v660, %v659
      %v772 = vpack.c.b16 %v662, %v661
      %v773 = vpack.c.b16 %v664, %v663
      %v774 = vpack.c.b16 %v666, %v665
      %v775 = vpack.c.b16 %v668, %v667
      %v776 = vpack.c.b16 %v670, %v669
      %v777 = vpack.c.b16 %v672, %v671
      %v778 = vpack.c.b16 %v674, %v673
      %v779 = vpack.c.b16 %v676, %v675
      %v780 = vpack.c.b16 %v678, %v677
      %v781 = vpack.c.b16 %v680, %v679
      %v782 = vpack.c.b16 %v682, %v681
      %v783 = vpack.c.b16 %v684, %v683
      %v784 = vpack.c.b16 %v686, %v685
      %v785 = vpack.c.b16 %v688, %v687
      %v786 = vpack.c.b16 %v690, %v689
      %v787 = vpack.c.b16 %v692, %v691
      %v788 = vpack.c.b16 %v694, %v693
      %v789 = vpack.c.b16 %v696, %v695
      %v790 = vpack.c.b16 %v698, %v697
      %v791 = vpack.c.b16 %v700, %v699
      %v792 = vpack.c.b16 %v702, %v701
      %v793 = vpack.c.b16 %v704, %v703
      %v794 = vpack.c.b16 %v706, %v705
      %v795 = vpack.c.b16 %v708, %v707
      %v796 = vpack.c.b16 %v710, %v709
      %v797 = vpack.c.b16 %v712, %v711
      %v798 = vpack.c.b16 %v714, %v713
      %v799 = vpack.c.b16 %v716, %v715
      %v800 = vpack.c.b16 %v718, %v717
      %v801 = vpack.c.b16 %v720, %v719
      %v802 = vpack.c.b16 %v722, %v721
      %v803 = vpack.c.b16 %v724, %v723
      %v804 = vpack.c.b16 %v726, %v725
      %v805 = vpack.c.b16 %v728, %v727
      %v806 = vpack.c.b16 %v730, %v729
      %v807 = vpack.c.b16 %v732, %v731
      %v808 = vpack.c.b16 %v734, %v733
      %v809 = vpack.c.b16 %v736, %v735
      %v810 = vpack.c.b16 %v738, %v737
      %v811 = vpack.c.b16 %v740, %v739
      %v812 = vpack.c.b16 %v742, %v741
      %v813 = vpack.c.b16 %v744, %v743
      %v814 = vpack.c.b16 %v746, %v745
      %v815 = vpack.c.b16 %v748, %v747
      %v816 = vpack.c.b16 %v750, %v749
      %v817 = vpack.c.b16 %v752, %v751
      %v818 = vpack.c.b16 %v754, %v753
      %883 = vmatprep.subr.bf16.mxu0 0
      %884 = vmatpush1.bf16.msra.mxu0 %v755
      %885 = vmatprep.subr.bf16.mxu0 0
      %886 = vmatpush1.bf16.msra.mxu0 %v756
      %887 = vmatprep.subr.bf16.mxu0 0
      %888 = vmatpush1.bf16.msra.mxu0 %v757
      %889 = vmatprep.subr.bf16.mxu0 0
      %890 = vmatpush1.bf16.msra.mxu0 %v758
      %891 = vmatprep.subr.bf16.mxu0 0
      %892 = vmatpush1.bf16.msra.mxu0 %v759
      %893 = vmatprep.subr.bf16.mxu0 0
      %894 = vmatpush1.bf16.msra.mxu0 %v760
      %895 = vmatprep.subr.bf16.mxu0 0
      %896 = vmatpush1.bf16.msra.mxu0 %v761
      %897 = vmatprep.subr.bf16.mxu0 0
      %898 = vmatpush1.bf16.msra.mxu0 %v762
      %899 = vmatprep.subr.bf16.mxu0 0
      %900 = vmatpush1.bf16.msra.mxu0 %v763
      %901 = vmatprep.subr.bf16.mxu0 0
      %902 = vmatpush1.bf16.msra.mxu0 %v764
      %903 = vmatprep.subr.bf16.mxu0 0
      %904 = vmatpush1.bf16.msra.mxu0 %v765
      %905 = vmatprep.subr.bf16.mxu0 0
      %906 = vmatpush1.bf16.msra.mxu0 %v766
      %907 = vmatprep.subr.bf16.mxu0 0
      %908 = vmatpush1.bf16.msra.mxu0 %v767
      %909 = vmatprep.subr.bf16.mxu0 0
      %910 = vmatpush1.bf16.msra.mxu0 %v768
      %911 = vmatprep.subr.bf16.mxu0 0
      %912 = vmatpush1.bf16.msra.mxu0 %v769
      %913 = vmatprep.subr.bf16.mxu0 0
      %914 = vmatpush1.bf16.msra.mxu0 %v770
      %915 = vmatprep.mubr.bf16.mxu0 %v436
      %916 = vmatmul.mubr.bf16.gmra.mrb[0].mxu0 %v435
      %v917 = vpop.f32.mrb[0].mxu0
      %v918 = vadd.f32 %v337, %v917
      %v919 = vpop.f32.mrb[0].mxu0
      %v920 = vpop.f32.mrb[0].mxu0
      %v921 = vadd.f32 %v337, %v920
      %v922 = vpop.f32.mrb[0].mxu0
      %923 = vmatprep.mubr.bf16.mxu0 %v444
      %924 = vmatmul.mubr.bf16.gmra.mrb[0].mxu0 %v443
      %v925 = vpop.f32.mrb[0].mxu0
      %v926 = vadd.f32 %v337, %v925
      %v927 = vpop.f32.mrb[0].mxu0
      %v928 = vpop.f32.mrb[0].mxu0
      %v929 = vadd.f32 %v337, %v928
      %v930 = vpop.f32.mrb[0].mxu0
      %931 = vmatprep.mubr.bf16.mxu0 %v452
      %932 = vmatmul.mubr.bf16.gmra.mrb[0].mxu0 %v451
      %v933 = vpop.f32.mrb[0].mxu0
      %v934 = vadd.f32 %v337, %v933
      %v935 = vpop.f32.mrb[0].mxu0
      %v936 = vpop.f32.mrb[0].mxu0
      %v937 = vadd.f32 %v337, %v936
      %v938 = vpop.f32.mrb[0].mxu0
      %939 = vmatprep.mubr.bf16.mxu0 %v460
      %940 = vmatmul.mubr.bf16.gmra.mrb[0].mxu0 %v459
      %v941 = vpop.f32.mrb[0].mxu0
      %v942 = vadd.f32 %v337, %v941
      %v943 = vpop.f32.mrb[0].mxu0
      %v944 = vpop.f32.mrb[0].mxu0
      %v945 = vadd.f32 %v337, %v944
      %v946 = vpop.f32.mrb[0].mxu0
      %947 = vdwg.mxu0
      %948 = vmatprep.subr.bf16.mxu0 0
      %949 = vmatpush1.bf16.msra.mxu0 %v771
      %950 = vmatprep.subr.bf16.mxu0 0
      %951 = vmatpush1.bf16.msra.mxu0 %v772
      %952 = vmatprep.subr.bf16.mxu0 0
      %953 = vmatpush1.bf16.msra.mxu0 %v773
      %954 = vmatprep.subr.bf16.mxu0 0
      %955 = vmatpush1.bf16.msra.mxu0 %v774
      %956 = vmatprep.subr.bf16.mxu0 0
      %957 = vmatpush1.bf16.msra.mxu0 %v775
      %958 = vmatprep.subr.bf16.mxu0 0
      %959 = vmatpush1.bf16.msra.mxu0 %v776
      %960 = vmatprep.subr.bf16.mxu0 0
      %961 = vmatpush1.bf16.msra.mxu0 %v777
      %962 = vmatprep.subr.bf16.mxu0 0
      %963 = vmatpush1.bf16.msra.mxu0 %v778
      %964 = vmatprep.subr.bf16.mxu0 0
      %965 = vmatpush1.bf16.msra.mxu0 %v779
      %966 = vmatprep.subr.bf16.mxu0 0
      %967 = vmatpush1.bf16.msra.mxu0 %v780
      %968 = vmatprep.subr.bf16.mxu0 0
      %969 = vmatpush1.bf16.msra.mxu0 %v781
      %970 = vmatprep.subr.bf16.mxu0 0
      %971 = vmatpush1.bf16.msra.mxu0 %v782
      %972 = vmatprep.subr.bf16.mxu0 0
      %973 = vmatpush1.bf16.msra.mxu0 %v783
      %974 = vmatprep.subr.bf16.mxu0 0
      %975 = vmatpush1.bf16.msra.mxu0 %v784
      %976 = vmatprep.subr.bf16.mxu0 0
      %977 = vmatpush1.bf16.msra.mxu0 %v785
      %978 = vmatprep.subr.bf16.mxu0 0
      %979 = vmatpush1.bf16.msra.mxu0 %v786
      %980 = vmatprep.mubr.bf16.mxu0 %v438
      %981 = vmatmul.mubr.bf16.gmra.mrb[0].mxu0 %v437
      %v982 = vpop.f32.mrb[0].mxu0
      %v983 = vadd.f32 %v918, %v982
      %v984 = vpop.f32.mrb[0].mxu0
      %v985 = vpop.f32.mrb[0].mxu0
      %v986 = vadd.f32 %v921, %v985
      %v987 = vpop.f32.mrb[0].mxu0
      %988 = vmatprep.mubr.bf16.mxu0 %v446
      %989 = vmatmul.mubr.bf16.gmra.mrb[0].mxu0 %v445
      %v990 = vpop.f32.mrb[0].mxu0
      %v991 = vadd.f32 %v926, %v990
      %v992 = vpop.f32.mrb[0].mxu0
      %v993 = vpop.f32.mrb[0].mxu0
      %v994 = vadd.f32 %v929, %v993
      %v995 = vpop.f32.mrb[0].mxu0
      %996 = vmatprep.mubr.bf16.mxu0 %v454
      %997 = vmatmul.mubr.bf16.gmra.mrb[0].mxu0 %v453
      %v998 = vpop.f32.mrb[0].mxu0
      %v999 = vadd.f32 %v934, %v998
      %v1000 = vpop.f32.mrb[0].mxu0
      %v1001 = vpop.f32.mrb[0].mxu0
      %v1002 = vadd.f32 %v937, %v1001
      %v1003 = vpop.f32.mrb[0].mxu0
      %1004 = vmatprep.mubr.bf16.mxu0 %v462
      %1005 = vmatmul.mubr.bf16.gmra.mrb[0].mxu0 %v461
      %v1006 = vpop.f32.mrb[0].mxu0
      %v1007 = vadd.f32 %v942, %v1006
      %v1008 = vpop.f32.mrb[0].mxu0
      %v1009 = vpop.f32.mrb[0].mxu0
      %v1010 = vadd.f32 %v945, %v1009
      %v1011 = vpop.f32.mrb[0].mxu0
      %1012 = vdwg.mxu0
      %1013 = vmatprep.subr.bf16.mxu0 0
      %1014 = vmatpush1.bf16.msra.mxu0 %v787
      %1015 = vmatprep.subr.bf16.mxu0 0
      %1016 = vmatpush1.bf16.msra.mxu0 %v788
      %1017 = vmatprep.subr.bf16.mxu0 0
      %1018 = vmatpush1.bf16.msra.mxu0 %v789
      %1019 = vmatprep.subr.bf16.mxu0 0
      %1020 = vmatpush1.bf16.msra.mxu0 %v790
      %1021 = vmatprep.subr.bf16.mxu0 0
      %1022 = vmatpush1.bf16.msra.mxu0 %v791
      %1023 = vmatprep.subr.bf16.mxu0 0
      %1024 = vmatpush1.bf16.msra.mxu0 %v792
      %1025 = vmatprep.subr.bf16.mxu0 0
      %1026 = vmatpush1.bf16.msra.mxu0 %v793
      %1027 = vmatprep.subr.bf16.mxu0 0
      %1028 = vmatpush1.bf16.msra.mxu0 %v794
      %1029 = vmatprep.subr.bf16.mxu0 0
      %1030 = vmatpush1.bf16.msra.mxu0 %v795
      %1031 = vmatprep.subr.bf16.mxu0 0
      %1032 = vmatpush1.bf16.msra.mxu0 %v796
      %1033 = vmatprep.subr.bf16.mxu0 0
      %1034 = vmatpush1.bf16.msra.mxu0 %v797
      %1035 = vmatprep.subr.bf16.mxu0 0
      %1036 = vmatpush1.bf16.msra.mxu0 %v798
      %1037 = vmatprep.subr.bf16.mxu0 0
      %1038 = vmatpush1.bf16.msra.mxu0 %v799
      %1039 = vmatprep.subr.bf16.mxu0 0
      %1040 = vmatpush1.bf16.msra.mxu0 %v800
      %1041 = vmatprep.subr.bf16.mxu0 0
      %1042 = vmatpush1.bf16.msra.mxu0 %v801
      %1043 = vmatprep.subr.bf16.mxu0 0
      %1044 = vmatpush1.bf16.msra.mxu0 %v802
      %1045 = vmatprep.mubr.bf16.mxu0 %v440
      %1046 = vmatmul.mubr.bf16.gmra.mrb[0].mxu0 %v439
      %v1047 = vpop.f32.mrb[0].mxu0
      %v1048 = vadd.f32 %v983, %v1047
      %v1049 = vpop.f32.mrb[0].mxu0
      %v1050 = vpop.f32.mrb[0].mxu0
      %v1051 = vadd.f32 %v986, %v1050
      %v1052 = vpop.f32.mrb[0].mxu0
      %1053 = vmatprep.mubr.bf16.mxu0 %v448
      %1054 = vmatmul.mubr.bf16.gmra.mrb[0].mxu0 %v447
      %v1055 = vpop.f32.mrb[0].mxu0
      %v1056 = vadd.f32 %v991, %v1055
      %v1057 = vpop.f32.mrb[0].mxu0
      %v1058 = vpop.f32.mrb[0].mxu0
      %v1059 = vadd.f32 %v994, %v1058
      %v1060 = vpop.f32.mrb[0].mxu0
      %1061 = vmatprep.mubr.bf16.mxu0 %v456
      %1062 = vmatmul.mubr.bf16.gmra.mrb[0].mxu0 %v455
      %v1063 = vpop.f32.mrb[0].mxu0
      %v1064 = vadd.f32 %v999, %v1063
      %v1065 = vpop.f32.mrb[0].mxu0
      %v1066 = vpop.f32.mrb[0].mxu0
      %v1067 = vadd.f32 %v1002, %v1066
      %v1068 = vpop.f32.mrb[0].mxu0
      %1069 = vmatprep.mubr.bf16.mxu0 %v464
      %1070 = vmatmul.mubr.bf16.gmra.mrb[0].mxu0 %v463
      %v1071 = vpop.f32.mrb[0].mxu0
      %v1072 = vadd.f32 %v1007, %v1071
      %v1073 = vpop.f32.mrb[0].mxu0
      %v1074 = vpop.f32.mrb[0].mxu0
      %v1075 = vadd.f32 %v1010, %v1074
      %v1076 = vpop.f32.mrb[0].mxu0
      %1077 = vdwg.mxu0
      %1078 = vmatprep.subr.bf16.mxu0 0
      %1079 = vmatpush1.bf16.msra.mxu0 %v803
      %1080 = vmatprep.subr.bf16.mxu0 0
      %1081 = vmatpush1.bf16.msra.mxu0 %v804
      %1082 = vmatprep.subr.bf16.mxu0 0
      %1083 = vmatpush1.bf16.msra.mxu0 %v805
      %1084 = vmatprep.subr.bf16.mxu0 0
      %1085 = vmatpush1.bf16.msra.mxu0 %v806
      %1086 = vmatprep.subr.bf16.mxu0 0
      %1087 = vmatpush1.bf16.msra.mxu0 %v807
      %1088 = vmatprep.subr.bf16.mxu0 0
      %1089 = vmatpush1.bf16.msra.mxu0 %v808
      %1090 = vmatprep.subr.bf16.mxu0 0
      %1091 = vmatpush1.bf16.msra.mxu0 %v809
      %1092 = vmatprep.subr.bf16.mxu0 0
      %1093 = vmatpush1.bf16.msra.mxu0 %v810
      %1094 = vmatprep.subr.bf16.mxu0 0
      %1095 = vmatpush1.bf16.msra.mxu0 %v811
      %1096 = vmatprep.subr.bf16.mxu0 0
      %1097 = vmatpush1.bf16.msra.mxu0 %v812
      %1098 = vmatprep.subr.bf16.mxu0 0
      %1099 = vmatpush1.bf16.msra.mxu0 %v813
      %1100 = vmatprep.subr.bf16.mxu0 0
      %1101 = vmatpush1.bf16.msra.mxu0 %v814
      %1102 = vmatprep.subr.bf16.mxu0 0
      %1103 = vmatpush1.bf16.msra.mxu0 %v815
      %1104 = vmatprep.subr.bf16.mxu0 0
      %1105 = vmatpush1.bf16.msra.mxu0 %v816
      %1106 = vmatprep.subr.bf16.mxu0 0
      %1107 = vmatpush1.bf16.msra.mxu0 %v817
      %1108 = vmatprep.subr.bf16.mxu0 0
      %1109 = vmatpush1.bf16.msra.mxu0 %v818
      %1110 = vmatprep.mubr.bf16.mxu0 %v442
      %1111 = vmatmul.mubr.bf16.gmra.mrb[0].mxu0 %v441
      %v1112 = vpop.f32.mrb[0].mxu0
      %v1113 = vadd.f32 %v1048, %v1112
      %v1114 = vpop.f32.mrb[0].mxu0
      %v1115 = vpop.f32.mrb[0].mxu0
      %v1116 = vadd.f32 %v1051, %v1115
      %v1117 = vpop.f32.mrb[0].mxu0
      %1118 = vmatprep.mubr.bf16.mxu0 %v450
      %1119 = vmatmul.mubr.bf16.gmra.mrb[0].mxu0 %v449
      %v1120 = vpop.f32.mrb[0].mxu0
      %v1121 = vadd.f32 %v1056, %v1120
      %v1122 = vpop.f32.mrb[0].mxu0
      %v1123 = vpop.f32.mrb[0].mxu0
      %v1124 = vadd.f32 %v1059, %v1123
      %v1125 = vpop.f32.mrb[0].mxu0
      %1126 = vmatprep.mubr.bf16.mxu0 %v458
      %1127 = vmatmul.mubr.bf16.gmra.mrb[0].mxu0 %v457
      %v1128 = vpop.f32.mrb[0].mxu0
      %v1129 = vadd.f32 %v1064, %v1128
      %v1130 = vpop.f32.mrb[0].mxu0
      %v1131 = vpop.f32.mrb[0].mxu0
      %v1132 = vadd.f32 %v1067, %v1131
      %v1133 = vpop.f32.mrb[0].mxu0
      %1134 = vmatprep.mubr.bf16.mxu0 %v466
      %1135 = vmatmul.mubr.bf16.gmra.mrb[0].mxu0 %v465
      %v1136 = vpop.f32.mrb[0].mxu0
      %v1137 = vadd.f32 %v1072, %v1136
      %v1138 = vpop.f32.mrb[0].mxu0
      %v1139 = vpop.f32.mrb[0].mxu0
      %v1140 = vadd.f32 %v1075, %v1139
      %v1141 = vpop.f32.mrb[0].mxu0
      %1142 = vdwg.mxu0
      %v1143 = vadd.f32 %v1113, %v1116
      %v1144 = vadd.f32 %v1143, %v1121
      %v1145 = vadd.f32 %v1144, %v1124
      %v1146 = vadd.f32 %v1145, %v1129
      %v1147 = vadd.f32 %v1146, %v1132
      %v1148 = vadd.f32 %v1147, %v1137
      %v1149 = vadd.f32 %v1148, %v1140
      %v1150 = vrot.slane %v1149, 4
      %v1151 = vadd.f32 %v1149, %v1150
      %v1152 = vrot.slane %v1151, 2
      %v1153 = vadd.f32 %v1151, %v1152
      %v1154 = vrot.slane %v1153, 1
      %v1155 = vadd.f32 %v1153, %v1154
      %v1156 = vmul.f32 %v1113, %v1113
      %v1157 = vmul.f32 %v1116, %v1116
      %v1158 = vmul.f32 %v1121, %v1121
      %v1159 = vmul.f32 %v1124, %v1124
      %v1160 = vmul.f32 %v1129, %v1129
      %v1161 = vmul.f32 %v1132, %v1132
      %v1162 = vmul.f32 %v1137, %v1137
      %v1163 = vmul.f32 %v1140, %v1140
      %v1164 = vadd.f32 %v1156, %v1157
      %v1165 = vadd.f32 %v1164, %v1158
      %v1166 = vadd.f32 %v1165, %v1159
      %v1167 = vadd.f32 %v1166, %v1160
      %v1168 = vadd.f32 %v1167, %v1161
      %v1169 = vadd.f32 %v1168, %v1162
      %v1170 = vadd.f32 %v1169, %v1163
      %v1171 = vrot.slane %v1170, 4
      %v1172 = vadd.f32 %v1170, %v1171
      %v1173 = vrot.slane %v1172, 2
      %v1174 = vadd.f32 %v1172, %v1173
      %v1175 = vrot.slane %v1174, 1
      %v1176 = vadd.f32 %v1174, %v1175
      %v1177 = vmul.f32 %v1155, 0.015625
      %v1178 = vmul.f32 %v1176, 0.015625
      %v1179 = vmul.f32 %v1177, %v1177
      %v1180 = vsub.f32 %v1178, %v1179
      %v1181 = vmax.f32 %v1180, 0.0
      %v1182 = vsub.f32 %v1113, %v1177
      %v1183 = vsub.f32 %v1116, %v1177
      %v1184 = vsub.f32 %v1121, %v1177
      %v1185 = vsub.f32 %v1124, %v1177
      %v1186 = vsub.f32 %v1129, %v1177
      %v1187 = vsub.f32 %v1132, %v1177
      %v1188 = vsub.f32 %v1137, %v1177
      %v1189 = vsub.f32 %v1140, %v1177
      %v1190 = vadd.f32 %v1181, 1e-05
      %v1191 = vrsqrt.pop %v1190
      %v1192 = vmul.f32 %v1182, %v1191
      %v1193 = vmul.f32 %v1183, %v1191
      %v1194 = vmul.f32 %v1184, %v1191
      %v1195 = vmul.f32 %v1185, %v1191
      %v1196 = vmul.f32 %v1186, %v1191
      %v1197 = vmul.f32 %v1187, %v1191
      %v1198 = vmul.f32 %v1188, %v1191
      %v1199 = vmul.f32 %v1189, %v1191
      %vm1200 = vcmp.gt.f32.partialorder %v1192, 0.0
      %vm1201 = vcmp.gt.f32.partialorder %v1193, 0.0
      %vm1202 = vcmp.gt.f32.partialorder %v1194, 0.0
      %vm1203 = vcmp.gt.f32.partialorder %v1195, 0.0
      %vm1204 = vcmp.gt.f32.partialorder %v1196, 0.0
      %vm1205 = vcmp.gt.f32.partialorder %v1197, 0.0
      %vm1206 = vcmp.gt.f32.partialorder %v1198, 0.0
      %vm1207 = vcmp.gt.f32.partialorder %v1199, 0.0
      %v1208 = vmul.f32 %v1192, 0.2
      %v1209 = vmul.f32 %v1193, 0.2
      %v1210 = vmul.f32 %v1194, 0.2
      %v1211 = vmul.f32 %v1195, 0.2
      %v1212 = vmul.f32 %v1196, 0.2
      %v1213 = vmul.f32 %v1197, 0.2
      %v1214 = vmul.f32 %v1198, 0.2
      %v1215 = vmul.f32 %v1199, 0.2
      %v1216 = vsel %vm1200, %v1192, %v1208
      %v1217 = vsel %vm1201, %v1193, %v1209
      %v1218 = vsel %vm1202, %v1194, %v1210
      %v1219 = vsel %vm1203, %v1195, %v1211
      %v1220 = vsel %vm1204, %v1196, %v1212
      %v1221 = vsel %vm1205, %v1197, %v1213
      %v1222 = vsel %vm1206, %v1198, %v1214
      %v1223 = vsel %vm1207, %v1199, %v1215
      %1224 = vst [vmem:[%s170] sm:$0xff] %v1216
      %1225 = vst [vmem:[%s170 + $0x8] sm:$0xff] %v1217
      %1226 = vst [vmem:[%s170 + $0x10] sm:$0xff] %v1218
      %1227 = vst [vmem:[%s170 + $0x18] sm:$0xff] %v1219
      %1228 = vst [vmem:[%s170 + $0x20] sm:$0xff] %v1220
      %1229 = vst [vmem:[%s170 + $0x28] sm:$0xff] %v1221
      %1230 = vst [vmem:[%s170 + $0x30] sm:$0xff] %v1222
      %1231 = vst [vmem:[%s170 + $0x38] sm:$0xff] %v1223
      %p1232 = scmp.lt.s32.totalorder %s14, 1
      %s1233 = scalar_select %p1232, %s14, 1
      %s1234 = smul.addr %s1233, 8
      %s1235 = smul.addr %s1234, 8
      %s1236 = scalar_lea.vmem %s3, %s1235
      // Predicated region
      $region33: #{critic_forward.8} parent=31 // pred_check
        %p1237 = pneg %p100
      $region34: #{critic_forward.8} parent=31 // pred_check_branch
        %1239 = sbr.rel (%p1237) target = $region36
      $region35: #{critic_forward.8} parent=31 // pred_region
        _
      $region36: #{critic_forward.8} parent=31 // pred_fallthru
        _
    $region32: #{critic_forward.8} parent=5 // pred_fallthru
      _
    %p1240 = scmp.le.s32.totalorder 2, %s9
    // Predicated region
    $region37: #{critic_forward.8} parent=5 // pred_check
      %p1241 = pneg %p1240
    $region38: #{critic_forward.8} parent=5 // pred_check_branch
      %1243 = sbr.rel (%p1241) target = $region40
    $region39: #{critic_forward.8} parent=5 // pred_region
      %s1244 = ssub.s32 %s9, 2
      // Predicated region
      $region41: #{critic_forward.8} parent=39 // pred_check
        %p1245 = pneg %p106
      $region42: #{critic_forward.8} parent=39 // pred_check_branch
        %1247 = sbr.rel (%p1245) target = $region44
      $region43: #{critic_forward.8} parent=39 // pred_region
        %p1248 = scmp.lt.s32.totalorder %s15, 1
        %s1249 = scalar_select %p1248, %s15, 1
        %s1250 = smul.addr %s1249, 8
        %s1251 = smul.addr %s1250, 8
        %s1252 = scalar_lea.vmem %s3, %s1251
      $region44: #{critic_forward.8} parent=39 // pred_fallthru
        _
    $region40: #{critic_forward.8} parent=5 // pred_fallthru
      _
  $region6: #{critic_forward.8} parent=0 // loop_footer
    %s13 = sadd.s32 1, %s9
  $region7: #{critic_forward.8} parent=0 // loop_footer_branch
    %8 = sbr.rel target = $region3
  $region8: #{critic_forward.8} parent=0 // loop_exit
    _

// kernel: critic_forward.9
$region0: #{critic_forward.9}
  #allocation0 [shape = 'u32[]', space=smem, size = 0x4, offset = 0x4, fixed_abs, tag = 'smem constant byte address 0x4 - core index']
  #allocation1 [shape = 'u32[144,128]{1,0:T(1,128)}', space=vmem, size = 0x12000, scoped, tag = 'internal scratch']
  #allocation2 [shape = 'f32[1,1]{1,0:T(1,128)S(1)}', space=vmem, size = 0x200, scoped, tag = 'scoped memory for critic_forward.9']
  %s0 = inlined_call_operand.vmem [shape: bf16[2,16,2048], index: 0, kind: input, shape index: {}]
  %s1 = inlined_call_operand.vmem [shape: bf16[2048,256], index: 1, kind: input, shape index: {}]
  %s2 = inlined_call_operand.vmem [shape: f32[1,256], index: 2, kind: input, shape index: {}]
  %s3 = inlined_call_operand.vmem [shape: f32[16,256], index: 3, kind: input, shape index: {}]
  %s4 = inlined_call_operand.<no memory space> [shape: f32[1,1], index: 4, kind: input, shape index: {}]
  %s5 = inlined_call_operand.vmem [shape: f32[2,1,1], index: 5, kind: output, shape index: {}]
  %s6 = sld [smem:[#allocation0]]
  $region53: #{critic_forward.9} parent=0
    _
  %s8 = ssub.s32 1, %s6
  %s9 = scalar_select 0, %s8, %s6
  %v10 = vstv %s4
  %11 = vst [vmem:[#allocation2] sm:$0x1] %v10
  loop: start=0, step=1, limit=4
  $region2: #{critic_forward.9} parent=0 // loop_pre_header
    _
  $region3: #{critic_forward.9} parent=0 // loop_header
    %s13 = sphi 0, %s17
    %p14 = scmp.ge.s32.totalorder %s13, 4
    %s23 = sphi 0, %s25
    %s26 = sphi 0, %s23
    %s27 = sphi 0, %s26
    %s43 = sphi 0, %s27
    %s47 = sphi 0, %s47
    %s49 = sphi 0, %s47
    %s50 = sphi 0, %s49
    %s64 = sphi 0, %s50
    %s68 = sphi 0, %s68
    %s70 = sphi 0, %s68
    %s71 = sphi 0, %s70
    %s85 = sphi 0, %s71
    %s89 = sphi 0, %s89
    %s91 = sphi 0, %s89
    %s92 = sphi 0, %s91
    %s106 = sphi 0, %s92
    %s110 = sphi 0, %s110
    %s112 = sphi 0, %s110
    %s113 = sphi 0, %s112
    %s127 = sphi 0, %s113
    %s133 = sphi 0, %s135
    %s136 = sphi 0, %s133
    %s137 = sphi 0, %s136
    %s153 = sphi 0, %s137
  $region4: #{critic_forward.9} parent=0 // loop_header_branch
    %16 = sbr.rel (%p14) target = $region8
  $region5: #{critic_forward.9} parent=0 // loop_body
    %s18 = ssub.s32 %s13, 1
    %s19 = ssub.s32 %s13, 2
    %s20 = sadd.s32 %s13, 1
    %s21 = ssub.s32 %s13, %s20
    %p22 = scmp.eq.s32.totalorder %s21, 0
    %s24 = sadd.s32 %s23, 1
    %s25 = scalar_select %p22, %s23, %s24
    %p28 = pneg %p22
    %p29 = scmp.eq.s32.totalorder %s13, 1
    %p30 = por %p28, %p29
    %p31 = scmp.ne.s32.totalorder %s23, %s26
    %p32 = scmp.eq.s32.totalorder %s13, 0
    %p33 = por %p31, %p32
    %p34 = scmp.ne.s32.totalorder %s23, %s26
    %p35 = scmp.eq.s32.totalorder %s18, 1
    %p36 = por %p34, %p35
    %p37 = scmp.ne.s32.totalorder %s26, %s27
    %p38 = scmp.eq.s32.totalorder %s18, 0
    %p39 = por %p37, %p38
    %p40 = scmp.ne.s32.totalorder %s26, %s27
    %p41 = scmp.eq.s32.totalorder %s19, 1
    %p42 = por %p40, %p41
    %p44 = scmp.ne.s32.totalorder %s27, %s43
    %p45 = scmp.eq.s32.totalorder %s19, 0
    %p46 = por %p44, %p45
    %s48 = sadd.s32 %s47, 1
    %p51 = scmp.eq.s32.totalorder %s13, 1
    %p52 = scmp.ne.s32.totalorder %s47, %s49
    %p53 = scmp.eq.s32.totalorder %s13, 0
    %p54 = por %p52, %p53
    %p55 = scmp.ne.s32.totalorder %s47, %s49
    %p56 = scmp.eq.s32.totalorder %s18, 1
    %p57 = por %p55, %p56
    %p58 = scmp.ne.s32.totalorder %s49, %s50
    %p59 = scmp.eq.s32.totalorder %s18, 0
    %p60 = por %p58, %p59
    %p61 = scmp.ne.s32.totalorder %s49, %s50
    %p62 = scmp.eq.s32.totalorder %s19, 1
    %p63 = por %p61, %p62
    %p65 = scmp.ne.s32.totalorder %s50, %s64
    %p66 = scmp.eq.s32.totalorder %s19, 0
    %p67 = por %p65, %p66
    %s69 = sadd.s32 %s68, 1
    %p72 = scmp.eq.s32.totalorder %s13, 1
    %p73 = scmp.ne.s32.totalorder %s68, %s70
    %p74 = scmp.eq.s32.totalorder %s13, 0
    %p75 = por %p73, %p74
    %p76 = scmp.ne.s32.totalorder %s68, %s70
    %p77 = scmp.eq.s32.totalorder %s18, 1
    %p78 = por %p76, %p77
    %p79 = scmp.ne.s32.totalorder %s70, %s71
    %p80 = scmp.eq.s32.totalorder %s18, 0
    %p81 = por %p79, %p80
    %p82 = scmp.ne.s32.totalorder %s70, %s71
    %p83 = scmp.eq.s32.totalorder %s19, 1
    %p84 = por %p82, %p83
    %p86 = scmp.ne.s32.totalorder %s71, %s85
    %p87 = scmp.eq.s32.totalorder %s19, 0
    %p88 = por %p86, %p87
    %s90 = sadd.s32 %s89, 1
    %p93 = scmp.eq.s32.totalorder %s13, 1
    %p94 = scmp.ne.s32.totalorder %s89, %s91
    %p95 = scmp.eq.s32.totalorder %s13, 0
    %p96 = por %p94, %p95
    %p97 = scmp.ne.s32.totalorder %s89, %s91
    %p98 = scmp.eq.s32.totalorder %s18, 1
    %p99 = por %p97, %p98
    %p100 = scmp.ne.s32.totalorder %s91, %s92
    %p101 = scmp.eq.s32.totalorder %s18, 0
    %p102 = por %p100, %p101
    %p103 = scmp.ne.s32.totalorder %s91, %s92
    %p104 = scmp.eq.s32.totalorder %s19, 1
    %p105 = por %p103, %p104
    %p107 = scmp.ne.s32.totalorder %s92, %s106
    %p108 = scmp.eq.s32.totalorder %s19, 0
    %p109 = por %p107, %p108
    %s111 = sadd.s32 %s110, 1
    %p114 = scmp.eq.s32.totalorder %s13, 1
    %p115 = scmp.ne.s32.totalorder %s110, %s112
    %p116 = scmp.eq.s32.totalorder %s13, 0
    %p117 = por %p115, %p116
    %p118 = scmp.ne.s32.totalorder %s110, %s112
    %p119 = scmp.eq.s32.totalorder %s18, 1
    %p120 = por %p118, %p119
    %p121 = scmp.ne.s32.totalorder %s112, %s113
    %p122 = scmp.eq.s32.totalorder %s18, 0
    %p123 = por %p121, %p122
    %p124 = scmp.ne.s32.totalorder %s112, %s113
    %p125 = scmp.eq.s32.totalorder %s19, 1
    %p126 = por %p124, %p125
    %p128 = scmp.ne.s32.totalorder %s113, %s127
    %p129 = scmp.eq.s32.totalorder %s19, 0
    %p130 = por %p128, %p129
    %s131 = ssub.s32 %s13, %s20
    %p132 = scmp.eq.s32.totalorder %s131, 0
    %s134 = sadd.s32 %s133, 1
    %s135 = scalar_select %p132, %s133, %s134
    %p138 = pneg %p132
    %p139 = scmp.eq.s32.totalorder %s13, 1
    %p140 = por %p138, %p139
    %p141 = scmp.ne.s32.totalorder %s133, %s136
    %p142 = scmp.eq.s32.totalorder %s13, 0
    %p143 = por %p141, %p142
    %p144 = scmp.ne.s32.totalorder %s133, %s136
    %p145 = scmp.eq.s32.totalorder %s18, 1
    %p146 = por %p144, %p145
    %p147 = scmp.ne.s32.totalorder %s136, %s137
    %p148 = scmp.eq.s32.totalorder %s18, 0
    %p149 = por %p147, %p148
    %p150 = scmp.ne.s32.totalorder %s136, %s137
    %p151 = scmp.eq.s32.totalorder %s19, 1
    %p152 = por %p150, %p151
    %p154 = scmp.ne.s32.totalorder %s137, %s153
    %p155 = scmp.eq.s32.totalorder %s19, 0
    %p156 = por %p154, %p155
    %p157 = scmp.le.s32.totalorder 1, %s13
    %p158 = scmp.lt.s32.totalorder %s13, 3
    %p159 = pnand %p157, %p158
    %p160 = pneg %p159
    // Predicated region
    $region9: #{critic_forward.9} parent=5 // pred_check
      _
    $region10: #{critic_forward.9} parent=5 // pred_check_branch
      %162 = sbr.rel (%p159) target = $region12
    $region11: #{critic_forward.9} parent=5 // pred_region
      %s163 = ssub.s32 %s13, 1
      // Predicated region
      $region13: #{critic_forward.9} parent=11 // pred_check
        %p164 = pneg %p60
      $region14: #{critic_forward.9} parent=11 // pred_check_branch
        %166 = sbr.rel (%p164) target = $region16
      $region15: #{critic_forward.9} parent=11 // pred_region
        _
      $region16: #{critic_forward.9} parent=11 // pred_fallthru
        _
      // Predicated region
      $region17: #{critic_forward.9} parent=11 // pred_check
        %p167 = pneg %p81
      $region18: #{critic_forward.9} parent=11 // pred_check_branch
        %169 = sbr.rel (%p167) target = $region20
      $region19: #{critic_forward.9} parent=11 // pred_region
        _
      $region20: #{critic_forward.9} parent=11 // pred_fallthru
        _
      // Predicated region
      $region21: #{critic_forward.9} parent=11 // pred_check
        %p170 = pneg %p102
      $region22: #{critic_forward.9} parent=11 // pred_check_branch
        %172 = sbr.rel (%p170) target = $region24
      $region23: #{critic_forward.9} parent=11 // pred_region
        _
      $region24: #{critic_forward.9} parent=11 // pred_fallthru
        _
      // Predicated region
      $region25: #{critic_forward.9} parent=11 // pred_check
        %p173 = pneg %p123
      $region26: #{critic_forward.9} parent=11 // pred_check_branch
        %175 = sbr.rel (%p173) target = $region28
      $region27: #{critic_forward.9} parent=11 // pred_region
        _
      $region28: #{critic_forward.9} parent=11 // pred_fallthru
        _
    $region12: #{critic_forward.9} parent=5 // pred_fallthru
      _
    %p176 = scmp.lt.s32.totalorder %s13, 2
    // Predicated region
    $region29: #{critic_forward.9} parent=5 // pred_check
      %p177 = pneg %p176
    $region30: #{critic_forward.9} parent=5 // pred_check_branch
      %179 = sbr.rel (%p177) target = $region32
    $region31: #{critic_forward.9} parent=5 // pred_region
      // Predicated region
      $region33: #{critic_forward.9} parent=31 // pred_check
        %p180 = pneg %p33
      $region34: #{critic_forward.9} parent=31 // pred_check_branch
        %182 = sbr.rel (%p180) target = $region36
      $region35: #{critic_forward.9} parent=31 // pred_region
        %p183 = scmp.lt.s32.totalorder %s13, 1
        %s184 = scalar_select %p183, %s13, 1
        %s185 = smul.addr %s184, 32
        %s186 = smul.addr %s185, 4
        %s187 = scalar_lea.vmem %s0, %s186
      $region36: #{critic_forward.9} parent=31 // pred_fallthru
        _
    $region32: #{critic_forward.9} parent=5 // pred_fallthru
      _
    %p188 = scmp.le.s32.totalorder 1, %s13
    %p189 = scmp.lt.s32.totalorder %s13, 3
    %p190 = pnand %p188, %p189
    %p191 = pneg %p190
    // Predicated region
    $region37: #{critic_forward.9} parent=5 // pred_check
      _
    $region38: #{critic_forward.9} parent=5 // pred_check_branch
      %193 = sbr.rel (%p190) target = $region40
    $region39: #{critic_forward.9} parent=5 // pred_region
      %s194 = ssub.s32 %s13, 1
      %p195 = scmp.lt.s32.totalorder %s18, 1
      %s196 = scalar_select %p195, %s18, 1
      %s197 = smul.addr %s196, 32
      %s198 = smul.addr %s197, 4
      %s199 = scalar_lea.vmem %s0, %s198
      %p200 = pneg %p39
      %p201 = pneg %p36
      %p202 = pneg %p60
      %p203 = pneg %p57
      %p204 = pneg %p81
      %p205 = pneg %p78
      %p206 = pneg %p102
      %p207 = pneg %p99
      %p208 = pneg %p123
      %p209 = pneg %p120
      %p210 = pneg %p149
      %p211 = pneg %p146
      %p212 = scmp.lt.s32.totalorder %s18, 1
      %s213 = scalar_select %p212, %s18, 1
      %s214 = scalar_lea.vmem %s5, %s213
      %p215 = scmp.lt.s32.totalorder %s18, 1
      %s216 = scalar_select %p215, %s18, 1
      %s217 = smul.addr %s216, 32
      %s218 = smul.addr %s217, 4
      %s219 = scalar_lea.vmem %s0, %s218
      %p220 = scmp.lt.s32.totalorder %s18, 1
      %s221 = scalar_select %p220, %s18, 1
      %s222 = scalar_lea.vmem %s5, %s221
      %v223 = vld [vmem:[%s219] sm:$0xff]
      %v224 = vld [vmem:[%s219 + $0x8] sm:$0xff]
      %v225 = vld [vmem:[%s219 + $0x10] sm:$0xff]
      %v226 = vld [vmem:[%s219 + $0x18] sm:$0xff]
      %v227 = vld [vmem:[%s219 + $0x20] sm:$0xff]
      %v228 = vld [vmem:[%s219 + $0x28] sm:$0xff]
      %v229 = vld [vmem:[%s219 + $0x30] sm:$0xff]
      %v230 = vld [vmem:[%s219 + $0x38] sm:$0xff]
      %v231 = vld [vmem:[%s219 + $0x40] sm:$0xff]
      %v232 = vld [vmem:[%s219 + $0x48] sm:$0xff]
      %v233 = vld [vmem:[%s219 + $0x50] sm:$0xff]
      %v234 = vld [vmem:[%s219 + $0x58] sm:$0xff]
      %v235 = vld [vmem:[%s219 + $0x60] sm:$0xff]
      %v236 = vld [vmem:[%s219 + $0x68] sm:$0xff]
      %v237 = vld [vmem:[%s219 + $0x70] sm:$0xff]
      %v238 = vld [vmem:[%s219 + $0x78] sm:$0xff]
      %v239 = vld [vmem:[%s1] sm:$0xff]
      %v240 = vld [vmem:[%s1 + $0x8] sm:$0xff]
      %v241 = vld [vmem:[%s1 + $0x10] sm:$0xff]
      %v242 = vld [vmem:[%s1 + $0x18] sm:$0xff]
      %v243 = vld [vmem:[%s1 + $0x20] sm:$0xff]
      %v244 = vld [vmem:[%s1 + $0x28] sm:$0xff]
      %v245 = vld [vmem:[%s1 + $0x30] sm:$0xff]
      %v246 = vld [vmem:[%s1 + $0x38] sm:$0xff]
      %v247 = vld [vmem:[%s1 + $0x40] sm:$0xff]
      %v248 = vld [vmem:[%s1 + $0x48] sm:$0xff]
      %v249 = vld [vmem:[%s1 + $0x50] sm:$0xff]
      %v250 = vld [vmem:[%s1 + $0x58] sm:$0xff]
      %v251 = vld [vmem:[%s1 + $0x60] sm:$0xff]
      %v252 = vld [vmem:[%s1 + $0x68] sm:$0xff]
      %v253 = vld [vmem:[%s1 + $0x70] sm:$0xff]
      %v254 = vld [vmem:[%s1 + $0x78] sm:$0xff]
      %v255 = vld [vmem:[%s1 + $0x80] sm:$0xff]
      %v256 = vld [vmem:[%s1 + $0x88] sm:$0xff]
      %v257 = vld [vmem:[%s1 + $0x90] sm:$0xff]
      %v258 = vld [vmem:[%s1 + $0x98] sm:$0xff]
      %v259 = vld [vmem:[%s1 + $0xa0] sm:$0xff]
      %v260 = vld [vmem:[%s1 + $0xa8] sm:$0xff]
      %v261 = vld [vmem:[%s1 + $0xb0] sm:$0xff]
      %v262 = vld [vmem:[%s1 + $0xb8] sm:$0xff]
      %v263 = vld [vmem:[%s1 + $0xc0] sm:$0xff]
      %v264 = vld [vmem:[%s1 + $0xc8] sm:$0xff]
      %v265 = vld [vmem:[%s1 + $0xd0] sm:$0xff]
      %v266 = vld [vmem:[%s1 + $0xd8] sm:$0xff]
      %v267 = vld [vmem:[%s1 + $0xe0] sm:$0xff]
      %v268 = vld [vmem:[%s1 + $0xe8] sm:$0xff]
      %v269 = vld [vmem:[%s1 + $0xf0] sm:$0xff]
      %v270 = vld [vmem:[%s1 + $0xf8] sm:$0xff]
      %v271 = vld [vmem:[%s1 + $0x100] sm:$0xff]
      %v272 = vld [vmem:[%s1 + $0x108] sm:$0xff]
      %v273 = vld [vmem:[%s1 + $0x110] sm:$0xff]
      %v274 = vld [vmem:[%s1 + $0x118] sm:$0xff]
      %v275 = vld [vmem:[%s1 + $0x120] sm:$0xff]
      %v276 = vld [vmem:[%s1 + $0x128] sm:$0xff]
      %v277 = vld [vmem:[%s1 + $0x130] sm:$0xff]
      %v278 = vld [vmem:[%s1 + $0x138] sm:$0xff]
      %v279 = vld [vmem:[%s1 + $0x140] sm:$0xff]
      %v280 = vld [vmem:[%s1 + $0x148] sm:$0xff]
      %v281 = vld [vmem:[%s1 + $0x150] sm:$0xff]
      %v282 = vld [vmem:[%s1 + $0x158] sm:$0xff]
      %v283 = vld [vmem:[%s1 + $0x160] sm:$0xff]
      %v284 = vld [vmem:[%s1 + $0x168] sm:$0xff]
      %v285 = vld [vmem:[%s1 + $0x170] sm:$0xff]
      %v286 = vld [vmem:[%s1 + $0x178] sm:$0xff]
      %v287 = vld [vmem:[%s1 + $0x180] sm:$0xff]
      %v288 = vld [vmem:[%s1 + $0x188] sm:$0xff]
      %v289 = vld [vmem:[%s1 + $0x190] sm:$0xff]
      %v290 = vld [vmem:[%s1 + $0x198] sm:$0xff]
      %v291 = vld [vmem:[%s1 + $0x1a0] sm:$0xff]
      %v292 = vld [vmem:[%s1 + $0x1a8] sm:$0xff]
      %v293 = vld [vmem:[%s1 + $0x1b0] sm:$0xff]
      %v294 = vld [vmem:[%s1 + $0x1b8] sm:$0xff]
      %v295 = vld [vmem:[%s1 + $0x1c0] sm:$0xff]
      %v296 = vld [vmem:[%s1 + $0x1c8] sm:$0xff]
      %v297 = vld [vmem:[%s1 + $0x1d0] sm:$0xff]
      %v298 = vld [vmem:[%s1 + $0x1d8] sm:$0xff]
      %v299 = vld [vmem:[%s1 + $0x1e0] sm:$0xff]
      %v300 = vld [vmem:[%s1 + $0x1e8] sm:$0xff]
      %v301 = vld [vmem:[%s1 + $0x1f0] sm:$0xff]
      %v302 = vld [vmem:[%s1 + $0x1f8] sm:$0xff]
      %v303 = vld [vmem:[%s1 + $0x200] sm:$0xff]
      %v304 = vld [vmem:[%s1 + $0x208] sm:$0xff]
      %v305 = vld [vmem:[%s1 + $0x210] sm:$0xff]
      %v306 = vld [vmem:[%s1 + $0x218] sm:$0xff]
      %v307 = vld [vmem:[%s1 + $0x220] sm:$0xff]
      %v308 = vld [vmem:[%s1 + $0x228] sm:$0xff]
      %v309 = vld [vmem:[%s1 + $0x230] sm:$0xff]
      %v310 = vld [vmem:[%s1 + $0x238] sm:$0xff]
      %v311 = vld [vmem:[%s1 + $0x240] sm:$0xff]
      %v312 = vld [vmem:[%s1 + $0x248] sm:$0xff]
      %v313 = vld [vmem:[%s1 + $0x250] sm:$0xff]
      %v314 = vld [vmem:[%s1 + $0x258] sm:$0xff]
      %v315 = vld [vmem:[%s1 + $0x260] sm:$0xff]
      %v316 = vld [vmem:[%s1 + $0x268] sm:$0xff]
      %v317 = vld [vmem:[%s1 + $0x270] sm:$0xff]
      %v318 = vld [vmem:[%s1 + $0x278] sm:$0xff]
      %v319 = vld [vmem:[%s1 + $0x280] sm:$0xff]
      %v320 = vld [vmem:[%s1 + $0x288] sm:$0xff]
      %v321 = vld [vmem:[%s1 + $0x290] sm:$0xff]
      %v322 = vld [vmem:[%s1 + $0x298] sm:$0xff]
      %v323 = vld [vmem:[%s1 + $0x2a0] sm:$0xff]
      %v324 = vld [vmem:[%s1 + $0x2a8] sm:$0xff]
      %v325 = vld [vmem:[%s1 + $0x2b0] sm:$0xff]
      %v326 = vld [vmem:[%s1 + $0x2b8] sm:$0xff]
      %v327 = vld [vmem:[%s1 + $0x2c0] sm:$0xff]
      %v328 = vld [vmem:[%s1 + $0x2c8] sm:$0xff]
      %v329 = vld [vmem:[%s1 + $0x2d0] sm:$0xff]
      %v330 = vld [vmem:[%s1 + $0x2d8] sm:$0xff]
      %v331 = vld [vmem:[%s1 + $0x2e0] sm:$0xff]
      %v332 = vld [vmem:[%s1 + $0x2e8] sm:$0xff]
      %v333 = vld [vmem:[%s1 + $0x2f0] sm:$0xff]
      %v334 = vld [vmem:[%s1 + $0x2f8] sm:$0xff]
      %v335 = vld [vmem:[%s1 + $0x300] sm:$0xff]
      %v336 = vld [vmem:[%s1 + $0x308] sm:$0xff]
      %v337 = vld [vmem:[%s1 + $0x310] sm:$0xff]
      %v338 = vld [vmem:[%s1 + $0x318] sm:$0xff]
      %v339 = vld [vmem:[%s1 + $0x320] sm:$0xff]
      %v340 = vld [vmem:[%s1 + $0x328] sm:$0xff]
      %v341 = vld [vmem:[%s1 + $0x330] sm:$0xff]
      %v342 = vld [vmem:[%s1 + $0x338] sm:$0xff]
      %v343 = vld [vmem:[%s1 + $0x340] sm:$0xff]
      %v344 = vld [vmem:[%s1 + $0x348] sm:$0xff]
      %v345 = vld [vmem:[%s1 + $0x350] sm:$0xff]
      %v346 = vld [vmem:[%s1 + $0x358] sm:$0xff]
      %v347 = vld [vmem:[%s1 + $0x360] sm:$0xff]
      %v348 = vld [vmem:[%s1 + $0x368] sm:$0xff]
      %v349 = vld [vmem:[%s1 + $0x370] sm:$0xff]
      %v350 = vld [vmem:[%s1 + $0x378] sm:$0xff]
      %v351 = vld [vmem:[%s1 + $0x380] sm:$0xff]
      %v352 = vld [vmem:[%s1 + $0x388] sm:$0xff]
      %v353 = vld [vmem:[%s1 + $0x390] sm:$0xff]
      %v354 = vld [vmem:[%s1 + $0x398] sm:$0xff]
      %v355 = vld [vmem:[%s1 + $0x3a0] sm:$0xff]
      %v356 = vld [vmem:[%s1 + $0x3a8] sm:$0xff]
      %v357 = vld [vmem:[%s1 + $0x3b0] sm:$0xff]
      %v358 = vld [vmem:[%s1 + $0x3b8] sm:$0xff]
      %v359 = vld [vmem:[%s1 + $0x3c0] sm:$0xff]
      %v360 = vld [vmem:[%s1 + $0x3c8] sm:$0xff]
      %v361 = vld [vmem:[%s1 + $0x3d0] sm:$0xff]
      %v362 = vld [vmem:[%s1 + $0x3d8] sm:$0xff]
      %v363 = vld [vmem:[%s1 + $0x3e0] sm:$0xff]
      %v364 = vld [vmem:[%s1 + $0x3e8] sm:$0xff]
      %v365 = vld [vmem:[%s1 + $0x3f0] sm:$0xff]
      %v366 = vld [vmem:[%s1 + $0x3f8] sm:$0xff]
      %v367 = vld [vmem:[%s1 + $0x400] sm:$0xff]
      %v368 = vld [vmem:[%s1 + $0x408] sm:$0xff]
      %v369 = vld [vmem:[%s1 + $0x410] sm:$0xff]
      %v370 = vld [vmem:[%s1 + $0x418] sm:$0xff]
      %v371 = vld [vmem:[%s1 + $0x420] sm:$0xff]
      %v372 = vld [vmem:[%s1 + $0x428] sm:$0xff]
      %v373 = vld [vmem:[%s1 + $0x430] sm:$0xff]
      %v374 = vld [vmem:[%s1 + $0x438] sm:$0xff]
      %v375 = vld [vmem:[%s1 + $0x440] sm:$0xff]
      %v376 = vld [vmem:[%s1 + $0x448] sm:$0xff]
      %v377 = vld [vmem:[%s1 + $0x450] sm:$0xff]
      %v378 = vld [vmem:[%s1 + $0x458] sm:$0xff]
      %v379 = vld [vmem:[%s1 + $0x460] sm:$0xff]
      %v380 = vld [vmem:[%s1 + $0x468] sm:$0xff]
      %v381 = vld [vmem:[%s1 + $0x470] sm:$0xff]
      %v382 = vld [vmem:[%s1 + $0x478] sm:$0xff]
      %v383 = vld [vmem:[%s1 + $0x480] sm:$0xff]
      %v384 = vld [vmem:[%s1 + $0x488] sm:$0xff]
      %v385 = vld [vmem:[%s1 + $0x490] sm:$0xff]
      %v386 = vld [vmem:[%s1 + $0x498] sm:$0xff]
      %v387 = vld [vmem:[%s1 + $0x4a0] sm:$0xff]
      %v388 = vld [vmem:[%s1 + $0x4a8] sm:$0xff]
      %v389 = vld [vmem:[%s1 + $0x4b0] sm:$0xff]
      %v390 = vld [vmem:[%s1 + $0x4b8] sm:$0xff]
      %v391 = vld [vmem:[%s1 + $0x4c0] sm:$0xff]
      %v392 = vld [vmem:[%s1 + $0x4c8] sm:$0xff]
      %v393 = vld [vmem:[%s1 + $0x4d0] sm:$0xff]
      %v394 = vld [vmem:[%s1 + $0x4d8] sm:$0xff]
      %v395 = vld [vmem:[%s1 + $0x4e0] sm:$0xff]
      %v396 = vld [vmem:[%s1 + $0x4e8] sm:$0xff]
      %v397 = vld [vmem:[%s1 + $0x4f0] sm:$0xff]
      %v398 = vld [vmem:[%s1 + $0x4f8] sm:$0xff]
      %v399 = vld [vmem:[%s1 + $0x500] sm:$0xff]
      %v400 = vld [vmem:[%s1 + $0x508] sm:$0xff]
      %v401 = vld [vmem:[%s1 + $0x510] sm:$0xff]
      %v402 = vld [vmem:[%s1 + $0x518] sm:$0xff]
      %v403 = vld [vmem:[%s1 + $0x520] sm:$0xff]
      %v404 = vld [vmem:[%s1 + $0x528] sm:$0xff]
      %v405 = vld [vmem:[%s1 + $0x530] sm:$0xff]
      %v406 = vld [vmem:[%s1 + $0x538] sm:$0xff]
      %v407 = vld [vmem:[%s1 + $0x540] sm:$0xff]
      %v408 = vld [vmem:[%s1 + $0x548] sm:$0xff]
      %v409 = vld [vmem:[%s1 + $0x550] sm:$0xff]
      %v410 = vld [vmem:[%s1 + $0x558] sm:$0xff]
      %v411 = vld [vmem:[%s1 + $0x560] sm:$0xff]
      %v412 = vld [vmem:[%s1 + $0x568] sm:$0xff]
      %v413 = vld [vmem:[%s1 + $0x570] sm:$0xff]
      %v414 = vld [vmem:[%s1 + $0x578] sm:$0xff]
      %v415 = vld [vmem:[%s1 + $0x580] sm:$0xff]
      %v416 = vld [vmem:[%s1 + $0x588] sm:$0xff]
      %v417 = vld [vmem:[%s1 + $0x590] sm:$0xff]
      %v418 = vld [vmem:[%s1 + $0x598] sm:$0xff]
      %v419 = vld [vmem:[%s1 + $0x5a0] sm:$0xff]
      %v420 = vld [vmem:[%s1 + $0x5a8] sm:$0xff]
      %v421 = vld [vmem:[%s1 + $0x5b0] sm:$0xff]
      %v422 = vld [vmem:[%s1 + $0x5b8] sm:$0xff]
      %v423 = vld [vmem:[%s1 + $0x5c0] sm:$0xff]
      %v424 = vld [vmem:[%s1 + $0x5c8] sm:$0xff]
      %v425 = vld [vmem:[%s1 + $0x5d0] sm:$0xff]
      %v426 = vld [vmem:[%s1 + $0x5d8] sm:$0xff]
      %v427 = vld [vmem:[%s1 + $0x5e0] sm:$0xff]
      %v428 = vld [vmem:[%s1 + $0x5e8] sm:$0xff]
      %v429 = vld [vmem:[%s1 + $0x5f0] sm:$0xff]
      %v430 = vld [vmem:[%s1 + $0x5f8] sm:$0xff]
      %v431 = vld [vmem:[%s1 + $0x600] sm:$0xff]
      %v432 = vld [vmem:[%s1 + $0x608] sm:$0xff]
      %v433 = vld [vmem:[%s1 + $0x610] sm:$0xff]
      %v434 = vld [vmem:[%s1 + $0x618] sm:$0xff]
      %v435 = vld [vmem:[%s1 + $0x620] sm:$0xff]
      %v436 = vld [vmem:[%s1 + $0x628] sm:$0xff]
      %v437 = vld [vmem:[%s1 + $0x630] sm:$0xff]
      %v438 = vld [vmem:[%s1 + $0x638] sm:$0xff]
      %v439 = vld [vmem:[%s1 + $0x640] sm:$0xff]
      %v440 = vld [vmem:[%s1 + $0x648] sm:$0xff]
      %v441 = vld [vmem:[%s1 + $0x650] sm:$0xff]
      %v442 = vld [vmem:[%s1 + $0x658] sm:$0xff]
      %v443 = vld [vmem:[%s1 + $0x660] sm:$0xff]
      %v444 = vld [vmem:[%s1 + $0x668] sm:$0xff]
      %v445 = vld [vmem:[%s1 + $0x670] sm:$0xff]
      %v446 = vld [vmem:[%s1 + $0x678] sm:$0xff]
      %v447 = vld [vmem:[%s1 + $0x680] sm:$0xff]
      %v448 = vld [vmem:[%s1 + $0x688] sm:$0xff]
      %v449 = vld [vmem:[%s1 + $0x690] sm:$0xff]
      %v450 = vld [vmem:[%s1 + $0x698] sm:$0xff]
      %v451 = vld [vmem:[%s1 + $0x6a0] sm:$0xff]
      %v452 = vld [vmem:[%s1 + $0x6a8] sm:$0xff]
      %v453 = vld [vmem:[%s1 + $0x6b0] sm:$0xff]
      %v454 = vld [vmem:[%s1 + $0x6b8] sm:$0xff]
      %v455 = vld [vmem:[%s1 + $0x6c0] sm:$0xff]
      %v456 = vld [vmem:[%s1 + $0x6c8] sm:$0xff]
      %v457 = vld [vmem:[%s1 + $0x6d0] sm:$0xff]
      %v458 = vld [vmem:[%s1 + $0x6d8] sm:$0xff]
      %v459 = vld [vmem:[%s1 + $0x6e0] sm:$0xff]
      %v460 = vld [vmem:[%s1 + $0x6e8] sm:$0xff]
      %v461 = vld [vmem:[%s1 + $0x6f0] sm:$0xff]
      %v462 = vld [vmem:[%s1 + $0x6f8] sm:$0xff]
      %v463 = vld [vmem:[%s1 + $0x700] sm:$0xff]
      %v464 = vld [vmem:[%s1 + $0x708] sm:$0xff]
      %v465 = vld [vmem:[%s1 + $0x710] sm:$0xff]
      %v466 = vld [vmem:[%s1 + $0x718] sm:$0xff]
      %v467 = vld [vmem:[%s1 + $0x720] sm:$0xff]
      %v468 = vld [vmem:[%s1 + $0x728] sm:$0xff]
      %v469 = vld [vmem:[%s1 + $0x730] sm:$0xff]
      %v470 = vld [vmem:[%s1 + $0x738] sm:$0xff]
      %v471 = vld [vmem:[%s1 + $0x740] sm:$0xff]
      %v472 = vld [vmem:[%s1 + $0x748] sm:$0xff]
      %v473 = vld [vmem:[%s1 + $0x750] sm:$0xff]
      %v474 = vld [vmem:[%s1 + $0x758] sm:$0xff]
      %v475 = vld [vmem:[%s1 + $0x760] sm:$0xff]
      %v476 = vld [vmem:[%s1 + $0x768] sm:$0xff]
      %v477 = vld [vmem:[%s1 + $0x770] sm:$0xff]
      %v478 = vld [vmem:[%s1 + $0x778] sm:$0xff]
      %v479 = vld [vmem:[%s1 + $0x780] sm:$0xff]
      %v480 = vld [vmem:[%s1 + $0x788] sm:$0xff]
      %v481 = vld [vmem:[%s1 + $0x790] sm:$0xff]
      %v482 = vld [vmem:[%s1 + $0x798] sm:$0xff]
      %v483 = vld [vmem:[%s1 + $0x7a0] sm:$0xff]
      %v484 = vld [vmem:[%s1 + $0x7a8] sm:$0xff]
      %v485 = vld [vmem:[%s1 + $0x7b0] sm:$0xff]
      %v486 = vld [vmem:[%s1 + $0x7b8] sm:$0xff]
      %v487 = vld [vmem:[%s1 + $0x7c0] sm:$0xff]
      %v488 = vld [vmem:[%s1 + $0x7c8] sm:$0xff]
      %v489 = vld [vmem:[%s1 + $0x7d0] sm:$0xff]
      %v490 = vld [vmem:[%s1 + $0x7d8] sm:$0xff]
      %v491 = vld [vmem:[%s1 + $0x7e0] sm:$0xff]
      %v492 = vld [vmem:[%s1 + $0x7e8] sm:$0xff]
      %v493 = vld [vmem:[%s1 + $0x7f0] sm:$0xff]
      %v494 = vld [vmem:[%s1 + $0x7f8] sm:$0xff]
      %v495 = vld [vmem:[%s2] sm:$0x3]
      %v497 = vlaneseq
      %v498 = vshrl.u32 %v497, 7
      %v499 = vsub.s32 0, %v498
      %v500 = vrot.slane %v495, %v499
      %v501 = vlaneseq
      %v502 = vshrl.u32 %v501, 7
      %v503 = vsub.s32 1, %v502
      %v504 = vrot.slane %v495, %v503
      %v523 = vunpack.c.l.b16 %v223
      %v524 = vunpack.c.h.b16 %v223
      %v525 = vunpack.c.l.b16 %v224
      %v526 = vunpack.c.h.b16 %v224
      %v527 = vunpack.c.l.b16 %v225
      %v528 = vunpack.c.h.b16 %v225
      %v529 = vunpack.c.l.b16 %v226
      %v530 = vunpack.c.h.b16 %v226
      %v531 = vunpack.c.l.b16 %v227
      %v532 = vunpack.c.h.b16 %v227
      %v533 = vunpack.c.l.b16 %v228
      %v534 = vunpack.c.h.b16 %v228
      %v535 = vunpack.c.l.b16 %v229
      %v536 = vunpack.c.h.b16 %v229
      %v537 = vunpack.c.l.b16 %v230
      %v538 = vunpack.c.h.b16 %v230
      %v539 = vunpack.c.l.b16 %v231
      %v540 = vunpack.c.h.b16 %v231
      %v541 = vunpack.c.l.b16 %v232
      %v542 = vunpack.c.h.b16 %v232
      %v543 = vunpack.c.l.b16 %v233
      %v544 = vunpack.c.h.b16 %v233
      %v545 = vunpack.c.l.b16 %v234
      %v546 = vunpack.c.h.b16 %v234
      %v547 = vunpack.c.l.b16 %v235
      %v548 = vunpack.c.h.b16 %v235
      %v549 = vunpack.c.l.b16 %v236
      %v550 = vunpack.c.h.b16 %v236
      %v551 = vunpack.c.l.b16 %v237
      %v552 = vunpack.c.h.b16 %v237
      %v553 = vunpack.c.l.b16 %v238
      %v554 = vunpack.c.h.b16 %v238
      %v555 = vpack.c.b16 %v539, %v523
      %v556 = vpack.c.b16 %v540, %v524
      %v557 = vpack.c.b16 %v541, %v525
      %v558 = vpack.c.b16 %v542, %v526
      %v559 = vpack.c.b16 %v543, %v527
      %v560 = vpack.c.b16 %v544, %v528
      %v561 = vpack.c.b16 %v545, %v529
      %v562 = vpack.c.b16 %v546, %v530
      %v563 = vpack.c.b16 %v547, %v531
      %v564 = vpack.c.b16 %v548, %v532
      %v565 = vpack.c.b16 %v549, %v533
      %v566 = vpack.c.b16 %v550, %v534
      %v567 = vpack.c.b16 %v551, %v535
      %v568 = vpack.c.b16 %v552, %v536
      %v569 = vpack.c.b16 %v553, %v537
      %v570 = vpack.c.b16 %v554, %v538
      %v843 = vunpack.c.l.b16 %v239
      %v844 = vunpack.c.h.b16 %v239
      %v845 = vunpack.c.l.b16 %v240
      %v846 = vunpack.c.h.b16 %v240
      %v847 = vunpack.c.l.b16 %v241
      %v848 = vunpack.c.h.b16 %v241
      %v849 = vunpack.c.l.b16 %v242
      %v850 = vunpack.c.h.b16 %v242
      %v851 = vunpack.c.l.b16 %v243
      %v852 = vunpack.c.h.b16 %v243
      %v853 = vunpack.c.l.b16 %v244
      %v854 = vunpack.c.h.b16 %v244
      %v855 = vunpack.c.l.b16 %v245
      %v856 = vunpack.c.h.b16 %v245
      %v857 = vunpack.c.l.b16 %v246
      %v858 = vunpack.c.h.b16 %v246
      %v859 = vunpack.c.l.b16 %v247
      %v860 = vunpack.c.h.b16 %v247
      %v861 = vunpack.c.l.b16 %v248
      %v862 = vunpack.c.h.b16 %v248
      %v863 = vunpack.c.l.b16 %v249
      %v864 = vunpack.c.h.b16 %v249
      %v865 = vunpack.c.l.b16 %v250
      %v866 = vunpack.c.h.b16 %v250
      %v867 = vunpack.c.l.b16 %v251
      %v868 = vunpack.c.h.b16 %v251
      %v869 = vunpack.c.l.b16 %v252
      %v870 = vunpack.c.h.b16 %v252
      %v871 = vunpack.c.l.b16 %v253
      %v872 = vunpack.c.h.b16 %v253
      %v873 = vunpack.c.l.b16 %v254
      %v874 = vunpack.c.h.b16 %v254
      %v875 = vunpack.c.l.b16 %v255
      %v876 = vunpack.c.h.b16 %v255
      %v877 = vunpack.c.l.b16 %v256
      %v878 = vunpack.c.h.b16 %v256
      %v879 = vunpack.c.l.b16 %v257
      %v880 = vunpack.c.h.b16 %v257
      %v881 = vunpack.c.l.b16 %v258
      %v882 = vunpack.c.h.b16 %v258
      %v883 = vunpack.c.l.b16 %v259
      %v884 = vunpack.c.h.b16 %v259
      %v885 = vunpack.c.l.b16 %v260
      %v886 = vunpack.c.h.b16 %v260
      %v887 = vunpack.c.l.b16 %v261
      %v888 = vunpack.c.h.b16 %v261
      %v889 = vunpack.c.l.b16 %v262
      %v890 = vunpack.c.h.b16 %v262
      %v891 = vunpack.c.l.b16 %v263
      %v892 = vunpack.c.h.b16 %v263
      %v893 = vunpack.c.l.b16 %v264
      %v894 = vunpack.c.h.b16 %v264
      %v895 = vunpack.c.l.b16 %v265
      %v896 = vunpack.c.h.b16 %v265
      %v897 = vunpack.c.l.b16 %v266
      %v898 = vunpack.c.h.b16 %v266
      %v899 = vunpack.c.l.b16 %v267
      %v900 = vunpack.c.h.b16 %v267
      %v901 = vunpack.c.l.b16 %v268
      %v902 = vunpack.c.h.b16 %v268
      %v903 = vunpack.c.l.b16 %v269
      %v904 = vunpack.c.h.b16 %v269
      %v905 = vunpack.c.l.b16 %v270
      %v906 = vunpack.c.h.b16 %v270
      %v907 = vunpack.c.l.b16 %v271
      %v908 = vunpack.c.h.b16 %v271
      %v909 = vunpack.c.l.b16 %v272
      %v910 = vunpack.c.h.b16 %v272
      %v911 = vunpack.c.l.b16 %v273
      %v912 = vunpack.c.h.b16 %v273
      %v913 = vunpack.c.l.b16 %v274
      %v914 = vunpack.c.h.b16 %v274
      %v915 = vunpack.c.l.b16 %v275
      %v916 = vunpack.c.h.b16 %v275
      %v917 = vunpack.c.l.b16 %v276
      %v918 = vunpack.c.h.b16 %v276
      %v919 = vunpack.c.l.b16 %v277
      %v920 = vunpack.c.h.b16 %v277
      %v921 = vunpack.c.l.b16 %v278
      %v922 = vunpack.c.h.b16 %v278
      %v923 = vunpack.c.l.b16 %v279
      %v924 = vunpack.c.h.b16 %v279
      %v925 = vunpack.c.l.b16 %v280
      %v926 = vunpack.c.h.b16 %v280
      %v927 = vunpack.c.l.b16 %v281
      %v928 = vunpack.c.h.b16 %v281
      %v929 = vunpack.c.l.b16 %v282
      %v930 = vunpack.c.h.b16 %v282
      %v931 = vunpack.c.l.b16 %v283
      %v932 = vunpack.c.h.b16 %v283
      %v933 = vunpack.c.l.b16 %v284
      %v934 = vunpack.c.h.b16 %v284
      %v935 = vunpack.c.l.b16 %v285
      %v936 = vunpack.c.h.b16 %v285
      %v937 = vunpack.c.l.b16 %v286
      %v938 = vunpack.c.h.b16 %v286
      %v939 = vunpack.c.l.b16 %v287
      %v940 = vunpack.c.h.b16 %v287
      %v941 = vunpack.c.l.b16 %v288
      %v942 = vunpack.c.h.b16 %v288
      %v943 = vunpack.c.l.b16 %v289
      %v944 = vunpack.c.h.b16 %v289
      %v945 = vunpack.c.l.b16 %v290
      %v946 = vunpack.c.h.b16 %v290
      %v947 = vunpack.c.l.b16 %v291
      %v948 = vunpack.c.h.b16 %v291
      %v949 = vunpack.c.l.b16 %v292
      %v950 = vunpack.c.h.b16 %v292
      %v951 = vunpack.c.l.b16 %v293
      %v952 = vunpack.c.h.b16 %v293
      %v953 = vunpack.c.l.b16 %v294
      %v954 = vunpack.c.h.b16 %v294
      %v955 = vunpack.c.l.b16 %v295
      %v956 = vunpack.c.h.b16 %v295
      %v957 = vunpack.c.l.b16 %v296
      %v958 = vunpack.c.h.b16 %v296
      %v959 = vunpack.c.l.b16 %v297
      %v960 = vunpack.c.h.b16 %v297
      %v961 = vunpack.c.l.b16 %v298
      %v962 = vunpack.c.h.b16 %v298
      %v963 = vunpack.c.l.b16 %v299
      %v964 = vunpack.c.h.b16 %v299
      %v965 = vunpack.c.l.b16 %v300
      %v966 = vunpack.c.h.b16 %v300
      %v967 = vunpack.c.l.b16 %v301
      %v968 = vunpack.c.h.b16 %v301
      %v969 = vunpack.c.l.b16 %v302
      %v970 = vunpack.c.h.b16 %v302
      %v971 = vunpack.c.l.b16 %v303
      %v972 = vunpack.c.h.b16 %v303
      %v973 = vunpack.c.l.b16 %v304
      %v974 = vunpack.c.h.b16 %v304
      %v975 = vunpack.c.l.b16 %v305
      %v976 = vunpack.c.h.b16 %v305
      %v977 = vunpack.c.l.b16 %v306
      %v978 = vunpack.c.h.b16 %v306
      %v979 = vunpack.c.l.b16 %v307
      %v980 = vunpack.c.h.b16 %v307
      %v981 = vunpack.c.l.b16 %v308
      %v982 = vunpack.c.h.b16 %v308
      %v983 = vunpack.c.l.b16 %v309
      %v984 = vunpack.c.h.b16 %v309
      %v985 = vunpack.c.l.b16 %v310
      %v986 = vunpack.c.h.b16 %v310
      %v987 = vunpack.c.l.b16 %v311
      %v988 = vunpack.c.h.b16 %v311
      %v989 = vunpack.c.l.b16 %v312
      %v990 = vunpack.c.h.b16 %v312
      %v991 = vunpack.c.l.b16 %v313
      %v992 = vunpack.c.h.b16 %v313
      %v993 = vunpack.c.l.b16 %v314
      %v994 = vunpack.c.h.b16 %v314
      %v995 = vunpack.c.l.b16 %v315
      %v996 = vunpack.c.h.b16 %v315
      %v997 = vunpack.c.l.b16 %v316
      %v998 = vunpack.c.h.b16 %v316
      %v999 = vunpack.c.l.b16 %v317
      %v1000 = vunpack.c.h.b16 %v317
      %v1001 = vunpack.c.l.b16 %v318
      %v1002 = vunpack.c.h.b16 %v318
      %v1003 = vunpack.c.l.b16 %v319
      %v1004 = vunpack.c.h.b16 %v319
      %v1005 = vunpack.c.l.b16 %v320
      %v1006 = vunpack.c.h.b16 %v320
      %v1007 = vunpack.c.l.b16 %v321
      %v1008 = vunpack.c.h.b16 %v321
      %v1009 = vunpack.c.l.b16 %v322
      %v1010 = vunpack.c.h.b16 %v322
      %v1011 = vunpack.c.l.b16 %v323
      %v1012 = vunpack.c.h.b16 %v323
      %v1013 = vunpack.c.l.b16 %v324
      %v1014 = vunpack.c.h.b16 %v324
      %v1015 = vunpack.c.l.b16 %v325
      %v1016 = vunpack.c.h.b16 %v325
      %v1017 = vunpack.c.l.b16 %v326
      %v1018 = vunpack.c.h.b16 %v326
      %v1019 = vunpack.c.l.b16 %v327
      %v1020 = vunpack.c.h.b16 %v327
      %v1021 = vunpack.c.l.b16 %v328
      %v1022 = vunpack.c.h.b16 %v328
      %v1023 = vunpack.c.l.b16 %v329
      %v1024 = vunpack.c.h.b16 %v329
      %v1025 = vunpack.c.l.b16 %v330
      %v1026 = vunpack.c.h.b16 %v330
      %v1027 = vunpack.c.l.b16 %v331
      %v1028 = vunpack.c.h.b16 %v331
      %v1029 = vunpack.c.l.b16 %v332
      %v1030 = vunpack.c.h.b16 %v332
      %v1031 = vunpack.c.l.b16 %v333
      %v1032 = vunpack.c.h.b16 %v333
      %v1033 = vunpack.c.l.b16 %v334
      %v1034 = vunpack.c.h.b16 %v334
      %v1035 = vunpack.c.l.b16 %v335
      %v1036 = vunpack.c.h.b16 %v335
      %v1037 = vunpack.c.l.b16 %v336
      %v1038 = vunpack.c.h.b16 %v336
      %v1039 = vunpack.c.l.b16 %v337
      %v1040 = vunpack.c.h.b16 %v337
      %v1041 = vunpack.c.l.b16 %v338
      %v1042 = vunpack.c.h.b16 %v338
      %v1043 = vunpack.c.l.b16 %v339
      %v1044 = vunpack.c.h.b16 %v339
      %v1045 = vunpack.c.l.b16 %v340
      %v1046 = vunpack.c.h.b16 %v340
      %v1047 = vunpack.c.l.b16 %v341
      %v1048 = vunpack.c.h.b16 %v341
      %v1049 = vunpack.c.l.b16 %v342
      %v1050 = vunpack.c.h.b16 %v342
      %v1051 = vunpack.c.l.b16 %v343
      %v1052 = vunpack.c.h.b16 %v343
      %v1053 = vunpack.c.l.b16 %v344
      %v1054 = vunpack.c.h.b16 %v344
      %v1055 = vunpack.c.l.b16 %v345
      %v1056 = vunpack.c.h.b16 %v345
      %v1057 = vunpack.c.l.b16 %v346
      %v1058 = vunpack.c.h.b16 %v346
      %v1059 = vunpack.c.l.b16 %v347
      %v1060 = vunpack.c.h.b16 %v347
      %v1061 = vunpack.c.l.b16 %v348
      %v1062 = vunpack.c.h.b16 %v348
      %v1063 = vunpack.c.l.b16 %v349
      %v1064 = vunpack.c.h.b16 %v349
      %v1065 = vunpack.c.l.b16 %v350
      %v1066 = vunpack.c.h.b16 %v350
      %v1067 = vunpack.c.l.b16 %v351
      %v1068 = vunpack.c.h.b16 %v351
      %v1069 = vunpack.c.l.b16 %v352
      %v1070 = vunpack.c.h.b16 %v352
      %v1071 = vunpack.c.l.b16 %v353
      %v1072 = vunpack.c.h.b16 %v353
      %v1073 = vunpack.c.l.b16 %v354
      %v1074 = vunpack.c.h.b16 %v354
      %v1075 = vunpack.c.l.b16 %v355
      %v1076 = vunpack.c.h.b16 %v355
      %v1077 = vunpack.c.l.b16 %v356
      %v1078 = vunpack.c.h.b16 %v356
      %v1079 = vunpack.c.l.b16 %v357
      %v1080 = vunpack.c.h.b16 %v357
      %v1081 = vunpack.c.l.b16 %v358
      %v1082 = vunpack.c.h.b16 %v358
      %v1083 = vunpack.c.l.b16 %v359
      %v1084 = vunpack.c.h.b16 %v359
      %v1085 = vunpack.c.l.b16 %v360
      %v1086 = vunpack.c.h.b16 %v360
      %v1087 = vunpack.c.l.b16 %v361
      %v1088 = vunpack.c.h.b16 %v361
      %v1089 = vunpack.c.l.b16 %v362
      %v1090 = vunpack.c.h.b16 %v362
      %v1091 = vunpack.c.l.b16 %v363
      %v1092 = vunpack.c.h.b16 %v363
      %v1093 = vunpack.c.l.b16 %v364
      %v1094 = vunpack.c.h.b16 %v364
      %v1095 = vunpack.c.l.b16 %v365
      %v1096 = vunpack.c.h.b16 %v365
      %v1097 = vunpack.c.l.b16 %v366
      %v1098 = vunpack.c.h.b16 %v366
      %v1099 = vunpack.c.l.b16 %v367
      %v1100 = vunpack.c.h.b16 %v367
      %v1101 = vunpack.c.l.b16 %v368
      %v1102 = vunpack.c.h.b16 %v368
      %v1103 = vunpack.c.l.b16 %v369
      %v1104 = vunpack.c.h.b16 %v369
      %v1105 = vunpack.c.l.b16 %v370
      %v1106 = vunpack.c.h.b16 %v370
      %v1107 = vunpack.c.l.b16 %v371
      %v1108 = vunpack.c.h.b16 %v371
      %v1109 = vunpack.c.l.b16 %v372
      %v1110 = vunpack.c.h.b16 %v372
      %v1111 = vunpack.c.l.b16 %v373
      %v1112 = vunpack.c.h.b16 %v373
      %v1113 = vunpack.c.l.b16 %v374
      %v1114 = vunpack.c.h.b16 %v374
      %v1115 = vunpack.c.l.b16 %v375
      %v1116 = vunpack.c.h.b16 %v375
      %v1117 = vunpack.c.l.b16 %v376
      %v1118 = vunpack.c.h.b16 %v376
      %v1119 = vunpack.c.l.b16 %v377
      %v1120 = vunpack.c.h.b16 %v377
      %v1121 = vunpack.c.l.b16 %v378
      %v1122 = vunpack.c.h.b16 %v378
      %v1123 = vunpack.c.l.b16 %v379
      %v1124 = vunpack.c.h.b16 %v379
      %v1125 = vunpack.c.l.b16 %v380
      %v1126 = vunpack.c.h.b16 %v380
      %v1127 = vunpack.c.l.b16 %v381
      %v1128 = vunpack.c.h.b16 %v381
      %v1129 = vunpack.c.l.b16 %v382
      %v1130 = vunpack.c.h.b16 %v382
      %v1131 = vunpack.c.l.b16 %v383
      %v1132 = vunpack.c.h.b16 %v383
      %v1133 = vunpack.c.l.b16 %v384
      %v1134 = vunpack.c.h.b16 %v384
      %v1135 = vunpack.c.l.b16 %v385
      %v1136 = vunpack.c.h.b16 %v385
      %v1137 = vunpack.c.l.b16 %v386
      %v1138 = vunpack.c.h.b16 %v386
      %v1139 = vunpack.c.l.b16 %v387
      %v1140 = vunpack.c.h.b16 %v387
      %v1141 = vunpack.c.l.b16 %v388
      %v1142 = vunpack.c.h.b16 %v388
      %v1143 = vunpack.c.l.b16 %v389
      %v1144 = vunpack.c.h.b16 %v389
      %v1145 = vunpack.c.l.b16 %v390
      %v1146 = vunpack.c.h.b16 %v390
      %v1147 = vunpack.c.l.b16 %v391
      %v1148 = vunpack.c.h.b16 %v391
      %v1149 = vunpack.c.l.b16 %v392
      %v1150 = vunpack.c.h.b16 %v392
      %v1151 = vunpack.c.l.b16 %v393
      %v1152 = vunpack.c.h.b16 %v393
      %v1153 = vunpack.c.l.b16 %v394
      %v1154 = vunpack.c.h.b16 %v394
      %v1155 = vunpack.c.l.b16 %v395
      %v1156 = vunpack.c.h.b16 %v395
      %v1157 = vunpack.c.l.b16 %v396
      %v1158 = vunpack.c.h.b16 %v396
      %v1159 = vunpack.c.l.b16 %v397
      %v1160 = vunpack.c.h.b16 %v397
      %v1161 = vunpack.c.l.b16 %v398
      %v1162 = vunpack.c.h.b16 %v398
      %v1163 = vunpack.c.l.b16 %v399
      %v1164 = vunpack.c.h.b16 %v399
      %v1165 = vunpack.c.l.b16 %v400
      %v1166 = vunpack.c.h.b16 %v400
      %v1167 = vunpack.c.l.b16 %v401
      %v1168 = vunpack.c.h.b16 %v401
      %v1169 = vunpack.c.l.b16 %v402
      %v1170 = vunpack.c.h.b16 %v402
      %v1171 = vunpack.c.l.b16 %v403
      %v1172 = vunpack.c.h.b16 %v403
      %v1173 = vunpack.c.l.b16 %v404
      %v1174 = vunpack.c.h.b16 %v404
      %v1175 = vunpack.c.l.b16 %v405
      %v1176 = vunpack.c.h.b16 %v405
      %v1177 = vunpack.c.l.b16 %v406
      %v1178 = vunpack.c.h.b16 %v406
      %v1179 = vunpack.c.l.b16 %v407
      %v1180 = vunpack.c.h.b16 %v407
      %v1181 = vunpack.c.l.b16 %v408
      %v1182 = vunpack.c.h.b16 %v408
      %v1183 = vunpack.c.l.b16 %v409
      %v1184 = vunpack.c.h.b16 %v409
      %v1185 = vunpack.c.l.b16 %v410
      %v1186 = vunpack.c.h.b16 %v410
      %v1187 = vunpack.c.l.b16 %v411
      %v1188 = vunpack.c.h.b16 %v411
      %v1189 = vunpack.c.l.b16 %v412
      %v1190 = vunpack.c.h.b16 %v412
      %v1191 = vunpack.c.l.b16 %v413
      %v1192 = vunpack.c.h.b16 %v413
      %v1193 = vunpack.c.l.b16 %v414
      %v1194 = vunpack.c.h.b16 %v414
      %v1195 = vunpack.c.l.b16 %v415
      %v1196 = vunpack.c.h.b16 %v415
      %v1197 = vunpack.c.l.b16 %v416
      %v1198 = vunpack.c.h.b16 %v416
      %v1199 = vunpack.c.l.b16 %v417
      %v1200 = vunpack.c.h.b16 %v417
      %v1201 = vunpack.c.l.b16 %v418
      %v1202 = vunpack.c.h.b16 %v418
      %v1203 = vunpack.c.l.b16 %v419
      %v1204 = vunpack.c.h.b16 %v419
      %v1205 = vunpack.c.l.b16 %v420
      %v1206 = vunpack.c.h.b16 %v420
      %v1207 = vunpack.c.l.b16 %v421
      %v1208 = vunpack.c.h.b16 %v421
      %v1209 = vunpack.c.l.b16 %v422
      %v1210 = vunpack.c.h.b16 %v422
      %v1211 = vunpack.c.l.b16 %v423
      %v1212 = vunpack.c.h.b16 %v423
      %v1213 = vunpack.c.l.b16 %v424
      %v1214 = vunpack.c.h.b16 %v424
      %v1215 = vunpack.c.l.b16 %v425
      %v1216 = vunpack.c.h.b16 %v425
      %v1217 = vunpack.c.l.b16 %v426
      %v1218 = vunpack.c.h.b16 %v426
      %v1219 = vunpack.c.l.b16 %v427
      %v1220 = vunpack.c.h.b16 %v427
      %v1221 = vunpack.c.l.b16 %v428
      %v1222 = vunpack.c.h.b16 %v428
      %v1223 = vunpack.c.l.b16 %v429
      %v1224 = vunpack.c.h.b16 %v429
      %v1225 = vunpack.c.l.b16 %v430
      %v1226 = vunpack.c.h.b16 %v430
      %v1227 = vunpack.c.l.b16 %v431
      %v1228 = vunpack.c.h.b16 %v431
      %v1229 = vunpack.c.l.b16 %v432
      %v1230 = vunpack.c.h.b16 %v432
      %v1231 = vunpack.c.l.b16 %v433
      %v1232 = vunpack.c.h.b16 %v433
      %v1233 = vunpack.c.l.b16 %v434
      %v1234 = vunpack.c.h.b16 %v434
      %v1235 = vunpack.c.l.b16 %v435
      %v1236 = vunpack.c.h.b16 %v435
      %v1237 = vunpack.c.l.b16 %v436
      %v1238 = vunpack.c.h.b16 %v436
      %v1239 = vunpack.c.l.b16 %v437
      %v1240 = vunpack.c.h.b16 %v437
      %v1241 = vunpack.c.l.b16 %v438
      %v1242 = vunpack.c.h.b16 %v438
      %v1243 = vunpack.c.l.b16 %v439
      %v1244 = vunpack.c.h.b16 %v439
      %v1245 = vunpack.c.l.b16 %v440
      %v1246 = vunpack.c.h.b16 %v440
      %v1247 = vunpack.c.l.b16 %v441
      %v1248 = vunpack.c.h.b16 %v441
      %v1249 = vunpack.c.l.b16 %v442
      %v1250 = vunpack.c.h.b16 %v442
      %v1251 = vunpack.c.l.b16 %v443
      %v1252 = vunpack.c.h.b16 %v443
      %v1253 = vunpack.c.l.b16 %v444
      %v1254 = vunpack.c.h.b16 %v444
      %v1255 = vunpack.c.l.b16 %v445
      %v1256 = vunpack.c.h.b16 %v445
      %v1257 = vunpack.c.l.b16 %v446
      %v1258 = vunpack.c.h.b16 %v446
      %v1259 = vunpack.c.l.b16 %v447
      %v1260 = vunpack.c.h.b16 %v447
      %v1261 = vunpack.c.l.b16 %v448
      %v1262 = vunpack.c.h.b16 %v448
      %v1263 = vunpack.c.l.b16 %v449
      %v1264 = vunpack.c.h.b16 %v449
      %v1265 = vunpack.c.l.b16 %v450
      %v1266 = vunpack.c.h.b16 %v450
      %v1267 = vunpack.c.l.b16 %v451
      %v1268 = vunpack.c.h.b16 %v451
      %v1269 = vunpack.c.l.b16 %v452
      %v1270 = vunpack.c.h.b16 %v452
      %v1271 = vunpack.c.l.b16 %v453
      %v1272 = vunpack.c.h.b16 %v453
      %v1273 = vunpack.c.l.b16 %v454
      %v1274 = vunpack.c.h.b16 %v454
      %v1275 = vunpack.c.l.b16 %v455
      %v1276 = vunpack.c.h.b16 %v455
      %v1277 = vunpack.c.l.b16 %v456
      %v1278 = vunpack.c.h.b16 %v456
      %v1279 = vunpack.c.l.b16 %v457
      %v1280 = vunpack.c.h.b16 %v457
      %v1281 = vunpack.c.l.b16 %v458
      %v1282 = vunpack.c.h.b16 %v458
      %v1283 = vunpack.c.l.b16 %v459
      %v1284 = vunpack.c.h.b16 %v459
      %v1285 = vunpack.c.l.b16 %v460
      %v1286 = vunpack.c.h.b16 %v460
      %v1287 = vunpack.c.l.b16 %v461
      %v1288 = vunpack.c.h.b16 %v461
      %v1289 = vunpack.c.l.b16 %v462
      %v1290 = vunpack.c.h.b16 %v462
      %v1291 = vunpack.c.l.b16 %v463
      %v1292 = vunpack.c.h.b16 %v463
      %v1293 = vunpack.c.l.b16 %v464
      %v1294 = vunpack.c.h.b16 %v464
      %v1295 = vunpack.c.l.b16 %v465
      %v1296 = vunpack.c.h.b16 %v465
      %v1297 = vunpack.c.l.b16 %v466
      %v1298 = vunpack.c.h.b16 %v466
      %v1299 = vunpack.c.l.b16 %v467
      %v1300 = vunpack.c.h.b16 %v467
      %v1301 = vunpack.c.l.b16 %v468
      %v1302 = vunpack.c.h.b16 %v468
      %v1303 = vunpack.c.l.b16 %v469
      %v1304 = vunpack.c.h.b16 %v469
      %v1305 = vunpack.c.l.b16 %v470
      %v1306 = vunpack.c.h.b16 %v470
      %v1307 = vunpack.c.l.b16 %v471
      %v1308 = vunpack.c.h.b16 %v471
      %v1309 = vunpack.c.l.b16 %v472
      %v1310 = vunpack.c.h.b16 %v472
      %v1311 = vunpack.c.l.b16 %v473
      %v1312 = vunpack.c.h.b16 %v473
      %v1313 = vunpack.c.l.b16 %v474
      %v1314 = vunpack.c.h.b16 %v474
      %v1315 = vunpack.c.l.b16 %v475
      %v1316 = vunpack.c.h.b16 %v475
      %v1317 = vunpack.c.l.b16 %v476
      %v1318 = vunpack.c.h.b16 %v476
      %v1319 = vunpack.c.l.b16 %v477
      %v1320 = vunpack.c.h.b16 %v477
      %v1321 = vunpack.c.l.b16 %v478
      %v1322 = vunpack.c.h.b16 %v478
      %v1323 = vunpack.c.l.b16 %v479
      %v1324 = vunpack.c.h.b16 %v479
      %v1325 = vunpack.c.l.b16 %v480
      %v1326 = vunpack.c.h.b16 %v480
      %v1327 = vunpack.c.l.b16 %v481
      %v1328 = vunpack.c.h.b16 %v481
      %v1329 = vunpack.c.l.b16 %v482
      %v1330 = vunpack.c.h.b16 %v482
      %v1331 = vunpack.c.l.b16 %v483
      %v1332 = vunpack.c.h.b16 %v483
      %v1333 = vunpack.c.l.b16 %v484
      %v1334 = vunpack.c.h.b16 %v484
      %v1335 = vunpack.c.l.b16 %v485
      %v1336 = vunpack.c.h.b16 %v485
      %v1337 = vunpack.c.l.b16 %v486
      %v1338 = vunpack.c.h.b16 %v486
      %v1339 = vunpack.c.l.b16 %v487
      %v1340 = vunpack.c.h.b16 %v487
      %v1341 = vunpack.c.l.b16 %v488
      %v1342 = vunpack.c.h.b16 %v488
      %v1343 = vunpack.c.l.b16 %v489
      %v1344 = vunpack.c.h.b16 %v489
      %v1345 = vunpack.c.l.b16 %v490
      %v1346 = vunpack.c.h.b16 %v490
      %v1347 = vunpack.c.l.b16 %v491
      %v1348 = vunpack.c.h.b16 %v491
      %v1349 = vunpack.c.l.b16 %v492
      %v1350 = vunpack.c.h.b16 %v492
      %v1351 = vunpack.c.l.b16 %v493
      %v1352 = vunpack.c.h.b16 %v493
      %v1353 = vunpack.c.l.b16 %v494
      %v1354 = vunpack.c.h.b16 %v494
      %v1355 = vpack.c.b16 %v845, %v843
      %v1356 = vpack.c.b16 %v846, %v844
      %v1357 = vpack.c.b16 %v849, %v847
      %v1358 = vpack.c.b16 %v850, %v848
      %v1359 = vpack.c.b16 %v853, %v851
      %v1360 = vpack.c.b16 %v854, %v852
      %v1361 = vpack.c.b16 %v857, %v855
      %v1362 = vpack.c.b16 %v858, %v856
      %v1363 = vpack.c.b16 %v861, %v859
      %v1364 = vpack.c.b16 %v862, %v860
      %v1365 = vpack.c.b16 %v865, %v863
      %v1366 = vpack.c.b16 %v866, %v864
      %v1367 = vpack.c.b16 %v869, %v867
      %v1368 = vpack.c.b16 %v870, %v868
      %v1369 = vpack.c.b16 %v873, %v871
      %v1370 = vpack.c.b16 %v874, %v872
      %v1371 = vpack.c.b16 %v877, %v875
      %v1372 = vpack.c.b16 %v878, %v876
      %v1373 = vpack.c.b16 %v881, %v879
      %v1374 = vpack.c.b16 %v882, %v880
      %v1375 = vpack.c.b16 %v885, %v883
      %v1376 = vpack.c.b16 %v886, %v884
      %v1377 = vpack.c.b16 %v889, %v887
      %v1378 = vpack.c.b16 %v890, %v888
      %v1379 = vpack.c.b16 %v893, %v891
      %v1380 = vpack.c.b16 %v894, %v892
      %v1381 = vpack.c.b16 %v897, %v895
      %v1382 = vpack.c.b16 %v898, %v896
      %v1383 = vpack.c.b16 %v901, %v899
      %v1384 = vpack.c.b16 %v902, %v900
      %v1385 = vpack.c.b16 %v905, %v903
      %v1386 = vpack.c.b16 %v906, %v904
      %v1387 = vpack.c.b16 %v909, %v907
      %v1388 = vpack.c.b16 %v910, %v908
      %v1389 = vpack.c.b16 %v913, %v911
      %v1390 = vpack.c.b16 %v914, %v912
      %v1391 = vpack.c.b16 %v917, %v915
      %v1392 = vpack.c.b16 %v918, %v916
      %v1393 = vpack.c.b16 %v921, %v919
      %v1394 = vpack.c.b16 %v922, %v920
      %v1395 = vpack.c.b16 %v925, %v923
      %v1396 = vpack.c.b16 %v926, %v924
      %v1397 = vpack.c.b16 %v929, %v927
      %v1398 = vpack.c.b16 %v930, %v928
      %v1399 = vpack.c.b16 %v933, %v931
      %v1400 = vpack.c.b16 %v934, %v932
      %v1401 = vpack.c.b16 %v937, %v935
      %v1402 = vpack.c.b16 %v938, %v936
      %v1403 = vpack.c.b16 %v941, %v939
      %v1404 = vpack.c.b16 %v942, %v940
      %v1405 = vpack.c.b16 %v945, %v943
      %v1406 = vpack.c.b16 %v946, %v944
      %v1407 = vpack.c.b16 %v949, %v947
      %v1408 = vpack.c.b16 %v950, %v948
      %v1409 = vpack.c.b16 %v953, %v951
      %v1410 = vpack.c.b16 %v954, %v952
      %v1411 = vpack.c.b16 %v957, %v955
      %v1412 = vpack.c.b16 %v958, %v956
      %v1413 = vpack.c.b16 %v961, %v959
      %v1414 = vpack.c.b16 %v962, %v960
      %v1415 = vpack.c.b16 %v965, %v963
      %v1416 = vpack.c.b16 %v966, %v964
      %v1417 = vpack.c.b16 %v969, %v967
      %v1418 = vpack.c.b16 %v970, %v968
      %v1419 = vpack.c.b16 %v973, %v971
      %v1420 = vpack.c.b16 %v974, %v972
      %v1421 = vpack.c.b16 %v977, %v975
      %v1422 = vpack.c.b16 %v978, %v976
      %v1423 = vpack.c.b16 %v981, %v979
      %v1424 = vpack.c.b16 %v982, %v980
      %v1425 = vpack.c.b16 %v985, %v983
      %v1426 = vpack.c.b16 %v986, %v984
      %v1427 = vpack.c.b16 %v989, %v987
      %v1428 = vpack.c.b16 %v990, %v988
      %v1429 = vpack.c.b16 %v993, %v991
      %v1430 = vpack.c.b16 %v994, %v992
      %v1431 = vpack.c.b16 %v997, %v995
      %v1432 = vpack.c.b16 %v998, %v996
      %v1433 = vpack.c.b16 %v1001, %v999
      %v1434 = vpack.c.b16 %v1002, %v1000
      %v1435 = vpack.c.b16 %v1005, %v1003
      %v1436 = vpack.c.b16 %v1006, %v1004
      %v1437 = vpack.c.b16 %v1009, %v1007
      %v1438 = vpack.c.b16 %v1010, %v1008
      %v1439 = vpack.c.b16 %v1013, %v1011
      %v1440 = vpack.c.b16 %v1014, %v1012
      %v1441 = vpack.c.b16 %v1017, %v1015
      %v1442 = vpack.c.b16 %v1018, %v1016
      %v1443 = vpack.c.b16 %v1021, %v1019
      %v1444 = vpack.c.b16 %v1022, %v1020
      %v1445 = vpack.c.b16 %v1025, %v1023
      %v1446 = vpack.c.b16 %v1026, %v1024
      %v1447 = vpack.c.b16 %v1029, %v1027
      %v1448 = vpack.c.b16 %v1030, %v1028
      %v1449 = vpack.c.b16 %v1033, %v1031
      %v1450 = vpack.c.b16 %v1034, %v1032
      %v1451 = vpack.c.b16 %v1037, %v1035
      %v1452 = vpack.c.b16 %v1038, %v1036
      %v1453 = vpack.c.b16 %v1041, %v1039
      %v1454 = vpack.c.b16 %v1042, %v1040
      %v1455 = vpack.c.b16 %v1045, %v1043
      %v1456 = vpack.c.b16 %v1046, %v1044
      %v1457 = vpack.c.b16 %v1049, %v1047
      %v1458 = vpack.c.b16 %v1050, %v1048
      %v1459 = vpack.c.b16 %v1053, %v1051
      %v1460 = vpack.c.b16 %v1054, %v1052
      %v1461 = vpack.c.b16 %v1057, %v1055
      %v1462 = vpack.c.b16 %v1058, %v1056
      %v1463 = vpack.c.b16 %v1061, %v1059
      %v1464 = vpack.c.b16 %v1062, %v1060
      %v1465 = vpack.c.b16 %v1065, %v1063
      %v1466 = vpack.c.b16 %v1066, %v1064
      %v1467 = vpack.c.b16 %v1069, %v1067
      %v1468 = vpack.c.b16 %v1070, %v1068
      %v1469 = vpack.c.b16 %v1073, %v1071
      %v1470 = vpack.c.b16 %v1074, %v1072
      %v1471 = vpack.c.b16 %v1077, %v1075
      %v1472 = vpack.c.b16 %v1078, %v1076
      %v1473 = vpack.c.b16 %v1081, %v1079
      %v1474 = vpack.c.b16 %v1082, %v1080
      %v1475 = vpack.c.b16 %v1085, %v1083
      %v1476 = vpack.c.b16 %v1086, %v1084
      %v1477 = vpack.c.b16 %v1089, %v1087
      %v1478 = vpack.c.b16 %v1090, %v1088
      %v1479 = vpack.c.b16 %v1093, %v1091
      %v1480 = vpack.c.b16 %v1094, %v1092
      %v1481 = vpack.c.b16 %v1097, %v1095
      %v1482 = vpack.c.b16 %v1098, %v1096
      %v1483 = vpack.c.b16 %v1101, %v1099
      %v1484 = vpack.c.b16 %v1102, %v1100
      %v1485 = vpack.c.b16 %v1105, %v1103
      %v1486 = vpack.c.b16 %v1106, %v1104
      %v1487 = vpack.c.b16 %v1109, %v1107
      %v1488 = vpack.c.b16 %v1110, %v1108
      %v1489 = vpack.c.b16 %v1113, %v1111
      %v1490 = vpack.c.b16 %v1114, %v1112
      %v1491 = vpack.c.b16 %v1117, %v1115
      %v1492 = vpack.c.b16 %v1118, %v1116
      %v1493 = vpack.c.b16 %v1121, %v1119
      %v1494 = vpack.c.b16 %v1122, %v1120
      %v1495 = vpack.c.b16 %v1125, %v1123
      %v1496 = vpack.c.b16 %v1126, %v1124
      %v1497 = vpack.c.b16 %v1129, %v1127
      %v1498 = vpack.c.b16 %v1130, %v1128
      %v1499 = vpack.c.b16 %v1133, %v1131
      %v1500 = vpack.c.b16 %v1134, %v1132
      %v1501 = vpack.c.b16 %v1137, %v1135
      %v1502 = vpack.c.b16 %v1138, %v1136
      %v1503 = vpack.c.b16 %v1141, %v1139
      %v1504 = vpack.c.b16 %v1142, %v1140
      %v1505 = vpack.c.b16 %v1145, %v1143
      %v1506 = vpack.c.b16 %v1146, %v1144
      %v1507 = vpack.c.b16 %v1149, %v1147
      %v1508 = vpack.c.b16 %v1150, %v1148
      %v1509 = vpack.c.b16 %v1153, %v1151
      %v1510 = vpack.c.b16 %v1154, %v1152
      %v1511 = vpack.c.b16 %v1157, %v1155
      %v1512 = vpack.c.b16 %v1158, %v1156
      %v1513 = vpack.c.b16 %v1161, %v1159
      %v1514 = vpack.c.b16 %v1162, %v1160
      %v1515 = vpack.c.b16 %v1165, %v1163
      %v1516 = vpack.c.b16 %v1166, %v1164
      %v1517 = vpack.c.b16 %v1169, %v1167
      %v1518 = vpack.c.b16 %v1170, %v1168
      %v1519 = vpack.c.b16 %v1173, %v1171
      %v1520 = vpack.c.b16 %v1174, %v1172
      %v1521 = vpack.c.b16 %v1177, %v1175
      %v1522 = vpack.c.b16 %v1178, %v1176
      %v1523 = vpack.c.b16 %v1181, %v1179
      %v1524 = vpack.c.b16 %v1182, %v1180
      %v1525 = vpack.c.b16 %v1185, %v1183
      %v1526 = vpack.c.b16 %v1186, %v1184
      %v1527 = vpack.c.b16 %v1189, %v1187
      %v1528 = vpack.c.b16 %v1190, %v1188
      %v1529 = vpack.c.b16 %v1193, %v1191
      %v1530 = vpack.c.b16 %v1194, %v1192
      %v1531 = vpack.c.b16 %v1197, %v1195
      %v1532 = vpack.c.b16 %v1198, %v1196
      %v1533 = vpack.c.b16 %v1201, %v1199
      %v1534 = vpack.c.b16 %v1202, %v1200
      %v1535 = vpack.c.b16 %v1205, %v1203
      %v1536 = vpack.c.b16 %v1206, %v1204
      %v1537 = vpack.c.b16 %v1209, %v1207
      %v1538 = vpack.c.b16 %v1210, %v1208
      %v1539 = vpack.c.b16 %v1213, %v1211
      %v1540 = vpack.c.b16 %v1214, %v1212
      %v1541 = vpack.c.b16 %v1217, %v1215
      %v1542 = vpack.c.b16 %v1218, %v1216
      %v1543 = vpack.c.b16 %v1221, %v1219
      %v1544 = vpack.c.b16 %v1222, %v1220
      %v1545 = vpack.c.b16 %v1225, %v1223
      %v1546 = vpack.c.b16 %v1226, %v1224
      %v1547 = vpack.c.b16 %v1229, %v1227
      %v1548 = vpack.c.b16 %v1230, %v1228
      %v1549 = vpack.c.b16 %v1233, %v1231
      %v1550 = vpack.c.b16 %v1234, %v1232
      %v1551 = vpack.c.b16 %v1237, %v1235
      %v1552 = vpack.c.b16 %v1238, %v1236
      %v1553 = vpack.c.b16 %v1241, %v1239
      %v1554 = vpack.c.b16 %v1242, %v1240
      %v1555 = vpack.c.b16 %v1245, %v1243
      %v1556 = vpack.c.b16 %v1246, %v1244
      %v1557 = vpack.c.b16 %v1249, %v1247
      %v1558 = vpack.c.b16 %v1250, %v1248
      %v1559 = vpack.c.b16 %v1253, %v1251
      %v1560 = vpack.c.b16 %v1254, %v1252
      %v1561 = vpack.c.b16 %v1257, %v1255
      %v1562 = vpack.c.b16 %v1258, %v1256
      %v1563 = vpack.c.b16 %v1261, %v1259
      %v1564 = vpack.c.b16 %v1262, %v1260
      %v1565 = vpack.c.b16 %v1265, %v1263
      %v1566 = vpack.c.b16 %v1266, %v1264
      %v1567 = vpack.c.b16 %v1269, %v1267
      %v1568 = vpack.c.b16 %v1270, %v1268
      %v1569 = vpack.c.b16 %v1273, %v1271
      %v1570 = vpack.c.b16 %v1274, %v1272
      %v1571 = vpack.c.b16 %v1277, %v1275
      %v1572 = vpack.c.b16 %v1278, %v1276
      %v1573 = vpack.c.b16 %v1281, %v1279
      %v1574 = vpack.c.b16 %v1282, %v1280
      %v1575 = vpack.c.b16 %v1285, %v1283
      %v1576 = vpack.c.b16 %v1286, %v1284
      %v1577 = vpack.c.b16 %v1289, %v1287
      %v1578 = vpack.c.b16 %v1290, %v1288
      %v1579 = vpack.c.b16 %v1293, %v1291
      %v1580 = vpack.c.b16 %v1294, %v1292
      %v1581 = vpack.c.b16 %v1297, %v1295
      %v1582 = vpack.c.b16 %v1298, %v1296
      %v1583 = vpack.c.b16 %v1301, %v1299
      %v1584 = vpack.c.b16 %v1302, %v1300
      %v1585 = vpack.c.b16 %v1305, %v1303
      %v1586 = vpack.c.b16 %v1306, %v1304
      %v1587 = vpack.c.b16 %v1309, %v1307
      %v1588 = vpack.c.b16 %v1310, %v1308
      %v1589 = vpack.c.b16 %v1313, %v1311
      %v1590 = vpack.c.b16 %v1314, %v1312
      %v1591 = vpack.c.b16 %v1317, %v1315
      %v1592 = vpack.c.b16 %v1318, %v1316
      %v1593 = vpack.c.b16 %v1321, %v1319
      %v1594 = vpack.c.b16 %v1322, %v1320
      %v1595 = vpack.c.b16 %v1325, %v1323
      %v1596 = vpack.c.b16 %v1326, %v1324
      %v1597 = vpack.c.b16 %v1329, %v1327
      %v1598 = vpack.c.b16 %v1330, %v1328
      %v1599 = vpack.c.b16 %v1333, %v1331
      %v1600 = vpack.c.b16 %v1334, %v1332
      %v1601 = vpack.c.b16 %v1337, %v1335
      %v1602 = vpack.c.b16 %v1338, %v1336
      %v1603 = vpack.c.b16 %v1341, %v1339
      %v1604 = vpack.c.b16 %v1342, %v1340
      %v1605 = vpack.c.b16 %v1345, %v1343
      %v1606 = vpack.c.b16 %v1346, %v1344
      %v1607 = vpack.c.b16 %v1349, %v1347
      %v1608 = vpack.c.b16 %v1350, %v1348
      %v1609 = vpack.c.b16 %v1353, %v1351
      %v1610 = vpack.c.b16 %v1354, %v1352
      %1867 = vmatprep.subr.bf16.mxu0 %v1356
      %1868 = vmatpush1.bf16.msra.mxu0 %v1355
      %1869 = vmatprep.subr.bf16.mxu0 %v1358
      %1870 = vmatpush1.bf16.msra.mxu0 %v1357
      %1871 = vmatprep.subr.bf16.mxu0 %v1360
      %1872 = vmatpush1.bf16.msra.mxu0 %v1359
      %1873 = vmatprep.subr.bf16.mxu0 %v1362
      %1874 = vmatpush1.bf16.msra.mxu0 %v1361
      %1875 = vmatprep.subr.bf16.mxu0 %v1364
      %1876 = vmatpush1.bf16.msra.mxu0 %v1363
      %1877 = vmatprep.subr.bf16.mxu0 %v1366
      %1878 = vmatpush1.bf16.msra.mxu0 %v1365
      %1879 = vmatprep.subr.bf16.mxu0 %v1368
      %1880 = vmatpush1.bf16.msra.mxu0 %v1367
      %1881 = vmatprep.subr.bf16.mxu0 %v1370
      %1882 = vmatpush1.bf16.msra.mxu0 %v1369
      %1883 = vmatprep.subr.bf16.mxu0 %v1372
      %1884 = vmatpush1.bf16.msra.mxu0 %v1371
      %1885 = vmatprep.subr.bf16.mxu0 %v1374
      %1886 = vmatpush1.bf16.msra.mxu0 %v1373
      %1887 = vmatprep.subr.bf16.mxu0 %v1376
      %1888 = vmatpush1.bf16.msra.mxu0 %v1375
      %1889 = vmatprep.subr.bf16.mxu0 %v1378
      %1890 = vmatpush1.bf16.msra.mxu0 %v1377
      %1891 = vmatprep.subr.bf16.mxu0 %v1380
      %1892 = vmatpush1.bf16.msra.mxu0 %v1379
      %1893 = vmatprep.subr.bf16.mxu0 %v1382
      %1894 = vmatpush1.bf16.msra.mxu0 %v1381
      %1895 = vmatprep.subr.bf16.mxu0 %v1384
      %1896 = vmatpush1.bf16.msra.mxu0 %v1383
      %1897 = vmatprep.subr.bf16.mxu0 %v1386
      %1898 = vmatpush1.bf16.msra.mxu0 %v1385
      %1899 = vmatprep.mubr.bf16.mxu0 %v556
      %1900 = vmatmul.mubr.bf16.gmra.mrb[0].mxu0 %v555
      %v1901 = vpop.f32.mrb[0].mxu0
      %v1902 = vadd.f32 %v500, %v1901
      %v1903 = vpop.f32.mrb[0].mxu0
      %v1904 = vadd.f32 %v504, %v1903
      %v1905 = vpop.f32.mrb[0].mxu0
      %v1906 = vadd.f32 %v500, %v1905
      %v1907 = vpop.f32.mrb[0].mxu0
      %v1908 = vadd.f32 %v504, %v1907
      %1909 = vdwg.mxu0
      %1910 = vmatprep.subr.bf16.mxu0 %v1388
      %1911 = vmatpush1.bf16.msra.mxu0 %v1387
      %1912 = vmatprep.subr.bf16.mxu0 %v1390
      %1913 = vmatpush1.bf16.msra.mxu0 %v1389
      %1914 = vmatprep.subr.bf16.mxu0 %v1392
      %1915 = vmatpush1.bf16.msra.mxu0 %v1391
      %1916 = vmatprep.subr.bf16.mxu0 %v1394
      %1917 = vmatpush1.bf16.msra.mxu0 %v1393
      %1918 = vmatprep.subr.bf16.mxu0 %v1396
      %1919 = vmatpush1.bf16.msra.mxu0 %v1395
      %1920 = vmatprep.subr.bf16.mxu0 %v1398
      %1921 = vmatpush1.bf16.msra.mxu0 %v1397
      %1922 = vmatprep.subr.bf16.mxu0 %v1400
      %1923 = vmatpush1.bf16.msra.mxu0 %v1399
      %1924 = vmatprep.subr.bf16.mxu0 %v1402
      %1925 = vmatpush1.bf16.msra.mxu0 %v1401
      %1926 = vmatprep.subr.bf16.mxu0 %v1404
      %1927 = vmatpush1.bf16.msra.mxu0 %v1403
      %1928 = vmatprep.subr.bf16.mxu0 %v1406
      %1929 = vmatpush1.bf16.msra.mxu0 %v1405
      %1930 = vmatprep.subr.bf16.mxu0 %v1408
      %1931 = vmatpush1.bf16.msra.mxu0 %v1407
      %1932 = vmatprep.subr.bf16.mxu0 %v1410
      %1933 = vmatpush1.bf16.msra.mxu0 %v1409
      %1934 = vmatprep.subr.bf16.mxu0 %v1412
      %1935 = vmatpush1.bf16.msra.mxu0 %v1411
      %1936 = vmatprep.subr.bf16.mxu0 %v1414
      %1937 = vmatpush1.bf16.msra.mxu0 %v1413
      %1938 = vmatprep.subr.bf16.mxu0 %v1416
      %1939 = vmatpush1.bf16.msra.mxu0 %v1415
      %1940 = vmatprep.subr.bf16.mxu0 %v1418
      %1941 = vmatpush1.bf16.msra.mxu0 %v1417
      %1942 = vmatprep.mubr.bf16.mxu0 %v558
      %1943 = vmatmul.mubr.bf16.gmra.mrb[0].mxu0 %v557
      %v1944 = vpop.f32.mrb[0].mxu0
      %v1945 = vadd.f32 %v1902, %v1944
      %v1946 = vpop.f32.mrb[0].mxu0
      %v1947 = vadd.f32 %v1904, %v1946
      %v1948 = vpop.f32.mrb[0].mxu0
      %v1949 = vadd.f32 %v1906, %v1948
      %v1950 = vpop.f32.mrb[0].mxu0
      %v1951 = vadd.f32 %v1908, %v1950
      %1952 = vdwg.mxu0
      %1953 = vmatprep.subr.bf16.mxu0 %v1420
      %1954 = vmatpush1.bf16.msra.mxu0 %v1419
      %1955 = vmatprep.subr.bf16.mxu0 %v1422
      %1956 = vmatpush1.bf16.msra.mxu0 %v1421
      %1957 = vmatprep.subr.bf16.mxu0 %v1424
      %1958 = vmatpush1.bf16.msra.mxu0 %v1423
      %1959 = vmatprep.subr.bf16.mxu0 %v1426
      %1960 = vmatpush1.bf16.msra.mxu0 %v1425
      %1961 = vmatprep.subr.bf16.mxu0 %v1428
      %1962 = vmatpush1.bf16.msra.mxu0 %v1427
      %1963 = vmatprep.subr.bf16.mxu0 %v1430
      %1964 = vmatpush1.bf16.msra.mxu0 %v1429
      %1965 = vmatprep.subr.bf16.mxu0 %v1432
      %1966 = vmatpush1.bf16.msra.mxu0 %v1431
      %1967 = vmatprep.subr.bf16.mxu0 %v1434
      %1968 = vmatpush1.bf16.msra.mxu0 %v1433
      %1969 = vmatprep.subr.bf16.mxu0 %v1436
      %1970 = vmatpush1.bf16.msra.mxu0 %v1435
      %1971 = vmatprep.subr.bf16.mxu0 %v1438
      %1972 = vmatpush1.bf16.msra.mxu0 %v1437
      %1973 = vmatprep.subr.bf16.mxu0 %v1440
      %1974 = vmatpush1.bf16.msra.mxu0 %v1439
      %1975 = vmatprep.subr.bf16.mxu0 %v1442
      %1976 = vmatpush1.bf16.msra.mxu0 %v1441
      %1977 = vmatprep.subr.bf16.mxu0 %v1444
      %1978 = vmatpush1.bf16.msra.mxu0 %v1443
      %1979 = vmatprep.subr.bf16.mxu0 %v1446
      %1980 = vmatpush1.bf16.msra.mxu0 %v1445
      %1981 = vmatprep.subr.bf16.mxu0 %v1448
      %1982 = vmatpush1.bf16.msra.mxu0 %v1447
      %1983 = vmatprep.subr.bf16.mxu0 %v1450
      %1984 = vmatpush1.bf16.msra.mxu0 %v1449
      %1985 = vmatprep.mubr.bf16.mxu0 %v560
      %1986 = vmatmul.mubr.bf16.gmra.mrb[0].mxu0 %v559
      %v1987 = vpop.f32.mrb[0].mxu0
      %v1988 = vadd.f32 %v1945, %v1987
      %v1989 = vpop.f32.mrb[0].mxu0
      %v1990 = vadd.f32 %v1947, %v1989
      %v1991 = vpop.f32.mrb[0].mxu0
      %v1992 = vadd.f32 %v1949, %v1991
      %v1993 = vpop.f32.mrb[0].mxu0
      %v1994 = vadd.f32 %v1951, %v1993
      %1995 = vdwg.mxu0
      %1996 = vmatprep.subr.bf16.mxu0 %v1452
      %1997 = vmatpush1.bf16.msra.mxu0 %v1451
      %1998 = vmatprep.subr.bf16.mxu0 %v1454
      %1999 = vmatpush1.bf16.msra.mxu0 %v1453
      %2000 = vmatprep.subr.bf16.mxu0 %v1456
      %2001 = vmatpush1.bf16.msra.mxu0 %v1455
      %2002 = vmatprep.subr.bf16.mxu0 %v1458
      %2003 = vmatpush1.bf16.msra.mxu0 %v1457
      %2004 = vmatprep.subr.bf16.mxu0 %v1460
      %2005 = vmatpush1.bf16.msra.mxu0 %v1459
      %2006 = vmatprep.subr.bf16.mxu0 %v1462
      %2007 = vmatpush1.bf16.msra.mxu0 %v1461
      %2008 = vmatprep.subr.bf16.mxu0 %v1464
      %2009 = vmatpush1.bf16.msra.mxu0 %v1463
      %2010 = vmatprep.subr.bf16.mxu0 %v1466
      %2011 = vmatpush1.bf16.msra.mxu0 %v1465
      %2012 = vmatprep.subr.bf16.mxu0 %v1468
      %2013 = vmatpush1.bf16.msra.mxu0 %v1467
      %2014 = vmatprep.subr.bf16.mxu0 %v1470
      %2015 = vmatpush1.bf16.msra.mxu0 %v1469
      %2016 = vmatprep.subr.bf16.mxu0 %v1472
      %2017 = vmatpush1.bf16.msra.mxu0 %v1471
      %2018 = vmatprep.subr.bf16.mxu0 %v1474
      %2019 = vmatpush1.bf16.msra.mxu0 %v1473
      %2020 = vmatprep.subr.bf16.mxu0 %v1476
      %2021 = vmatpush1.bf16.msra.mxu0 %v1475
      %2022 = vmatprep.subr.bf16.mxu0 %v1478
      %2023 = vmatpush1.bf16.msra.mxu0 %v1477
      %2024 = vmatprep.subr.bf16.mxu0 %v1480
      %2025 = vmatpush1.bf16.msra.mxu0 %v1479
      %2026 = vmatprep.subr.bf16.mxu0 %v1482
      %2027 = vmatpush1.bf16.msra.mxu0 %v1481
      %2028 = vmatprep.mubr.bf16.mxu0 %v562
      %2029 = vmatmul.mubr.bf16.gmra.mrb[0].mxu0 %v561
      %v2030 = vpop.f32.mrb[0].mxu0
      %v2031 = vadd.f32 %v1988, %v2030
      %v2032 = vpop.f32.mrb[0].mxu0
      %v2033 = vadd.f32 %v1990, %v2032
      %v2034 = vpop.f32.mrb[0].mxu0
      %v2035 = vadd.f32 %v1992, %v2034
      %v2036 = vpop.f32.mrb[0].mxu0
      %v2037 = vadd.f32 %v1994, %v2036
      %2038 = vdwg.mxu0
      %2039 = vmatprep.subr.bf16.mxu0 %v1484
      %2040 = vmatpush1.bf16.msra.mxu0 %v1483
      %2041 = vmatprep.subr.bf16.mxu0 %v1486
      %2042 = vmatpush1.bf16.msra.mxu0 %v1485
      %2043 = vmatprep.subr.bf16.mxu0 %v1488
      %2044 = vmatpush1.bf16.msra.mxu0 %v1487
      %2045 = vmatprep.subr.bf16.mxu0 %v1490
      %2046 = vmatpush1.bf16.msra.mxu0 %v1489
      %2047 = vmatprep.subr.bf16.mxu0 %v1492
      %2048 = vmatpush1.bf16.msra.mxu0 %v1491
      %2049 = vmatprep.subr.bf16.mxu0 %v1494
      %2050 = vmatpush1.bf16.msra.mxu0 %v1493
      %2051 = vmatprep.subr.bf16.mxu0 %v1496
      %2052 = vmatpush1.bf16.msra.mxu0 %v1495
      %2053 = vmatprep.subr.bf16.mxu0 %v1498
      %2054 = vmatpush1.bf16.msra.mxu0 %v1497
      %2055 = vmatprep.subr.bf16.mxu0 %v1500
      %2056 = vmatpush1.bf16.msra.mxu0 %v1499
      %2057 = vmatprep.subr.bf16.mxu0 %v1502
      %2058 = vmatpush1.bf16.msra.mxu0 %v1501
      %2059 = vmatprep.subr.bf16.mxu0 %v1504
      %2060 = vmatpush1.bf16.msra.mxu0 %v1503
      %2061 = vmatprep.subr.bf16.mxu0 %v1506
      %2062 = vmatpush1.bf16.msra.mxu0 %v1505
      %2063 = vmatprep.subr.bf16.mxu0 %v1508
      %2064 = vmatpush1.bf16.msra.mxu0 %v1507
      %2065 = vmatprep.subr.bf16.mxu0 %v1510
      %2066 = vmatpush1.bf16.msra.mxu0 %v1509
      %2067 = vmatprep.subr.bf16.mxu0 %v1512
      %2068 = vmatpush1.bf16.msra.mxu0 %v1511
      %2069 = vmatprep.subr.bf16.mxu0 %v1514
      %2070 = vmatpush1.bf16.msra.mxu0 %v1513
      %2071 = vmatprep.mubr.bf16.mxu0 %v564
      %2072 = vmatmul.mubr.bf16.gmra.mrb[0].mxu0 %v563
      %v2073 = vpop.f32.mrb[0].mxu0
      %v2074 = vadd.f32 %v2031, %v2073
      %v2075 = vpop.f32.mrb[0].mxu0
      %v2076 = vadd.f32 %v2033, %v2075
      %v2077 = vpop.f32.mrb[0].mxu0
      %v2078 = vadd.f32 %v2035, %v2077
      %v2079 = vpop.f32.mrb[0].mxu0
      %v2080 = vadd.f32 %v2037, %v2079
      %2081 = vdwg.mxu0
      %2082 = vmatprep.subr.bf16.mxu0 %v1516
      %2083 = vmatpush1.bf16.msra.mxu0 %v1515
      %2084 = vmatprep.subr.bf16.mxu0 %v1518
      %2085 = vmatpush1.bf16.msra.mxu0 %v1517
      %2086 = vmatprep.subr.bf16.mxu0 %v1520
      %2087 = vmatpush1.bf16.msra.mxu0 %v1519
      %2088 = vmatprep.subr.bf16.mxu0 %v1522
      %2089 = vmatpush1.bf16.msra.mxu0 %v1521
      %2090 = vmatprep.subr.bf16.mxu0 %v1524
      %2091 = vmatpush1.bf16.msra.mxu0 %v1523
      %2092 = vmatprep.subr.bf16.mxu0 %v1526
      %2093 = vmatpush1.bf16.msra.mxu0 %v1525
      %2094 = vmatprep.subr.bf16.mxu0 %v1528
      %2095 = vmatpush1.bf16.msra.mxu0 %v1527
      %2096 = vmatprep.subr.bf16.mxu0 %v1530
      %2097 = vmatpush1.bf16.msra.mxu0 %v1529
      %2098 = vmatprep.subr.bf16.mxu0 %v1532
      %2099 = vmatpush1.bf16.msra.mxu0 %v1531
      %2100 = vmatprep.subr.bf16.mxu0 %v1534
      %2101 = vmatpush1.bf16.msra.mxu0 %v1533
      %2102 = vmatprep.subr.bf16.mxu0 %v1536
      %2103 = vmatpush1.bf16.msra.mxu0 %v1535
      %2104 = vmatprep.subr.bf16.mxu0 %v1538
      %2105 = vmatpush1.bf16.msra.mxu0 %v1537
      %2106 = vmatprep.subr.bf16.mxu0 %v1540
      %2107 = vmatpush1.bf16.msra.mxu0 %v1539
      %2108 = vmatprep.subr.bf16.mxu0 %v1542
      %2109 = vmatpush1.bf16.msra.mxu0 %v1541
      %2110 = vmatprep.subr.bf16.mxu0 %v1544
      %2111 = vmatpush1.bf16.msra.mxu0 %v1543
      %2112 = vmatprep.subr.bf16.mxu0 %v1546
      %2113 = vmatpush1.bf16.msra.mxu0 %v1545
      %2114 = vmatprep.mubr.bf16.mxu0 %v566
      %2115 = vmatmul.mubr.bf16.gmra.mrb[0].mxu0 %v565
      %v2116 = vpop.f32.mrb[0].mxu0
      %v2117 = vadd.f32 %v2074, %v2116
      %v2118 = vpop.f32.mrb[0].mxu0
      %v2119 = vadd.f32 %v2076, %v2118
      %v2120 = vpop.f32.mrb[0].mxu0
      %v2121 = vadd.f32 %v2078, %v2120
      %v2122 = vpop.f32.mrb[0].mxu0
      %v2123 = vadd.f32 %v2080, %v2122
      %2124 = vdwg.mxu0
      %2125 = vmatprep.subr.bf16.mxu0 %v1548
      %2126 = vmatpush1.bf16.msra.mxu0 %v1547
      %2127 = vmatprep.subr.bf16.mxu0 %v1550
      %2128 = vmatpush1.bf16.msra.mxu0 %v1549
      %2129 = vmatprep.subr.bf16.mxu0 %v1552
      %2130 = vmatpush1.bf16.msra.mxu0 %v1551
      %2131 = vmatprep.subr.bf16.mxu0 %v1554
      %2132 = vmatpush1.bf16.msra.mxu0 %v1553
      %2133 = vmatprep.subr.bf16.mxu0 %v1556
      %2134 = vmatpush1.bf16.msra.mxu0 %v1555
      %2135 = vmatprep.subr.bf16.mxu0 %v1558
      %2136 = vmatpush1.bf16.msra.mxu0 %v1557
      %2137 = vmatprep.subr.bf16.mxu0 %v1560
      %2138 = vmatpush1.bf16.msra.mxu0 %v1559
      %2139 = vmatprep.subr.bf16.mxu0 %v1562
      %2140 = vmatpush1.bf16.msra.mxu0 %v1561
      %2141 = vmatprep.subr.bf16.mxu0 %v1564
      %2142 = vmatpush1.bf16.msra.mxu0 %v1563
      %2143 = vmatprep.subr.bf16.mxu0 %v1566
      %2144 = vmatpush1.bf16.msra.mxu0 %v1565
      %2145 = vmatprep.subr.bf16.mxu0 %v1568
      %2146 = vmatpush1.bf16.msra.mxu0 %v1567
      %2147 = vmatprep.subr.bf16.mxu0 %v1570
      %2148 = vmatpush1.bf16.msra.mxu0 %v1569
      %2149 = vmatprep.subr.bf16.mxu0 %v1572
      %2150 = vmatpush1.bf16.msra.mxu0 %v1571
      %2151 = vmatprep.subr.bf16.mxu0 %v1574
      %2152 = vmatpush1.bf16.msra.mxu0 %v1573
      %2153 = vmatprep.subr.bf16.mxu0 %v1576
      %2154 = vmatpush1.bf16.msra.mxu0 %v1575
      %2155 = vmatprep.subr.bf16.mxu0 %v1578
      %2156 = vmatpush1.bf16.msra.mxu0 %v1577
      %2157 = vmatprep.mubr.bf16.mxu0 %v568
      %2158 = vmatmul.mubr.bf16.gmra.mrb[0].mxu0 %v567
      %v2159 = vpop.f32.mrb[0].mxu0
      %v2160 = vadd.f32 %v2117, %v2159
      %v2161 = vpop.f32.mrb[0].mxu0
      %v2162 = vadd.f32 %v2119, %v2161
      %v2163 = vpop.f32.mrb[0].mxu0
      %v2164 = vadd.f32 %v2121, %v2163
      %v2165 = vpop.f32.mrb[0].mxu0
      %v2166 = vadd.f32 %v2123, %v2165
      %2167 = vdwg.mxu0
      %2168 = vmatprep.subr.bf16.mxu0 %v1580
      %2169 = vmatpush1.bf16.msra.mxu0 %v1579
      %2170 = vmatprep.subr.bf16.mxu0 %v1582
      %2171 = vmatpush1.bf16.msra.mxu0 %v1581
      %2172 = vmatprep.subr.bf16.mxu0 %v1584
      %2173 = vmatpush1.bf16.msra.mxu0 %v1583
      %2174 = vmatprep.subr.bf16.mxu0 %v1586
      %2175 = vmatpush1.bf16.msra.mxu0 %v1585
      %2176 = vmatprep.subr.bf16.mxu0 %v1588
      %2177 = vmatpush1.bf16.msra.mxu0 %v1587
      %2178 = vmatprep.subr.bf16.mxu0 %v1590
      %2179 = vmatpush1.bf16.msra.mxu0 %v1589
      %2180 = vmatprep.subr.bf16.mxu0 %v1592
      %2181 = vmatpush1.bf16.msra.mxu0 %v1591
      %2182 = vmatprep.subr.bf16.mxu0 %v1594
      %2183 = vmatpush1.bf16.msra.mxu0 %v1593
      %2184 = vmatprep.subr.bf16.mxu0 %v1596
      %2185 = vmatpush1.bf16.msra.mxu0 %v1595
      %2186 = vmatprep.subr.bf16.mxu0 %v1598
      %2187 = vmatpush1.bf16.msra.mxu0 %v1597
      %2188 = vmatprep.subr.bf16.mxu0 %v1600
      %2189 = vmatpush1.bf16.msra.mxu0 %v1599
      %2190 = vmatprep.subr.bf16.mxu0 %v1602
      %2191 = vmatpush1.bf16.msra.mxu0 %v1601
      %2192 = vmatprep.subr.bf16.mxu0 %v1604
      %2193 = vmatpush1.bf16.msra.mxu0 %v1603
      %2194 = vmatprep.subr.bf16.mxu0 %v1606
      %2195 = vmatpush1.bf16.msra.mxu0 %v1605
      %2196 = vmatprep.subr.bf16.mxu0 %v1608
      %2197 = vmatpush1.bf16.msra.mxu0 %v1607
      %2198 = vmatprep.subr.bf16.mxu0 %v1610
      %2199 = vmatpush1.bf16.msra.mxu0 %v1609
      %2200 = vmatprep.mubr.bf16.mxu0 %v570
      %2201 = vmatmul.mubr.bf16.gmra.mrb[0].mxu0 %v569
      %v2202 = vpop.f32.mrb[0].mxu0
      %v2203 = vadd.f32 %v2160, %v2202
      %v2204 = vpop.f32.mrb[0].mxu0
      %v2205 = vadd.f32 %v2162, %v2204
      %v2206 = vpop.f32.mrb[0].mxu0
      %v2207 = vadd.f32 %v2164, %v2206
      %v2208 = vpop.f32.mrb[0].mxu0
      %v2209 = vadd.f32 %v2166, %v2208
      %2210 = vdwg.mxu0
      %v2211 = vadd.f32 %v2203, %v2207
      %v2212 = vrot.slane %v2211, 4
      %v2213 = vadd.f32 %v2211, %v2212
      %v2214 = vrot.slane %v2213, 2
      %v2215 = vadd.f32 %v2213, %v2214
      %v2216 = vrot.slane %v2215, 1
      %v2217 = vadd.f32 %v2215, %v2216
      %v2218 = vadd.f32 %v2205, %v2209
      %v2219 = vrot.slane %v2218, 4
      %v2220 = vadd.f32 %v2218, %v2219
      %v2221 = vrot.slane %v2220, 2
      %v2222 = vadd.f32 %v2220, %v2221
      %v2223 = vrot.slane %v2222, 1
      %v2224 = vadd.f32 %v2222, %v2223
      %v2225 = vmul.f32 %v2203, %v2203
      %v2226 = vmul.f32 %v2205, %v2205
      %v2227 = vmul.f32 %v2207, %v2207
      %v2228 = vmul.f32 %v2209, %v2209
      %v2229 = vadd.f32 %v2225, %v2227
      %v2230 = vrot.slane %v2229, 4
      %v2231 = vadd.f32 %v2229, %v2230
      %v2232 = vrot.slane %v2231, 2
      %v2233 = vadd.f32 %v2231, %v2232
      %v2234 = vrot.slane %v2233, 1
      %v2235 = vadd.f32 %v2233, %v2234
      %v2236 = vadd.f32 %v2226, %v2228
      %v2237 = vrot.slane %v2236, 4
      %v2238 = vadd.f32 %v2236, %v2237
      %v2239 = vrot.slane %v2238, 2
      %v2240 = vadd.f32 %v2238, %v2239
      %v2241 = vrot.slane %v2240, 1
      %v2242 = vadd.f32 %v2240, %v2241
      %v2243 = vmul.f32 %v2217, 0.0625
      %v2244 = vmul.f32 %v2224, 0.0625
      %v2245 = vmul.f32 %v2235, 0.0625
      %v2246 = vmul.f32 %v2242, 0.0625
      %v2247 = vmul.f32 %v2243, %v2243
      %v2248 = vmul.f32 %v2244, %v2244
      %v2249 = vsub.f32 %v2245, %v2247
      %v2250 = vsub.f32 %v2246, %v2248
      %v2251 = vmax.f32 %v2249, 0.0
      %v2252 = vmax.f32 %v2250, 0.0
      %v2253 = vsub.f32 %v2203, %v2243
      %v2254 = vsub.f32 %v2205, %v2244
      %v2255 = vsub.f32 %v2207, %v2243
      %v2256 = vsub.f32 %v2209, %v2244
      %v2257 = vadd.f32 %v2251, 1e-05
      %v2258 = vadd.f32 %v2252, 1e-05
      %v2259 = vrsqrt.pop %v2257
      %v2260 = vrsqrt.pop %v2258
      %v2261 = vmul.f32 %v2253, %v2259
      %v2262 = vmul.f32 %v2254, %v2260
      %v2263 = vmul.f32 %v2255, %v2259
      %v2264 = vmul.f32 %v2256, %v2260
      %vm2265 = vcmp.gt.f32.partialorder %v2261, 0.0
      %vm2266 = vcmp.gt.f32.partialorder %v2262, 0.0
      %vm2267 = vcmp.gt.f32.partialorder %v2263, 0.0
      %vm2268 = vcmp.gt.f32.partialorder %v2264, 0.0
      %v2269 = vmul.f32 %v2261, 0.2
      %v2270 = vmul.f32 %v2262, 0.2
      %v2271 = vmul.f32 %v2263, 0.2
      %v2272 = vmul.f32 %v2264, 0.2
      %v2273 = vsel %vm2265, %v2261, %v2269
      %v2274 = vsel %vm2266, %v2262, %v2270
      %v2275 = vsel %vm2267, %v2263, %v2271
      %v2276 = vsel %vm2268, %v2264, %v2272
      %v2277 = vld [vmem:[%s3] sm:$0xff]
      %v2278 = vld [vmem:[%s3 + $0x8] sm:$0xff]
      %v2279 = vld [vmem:[%s3 + $0x10] sm:$0xff]
      %v2280 = vld [vmem:[%s3 + $0x18] sm:$0xff]
      %v2281 = vmul.f32 %v2273, %v2277
      %v2282 = vmul.f32 %v2274, %v2278
      %v2283 = vmul.f32 %v2275, %v2279
      %v2284 = vmul.f32 %v2276, %v2280
      %v2285 = vadd.f32 %v2281, %v2282
      %2286 = vadd.xlane.f32.xlu0 %v2285
      %v2287 = vpop.xlane.xlu0 %2286
      %v2288 = vadd.f32 %v2283, %v2284
      %2289 = vadd.xlane.f32.xlu0 %v2288
      %v2290 = vpop.xlane.xlu0 %2289
      %v2291 = vadd.f32 %v2287, %v2290
      %v2292 = vrot.slane %v2291, 4
      %v2293 = vadd.f32 %v2291, %v2292
      %v2294 = vrot.slane %v2293, 2
      %v2295 = vadd.f32 %v2293, %v2294
      %v2296 = vrot.slane %v2295, 1
      %v2297 = vadd.f32 %v2295, %v2296
      %v2298 = vld [vmem:[#allocation2] sm:$0x1]
      %v2299 = vadd.f32 %v2297, %v2298
      %vm2300 = vcmask 0
      %2301 = vst.msk [vmem:[%s222] sm:$0x1] %vm2300, %v2299
      %p2302 = scmp.lt.s32.totalorder %s18, 1
      %s2303 = scalar_select %p2302, %s18, 1
      %s2304 = scalar_lea.vmem %s5, %s2303
      // Predicated region
      $region41: #{critic_forward.9} parent=39 // pred_check
        %p2305 = pneg %p146
      $region42: #{critic_forward.9} parent=39 // pred_check_branch
        %2307 = sbr.rel (%p2305) target = $region44
      $region43: #{critic_forward.9} parent=39 // pred_region
        _
      $region44: #{critic_forward.9} parent=39 // pred_fallthru
        _
    $region40: #{critic_forward.9} parent=5 // pred_fallthru
      _
    %p2308 = scmp.le.s32.totalorder 2, %s13
    // Predicated region
    $region45: #{critic_forward.9} parent=5 // pred_check
      %p2309 = pneg %p2308
    $region46: #{critic_forward.9} parent=5 // pred_check_branch
      %2311 = sbr.rel (%p2309) target = $region48
    $region47: #{critic_forward.9} parent=5 // pred_region
      %s2312 = ssub.s32 %s13, 2
      // Predicated region
      $region49: #{critic_forward.9} parent=47 // pred_check
        %p2313 = pneg %p152
      $region50: #{critic_forward.9} parent=47 // pred_check_branch
        %2315 = sbr.rel (%p2313) target = $region52
      $region51: #{critic_forward.9} parent=47 // pred_region
        %p2316 = scmp.lt.s32.totalorder %s19, 1
        %s2317 = scalar_select %p2316, %s19, 1
        %s2318 = scalar_lea.vmem %s5, %s2317
      $region52: #{critic_forward.9} parent=47 // pred_fallthru
        _
    $region48: #{critic_forward.9} parent=5 // pred_fallthru
      _
  $region6: #{critic_forward.9} parent=0 // loop_footer
    %s17 = sadd.s32 1, %s13
  $region7: #{critic_forward.9} parent=0 // loop_footer_branch
    %12 = sbr.rel target = $region3
  $region8: #{critic_forward.9} parent=0 // loop_exit
    _

</llo_original>
